<compile_context>
chip_gen: v7x
topology: tpu7x:2x2x1
jax: 0.10.0
libtpu: 0.0.40
codegen_flags: <defaults>
</compile_context>

<pallas_src>
import functools

import numpy as np
import jax
import jax.numpy as jnp
from jax import lax
from jax.experimental import pallas as pl
from jax.experimental.pallas import tpu as pltpu


# ----------------------------------------------------------------------------
# Bicubic (align_corners=True, a=-0.75) interpolation matrix, PyTorch semantics.
# (The original module explicitly passes align_corners=True.)
# ----------------------------------------------------------------------------
def _bicubic_matrix(in_size: int, out_size: int) -> np.ndarray:
    A = -0.75

    def cc1(t):  # |t| <= 1
        return ((A + 2.0) * t - (A + 3.0)) * t * t + 1.0

    def cc2(t):  # 1 < |t| <= 2
        return ((A * t - 5.0 * A) * t + 8.0 * A) * t - 4.0 * A

    W = np.zeros((out_size, in_size), np.float32)
    for i in range(out_size):
        src = i * (in_size - 1) / (out_size - 1) if out_size > 1 else 0.0
        x0 = int(np.floor(src))
        t = src - x0
        coeffs = [cc2(t + 1.0), cc1(t), cc1(1.0 - t), cc2(2.0 - t)]
        for k, c in enumerate(coeffs):
            idx = min(max(x0 - 1 + k, 0), in_size - 1)
            W[i, idx] += c
    return W


# ----------------------------------------------------------------------------
# Fused Pallas kernel: upsample -> conv1+b1 -> relu -> conv2+b2 -> + out0
# ----------------------------------------------------------------------------
def _upsample_blk_kernel(x_ref, kup_ref, w1_ref, b1_ref, w2_ref, b2_ref, mask_ref,
                         out_ref, up_pad_ref, relu_pad_ref,
                         *, cout, ws, nout, pad_base):
    taps = tuple(ky * ws + kx for ky in range(3) for kx in range(3))

    def conv9(w_ref, src_ref, base):
        # Direct per-tap accumulation (no im2col materialization): 9 small MXU
        # matmuls (cout, 8) @ (8, nout); the accumulator stays in vregs.
        acc = None
        for t, off in enumerate(taps):
            part = jnp.dot(w_ref[t], src_ref[:, base + off:base + off + nout],
                           preferred_element_type=jnp.float32)
            acc = part if acc is None else acc + part
        return acc

    # 1) bicubic x2 upsample; SAME zero-padding + row-stride padding are folded into
    #    the kron upsample matrix -> zero-padded, row-major flattened channel planes.
    up_pad_ref[...] = jnp.dot(x_ref[0], kup_ref[...],
                              preferred_element_type=jnp.float32)

    # 2) conv1 (+ bias).  Store out0 immediately: it is the residual and part of the
    #    final output, and storing it bounds its vreg live range.
    out0 = conv9(w1_ref, up_pad_ref, 0) + b1_ref[...]
    out_ref[0] = out0

    # 3) relu; zero the between-row stride columns; place into the padded relu plane.
    #    Only the head/tail border regions are re-zeroed (interior fully overwritten).
    tail = relu_pad_ref.shape[1] - (pad_base + nout)
    relu_pad_ref[:, 0:pad_base] = jnp.zeros((cout, pad_base), jnp.float32)
    relu_pad_ref[:, pad_base + nout:pad_base + nout + tail] = (
        jnp.zeros((cout, tail), jnp.float32))
    relu_pad_ref[:, pad_base:pad_base + nout] = (
        jnp.maximum(out0, 0.0) * mask_ref[...])

    # 4) conv2 (+ bias) + residual add.
    out_ref[0] = (out_ref[0]
                  + conv9(w2_ref, relu_pad_ref, pad_base - ws - 1)
                  + b2_ref[...])


# ----------------------------------------------------------------------------
# Wrapper: constant prep (trace-time numpy) + one pallas_call + output un-flatten
# ----------------------------------------------------------------------------
@jax.jit
def upsample_blk_forward(x, w1, b1, w2, b2):
    n, cin, hi, wi = x.shape
    cout = w1.shape[0]
    ho, wo = 2 * hi, 2 * wi
    hp = ho + 2                                   # zero-padded plane height

    # flat row stride: smallest >= wo+2 making nout a multiple of 128 (lane-dense)
    ws = wo + 2
    while (ho * ws) % 128 != 0:
        ws += 1
    nout = ho * ws                                # flat output positions (incl. junk cols)
    pad_base = ((ws + 1 + 127) // 128) * 128      # lane-aligned interior offset (>= ws+1)
    tail = ((ws + 1 + 127) // 128) * 128          # lane-aligned zero tail (>= ws+1)
    flat1 = ((hp * ws + 2 + 127) // 128) * 128    # padded upsample plane (+slack for taps)
    flat2 = pad_base + nout + tail                # padded relu plane length
    cpad = ((cin + 7) // 8) * 8                   # pad cin to a full sublane tile

    # ---- host-side constants (trace-time numpy) ----
    wh = _bicubic_matrix(hi, ho)                                  # (ho, hi)
    ww = _bicubic_matrix(wi, wo)                                  # (wo, wi)
    wh_pad = np.zeros((hp, hi), np.float32); wh_pad[1:1 + ho] = wh
    ww_pad = np.zeros((ws, wi), np.float32); ww_pad[1:1 + wo] = ww
    kup = np.zeros((hi * wi, flat1), np.float32)
    kup[:, :hp * ws] = np.kron(wh_pad, ww_pad).T                  # (hi*wi, hp*ws)

    colmask = np.ones((1, nout), np.float32)
    colmask[0, (np.arange(nout) % ws) >= wo] = 0.0                # zero junk cols per row

    # ---- cheap XLA-side repacking (metadata / tiny weights only) ----
    x_flat = x.reshape(n, cin, hi * wi)
    if cpad != cin:
        x_flat = jnp.pad(x_flat, ((0, 0), (0, cpad - cin), (0, 0)))
    w1_t = jnp.transpose(w1, (2, 3, 0, 1)).reshape(9, cout, cin)  # (ky,kx,co,ci)
    if cpad != cin:
        w1_t = jnp.pad(w1_t, ((0, 0), (0, 0), (0, cpad - cin)))
    w2_t = jnp.transpose(w2, (2, 3, 0, 1)).reshape(9, cout, cout)

    kernel = functools.partial(_upsample_blk_kernel, cout=cout, ws=ws,
                               nout=nout, pad_base=pad_base)

    out_flat = pl.pallas_call(
        kernel,
        out_shape=jax.ShapeDtypeStruct((n, cout, nout), jnp.float32),
        grid=(n,),
        in_specs=[
            pl.BlockSpec((1, cpad, hi * wi), lambda b: (b, 0, 0)),   # x (per batch)
            pl.BlockSpec((hi * wi, flat1), lambda b: (0, 0)),        # kron upsample matrix
            pl.BlockSpec((9, cout, cpad), lambda b: (0, 0, 0)),      # conv1 per-tap weights
            pl.BlockSpec((cout, 1), lambda b: (0, 0)),               # conv1 bias
            pl.BlockSpec((9, cout, cout), lambda b: (0, 0, 0)),      # conv2 per-tap weights
            pl.BlockSpec((cout, 1), lambda b: (0, 0)),               # conv2 bias
            pl.BlockSpec((1, nout), lambda b: (0, 0)),               # junk-column mask
        ],
        out_specs=pl.BlockSpec((1, cout, nout), lambda b: (b, 0, 0)),
        scratch_shapes=[
            pltpu.VMEM((cpad, flat1), jnp.float32),   # zero-padded upsampled planes
            pltpu.VMEM((cout, flat2), jnp.float32),   # zero-padded relu plane
        ],
        compiler_params=pltpu.CompilerParams(dimension_semantics=("parallel",)),
    )(x_flat, jnp.asarray(kup), w1_t, b1.reshape(cout, 1),
      w2_t, b2.reshape(cout, 1), jnp.asarray(colmask))

    # strip the junk stride columns per output row (cheap reshape + slice)
    return out_flat.reshape(n, cout, ho, ws)[:, :, :, :wo]


# ----------------------------------------------------------------------------
# Pure-JAX reference (same math) for a correctness check
# ----------------------------------------------------------------------------
def reference_forward(x, w1, b1, w2, b2):
    _, _, hi, wi = x.shape
    wh = jnp.asarray(_bicubic_matrix(hi, 2 * hi))
    ww = jnp.asarray(_bicubic_matrix(wi, 2 * wi))
    up = jnp.einsum('oh,nchw->ncow', wh, x)
    up = jnp.einsum('pw,ncow->ncop', ww, up)
    dn = ('NCHW', 'OIHW', 'NCHW')
    out0 = lax.conv_general_dilated(up, w1, (1, 1), 'SAME',
                                    dimension_numbers=dn) + b1[None, :, None, None]
    r = jnp.maximum(out0, 0.0)
    out = lax.conv_general_dilated(r, w2, (1, 1), 'SAME',
                                   dimension_numbers=dn) + b2[None, :, None, None]
    return out + out0


if __name__ == "__main__":
    N, Cin, Hi, Wi = 2, 4, 16, 16   # inplanes=4
    Cout = 8                        # outplanes=8

    key = jax.random.PRNGKey(0)
    k1, k2, k3, k4, k5 = jax.random.split(key, 5)
    x = jax.random.normal(k1, (N, Cin, Hi, Wi), jnp.float32)
    w1 = jax.random.normal(k2, (Cout, Cin, 3, 3), jnp.float32) * 0.1
    b1 = jax.random.normal(k3, (Cout,), jnp.float32) * 0.1
    w2 = jax.random.normal(k4, (Cout, Cout, 3, 3), jnp.float32) * 0.1
    b2 = jax.random.normal(k5, (Cout,), jnp.float32) * 0.1

    out = jax.block_until_ready(upsample_blk_forward(x, w1, b1, w2, b2))
    ref = jax.block_until_ready(reference_forward(x, w1, b1, w2, b2))

    assert out.shape == (N, Cout, 2 * Hi, 2 * Wi), out.shape
    err = float(np.max(np.abs(np.asarray(out) - np.asarray(ref))))
    assert np.allclose(np.asarray(out), np.asarray(ref), rtol=1e-3, atol=1e-3), err

    print("KERNEL_OK")
</pallas_src>

<mosaic_0001>
module attributes {stable_mosaic.version = 11 : i64} {
  func.func @_upsample_blk_kernel(%arg0: i32, %arg1: memref<1x8x256xf32, #tpu.memory_space<vmem>>, %arg2: memref<256x1280xf32, #tpu.memory_space<vmem>>, %arg3: memref<9x8x8xf32, #tpu.memory_space<vmem>>, %arg4: memref<8x1xf32, #tpu.memory_space<vmem>>, %arg5: memref<9x8x8xf32, #tpu.memory_space<vmem>>, %arg6: memref<8x1xf32, #tpu.memory_space<vmem>>, %arg7: memref<1x1152xf32, #tpu.memory_space<vmem>>, %arg8: memref<1x8x1152xf32, #tpu.memory_space<vmem>>, %arg9: memref<8x1280xf32, #tpu.memory_space<vmem>>, %arg10: memref<8x1408xf32, #tpu.memory_space<vmem>>) attributes {dimension_semantics = [#tpu.dimension_semantics<parallel>], iteration_bounds = array<i64: 2>, scalar_prefetch = 0 : i64, scratch_operands = 2 : i64, tpu.core_type = #tpu.core_type<tc>, window_params = [{transform_indices = @transform_0, window_bounds = array<i64: 1, 8, 256>}, {pipeline_mode = #tpu.pipeline_mode<synchronous>, transform_indices = @transform_1, window_bounds = array<i64: 256, 1280>}, {pipeline_mode = #tpu.pipeline_mode<synchronous>, transform_indices = @transform_2, window_bounds = array<i64: 9, 8, 8>}, {pipeline_mode = #tpu.pipeline_mode<synchronous>, transform_indices = @transform_3, window_bounds = array<i64: 8, 1>}, {pipeline_mode = #tpu.pipeline_mode<synchronous>, transform_indices = @transform_4, window_bounds = array<i64: 9, 8, 8>}, {pipeline_mode = #tpu.pipeline_mode<synchronous>, transform_indices = @transform_5, window_bounds = array<i64: 8, 1>}, {pipeline_mode = #tpu.pipeline_mode<synchronous>, transform_indices = @transform_6, window_bounds = array<i64: 1, 1152>}, {transform_indices = @transform_7, window_bounds = array<i64: 1, 8, 1152>}]} {
    %c0 = arith.constant 0 : index
    %c0_0 = arith.constant 0 : index
    %c0_1 = arith.constant 0 : index
    %0 = vector.load %arg1[%c0, %c0_0, %c0_1] : memref<1x8x256xf32, #tpu.memory_space<vmem>>, vector<1x8x256xf32>
    %1 = vector.shape_cast %0 : vector<1x8x256xf32> to vector<8x256xf32>
    %c0_2 = arith.constant 0 : index
    %c0_3 = arith.constant 0 : index
    %2 = vector.load %arg2[%c0_2, %c0_3] : memref<256x1280xf32, #tpu.memory_space<vmem>>, vector<256x1280xf32>
    %cst = arith.constant dense<0.000000e+00> : vector<8x1280xf32>
    %3 = tpu.matmul %1, %2, %cst {dimension_numbers = #tpu.dot_dimension_numbers<[1], [0], [0], [1], [0, 0, 1, 1], [], []>} : vector<8x256xf32>, vector<256x1280xf32>, vector<8x1280xf32> -> vector<8x1280xf32>
    %c0_4 = arith.constant 0 : index
    %c0_5 = arith.constant 0 : index
    %4 = vector.load %arg9[%c0_4, %c0_5] : memref<8x1280xf32, #tpu.memory_space<vmem>>, vector<8x1280xf32>
    tpu.vector_store %arg9[%c0_4, %c0_5], %3 {strides = array<i32>} : memref<8x1280xf32, #tpu.memory_space<vmem>>, vector<8x1280xf32>,
    %c0_6 = arith.constant 0 : index
    %c0_7 = arith.constant 0 : index
    %c0_8 = arith.constant 0 : index
    %5 = vector.load %arg3[%c0_6, %c0_7, %c0_8] : memref<9x8x8xf32, #tpu.memory_space<vmem>>, vector<1x8x8xf32>
    %6 = vector.shape_cast %5 : vector<1x8x8xf32> to vector<8x8xf32>
    %c0_9 = arith.constant 0 : index
    %c0_10 = arith.constant 0 : index
    %7 = vector.load %arg9[%c0_9, %c0_10] : memref<8x1280xf32, #tpu.memory_space<vmem>>, vector<8x1152xf32>
    %cst_11 = arith.constant dense<0.000000e+00> : vector<8x1152xf32>
    %8 = tpu.matmul %6, %7, %cst_11 {dimension_numbers = #tpu.dot_dimension_numbers<[1], [0], [0], [1], [0, 0, 1, 1], [], []>} : vector<8x8xf32>, vector<8x1152xf32>, vector<8x1152xf32> -> vector<8x1152xf32>
    %c1 = arith.constant 1 : index
    %c0_12 = arith.constant 0 : index
    %c0_13 = arith.constant 0 : index
    %9 = vector.load %arg3[%c1, %c0_12, %c0_13] : memref<9x8x8xf32, #tpu.memory_space<vmem>>, vector<1x8x8xf32>
    %10 = vector.shape_cast %9 : vector<1x8x8xf32> to vector<8x8xf32>
    %c0_14 = arith.constant 0 : index
    %c1_15 = arith.constant 1 : index
    %11 = vector.load %arg9[%c0_14, %c1_15] : memref<8x1280xf32, #tpu.memory_space<vmem>>, vector<8x1152xf32>
    %cst_16 = arith.constant dense<0.000000e+00> : vector<8x1152xf32>
    %12 = tpu.matmul %10, %11, %cst_16 {dimension_numbers = #tpu.dot_dimension_numbers<[1], [0], [0], [1], [0, 0, 1, 1], [], []>} : vector<8x8xf32>, vector<8x1152xf32>, vector<8x1152xf32> -> vector<8x1152xf32>
    %13 = arith.addf %8, %12 : vector<8x1152xf32>
    %c2 = arith.constant 2 : index
    %c0_17 = arith.constant 0 : index
    %c0_18 = arith.constant 0 : index
    %14 = vector.load %arg3[%c2, %c0_17, %c0_18] : memref<9x8x8xf32, #tpu.memory_space<vmem>>, vector<1x8x8xf32>
    %15 = vector.shape_cast %14 : vector<1x8x8xf32> to vector<8x8xf32>
    %c0_19 = arith.constant 0 : index
    %c2_20 = arith.constant 2 : index
    %16 = vector.load %arg9[%c0_19, %c2_20] : memref<8x1280xf32, #tpu.memory_space<vmem>>, vector<8x1152xf32>
    %cst_21 = arith.constant dense<0.000000e+00> : vector<8x1152xf32>
    %17 = tpu.matmul %15, %16, %cst_21 {dimension_numbers = #tpu.dot_dimension_numbers<[1], [0], [0], [1], [0, 0, 1, 1], [], []>} : vector<8x8xf32>, vector<8x1152xf32>, vector<8x1152xf32> -> vector<8x1152xf32>
    %18 = arith.addf %13, %17 : vector<8x1152xf32>
    %c3 = arith.constant 3 : index
    %c0_22 = arith.constant 0 : index
    %c0_23 = arith.constant 0 : index
    %19 = vector.load %arg3[%c3, %c0_22, %c0_23] : memref<9x8x8xf32, #tpu.memory_space<vmem>>, vector<1x8x8xf32>
    %20 = vector.shape_cast %19 : vector<1x8x8xf32> to vector<8x8xf32>
    %c0_24 = arith.constant 0 : index
    %c36 = arith.constant 36 : index
    %21 = vector.load %arg9[%c0_24, %c36] : memref<8x1280xf32, #tpu.memory_space<vmem>>, vector<8x1152xf32>
    %cst_25 = arith.constant dense<0.000000e+00> : vector<8x1152xf32>
    %22 = tpu.matmul %20, %21, %cst_25 {dimension_numbers = #tpu.dot_dimension_numbers<[1], [0], [0], [1], [0, 0, 1, 1], [], []>} : vector<8x8xf32>, vector<8x1152xf32>, vector<8x1152xf32> -> vector<8x1152xf32>
    %23 = arith.addf %18, %22 : vector<8x1152xf32>
    %c4 = arith.constant 4 : index
    %c0_26 = arith.constant 0 : index
    %c0_27 = arith.constant 0 : index
    %24 = vector.load %arg3[%c4, %c0_26, %c0_27] : memref<9x8x8xf32, #tpu.memory_space<vmem>>, vector<1x8x8xf32>
    %25 = vector.shape_cast %24 : vector<1x8x8xf32> to vector<8x8xf32>
    %c0_28 = arith.constant 0 : index
    %c37 = arith.constant 37 : index
    %26 = vector.load %arg9[%c0_28, %c37] : memref<8x1280xf32, #tpu.memory_space<vmem>>, vector<8x1152xf32>
    %cst_29 = arith.constant dense<0.000000e+00> : vector<8x1152xf32>
    %27 = tpu.matmul %25, %26, %cst_29 {dimension_numbers = #tpu.dot_dimension_numbers<[1], [0], [0], [1], [0, 0, 1, 1], [], []>} : vector<8x8xf32>, vector<8x1152xf32>, vector<8x1152xf32> -> vector<8x1152xf32>
    %28 = arith.addf %23, %27 : vector<8x1152xf32>
    %c5 = arith.constant 5 : index
    %c0_30 = arith.constant 0 : index
    %c0_31 = arith.constant 0 : index
    %29 = vector.load %arg3[%c5, %c0_30, %c0_31] : memref<9x8x8xf32, #tpu.memory_space<vmem>>, vector<1x8x8xf32>
    %30 = vector.shape_cast %29 : vector<1x8x8xf32> to vector<8x8xf32>
    %c0_32 = arith.constant 0 : index
    %c38 = arith.constant 38 : index
    %31 = vector.load %arg9[%c0_32, %c38] : memref<8x1280xf32, #tpu.memory_space<vmem>>, vector<8x1152xf32>
    %cst_33 = arith.constant dense<0.000000e+00> : vector<8x1152xf32>
    %32 = tpu.matmul %30, %31, %cst_33 {dimension_numbers = #tpu.dot_dimension_numbers<[1], [0], [0], [1], [0, 0, 1, 1], [], []>} : vector<8x8xf32>, vector<8x1152xf32>, vector<8x1152xf32> -> vector<8x1152xf32>
    %33 = arith.addf %28, %32 : vector<8x1152xf32>
    %c6 = arith.constant 6 : index
    %c0_34 = arith.constant 0 : index
    %c0_35 = arith.constant 0 : index
    %34 = vector.load %arg3[%c6, %c0_34, %c0_35] : memref<9x8x8xf32, #tpu.memory_space<vmem>>, vector<1x8x8xf32>
    %35 = vector.shape_cast %34 : vector<1x8x8xf32> to vector<8x8xf32>
    %c0_36 = arith.constant 0 : index
    %c72 = arith.constant 72 : index
    %36 = vector.load %arg9[%c0_36, %c72] : memref<8x1280xf32, #tpu.memory_space<vmem>>, vector<8x1152xf32>
    %cst_37 = arith.constant dense<0.000000e+00> : vector<8x1152xf32>
    %37 = tpu.matmul %35, %36, %cst_37 {dimension_numbers = #tpu.dot_dimension_numbers<[1], [0], [0], [1], [0, 0, 1, 1], [], []>} : vector<8x8xf32>, vector<8x1152xf32>, vector<8x1152xf32> -> vector<8x1152xf32>
    %38 = arith.addf %33, %37 : vector<8x1152xf32>
    %c7 = arith.constant 7 : index
    %c0_38 = arith.constant 0 : index
    %c0_39 = arith.constant 0 : index
    %39 = vector.load %arg3[%c7, %c0_38, %c0_39] : memref<9x8x8xf32, #tpu.memory_space<vmem>>, vector<1x8x8xf32>
    %40 = vector.shape_cast %39 : vector<1x8x8xf32> to vector<8x8xf32>
    %c0_40 = arith.constant 0 : index
    %c73 = arith.constant 73 : index
    %41 = vector.load %arg9[%c0_40, %c73] : memref<8x1280xf32, #tpu.memory_space<vmem>>, vector<8x1152xf32>
    %cst_41 = arith.constant dense<0.000000e+00> : vector<8x1152xf32>
    %42 = tpu.matmul %40, %41, %cst_41 {dimension_numbers = #tpu.dot_dimension_numbers<[1], [0], [0], [1], [0, 0, 1, 1], [], []>} : vector<8x8xf32>, vector<8x1152xf32>, vector<8x1152xf32> -> vector<8x1152xf32>
    %43 = arith.addf %38, %42 : vector<8x1152xf32>
    %c8 = arith.constant 8 : index
    %c0_42 = arith.constant 0 : index
    %c0_43 = arith.constant 0 : index
    %44 = vector.load %arg3[%c8, %c0_42, %c0_43] : memref<9x8x8xf32, #tpu.memory_space<vmem>>, vector<1x8x8xf32>
    %45 = vector.shape_cast %44 : vector<1x8x8xf32> to vector<8x8xf32>
    %c0_44 = arith.constant 0 : index
    %c74 = arith.constant 74 : index
    %46 = vector.load %arg9[%c0_44, %c74] : memref<8x1280xf32, #tpu.memory_space<vmem>>, vector<8x1152xf32>
    %cst_45 = arith.constant dense<0.000000e+00> : vector<8x1152xf32>
    %47 = tpu.matmul %45, %46, %cst_45 {dimension_numbers = #tpu.dot_dimension_numbers<[1], [0], [0], [1], [0, 0, 1, 1], [], []>} : vector<8x8xf32>, vector<8x1152xf32>, vector<8x1152xf32> -> vector<8x1152xf32>
    %48 = arith.addf %43, %47 : vector<8x1152xf32>
    %c0_46 = arith.constant 0 : index
    %c0_47 = arith.constant 0 : index
    %49 = vector.load %arg4[%c0_46, %c0_47] : memref<8x1xf32, #tpu.memory_space<vmem>>, vector<8x1xf32>
    %50 = vector.broadcast %49 : vector<8x1xf32> to vector<8x1152xf32>
    %51 = arith.addf %48, %50 : vector<8x1152xf32>
    %c0_48 = arith.constant 0 : index
    %c0_49 = arith.constant 0 : index
    %c0_50 = arith.constant 0 : index
    %52 = vector.load %arg8[%c0_48, %c0_49, %c0_50] : memref<1x8x1152xf32, #tpu.memory_space<vmem>>, vector<1x8x1152xf32>
    %53 = vector.shape_cast %52 : vector<1x8x1152xf32> to vector<8x1152xf32>
    %54 = vector.shape_cast %51 : vector<8x1152xf32> to vector<1x8x1152xf32>
    tpu.vector_store %arg8[%c0_48, %c0_49, %c0_50], %54 {strides = array<i32>} : memref<1x8x1152xf32, #tpu.memory_space<vmem>>, vector<1x8x1152xf32>,
    %cst_51 = arith.constant 0.000000e+00 : f32
    %55 = vector.broadcast %cst_51 : f32 to vector<8x128xf32>
    %c0_52 = arith.constant 0 : index
    %c0_53 = arith.constant 0 : index
    %56 = vector.load %arg10[%c0_52, %c0_53] : memref<8x1408xf32, #tpu.memory_space<vmem>>, vector<8x128xf32>
    tpu.vector_store %arg10[%c0_52, %c0_53], %55 {strides = array<i32>} : memref<8x1408xf32, #tpu.memory_space<vmem>>, vector<8x128xf32>,
    %cst_54 = arith.constant 0.000000e+00 : f32
    %57 = vector.broadcast %cst_54 : f32 to vector<8x128xf32>
    %c0_55 = arith.constant 0 : index
    %c1280 = arith.constant 1280 : index
    %58 = vector.load %arg10[%c0_55, %c1280] : memref<8x1408xf32, #tpu.memory_space<vmem>>, vector<8x128xf32>
    tpu.vector_store %arg10[%c0_55, %c1280], %57 {strides = array<i32>} : memref<8x1408xf32, #tpu.memory_space<vmem>>, vector<8x128xf32>,
    %cst_56 = arith.constant 0.000000e+00 : f32
    %59 = vector.broadcast %cst_56 : f32 to vector<8x1152xf32>
    %60 = arith.maximumf %51, %59 : vector<8x1152xf32>
    %c0_57 = arith.constant 0 : index
    %c0_58 = arith.constant 0 : index
    %61 = vector.load %arg7[%c0_57, %c0_58] : memref<1x1152xf32, #tpu.memory_space<vmem>>, vector<1x1152xf32>
    %62 = vector.broadcast %61 : vector<1x1152xf32> to vector<8x1152xf32>
    %63 = arith.mulf %60, %62 : vector<8x1152xf32>
    %c0_59 = arith.constant 0 : index
    %c128 = arith.constant 128 : index
    %64 = vector.load %arg10[%c0_59, %c128] : memref<8x1408xf32, #tpu.memory_space<vmem>>, vector<8x1152xf32>
    tpu.vector_store %arg10[%c0_59, %c128], %63 {strides = array<i32>} : memref<8x1408xf32, #tpu.memory_space<vmem>>, vector<8x1152xf32>,
    %c0_60 = arith.constant 0 : index
    %c0_61 = arith.constant 0 : index
    %c0_62 = arith.constant 0 : index
    %65 = vector.load %arg8[%c0_60, %c0_61, %c0_62] : memref<1x8x1152xf32, #tpu.memory_space<vmem>>, vector<1x8x1152xf32>
    %66 = vector.shape_cast %65 : vector<1x8x1152xf32> to vector<8x1152xf32>
    %c0_63 = arith.constant 0 : index
    %c0_64 = arith.constant 0 : index
    %c0_65 = arith.constant 0 : index
    %67 = vector.load %arg5[%c0_63, %c0_64, %c0_65] : memref<9x8x8xf32, #tpu.memory_space<vmem>>, vector<1x8x8xf32>
    %68 = vector.shape_cast %67 : vector<1x8x8xf32> to vector<8x8xf32>
    %c0_66 = arith.constant 0 : index
    %c91 = arith.constant 91 : index
    %69 = vector.load %arg10[%c0_66, %c91] : memref<8x1408xf32, #tpu.memory_space<vmem>>, vector<8x1152xf32>
    %cst_67 = arith.constant dense<0.000000e+00> : vector<8x1152xf32>
    %70 = tpu.matmul %68, %69, %cst_67 {dimension_numbers = #tpu.dot_dimension_numbers<[1], [0], [0], [1], [0, 0, 1, 1], [], []>} : vector<8x8xf32>, vector<8x1152xf32>, vector<8x1152xf32> -> vector<8x1152xf32>
    %c1_68 = arith.constant 1 : index
    %c0_69 = arith.constant 0 : index
    %c0_70 = arith.constant 0 : index
    %71 = vector.load %arg5[%c1_68, %c0_69, %c0_70] : memref<9x8x8xf32, #tpu.memory_space<vmem>>, vector<1x8x8xf32>
    %72 = vector.shape_cast %71 : vector<1x8x8xf32> to vector<8x8xf32>
    %c0_71 = arith.constant 0 : index
    %c92 = arith.constant 92 : index
    %73 = vector.load %arg10[%c0_71, %c92] : memref<8x1408xf32, #tpu.memory_space<vmem>>, vector<8x1152xf32>
    %cst_72 = arith.constant dense<0.000000e+00> : vector<8x1152xf32>
    %74 = tpu.matmul %72, %73, %cst_72 {dimension_numbers = #tpu.dot_dimension_numbers<[1], [0], [0], [1], [0, 0, 1, 1], [], []>} : vector<8x8xf32>, vector<8x1152xf32>, vector<8x1152xf32> -> vector<8x1152xf32>
    %75 = arith.addf %70, %74 : vector<8x1152xf32>
    %c2_73 = arith.constant 2 : index
    %c0_74 = arith.constant 0 : index
    %c0_75 = arith.constant 0 : index
    %76 = vector.load %arg5[%c2_73, %c0_74, %c0_75] : memref<9x8x8xf32, #tpu.memory_space<vmem>>, vector<1x8x8xf32>
    %77 = vector.shape_cast %76 : vector<1x8x8xf32> to vector<8x8xf32>
    %c0_76 = arith.constant 0 : index
    %c93 = arith.constant 93 : index
    %78 = vector.load %arg10[%c0_76, %c93] : memref<8x1408xf32, #tpu.memory_space<vmem>>, vector<8x1152xf32>
    %cst_77 = arith.constant dense<0.000000e+00> : vector<8x1152xf32>
    %79 = tpu.matmul %77, %78, %cst_77 {dimension_numbers = #tpu.dot_dimension_numbers<[1], [0], [0], [1], [0, 0, 1, 1], [], []>} : vector<8x8xf32>, vector<8x1152xf32>, vector<8x1152xf32> -> vector<8x1152xf32>
    %80 = arith.addf %75, %79 : vector<8x1152xf32>
    %c3_78 = arith.constant 3 : index
    %c0_79 = arith.constant 0 : index
    %c0_80 = arith.constant 0 : index
    %81 = vector.load %arg5[%c3_78, %c0_79, %c0_80] : memref<9x8x8xf32, #tpu.memory_space<vmem>>, vector<1x8x8xf32>
    %82 = vector.shape_cast %81 : vector<1x8x8xf32> to vector<8x8xf32>
    %c0_81 = arith.constant 0 : index
    %c127 = arith.constant 127 : index
    %83 = vector.load %arg10[%c0_81, %c127] : memref<8x1408xf32, #tpu.memory_space<vmem>>, vector<8x1152xf32>
    %cst_82 = arith.constant dense<0.000000e+00> : vector<8x1152xf32>
    %84 = tpu.matmul %82, %83, %cst_82 {dimension_numbers = #tpu.dot_dimension_numbers<[1], [0], [0], [1], [0, 0, 1, 1], [], []>} : vector<8x8xf32>, vector<8x1152xf32>, vector<8x1152xf32> -> vector<8x1152xf32>
    %85 = arith.addf %80, %84 : vector<8x1152xf32>
    %c4_83 = arith.constant 4 : index
    %c0_84 = arith.constant 0 : index
    %c0_85 = arith.constant 0 : index
    %86 = vector.load %arg5[%c4_83, %c0_84, %c0_85] : memref<9x8x8xf32, #tpu.memory_space<vmem>>, vector<1x8x8xf32>
    %87 = vector.shape_cast %86 : vector<1x8x8xf32> to vector<8x8xf32>
    %c0_86 = arith.constant 0 : index
    %c128_87 = arith.constant 128 : index
    %88 = vector.load %arg10[%c0_86, %c128_87] : memref<8x1408xf32, #tpu.memory_space<vmem>>, vector<8x1152xf32>
    %cst_88 = arith.constant dense<0.000000e+00> : vector<8x1152xf32>
    %89 = tpu.matmul %87, %88, %cst_88 {dimension_numbers = #tpu.dot_dimension_numbers<[1], [0], [0], [1], [0, 0, 1, 1], [], []>} : vector<8x8xf32>, vector<8x1152xf32>, vector<8x1152xf32> -> vector<8x1152xf32>
    %90 = arith.addf %85, %89 : vector<8x1152xf32>
    %c5_89 = arith.constant 5 : index
    %c0_90 = arith.constant 0 : index
    %c0_91 = arith.constant 0 : index
    %91 = vector.load %arg5[%c5_89, %c0_90, %c0_91] : memref<9x8x8xf32, #tpu.memory_space<vmem>>, vector<1x8x8xf32>
    %92 = vector.shape_cast %91 : vector<1x8x8xf32> to vector<8x8xf32>
    %c0_92 = arith.constant 0 : index
    %c129 = arith.constant 129 : index
    %93 = vector.load %arg10[%c0_92, %c129] : memref<8x1408xf32, #tpu.memory_space<vmem>>, vector<8x1152xf32>
    %cst_93 = arith.constant dense<0.000000e+00> : vector<8x1152xf32>
    %94 = tpu.matmul %92, %93, %cst_93 {dimension_numbers = #tpu.dot_dimension_numbers<[1], [0], [0], [1], [0, 0, 1, 1], [], []>} : vector<8x8xf32>, vector<8x1152xf32>, vector<8x1152xf32> -> vector<8x1152xf32>
    %95 = arith.addf %90, %94 : vector<8x1152xf32>
    %c6_94 = arith.constant 6 : index
    %c0_95 = arith.constant 0 : index
    %c0_96 = arith.constant 0 : index
    %96 = vector.load %arg5[%c6_94, %c0_95, %c0_96] : memref<9x8x8xf32, #tpu.memory_space<vmem>>, vector<1x8x8xf32>
    %97 = vector.shape_cast %96 : vector<1x8x8xf32> to vector<8x8xf32>
    %c0_97 = arith.constant 0 : index
    %c163 = arith.constant 163 : index
    %98 = vector.load %arg10[%c0_97, %c163] : memref<8x1408xf32, #tpu.memory_space<vmem>>, vector<8x1152xf32>
    %cst_98 = arith.constant dense<0.000000e+00> : vector<8x1152xf32>
    %99 = tpu.matmul %97, %98, %cst_98 {dimension_numbers = #tpu.dot_dimension_numbers<[1], [0], [0], [1], [0, 0, 1, 1], [], []>} : vector<8x8xf32>, vector<8x1152xf32>, vector<8x1152xf32> -> vector<8x1152xf32>
    %100 = arith.addf %95, %99 : vector<8x1152xf32>
    %c7_99 = arith.constant 7 : index
    %c0_100 = arith.constant 0 : index
    %c0_101 = arith.constant 0 : index
    %101 = vector.load %arg5[%c7_99, %c0_100, %c0_101] : memref<9x8x8xf32, #tpu.memory_space<vmem>>, vector<1x8x8xf32>
    %102 = vector.shape_cast %101 : vector<1x8x8xf32> to vector<8x8xf32>
    %c0_102 = arith.constant 0 : index
    %c164 = arith.constant 164 : index
    %103 = vector.load %arg10[%c0_102, %c164] : memref<8x1408xf32, #tpu.memory_space<vmem>>, vector<8x1152xf32>
    %cst_103 = arith.constant dense<0.000000e+00> : vector<8x1152xf32>
    %104 = tpu.matmul %102, %103, %cst_103 {dimension_numbers = #tpu.dot_dimension_numbers<[1], [0], [0], [1], [0, 0, 1, 1], [], []>} : vector<8x8xf32>, vector<8x1152xf32>, vector<8x1152xf32> -> vector<8x1152xf32>
    %105 = arith.addf %100, %104 : vector<8x1152xf32>
    %c8_104 = arith.constant 8 : index
    %c0_105 = arith.constant 0 : index
    %c0_106 = arith.constant 0 : index
    %106 = vector.load %arg5[%c8_104, %c0_105, %c0_106] : memref<9x8x8xf32, #tpu.memory_space<vmem>>, vector<1x8x8xf32>
    %107 = vector.shape_cast %106 : vector<1x8x8xf32> to vector<8x8xf32>
    %c0_107 = arith.constant 0 : index
    %c165 = arith.constant 165 : index
    %108 = vector.load %arg10[%c0_107, %c165] : memref<8x1408xf32, #tpu.memory_space<vmem>>, vector<8x1152xf32>
    %cst_108 = arith.constant dense<0.000000e+00> : vector<8x1152xf32>
    %109 = tpu.matmul %107, %108, %cst_108 {dimension_numbers = #tpu.dot_dimension_numbers<[1], [0], [0], [1], [0, 0, 1, 1], [], []>} : vector<8x8xf32>, vector<8x1152xf32>, vector<8x1152xf32> -> vector<8x1152xf32>
    %110 = arith.addf %105, %109 : vector<8x1152xf32>
    %111 = arith.addf %66, %110 : vector<8x1152xf32>
    %c0_109 = arith.constant 0 : index
    %c0_110 = arith.constant 0 : index
    %112 = vector.load %arg6[%c0_109, %c0_110] : memref<8x1xf32, #tpu.memory_space<vmem>>, vector<8x1xf32>
    %113 = vector.broadcast %112 : vector<8x1xf32> to vector<8x1152xf32>
    %114 = arith.addf %111, %113 : vector<8x1152xf32>
    %c0_111 = arith.constant 0 : index
    %c0_112 = arith.constant 0 : index
    %c0_113 = arith.constant 0 : index
    %115 = vector.load %arg8[%c0_111, %c0_112, %c0_113] : memref<1x8x1152xf32, #tpu.memory_space<vmem>>, vector<1x8x1152xf32>
    %116 = vector.shape_cast %115 : vector<1x8x1152xf32> to vector<8x1152xf32>
    %117 = vector.shape_cast %114 : vector<8x1152xf32> to vector<1x8x1152xf32>
    tpu.vector_store %arg8[%c0_111, %c0_112, %c0_113], %117 {strides = array<i32>} : memref<1x8x1152xf32, #tpu.memory_space<vmem>>, vector<1x8x1152xf32>,
    return
  }
  func.func @transform_0(%arg0: i32) -> (i32, i32, i32) {
    %c0_i32 = arith.constant 0 : i32
    %c0_i32_0 = arith.constant 0 : i32
    %c0_i32_1 = arith.constant 0 : i32
    return %arg0, %c0_i32, %c0_i32_0 : i32, i32, i32
  }
  func.func @transform_1(%arg0: i32) -> (i32, i32) {
    %c0_i32 = arith.constant 0 : i32
    %c0_i32_0 = arith.constant 0 : i32
    %c0_i32_1 = arith.constant 0 : i32
    return %c0_i32, %c0_i32_0 : i32, i32
  }
  func.func @transform_2(%arg0: i32) -> (i32, i32, i32) {
    %c0_i32 = arith.constant 0 : i32
    %c0_i32_0 = arith.constant 0 : i32
    %c0_i32_1 = arith.constant 0 : i32
    %c0_i32_2 = arith.constant 0 : i32
    return %c0_i32, %c0_i32_0, %c0_i32_1 : i32, i32, i32
  }
  func.func @transform_3(%arg0: i32) -> (i32, i32) {
    %c0_i32 = arith.constant 0 : i32
    %c0_i32_0 = arith.constant 0 : i32
    %c0_i32_1 = arith.constant 0 : i32
    return %c0_i32, %c0_i32_0 : i32, i32
  }
  func.func @transform_4(%arg0: i32) -> (i32, i32, i32) {
    %c0_i32 = arith.constant 0 : i32
    %c0_i32_0 = arith.constant 0 : i32
    %c0_i32_1 = arith.constant 0 : i32
    %c0_i32_2 = arith.constant 0 : i32
    return %c0_i32, %c0_i32_0, %c0_i32_1 : i32, i32, i32
  }
  func.func @transform_5(%arg0: i32) -> (i32, i32) {
    %c0_i32 = arith.constant 0 : i32
    %c0_i32_0 = arith.constant 0 : i32
    %c0_i32_1 = arith.constant 0 : i32
    return %c0_i32, %c0_i32_0 : i32, i32
  }
  func.func @transform_6(%arg0: i32) -> (i32, i32) {
    %c0_i32 = arith.constant 0 : i32
    %c0_i32_0 = arith.constant 0 : i32
    %c0_i32_1 = arith.constant 0 : i32
    return %c0_i32, %c0_i32_0 : i32, i32
  }
  func.func @transform_7(%arg0: i32) -> (i32, i32, i32) {
    %c0_i32 = arith.constant 0 : i32
    %c0_i32_0 = arith.constant 0 : i32
    %c0_i32_1 = arith.constant 0 : i32
    return %arg0, %c0_i32, %c0_i32_0 : i32, i32, i32
  }
}

</mosaic_0001>

<llo_original>
// kernel: upsample_blk_forward.1
$region0: #{upsample_blk_forward.1}
  #allocation0 [shape = 'u32[]', space=smem, size = 0x4, offset = 0x4, fixed_abs, tag = 'smem constant byte address 0x4 - core index']
  #allocation1 [shape = 'u32[144,128]{1,0:T(1,128)}', space=vmem, size = 0x12000, scoped, tag = 'internal scratch']
  #allocation2 [shape = 'f32[8,1280]{1,0:T(8,128)}', space=vmem, size = 0xa000, scoped, tag = 'scratch operand']
  #allocation3 [shape = 'f32[8,1408]{1,0:T(8,128)}', space=vmem, size = 0xb000, scoped, tag = 'scratch operand']
  %s0 = inlined_call_operand.vmem [shape: f32[2,8,256], index: 0, kind: input, shape index: {}]
  %s1 = inlined_call_operand.hbm [shape: f32[256,1280], index: 1, kind: input, shape index: {}]
  %s2 = inlined_call_operand.vmem [shape: f32[9,8,8], index: 2, kind: input, shape index: {}]
  %s3 = inlined_call_operand.vmem [shape: f32[8,1], index: 3, kind: input, shape index: {}]
  %s4 = inlined_call_operand.hbm [shape: f32[9,8,8], index: 4, kind: input, shape index: {}]
  %s5 = inlined_call_operand.vmem [shape: f32[8,1], index: 5, kind: input, shape index: {}]
  %s6 = inlined_call_operand.hbm [shape: f32[1,1152], index: 6, kind: input, shape index: {}]
  %s7 = inlined_call_operand.vmem [shape: f32[2,8,1152], index: 7, kind: output, shape index: {}]
  %s8 = sld [smem:[#allocation0]]
  $region73: #{upsample_blk_forward.1} parent=0
    _
  %s10 = ssub.s32 1, %s8
  %s11 = scalar_select 0, %s10, %s8
  $region1: #{upsample_blk_forward.1} parent=0
    #allocation4 [shape = 'u8[1310720]{0}', space=vmem, size = 0x140000, scoped, tag = 'input window, operand 1, single buffered']
    #allocation5 [shape = 's32[2]{0}', space=sflag, size = 0x8, scoped, tag = 'scoped memory for upsample_blk_forward.1']
    #allocation6 [shape = 'u8[36864]{0}', space=vmem, size = 0x9000, scoped, tag = 'input window, operand 4, single buffered']
    #allocation7 [shape = 's32[1]{0}', space=sflag, size = 0x4, scoped, tag = 'scoped memory for upsample_blk_forward.1']
    #allocation8 [shape = 'u8[4608]{0}', space=vmem, size = 0x1400, scoped, tag = 'input window, operand 6, single buffered']
    %12 = vsyncpa [#allocation5], 0
    %13 = vsyncpa [#allocation7], 0
    loop: start=0, step=1, limit=4
    $region2: #{upsample_blk_forward.1} parent=1 // loop_pre_header
      _
    $region3: #{upsample_blk_forward.1} parent=1 // loop_header
      %s15 = sphi 0, %s19
      %p16 = scmp.ge.s32.totalorder %s15, 4
      %s25 = sphi 0, %s27
      %s28 = sphi 0, %s25
      %s29 = sphi 0, %s28
      %s45 = sphi 0, %s29
      %s49 = sphi 0, %s49
      %s51 = sphi 0, %s49
      %s52 = sphi 0, %s51
      %s66 = sphi 0, %s52
      %s70 = sphi 0, %s70
      %s72 = sphi 0, %s70
      %s73 = sphi 0, %s72
      %s87 = sphi 0, %s73
      %s91 = sphi 0, %s91
      %s93 = sphi 0, %s91
      %s94 = sphi 0, %s93
      %s108 = sphi 0, %s94
      %s112 = sphi 0, %s112
      %s114 = sphi 0, %s112
      %s115 = sphi 0, %s114
      %s129 = sphi 0, %s115
      %s133 = sphi 0, %s133
      %s135 = sphi 0, %s133
      %s136 = sphi 0, %s135
      %s150 = sphi 0, %s136
      %s154 = sphi 0, %s154
      %s156 = sphi 0, %s154
      %s157 = sphi 0, %s156
      %s171 = sphi 0, %s157
      %s177 = sphi 0, %s179
      %s180 = sphi 0, %s177
      %s181 = sphi 0, %s180
      %s197 = sphi 0, %s181
    $region4: #{upsample_blk_forward.1} parent=1 // loop_header_branch
      %18 = sbr.rel (%p16) target = $region8
    $region5: #{upsample_blk_forward.1} parent=1 // loop_body
      %s20 = ssub.s32 %s15, 1
      %s21 = ssub.s32 %s15, 2
      %s22 = sadd.s32 %s15, 1
      %s23 = ssub.s32 %s15, %s22
      %p24 = scmp.eq.s32.totalorder %s23, 0
      %s26 = sadd.s32 %s25, 1
      %s27 = scalar_select %p24, %s25, %s26
      %p30 = pneg %p24
      %p31 = scmp.eq.s32.totalorder %s15, 1
      %p32 = por %p30, %p31
      %p33 = scmp.ne.s32.totalorder %s25, %s28
      %p34 = scmp.eq.s32.totalorder %s15, 0
      %p35 = por %p33, %p34
      %p36 = scmp.ne.s32.totalorder %s25, %s28
      %p37 = scmp.eq.s32.totalorder %s20, 1
      %p38 = por %p36, %p37
      %p39 = scmp.ne.s32.totalorder %s28, %s29
      %p40 = scmp.eq.s32.totalorder %s20, 0
      %p41 = por %p39, %p40
      %p42 = scmp.ne.s32.totalorder %s28, %s29
      %p43 = scmp.eq.s32.totalorder %s21, 1
      %p44 = por %p42, %p43
      %p46 = scmp.ne.s32.totalorder %s29, %s45
      %p47 = scmp.eq.s32.totalorder %s21, 0
      %p48 = por %p46, %p47
      %s50 = sadd.s32 %s49, 1
      %p53 = scmp.eq.s32.totalorder %s15, 1
      %p54 = scmp.ne.s32.totalorder %s49, %s51
      %p55 = scmp.eq.s32.totalorder %s15, 0
      %p56 = por %p54, %p55
      %p57 = scmp.ne.s32.totalorder %s49, %s51
      %p58 = scmp.eq.s32.totalorder %s20, 1
      %p59 = por %p57, %p58
      %p60 = scmp.ne.s32.totalorder %s51, %s52
      %p61 = scmp.eq.s32.totalorder %s20, 0
      %p62 = por %p60, %p61
      %p63 = scmp.ne.s32.totalorder %s51, %s52
      %p64 = scmp.eq.s32.totalorder %s21, 1
      %p65 = por %p63, %p64
      %p67 = scmp.ne.s32.totalorder %s52, %s66
      %p68 = scmp.eq.s32.totalorder %s21, 0
      %p69 = por %p67, %p68
      %s71 = sadd.s32 %s70, 1
      %p74 = scmp.eq.s32.totalorder %s15, 1
      %p75 = scmp.ne.s32.totalorder %s70, %s72
      %p76 = scmp.eq.s32.totalorder %s15, 0
      %p77 = por %p75, %p76
      %p78 = scmp.ne.s32.totalorder %s70, %s72
      %p79 = scmp.eq.s32.totalorder %s20, 1
      %p80 = por %p78, %p79
      %p81 = scmp.ne.s32.totalorder %s72, %s73
      %p82 = scmp.eq.s32.totalorder %s20, 0
      %p83 = por %p81, %p82
      %p84 = scmp.ne.s32.totalorder %s72, %s73
      %p85 = scmp.eq.s32.totalorder %s21, 1
      %p86 = por %p84, %p85
      %p88 = scmp.ne.s32.totalorder %s73, %s87
      %p89 = scmp.eq.s32.totalorder %s21, 0
      %p90 = por %p88, %p89
      %s92 = sadd.s32 %s91, 1
      %p95 = scmp.eq.s32.totalorder %s15, 1
      %p96 = scmp.ne.s32.totalorder %s91, %s93
      %p97 = scmp.eq.s32.totalorder %s15, 0
      %p98 = por %p96, %p97
      %p99 = scmp.ne.s32.totalorder %s91, %s93
      %p100 = scmp.eq.s32.totalorder %s20, 1
      %p101 = por %p99, %p100
      %p102 = scmp.ne.s32.totalorder %s93, %s94
      %p103 = scmp.eq.s32.totalorder %s20, 0
      %p104 = por %p102, %p103
      %p105 = scmp.ne.s32.totalorder %s93, %s94
      %p106 = scmp.eq.s32.totalorder %s21, 1
      %p107 = por %p105, %p106
      %p109 = scmp.ne.s32.totalorder %s94, %s108
      %p110 = scmp.eq.s32.totalorder %s21, 0
      %p111 = por %p109, %p110
      %s113 = sadd.s32 %s112, 1
      %p116 = scmp.eq.s32.totalorder %s15, 1
      %p117 = scmp.ne.s32.totalorder %s112, %s114
      %p118 = scmp.eq.s32.totalorder %s15, 0
      %p119 = por %p117, %p118
      %p120 = scmp.ne.s32.totalorder %s112, %s114
      %p121 = scmp.eq.s32.totalorder %s20, 1
      %p122 = por %p120, %p121
      %p123 = scmp.ne.s32.totalorder %s114, %s115
      %p124 = scmp.eq.s32.totalorder %s20, 0
      %p125 = por %p123, %p124
      %p126 = scmp.ne.s32.totalorder %s114, %s115
      %p127 = scmp.eq.s32.totalorder %s21, 1
      %p128 = por %p126, %p127
      %p130 = scmp.ne.s32.totalorder %s115, %s129
      %p131 = scmp.eq.s32.totalorder %s21, 0
      %p132 = por %p130, %p131
      %s134 = sadd.s32 %s133, 1
      %p137 = scmp.eq.s32.totalorder %s15, 1
      %p138 = scmp.ne.s32.totalorder %s133, %s135
      %p139 = scmp.eq.s32.totalorder %s15, 0
      %p140 = por %p138, %p139
      %p141 = scmp.ne.s32.totalorder %s133, %s135
      %p142 = scmp.eq.s32.totalorder %s20, 1
      %p143 = por %p141, %p142
      %p144 = scmp.ne.s32.totalorder %s135, %s136
      %p145 = scmp.eq.s32.totalorder %s20, 0
      %p146 = por %p144, %p145
      %p147 = scmp.ne.s32.totalorder %s135, %s136
      %p148 = scmp.eq.s32.totalorder %s21, 1
      %p149 = por %p147, %p148
      %p151 = scmp.ne.s32.totalorder %s136, %s150
      %p152 = scmp.eq.s32.totalorder %s21, 0
      %p153 = por %p151, %p152
      %s155 = sadd.s32 %s154, 1
      %p158 = scmp.eq.s32.totalorder %s15, 1
      %p159 = scmp.ne.s32.totalorder %s154, %s156
      %p160 = scmp.eq.s32.totalorder %s15, 0
      %p161 = por %p159, %p160
      %p162 = scmp.ne.s32.totalorder %s154, %s156
      %p163 = scmp.eq.s32.totalorder %s20, 1
      %p164 = por %p162, %p163
      %p165 = scmp.ne.s32.totalorder %s156, %s157
      %p166 = scmp.eq.s32.totalorder %s20, 0
      %p167 = por %p165, %p166
      %p168 = scmp.ne.s32.totalorder %s156, %s157
      %p169 = scmp.eq.s32.totalorder %s21, 1
      %p170 = por %p168, %p169
      %p172 = scmp.ne.s32.totalorder %s157, %s171
      %p173 = scmp.eq.s32.totalorder %s21, 0
      %p174 = por %p172, %p173
      %s175 = ssub.s32 %s15, %s22
      %p176 = scmp.eq.s32.totalorder %s175, 0
      %s178 = sadd.s32 %s177, 1
      %s179 = scalar_select %p176, %s177, %s178
      %p182 = pneg %p176
      %p183 = scmp.eq.s32.totalorder %s15, 1
      %p184 = por %p182, %p183
      %p185 = scmp.ne.s32.totalorder %s177, %s180
      %p186 = scmp.eq.s32.totalorder %s15, 0
      %p187 = por %p185, %p186
      %p188 = scmp.ne.s32.totalorder %s177, %s180
      %p189 = scmp.eq.s32.totalorder %s20, 1
      %p190 = por %p188, %p189
      %p191 = scmp.ne.s32.totalorder %s180, %s181
      %p192 = scmp.eq.s32.totalorder %s20, 0
      %p193 = por %p191, %p192
      %p194 = scmp.ne.s32.totalorder %s180, %s181
      %p195 = scmp.eq.s32.totalorder %s21, 1
      %p196 = por %p194, %p195
      %p198 = scmp.ne.s32.totalorder %s181, %s197
      %p199 = scmp.eq.s32.totalorder %s21, 0
      %p200 = por %p198, %p199
      %p201 = scmp.le.s32.totalorder 1, %s15
      %p202 = scmp.lt.s32.totalorder %s15, 3
      %p203 = pnand %p201, %p202
      %p204 = pneg %p203
      // Predicated region
      $region9: #{upsample_blk_forward.1} parent=5 // pred_check
        _
      $region10: #{upsample_blk_forward.1} parent=5 // pred_check_branch
        %206 = sbr.rel (%p203) target = $region12
      $region11: #{upsample_blk_forward.1} parent=5 // pred_region
        %s207 = ssub.s32 %s15, 1
        // Predicated region
        $region13: #{upsample_blk_forward.1} parent=11 // pred_check
          %p208 = pneg %p62
        $region14: #{upsample_blk_forward.1} parent=11 // pred_check_branch
          %210 = sbr.rel (%p208) target = $region16
        $region15: #{upsample_blk_forward.1} parent=11 // pred_region
          %s212 = ssub.s32 40960, 40960
          %213 = vsyncadd [#allocation5], %s212
          %s214 = sshll.u32 [#allocation4], 4
          %s215 = int_to_ptr.vmem [resolvable:$true] %s214
          %220 = dma.hbm_to_vmem [thread:$0]  %s1, 40960, %s215, [#allocation5], 1280, 1280, 80
        $region16: #{upsample_blk_forward.1} parent=11 // pred_fallthru
          _
        // Predicated region
        $region17: #{upsample_blk_forward.1} parent=11 // pred_check
          %p221 = pneg %p83
        $region18: #{upsample_blk_forward.1} parent=11 // pred_check_branch
          %223 = sbr.rel (%p221) target = $region20
        $region19: #{upsample_blk_forward.1} parent=11 // pred_region
          _
        $region20: #{upsample_blk_forward.1} parent=11 // pred_fallthru
          _
        // Predicated region
        $region21: #{upsample_blk_forward.1} parent=11 // pred_check
          %p224 = pneg %p104
        $region22: #{upsample_blk_forward.1} parent=11 // pred_check_branch
          %226 = sbr.rel (%p224) target = $region24
        $region23: #{upsample_blk_forward.1} parent=11 // pred_region
          _
        $region24: #{upsample_blk_forward.1} parent=11 // pred_fallthru
          _
        // Predicated region
        $region25: #{upsample_blk_forward.1} parent=11 // pred_check
          %p227 = pneg %p125
        $region26: #{upsample_blk_forward.1} parent=11 // pred_check_branch
          %229 = sbr.rel (%p227) target = $region28
        $region27: #{upsample_blk_forward.1} parent=11 // pred_region
          %s231 = ssub.s32 1152, 1152
          %232 = vsyncadd [#allocation7], %s231
          %s233 = sshll.u32 [#allocation6], 4
          %s234 = int_to_ptr.vmem [resolvable:$true] %s233
          %239 = dma.hbm_to_vmem [thread:$0]  %s4, 1152, %s234, [#allocation7], 128, 128, 8
        $region28: #{upsample_blk_forward.1} parent=11 // pred_fallthru
          _
        // Predicated region
        $region29: #{upsample_blk_forward.1} parent=11 // pred_check
          %p240 = pneg %p146
        $region30: #{upsample_blk_forward.1} parent=11 // pred_check_branch
          %242 = sbr.rel (%p240) target = $region32
        $region31: #{upsample_blk_forward.1} parent=11 // pred_region
          _
        $region32: #{upsample_blk_forward.1} parent=11 // pred_fallthru
          _
        // Predicated region
        $region33: #{upsample_blk_forward.1} parent=11 // pred_check
          %p243 = pneg %p167
        $region34: #{upsample_blk_forward.1} parent=11 // pred_check_branch
          %245 = sbr.rel (%p243) target = $region36
        $region35: #{upsample_blk_forward.1} parent=11 // pred_region
          %s247 = ssub.s32 144, 144
          %248 = vsyncadd [#allocation7], %s247
          %s250 = sshll.u32 [#allocation8], 4
          %s251 = int_to_ptr.vmem [resolvable:$true] %s250
          %253 = dma.hbm_to_vmem [thread:$0]  %s6, 144, %s251, [#allocation7]
        $region36: #{upsample_blk_forward.1} parent=11 // pred_fallthru
          _
      $region12: #{upsample_blk_forward.1} parent=5 // pred_fallthru
        _
      %p254 = scmp.lt.s32.totalorder %s15, 2
      // Predicated region
      $region37: #{upsample_blk_forward.1} parent=5 // pred_check
        %p255 = pneg %p254
      $region38: #{upsample_blk_forward.1} parent=5 // pred_check_branch
        %257 = sbr.rel (%p255) target = $region40
      $region39: #{upsample_blk_forward.1} parent=5 // pred_region
        // Predicated region
        $region41: #{upsample_blk_forward.1} parent=39 // pred_check
          %p258 = pneg %p35
        $region42: #{upsample_blk_forward.1} parent=39 // pred_check_branch
          %260 = sbr.rel (%p258) target = $region44
        $region43: #{upsample_blk_forward.1} parent=39 // pred_region
          %p261 = scmp.lt.s32.totalorder %s15, 1
          %s262 = scalar_select %p261, %s15, 1
          %s263 = smul.addr %s262, 2
          %s264 = smul.addr %s263, 8
          %s265 = scalar_lea.vmem %s0, %s264
        $region44: #{upsample_blk_forward.1} parent=39 // pred_fallthru
          _
      $region40: #{upsample_blk_forward.1} parent=5 // pred_fallthru
        _
      %p266 = scmp.le.s32.totalorder 1, %s15
      %p267 = scmp.lt.s32.totalorder %s15, 3
      %p268 = pnand %p266, %p267
      %p269 = pneg %p268
      // Predicated region
      $region45: #{upsample_blk_forward.1} parent=5 // pred_check
        _
      $region46: #{upsample_blk_forward.1} parent=5 // pred_check_branch
        %271 = sbr.rel (%p268) target = $region48
      $region47: #{upsample_blk_forward.1} parent=5 // pred_region
        %s272 = ssub.s32 %s15, 1
        // Predicated region
        $region49: #{upsample_blk_forward.1} parent=47 // pred_check
          %p273 = pneg %p62
        $region50: #{upsample_blk_forward.1} parent=47 // pred_check_branch
          %275 = sbr.rel (%p273) target = $region52
        $region51: #{upsample_blk_forward.1} parent=47 // pred_region
          %276 = dma.done [#allocation5], 40960
        $region52: #{upsample_blk_forward.1} parent=47 // pred_fallthru
          _
        // Predicated region
        $region53: #{upsample_blk_forward.1} parent=47 // pred_check
          %p277 = pneg %p125
        $region54: #{upsample_blk_forward.1} parent=47 // pred_check_branch
          %279 = sbr.rel (%p277) target = $region56
        $region55: #{upsample_blk_forward.1} parent=47 // pred_region
          %280 = dma.done [#allocation7], 1152
        $region56: #{upsample_blk_forward.1} parent=47 // pred_fallthru
          _
        // Predicated region
        $region57: #{upsample_blk_forward.1} parent=47 // pred_check
          %p281 = pneg %p167
        $region58: #{upsample_blk_forward.1} parent=47 // pred_check_branch
          %283 = sbr.rel (%p281) target = $region60
        $region59: #{upsample_blk_forward.1} parent=47 // pred_region
          %284 = dma.done [#allocation7], 144
        $region60: #{upsample_blk_forward.1} parent=47 // pred_fallthru
          _
        %p285 = scmp.lt.s32.totalorder %s20, 1
        %s286 = scalar_select %p285, %s20, 1
        %s287 = smul.addr %s286, 2
        %s288 = smul.addr %s287, 8
        %s289 = scalar_lea.vmem %s0, %s288
        %p290 = pneg %p41
        %p291 = pneg %p38
        %p292 = pneg %p62
        %p293 = pneg %p59
        %p294 = pneg %p83
        %p295 = pneg %p80
        %p296 = pneg %p104
        %p297 = pneg %p101
        %p298 = pneg %p125
        %p299 = pneg %p122
        %p300 = pneg %p146
        %p301 = pneg %p143
        %p302 = pneg %p167
        %p303 = pneg %p164
        %p304 = pneg %p193
        %p305 = pneg %p190
        %p306 = scmp.lt.s32.totalorder %s20, 1
        %s307 = scalar_select %p306, %s20, 1
        %s308 = smul.addr %s307, 9
        %s309 = smul.addr %s308, 8
        %s310 = scalar_lea.vmem %s7, %s309
        %p311 = scmp.lt.s32.totalorder %s20, 1
        %s312 = scalar_select %p311, %s20, 1
        %s313 = smul.addr %s312, 2
        %s314 = smul.addr %s313, 8
        %s315 = scalar_lea.vmem %s0, %s314
        %p316 = scmp.lt.s32.totalorder %s20, 1
        %s317 = scalar_select %p316, %s20, 1
        %s318 = smul.addr %s317, 9
        %s319 = smul.addr %s318, 8
        %s320 = scalar_lea.vmem %s7, %s319
        %v321 = vld [vmem:[%s315] sm:$0xff]
        %v322 = vld [vmem:[%s315 + $0x8] sm:$0xff]
        %v323 = vld [vmem:[#allocation4] sm:$0xff]
        %v324 = vld [vmem:[#allocation4 + $0x8] sm:$0xff]
        %v325 = vld [vmem:[#allocation4 + $0x10] sm:$0xff]
        %v326 = vld [vmem:[#allocation4 + $0x18] sm:$0xff]
        %v327 = vld [vmem:[#allocation4 + $0x20] sm:$0xff]
        %v328 = vld [vmem:[#allocation4 + $0x28] sm:$0xff]
        %v329 = vld [vmem:[#allocation4 + $0x30] sm:$0xff]
        %v330 = vld [vmem:[#allocation4 + $0x38] sm:$0xff]
        %v331 = vld [vmem:[#allocation4 + $0x40] sm:$0xff]
        %v332 = vld [vmem:[#allocation4 + $0x48] sm:$0xff]
        %v333 = vld [vmem:[#allocation4 + $0x50] sm:$0xff]
        %v334 = vld [vmem:[#allocation4 + $0x58] sm:$0xff]
        %v335 = vld [vmem:[#allocation4 + $0x60] sm:$0xff]
        %v336 = vld [vmem:[#allocation4 + $0x68] sm:$0xff]
        %v337 = vld [vmem:[#allocation4 + $0x70] sm:$0xff]
        %v338 = vld [vmem:[#allocation4 + $0x78] sm:$0xff]
        %v339 = vld [vmem:[#allocation4 + $0x80] sm:$0xff]
        %v340 = vld [vmem:[#allocation4 + $0x88] sm:$0xff]
        %v341 = vld [vmem:[#allocation4 + $0x90] sm:$0xff]
        %v342 = vld [vmem:[#allocation4 + $0x98] sm:$0xff]
        %v343 = vld [vmem:[#allocation4 + $0xa0] sm:$0xff]
        %v344 = vld [vmem:[#allocation4 + $0xa8] sm:$0xff]
        %v345 = vld [vmem:[#allocation4 + $0xb0] sm:$0xff]
        %v346 = vld [vmem:[#allocation4 + $0xb8] sm:$0xff]
        %v347 = vld [vmem:[#allocation4 + $0xc0] sm:$0xff]
        %v348 = vld [vmem:[#allocation4 + $0xc8] sm:$0xff]
        %v349 = vld [vmem:[#allocation4 + $0xd0] sm:$0xff]
        %v350 = vld [vmem:[#allocation4 + $0xd8] sm:$0xff]
        %v351 = vld [vmem:[#allocation4 + $0xe0] sm:$0xff]
        %v352 = vld [vmem:[#allocation4 + $0xe8] sm:$0xff]
        %v353 = vld [vmem:[#allocation4 + $0xf0] sm:$0xff]
        %v354 = vld [vmem:[#allocation4 + $0xf8] sm:$0xff]
        %v355 = vld [vmem:[#allocation4 + $0x100] sm:$0xff]
        %v356 = vld [vmem:[#allocation4 + $0x108] sm:$0xff]
        %v357 = vld [vmem:[#allocation4 + $0x110] sm:$0xff]
        %v358 = vld [vmem:[#allocation4 + $0x118] sm:$0xff]
        %v359 = vld [vmem:[#allocation4 + $0x120] sm:$0xff]
        %v360 = vld [vmem:[#allocation4 + $0x128] sm:$0xff]
        %v361 = vld [vmem:[#allocation4 + $0x130] sm:$0xff]
        %v362 = vld [vmem:[#allocation4 + $0x138] sm:$0xff]
        %v363 = vld [vmem:[#allocation4 + $0x140] sm:$0xff]
        %v364 = vld [vmem:[#allocation4 + $0x148] sm:$0xff]
        %v365 = vld [vmem:[#allocation4 + $0x150] sm:$0xff]
        %v366 = vld [vmem:[#allocation4 + $0x158] sm:$0xff]
        %v367 = vld [vmem:[#allocation4 + $0x160] sm:$0xff]
        %v368 = vld [vmem:[#allocation4 + $0x168] sm:$0xff]
        %v369 = vld [vmem:[#allocation4 + $0x170] sm:$0xff]
        %v370 = vld [vmem:[#allocation4 + $0x178] sm:$0xff]
        %v371 = vld [vmem:[#allocation4 + $0x180] sm:$0xff]
        %v372 = vld [vmem:[#allocation4 + $0x188] sm:$0xff]
        %v373 = vld [vmem:[#allocation4 + $0x190] sm:$0xff]
        %v374 = vld [vmem:[#allocation4 + $0x198] sm:$0xff]
        %v375 = vld [vmem:[#allocation4 + $0x1a0] sm:$0xff]
        %v376 = vld [vmem:[#allocation4 + $0x1a8] sm:$0xff]
        %v377 = vld [vmem:[#allocation4 + $0x1b0] sm:$0xff]
        %v378 = vld [vmem:[#allocation4 + $0x1b8] sm:$0xff]
        %v379 = vld [vmem:[#allocation4 + $0x1c0] sm:$0xff]
        %v380 = vld [vmem:[#allocation4 + $0x1c8] sm:$0xff]
        %v381 = vld [vmem:[#allocation4 + $0x1d0] sm:$0xff]
        %v382 = vld [vmem:[#allocation4 + $0x1d8] sm:$0xff]
        %v383 = vld [vmem:[#allocation4 + $0x1e0] sm:$0xff]
        %v384 = vld [vmem:[#allocation4 + $0x1e8] sm:$0xff]
        %v385 = vld [vmem:[#allocation4 + $0x1f0] sm:$0xff]
        %v386 = vld [vmem:[#allocation4 + $0x1f8] sm:$0xff]
        %v387 = vld [vmem:[#allocation4 + $0x200] sm:$0xff]
        %v388 = vld [vmem:[#allocation4 + $0x208] sm:$0xff]
        %v389 = vld [vmem:[#allocation4 + $0x210] sm:$0xff]
        %v390 = vld [vmem:[#allocation4 + $0x218] sm:$0xff]
        %v391 = vld [vmem:[#allocation4 + $0x220] sm:$0xff]
        %v392 = vld [vmem:[#allocation4 + $0x228] sm:$0xff]
        %v393 = vld [vmem:[#allocation4 + $0x230] sm:$0xff]
        %v394 = vld [vmem:[#allocation4 + $0x238] sm:$0xff]
        %v395 = vld [vmem:[#allocation4 + $0x240] sm:$0xff]
        %v396 = vld [vmem:[#allocation4 + $0x248] sm:$0xff]
        %v397 = vld [vmem:[#allocation4 + $0x250] sm:$0xff]
        %v398 = vld [vmem:[#allocation4 + $0x258] sm:$0xff]
        %v399 = vld [vmem:[#allocation4 + $0x260] sm:$0xff]
        %v400 = vld [vmem:[#allocation4 + $0x268] sm:$0xff]
        %v401 = vld [vmem:[#allocation4 + $0x270] sm:$0xff]
        %v402 = vld [vmem:[#allocation4 + $0x278] sm:$0xff]
        %v403 = vld [vmem:[#allocation4 + $0x280] sm:$0xff]
        %v404 = vld [vmem:[#allocation4 + $0x288] sm:$0xff]
        %v405 = vld [vmem:[#allocation4 + $0x290] sm:$0xff]
        %v406 = vld [vmem:[#allocation4 + $0x298] sm:$0xff]
        %v407 = vld [vmem:[#allocation4 + $0x2a0] sm:$0xff]
        %v408 = vld [vmem:[#allocation4 + $0x2a8] sm:$0xff]
        %v409 = vld [vmem:[#allocation4 + $0x2b0] sm:$0xff]
        %v410 = vld [vmem:[#allocation4 + $0x2b8] sm:$0xff]
        %v411 = vld [vmem:[#allocation4 + $0x2c0] sm:$0xff]
        %v412 = vld [vmem:[#allocation4 + $0x2c8] sm:$0xff]
        %v413 = vld [vmem:[#allocation4 + $0x2d0] sm:$0xff]
        %v414 = vld [vmem:[#allocation4 + $0x2d8] sm:$0xff]
        %v415 = vld [vmem:[#allocation4 + $0x2e0] sm:$0xff]
        %v416 = vld [vmem:[#allocation4 + $0x2e8] sm:$0xff]
        %v417 = vld [vmem:[#allocation4 + $0x2f0] sm:$0xff]
        %v418 = vld [vmem:[#allocation4 + $0x2f8] sm:$0xff]
        %v419 = vld [vmem:[#allocation4 + $0x300] sm:$0xff]
        %v420 = vld [vmem:[#allocation4 + $0x308] sm:$0xff]
        %v421 = vld [vmem:[#allocation4 + $0x310] sm:$0xff]
        %v422 = vld [vmem:[#allocation4 + $0x318] sm:$0xff]
        %v423 = vld [vmem:[#allocation4 + $0x320] sm:$0xff]
        %v424 = vld [vmem:[#allocation4 + $0x328] sm:$0xff]
        %v425 = vld [vmem:[#allocation4 + $0x330] sm:$0xff]
        %v426 = vld [vmem:[#allocation4 + $0x338] sm:$0xff]
        %v427 = vld [vmem:[#allocation4 + $0x340] sm:$0xff]
        %v428 = vld [vmem:[#allocation4 + $0x348] sm:$0xff]
        %v429 = vld [vmem:[#allocation4 + $0x350] sm:$0xff]
        %v430 = vld [vmem:[#allocation4 + $0x358] sm:$0xff]
        %v431 = vld [vmem:[#allocation4 + $0x360] sm:$0xff]
        %v432 = vld [vmem:[#allocation4 + $0x368] sm:$0xff]
        %v433 = vld [vmem:[#allocation4 + $0x370] sm:$0xff]
        %v434 = vld [vmem:[#allocation4 + $0x378] sm:$0xff]
        %v435 = vld [vmem:[#allocation4 + $0x380] sm:$0xff]
        %v436 = vld [vmem:[#allocation4 + $0x388] sm:$0xff]
        %v437 = vld [vmem:[#allocation4 + $0x390] sm:$0xff]
        %v438 = vld [vmem:[#allocation4 + $0x398] sm:$0xff]
        %v439 = vld [vmem:[#allocation4 + $0x3a0] sm:$0xff]
        %v440 = vld [vmem:[#allocation4 + $0x3a8] sm:$0xff]
        %v441 = vld [vmem:[#allocation4 + $0x3b0] sm:$0xff]
        %v442 = vld [vmem:[#allocation4 + $0x3b8] sm:$0xff]
        %v443 = vld [vmem:[#allocation4 + $0x3c0] sm:$0xff]
        %v444 = vld [vmem:[#allocation4 + $0x3c8] sm:$0xff]
        %v445 = vld [vmem:[#allocation4 + $0x3d0] sm:$0xff]
        %v446 = vld [vmem:[#allocation4 + $0x3d8] sm:$0xff]
        %v447 = vld [vmem:[#allocation4 + $0x3e0] sm:$0xff]
        %v448 = vld [vmem:[#allocation4 + $0x3e8] sm:$0xff]
        %v449 = vld [vmem:[#allocation4 + $0x3f0] sm:$0xff]
        %v450 = vld [vmem:[#allocation4 + $0x3f8] sm:$0xff]
        %v451 = vld [vmem:[#allocation4 + $0x400] sm:$0xff]
        %v452 = vld [vmem:[#allocation4 + $0x408] sm:$0xff]
        %v453 = vld [vmem:[#allocation4 + $0x410] sm:$0xff]
        %v454 = vld [vmem:[#allocation4 + $0x418] sm:$0xff]
        %v455 = vld [vmem:[#allocation4 + $0x420] sm:$0xff]
        %v456 = vld [vmem:[#allocation4 + $0x428] sm:$0xff]
        %v457 = vld [vmem:[#allocation4 + $0x430] sm:$0xff]
        %v458 = vld [vmem:[#allocation4 + $0x438] sm:$0xff]
        %v459 = vld [vmem:[#allocation4 + $0x440] sm:$0xff]
        %v460 = vld [vmem:[#allocation4 + $0x448] sm:$0xff]
        %v461 = vld [vmem:[#allocation4 + $0x450] sm:$0xff]
        %v462 = vld [vmem:[#allocation4 + $0x458] sm:$0xff]
        %v463 = vld [vmem:[#allocation4 + $0x460] sm:$0xff]
        %v464 = vld [vmem:[#allocation4 + $0x468] sm:$0xff]
        %v465 = vld [vmem:[#allocation4 + $0x470] sm:$0xff]
        %v466 = vld [vmem:[#allocation4 + $0x478] sm:$0xff]
        %v467 = vld [vmem:[#allocation4 + $0x480] sm:$0xff]
        %v468 = vld [vmem:[#allocation4 + $0x488] sm:$0xff]
        %v469 = vld [vmem:[#allocation4 + $0x490] sm:$0xff]
        %v470 = vld [vmem:[#allocation4 + $0x498] sm:$0xff]
        %v471 = vld [vmem:[#allocation4 + $0x4a0] sm:$0xff]
        %v472 = vld [vmem:[#allocation4 + $0x4a8] sm:$0xff]
        %v473 = vld [vmem:[#allocation4 + $0x4b0] sm:$0xff]
        %v474 = vld [vmem:[#allocation4 + $0x4b8] sm:$0xff]
        %v475 = vld [vmem:[#allocation4 + $0x4c0] sm:$0xff]
        %v476 = vld [vmem:[#allocation4 + $0x4c8] sm:$0xff]
        %v477 = vld [vmem:[#allocation4 + $0x4d0] sm:$0xff]
        %v478 = vld [vmem:[#allocation4 + $0x4d8] sm:$0xff]
        %v479 = vld [vmem:[#allocation4 + $0x4e0] sm:$0xff]
        %v480 = vld [vmem:[#allocation4 + $0x4e8] sm:$0xff]
        %v481 = vld [vmem:[#allocation4 + $0x4f0] sm:$0xff]
        %v482 = vld [vmem:[#allocation4 + $0x4f8] sm:$0xff]
        %v483 = vld [vmem:[#allocation4 + $0x500] sm:$0xff]
        %v484 = vld [vmem:[#allocation4 + $0x508] sm:$0xff]
        %v485 = vld [vmem:[#allocation4 + $0x510] sm:$0xff]
        %v486 = vld [vmem:[#allocation4 + $0x518] sm:$0xff]
        %v487 = vld [vmem:[#allocation4 + $0x520] sm:$0xff]
        %v488 = vld [vmem:[#allocation4 + $0x528] sm:$0xff]
        %v489 = vld [vmem:[#allocation4 + $0x530] sm:$0xff]
        %v490 = vld [vmem:[#allocation4 + $0x538] sm:$0xff]
        %v491 = vld [vmem:[#allocation4 + $0x540] sm:$0xff]
        %v492 = vld [vmem:[#allocation4 + $0x548] sm:$0xff]
        %v493 = vld [vmem:[#allocation4 + $0x550] sm:$0xff]
        %v494 = vld [vmem:[#allocation4 + $0x558] sm:$0xff]
        %v495 = vld [vmem:[#allocation4 + $0x560] sm:$0xff]
        %v496 = vld [vmem:[#allocation4 + $0x568] sm:$0xff]
        %v497 = vld [vmem:[#allocation4 + $0x570] sm:$0xff]
        %v498 = vld [vmem:[#allocation4 + $0x578] sm:$0xff]
        %v499 = vld [vmem:[#allocation4 + $0x580] sm:$0xff]
        %v500 = vld [vmem:[#allocation4 + $0x588] sm:$0xff]
        %v501 = vld [vmem:[#allocation4 + $0x590] sm:$0xff]
        %v502 = vld [vmem:[#allocation4 + $0x598] sm:$0xff]
        %v503 = vld [vmem:[#allocation4 + $0x5a0] sm:$0xff]
        %v504 = vld [vmem:[#allocation4 + $0x5a8] sm:$0xff]
        %v505 = vld [vmem:[#allocation4 + $0x5b0] sm:$0xff]
        %v506 = vld [vmem:[#allocation4 + $0x5b8] sm:$0xff]
        %v507 = vld [vmem:[#allocation4 + $0x5c0] sm:$0xff]
        %v508 = vld [vmem:[#allocation4 + $0x5c8] sm:$0xff]
        %v509 = vld [vmem:[#allocation4 + $0x5d0] sm:$0xff]
        %v510 = vld [vmem:[#allocation4 + $0x5d8] sm:$0xff]
        %v511 = vld [vmem:[#allocation4 + $0x5e0] sm:$0xff]
        %v512 = vld [vmem:[#allocation4 + $0x5e8] sm:$0xff]
        %v513 = vld [vmem:[#allocation4 + $0x5f0] sm:$0xff]
        %v514 = vld [vmem:[#allocation4 + $0x5f8] sm:$0xff]
        %v515 = vld [vmem:[#allocation4 + $0x600] sm:$0xff]
        %v516 = vld [vmem:[#allocation4 + $0x608] sm:$0xff]
        %v517 = vld [vmem:[#allocation4 + $0x610] sm:$0xff]
        %v518 = vld [vmem:[#allocation4 + $0x618] sm:$0xff]
        %v519 = vld [vmem:[#allocation4 + $0x620] sm:$0xff]
        %v520 = vld [vmem:[#allocation4 + $0x628] sm:$0xff]
        %v521 = vld [vmem:[#allocation4 + $0x630] sm:$0xff]
        %v522 = vld [vmem:[#allocation4 + $0x638] sm:$0xff]
        %v523 = vld [vmem:[#allocation4 + $0x640] sm:$0xff]
        %v524 = vld [vmem:[#allocation4 + $0x648] sm:$0xff]
        %v525 = vld [vmem:[#allocation4 + $0x650] sm:$0xff]
        %v526 = vld [vmem:[#allocation4 + $0x658] sm:$0xff]
        %v527 = vld [vmem:[#allocation4 + $0x660] sm:$0xff]
        %v528 = vld [vmem:[#allocation4 + $0x668] sm:$0xff]
        %v529 = vld [vmem:[#allocation4 + $0x670] sm:$0xff]
        %v530 = vld [vmem:[#allocation4 + $0x678] sm:$0xff]
        %v531 = vld [vmem:[#allocation4 + $0x680] sm:$0xff]
        %v532 = vld [vmem:[#allocation4 + $0x688] sm:$0xff]
        %v533 = vld [vmem:[#allocation4 + $0x690] sm:$0xff]
        %v534 = vld [vmem:[#allocation4 + $0x698] sm:$0xff]
        %v535 = vld [vmem:[#allocation4 + $0x6a0] sm:$0xff]
        %v536 = vld [vmem:[#allocation4 + $0x6a8] sm:$0xff]
        %v537 = vld [vmem:[#allocation4 + $0x6b0] sm:$0xff]
        %v538 = vld [vmem:[#allocation4 + $0x6b8] sm:$0xff]
        %v539 = vld [vmem:[#allocation4 + $0x6c0] sm:$0xff]
        %v540 = vld [vmem:[#allocation4 + $0x6c8] sm:$0xff]
        %v541 = vld [vmem:[#allocation4 + $0x6d0] sm:$0xff]
        %v542 = vld [vmem:[#allocation4 + $0x6d8] sm:$0xff]
        %v543 = vld [vmem:[#allocation4 + $0x6e0] sm:$0xff]
        %v544 = vld [vmem:[#allocation4 + $0x6e8] sm:$0xff]
        %v545 = vld [vmem:[#allocation4 + $0x6f0] sm:$0xff]
        %v546 = vld [vmem:[#allocation4 + $0x6f8] sm:$0xff]
        %v547 = vld [vmem:[#allocation4 + $0x700] sm:$0xff]
        %v548 = vld [vmem:[#allocation4 + $0x708] sm:$0xff]
        %v549 = vld [vmem:[#allocation4 + $0x710] sm:$0xff]
        %v550 = vld [vmem:[#allocation4 + $0x718] sm:$0xff]
        %v551 = vld [vmem:[#allocation4 + $0x720] sm:$0xff]
        %v552 = vld [vmem:[#allocation4 + $0x728] sm:$0xff]
        %v553 = vld [vmem:[#allocation4 + $0x730] sm:$0xff]
        %v554 = vld [vmem:[#allocation4 + $0x738] sm:$0xff]
        %v555 = vld [vmem:[#allocation4 + $0x740] sm:$0xff]
        %v556 = vld [vmem:[#allocation4 + $0x748] sm:$0xff]
        %v557 = vld [vmem:[#allocation4 + $0x750] sm:$0xff]
        %v558 = vld [vmem:[#allocation4 + $0x758] sm:$0xff]
        %v559 = vld [vmem:[#allocation4 + $0x760] sm:$0xff]
        %v560 = vld [vmem:[#allocation4 + $0x768] sm:$0xff]
        %v561 = vld [vmem:[#allocation4 + $0x770] sm:$0xff]
        %v562 = vld [vmem:[#allocation4 + $0x778] sm:$0xff]
        %v563 = vld [vmem:[#allocation4 + $0x780] sm:$0xff]
        %v564 = vld [vmem:[#allocation4 + $0x788] sm:$0xff]
        %v565 = vld [vmem:[#allocation4 + $0x790] sm:$0xff]
        %v566 = vld [vmem:[#allocation4 + $0x798] sm:$0xff]
        %v567 = vld [vmem:[#allocation4 + $0x7a0] sm:$0xff]
        %v568 = vld [vmem:[#allocation4 + $0x7a8] sm:$0xff]
        %v569 = vld [vmem:[#allocation4 + $0x7b0] sm:$0xff]
        %v570 = vld [vmem:[#allocation4 + $0x7b8] sm:$0xff]
        %v571 = vld [vmem:[#allocation4 + $0x7c0] sm:$0xff]
        %v572 = vld [vmem:[#allocation4 + $0x7c8] sm:$0xff]
        %v573 = vld [vmem:[#allocation4 + $0x7d0] sm:$0xff]
        %v574 = vld [vmem:[#allocation4 + $0x7d8] sm:$0xff]
        %v575 = vld [vmem:[#allocation4 + $0x7e0] sm:$0xff]
        %v576 = vld [vmem:[#allocation4 + $0x7e8] sm:$0xff]
        %v577 = vld [vmem:[#allocation4 + $0x7f0] sm:$0xff]
        %v578 = vld [vmem:[#allocation4 + $0x7f8] sm:$0xff]
        %v579 = vld [vmem:[#allocation4 + $0x800] sm:$0xff]
        %v580 = vld [vmem:[#allocation4 + $0x808] sm:$0xff]
        %v581 = vld [vmem:[#allocation4 + $0x810] sm:$0xff]
        %v582 = vld [vmem:[#allocation4 + $0x818] sm:$0xff]
        %v583 = vld [vmem:[#allocation4 + $0x820] sm:$0xff]
        %v584 = vld [vmem:[#allocation4 + $0x828] sm:$0xff]
        %v585 = vld [vmem:[#allocation4 + $0x830] sm:$0xff]
        %v586 = vld [vmem:[#allocation4 + $0x838] sm:$0xff]
        %v587 = vld [vmem:[#allocation4 + $0x840] sm:$0xff]
        %v588 = vld [vmem:[#allocation4 + $0x848] sm:$0xff]
        %v589 = vld [vmem:[#allocation4 + $0x850] sm:$0xff]
        %v590 = vld [vmem:[#allocation4 + $0x858] sm:$0xff]
        %v591 = vld [vmem:[#allocation4 + $0x860] sm:$0xff]
        %v592 = vld [vmem:[#allocation4 + $0x868] sm:$0xff]
        %v593 = vld [vmem:[#allocation4 + $0x870] sm:$0xff]
        %v594 = vld [vmem:[#allocation4 + $0x878] sm:$0xff]
        %v595 = vld [vmem:[#allocation4 + $0x880] sm:$0xff]
        %v596 = vld [vmem:[#allocation4 + $0x888] sm:$0xff]
        %v597 = vld [vmem:[#allocation4 + $0x890] sm:$0xff]
        %v598 = vld [vmem:[#allocation4 + $0x898] sm:$0xff]
        %v599 = vld [vmem:[#allocation4 + $0x8a0] sm:$0xff]
        %v600 = vld [vmem:[#allocation4 + $0x8a8] sm:$0xff]
        %v601 = vld [vmem:[#allocation4 + $0x8b0] sm:$0xff]
        %v602 = vld [vmem:[#allocation4 + $0x8b8] sm:$0xff]
        %v603 = vld [vmem:[#allocation4 + $0x8c0] sm:$0xff]
        %v604 = vld [vmem:[#allocation4 + $0x8c8] sm:$0xff]
        %v605 = vld [vmem:[#allocation4 + $0x8d0] sm:$0xff]
        %v606 = vld [vmem:[#allocation4 + $0x8d8] sm:$0xff]
        %v607 = vld [vmem:[#allocation4 + $0x8e0] sm:$0xff]
        %v608 = vld [vmem:[#allocation4 + $0x8e8] sm:$0xff]
        %v609 = vld [vmem:[#allocation4 + $0x8f0] sm:$0xff]
        %v610 = vld [vmem:[#allocation4 + $0x8f8] sm:$0xff]
        %v611 = vld [vmem:[#allocation4 + $0x900] sm:$0xff]
        %v612 = vld [vmem:[#allocation4 + $0x908] sm:$0xff]
        %v613 = vld [vmem:[#allocation4 + $0x910] sm:$0xff]
        %v614 = vld [vmem:[#allocation4 + $0x918] sm:$0xff]
        %v615 = vld [vmem:[#allocation4 + $0x920] sm:$0xff]
        %v616 = vld [vmem:[#allocation4 + $0x928] sm:$0xff]
        %v617 = vld [vmem:[#allocation4 + $0x930] sm:$0xff]
        %v618 = vld [vmem:[#allocation4 + $0x938] sm:$0xff]
        %v619 = vld [vmem:[#allocation4 + $0x940] sm:$0xff]
        %v620 = vld [vmem:[#allocation4 + $0x948] sm:$0xff]
        %v621 = vld [vmem:[#allocation4 + $0x950] sm:$0xff]
        %v622 = vld [vmem:[#allocation4 + $0x958] sm:$0xff]
        %v623 = vld [vmem:[#allocation4 + $0x960] sm:$0xff]
        %v624 = vld [vmem:[#allocation4 + $0x968] sm:$0xff]
        %v625 = vld [vmem:[#allocation4 + $0x970] sm:$0xff]
        %v626 = vld [vmem:[#allocation4 + $0x978] sm:$0xff]
        %v627 = vld [vmem:[#allocation4 + $0x980] sm:$0xff]
        %v628 = vld [vmem:[#allocation4 + $0x988] sm:$0xff]
        %v629 = vld [vmem:[#allocation4 + $0x990] sm:$0xff]
        %v630 = vld [vmem:[#allocation4 + $0x998] sm:$0xff]
        %v631 = vld [vmem:[#allocation4 + $0x9a0] sm:$0xff]
        %v632 = vld [vmem:[#allocation4 + $0x9a8] sm:$0xff]
        %v633 = vld [vmem:[#allocation4 + $0x9b0] sm:$0xff]
        %v634 = vld [vmem:[#allocation4 + $0x9b8] sm:$0xff]
        %v635 = vld [vmem:[#allocation4 + $0x9c0] sm:$0xff]
        %v636 = vld [vmem:[#allocation4 + $0x9c8] sm:$0xff]
        %v637 = vld [vmem:[#allocation4 + $0x9d0] sm:$0xff]
        %v638 = vld [vmem:[#allocation4 + $0x9d8] sm:$0xff]
        %v639 = vld [vmem:[#allocation4 + $0x9e0] sm:$0xff]
        %v640 = vld [vmem:[#allocation4 + $0x9e8] sm:$0xff]
        %v641 = vld [vmem:[#allocation4 + $0x9f0] sm:$0xff]
        %v642 = vld [vmem:[#allocation4 + $0x9f8] sm:$0xff]
        %643 = vmatprep.subr.mxu0 %v324
        %644 = vmatpush1.msra.mxu0 %v323
        %645 = vmatprep.subr.mxu0 %v334
        %646 = vmatpush1.msra.mxu0 %v333
        %647 = vmatprep.subr.mxu0 %v344
        %648 = vmatpush1.msra.mxu0 %v343
        %649 = vmatprep.subr.mxu0 %v354
        %650 = vmatpush1.msra.mxu0 %v353
        %651 = vmatprep.subr.mxu0 %v364
        %652 = vmatpush1.msra.mxu0 %v363
        %653 = vmatprep.subr.mxu0 %v374
        %654 = vmatpush1.msra.mxu0 %v373
        %655 = vmatprep.subr.mxu0 %v384
        %656 = vmatpush1.msra.mxu0 %v383
        %657 = vmatprep.subr.mxu0 %v394
        %658 = vmatpush1.msra.mxu0 %v393
        %659 = vmatprep.subr.mxu0 %v404
        %660 = vmatpush1.msra.mxu0 %v403
        %661 = vmatprep.subr.mxu0 %v414
        %662 = vmatpush1.msra.mxu0 %v413
        %663 = vmatprep.subr.mxu0 %v424
        %664 = vmatpush1.msra.mxu0 %v423
        %665 = vmatprep.subr.mxu0 %v434
        %666 = vmatpush1.msra.mxu0 %v433
        %667 = vmatprep.subr.mxu0 %v444
        %668 = vmatpush1.msra.mxu0 %v443
        %669 = vmatprep.subr.mxu0 %v454
        %670 = vmatpush1.msra.mxu0 %v453
        %671 = vmatprep.subr.mxu0 %v464
        %672 = vmatpush1.msra.mxu0 %v463
        %673 = vmatprep.subr.mxu0 %v474
        %674 = vmatpush1.msra.mxu0 %v473
        %675 = vmatprep.subr.mxu0 %v484
        %676 = vmatpush1.msra.mxu0 %v483
        %677 = vmatprep.subr.mxu0 %v494
        %678 = vmatpush1.msra.mxu0 %v493
        %679 = vmatprep.subr.mxu0 %v504
        %680 = vmatpush1.msra.mxu0 %v503
        %681 = vmatprep.subr.mxu0 %v514
        %682 = vmatpush1.msra.mxu0 %v513
        %683 = vmatprep.subr.mxu0 %v524
        %684 = vmatpush1.msra.mxu0 %v523
        %685 = vmatprep.subr.mxu0 %v534
        %686 = vmatpush1.msra.mxu0 %v533
        %687 = vmatprep.subr.mxu0 %v544
        %688 = vmatpush1.msra.mxu0 %v543
        %689 = vmatprep.subr.mxu0 %v554
        %690 = vmatpush1.msra.mxu0 %v553
        %691 = vmatprep.subr.mxu0 %v564
        %692 = vmatpush1.msra.mxu0 %v563
        %693 = vmatprep.subr.mxu0 %v574
        %694 = vmatpush1.msra.mxu0 %v573
        %695 = vmatprep.subr.mxu0 %v584
        %696 = vmatpush1.msra.mxu0 %v583
        %697 = vmatprep.subr.mxu0 %v594
        %698 = vmatpush1.msra.mxu0 %v593
        %699 = vmatprep.subr.mxu0 %v604
        %700 = vmatpush1.msra.mxu0 %v603
        %701 = vmatprep.subr.mxu0 %v614
        %702 = vmatpush1.msra.mxu0 %v613
        %703 = vmatprep.subr.mxu0 %v624
        %704 = vmatpush1.msra.mxu0 %v623
        %705 = vmatprep.subr.mxu0 %v634
        %706 = vmatpush1.msra.mxu0 %v633
        %707 = vmatprep.mubr.f32.mxu0 %v322
        %708 = vmatmul.mubr.f32.gmra.mrb[0].mxu0 %v321
        %v709 = vpop.f32.mrb[0].mxu0
        %v710 = vadd.f32 0.0, %v709
        %v711 = vpop.f32.mrb[0].mxu0
        %v712 = vadd.f32 0.0, %v711
        %713 = vdwg.mxu0
        %714 = vmatprep.subr.mxu0 %v326
        %715 = vmatpush1.msra.mxu0 %v325
        %716 = vmatprep.subr.mxu0 %v336
        %717 = vmatpush1.msra.mxu0 %v335
        %718 = vmatprep.subr.mxu0 %v346
        %719 = vmatpush1.msra.mxu0 %v345
        %720 = vmatprep.subr.mxu0 %v356
        %721 = vmatpush1.msra.mxu0 %v355
        %722 = vmatprep.subr.mxu0 %v366
        %723 = vmatpush1.msra.mxu0 %v365
        %724 = vmatprep.subr.mxu0 %v376
        %725 = vmatpush1.msra.mxu0 %v375
        %726 = vmatprep.subr.mxu0 %v386
        %727 = vmatpush1.msra.mxu0 %v385
        %728 = vmatprep.subr.mxu0 %v396
        %729 = vmatpush1.msra.mxu0 %v395
        %730 = vmatprep.subr.mxu0 %v406
        %731 = vmatpush1.msra.mxu0 %v405
        %732 = vmatprep.subr.mxu0 %v416
        %733 = vmatpush1.msra.mxu0 %v415
        %734 = vmatprep.subr.mxu0 %v426
        %735 = vmatpush1.msra.mxu0 %v425
        %736 = vmatprep.subr.mxu0 %v436
        %737 = vmatpush1.msra.mxu0 %v435
        %738 = vmatprep.subr.mxu0 %v446
        %739 = vmatpush1.msra.mxu0 %v445
        %740 = vmatprep.subr.mxu0 %v456
        %741 = vmatpush1.msra.mxu0 %v455
        %742 = vmatprep.subr.mxu0 %v466
        %743 = vmatpush1.msra.mxu0 %v465
        %744 = vmatprep.subr.mxu0 %v476
        %745 = vmatpush1.msra.mxu0 %v475
        %746 = vmatprep.subr.mxu0 %v486
        %747 = vmatpush1.msra.mxu0 %v485
        %748 = vmatprep.subr.mxu0 %v496
        %749 = vmatpush1.msra.mxu0 %v495
        %750 = vmatprep.subr.mxu0 %v506
        %751 = vmatpush1.msra.mxu0 %v505
        %752 = vmatprep.subr.mxu0 %v516
        %753 = vmatpush1.msra.mxu0 %v515
        %754 = vmatprep.subr.mxu0 %v526
        %755 = vmatpush1.msra.mxu0 %v525
        %756 = vmatprep.subr.mxu0 %v536
        %757 = vmatpush1.msra.mxu0 %v535
        %758 = vmatprep.subr.mxu0 %v546
        %759 = vmatpush1.msra.mxu0 %v545
        %760 = vmatprep.subr.mxu0 %v556
        %761 = vmatpush1.msra.mxu0 %v555
        %762 = vmatprep.subr.mxu0 %v566
        %763 = vmatpush1.msra.mxu0 %v565
        %764 = vmatprep.subr.mxu0 %v576
        %765 = vmatpush1.msra.mxu0 %v575
        %766 = vmatprep.subr.mxu0 %v586
        %767 = vmatpush1.msra.mxu0 %v585
        %768 = vmatprep.subr.mxu0 %v596
        %769 = vmatpush1.msra.mxu0 %v595
        %770 = vmatprep.subr.mxu0 %v606
        %771 = vmatpush1.msra.mxu0 %v605
        %772 = vmatprep.subr.mxu0 %v616
        %773 = vmatpush1.msra.mxu0 %v615
        %774 = vmatprep.subr.mxu0 %v626
        %775 = vmatpush1.msra.mxu0 %v625
        %776 = vmatprep.subr.mxu0 %v636
        %777 = vmatpush1.msra.mxu0 %v635
        %778 = vmatprep.mubr.f32.mxu0 %v322
        %779 = vmatmul.mubr.f32.gmra.mrb[0].mxu0 %v321
        %v780 = vpop.f32.mrb[0].mxu0
        %v781 = vadd.f32 0.0, %v780
        %v782 = vpop.f32.mrb[0].mxu0
        %v783 = vadd.f32 0.0, %v782
        %784 = vdwg.mxu0
        %785 = vmatprep.subr.mxu0 %v328
        %786 = vmatpush1.msra.mxu0 %v327
        %787 = vmatprep.subr.mxu0 %v338
        %788 = vmatpush1.msra.mxu0 %v337
        %789 = vmatprep.subr.mxu0 %v348
        %790 = vmatpush1.msra.mxu0 %v347
        %791 = vmatprep.subr.mxu0 %v358
        %792 = vmatpush1.msra.mxu0 %v357
        %793 = vmatprep.subr.mxu0 %v368
        %794 = vmatpush1.msra.mxu0 %v367
        %795 = vmatprep.subr.mxu0 %v378
        %796 = vmatpush1.msra.mxu0 %v377
        %797 = vmatprep.subr.mxu0 %v388
        %798 = vmatpush1.msra.mxu0 %v387
        %799 = vmatprep.subr.mxu0 %v398
        %800 = vmatpush1.msra.mxu0 %v397
        %801 = vmatprep.subr.mxu0 %v408
        %802 = vmatpush1.msra.mxu0 %v407
        %803 = vmatprep.subr.mxu0 %v418
        %804 = vmatpush1.msra.mxu0 %v417
        %805 = vmatprep.subr.mxu0 %v428
        %806 = vmatpush1.msra.mxu0 %v427
        %807 = vmatprep.subr.mxu0 %v438
        %808 = vmatpush1.msra.mxu0 %v437
        %809 = vmatprep.subr.mxu0 %v448
        %810 = vmatpush1.msra.mxu0 %v447
        %811 = vmatprep.subr.mxu0 %v458
        %812 = vmatpush1.msra.mxu0 %v457
        %813 = vmatprep.subr.mxu0 %v468
        %814 = vmatpush1.msra.mxu0 %v467
        %815 = vmatprep.subr.mxu0 %v478
        %816 = vmatpush1.msra.mxu0 %v477
        %817 = vmatprep.subr.mxu0 %v488
        %818 = vmatpush1.msra.mxu0 %v487
        %819 = vmatprep.subr.mxu0 %v498
        %820 = vmatpush1.msra.mxu0 %v497
        %821 = vmatprep.subr.mxu0 %v508
        %822 = vmatpush1.msra.mxu0 %v507
        %823 = vmatprep.subr.mxu0 %v518
        %824 = vmatpush1.msra.mxu0 %v517
        %825 = vmatprep.subr.mxu0 %v528
        %826 = vmatpush1.msra.mxu0 %v527
        %827 = vmatprep.subr.mxu0 %v538
        %828 = vmatpush1.msra.mxu0 %v537
        %829 = vmatprep.subr.mxu0 %v548
        %830 = vmatpush1.msra.mxu0 %v547
        %831 = vmatprep.subr.mxu0 %v558
        %832 = vmatpush1.msra.mxu0 %v557
        %833 = vmatprep.subr.mxu0 %v568
        %834 = vmatpush1.msra.mxu0 %v567
        %835 = vmatprep.subr.mxu0 %v578
        %836 = vmatpush1.msra.mxu0 %v577
        %837 = vmatprep.subr.mxu0 %v588
        %838 = vmatpush1.msra.mxu0 %v587
        %839 = vmatprep.subr.mxu0 %v598
        %840 = vmatpush1.msra.mxu0 %v597
        %841 = vmatprep.subr.mxu0 %v608
        %842 = vmatpush1.msra.mxu0 %v607
        %843 = vmatprep.subr.mxu0 %v618
        %844 = vmatpush1.msra.mxu0 %v617
        %845 = vmatprep.subr.mxu0 %v628
        %846 = vmatpush1.msra.mxu0 %v627
        %847 = vmatprep.subr.mxu0 %v638
        %848 = vmatpush1.msra.mxu0 %v637
        %849 = vmatprep.mubr.f32.mxu0 %v322
        %850 = vmatmul.mubr.f32.gmra.mrb[0].mxu0 %v321
        %v851 = vpop.f32.mrb[0].mxu0
        %v852 = vadd.f32 0.0, %v851
        %v853 = vpop.f32.mrb[0].mxu0
        %v854 = vadd.f32 0.0, %v853
        %855 = vdwg.mxu0
        %856 = vmatprep.subr.mxu0 %v330
        %857 = vmatpush1.msra.mxu0 %v329
        %858 = vmatprep.subr.mxu0 %v340
        %859 = vmatpush1.msra.mxu0 %v339
        %860 = vmatprep.subr.mxu0 %v350
        %861 = vmatpush1.msra.mxu0 %v349
        %862 = vmatprep.subr.mxu0 %v360
        %863 = vmatpush1.msra.mxu0 %v359
        %864 = vmatprep.subr.mxu0 %v370
        %865 = vmatpush1.msra.mxu0 %v369
        %866 = vmatprep.subr.mxu0 %v380
        %867 = vmatpush1.msra.mxu0 %v379
        %868 = vmatprep.subr.mxu0 %v390
        %869 = vmatpush1.msra.mxu0 %v389
        %870 = vmatprep.subr.mxu0 %v400
        %871 = vmatpush1.msra.mxu0 %v399
        %872 = vmatprep.subr.mxu0 %v410
        %873 = vmatpush1.msra.mxu0 %v409
        %874 = vmatprep.subr.mxu0 %v420
        %875 = vmatpush1.msra.mxu0 %v419
        %876 = vmatprep.subr.mxu0 %v430
        %877 = vmatpush1.msra.mxu0 %v429
        %878 = vmatprep.subr.mxu0 %v440
        %879 = vmatpush1.msra.mxu0 %v439
        %880 = vmatprep.subr.mxu0 %v450
        %881 = vmatpush1.msra.mxu0 %v449
        %882 = vmatprep.subr.mxu0 %v460
        %883 = vmatpush1.msra.mxu0 %v459
        %884 = vmatprep.subr.mxu0 %v470
        %885 = vmatpush1.msra.mxu0 %v469
        %886 = vmatprep.subr.mxu0 %v480
        %887 = vmatpush1.msra.mxu0 %v479
        %888 = vmatprep.subr.mxu0 %v490
        %889 = vmatpush1.msra.mxu0 %v489
        %890 = vmatprep.subr.mxu0 %v500
        %891 = vmatpush1.msra.mxu0 %v499
        %892 = vmatprep.subr.mxu0 %v510
        %893 = vmatpush1.msra.mxu0 %v509
        %894 = vmatprep.subr.mxu0 %v520
        %895 = vmatpush1.msra.mxu0 %v519
        %896 = vmatprep.subr.mxu0 %v530
        %897 = vmatpush1.msra.mxu0 %v529
        %898 = vmatprep.subr.mxu0 %v540
        %899 = vmatpush1.msra.mxu0 %v539
        %900 = vmatprep.subr.mxu0 %v550
        %901 = vmatpush1.msra.mxu0 %v549
        %902 = vmatprep.subr.mxu0 %v560
        %903 = vmatpush1.msra.mxu0 %v559
        %904 = vmatprep.subr.mxu0 %v570
        %905 = vmatpush1.msra.mxu0 %v569
        %906 = vmatprep.subr.mxu0 %v580
        %907 = vmatpush1.msra.mxu0 %v579
        %908 = vmatprep.subr.mxu0 %v590
        %909 = vmatpush1.msra.mxu0 %v589
        %910 = vmatprep.subr.mxu0 %v600
        %911 = vmatpush1.msra.mxu0 %v599
        %912 = vmatprep.subr.mxu0 %v610
        %913 = vmatpush1.msra.mxu0 %v609
        %914 = vmatprep.subr.mxu0 %v620
        %915 = vmatpush1.msra.mxu0 %v619
        %916 = vmatprep.subr.mxu0 %v630
        %917 = vmatpush1.msra.mxu0 %v629
        %918 = vmatprep.subr.mxu0 %v640
        %919 = vmatpush1.msra.mxu0 %v639
        %920 = vmatprep.mubr.f32.mxu0 %v322
        %921 = vmatmul.mubr.f32.gmra.mrb[0].mxu0 %v321
        %v922 = vpop.f32.mrb[0].mxu0
        %v923 = vadd.f32 0.0, %v922
        %v924 = vpop.f32.mrb[0].mxu0
        %v925 = vadd.f32 0.0, %v924
        %926 = vdwg.mxu0
        %927 = vmatprep.subr.mxu0 %v332
        %928 = vmatpush1.msra.mxu0 %v331
        %929 = vmatprep.subr.mxu0 %v342
        %930 = vmatpush1.msra.mxu0 %v341
        %931 = vmatprep.subr.mxu0 %v352
        %932 = vmatpush1.msra.mxu0 %v351
        %933 = vmatprep.subr.mxu0 %v362
        %934 = vmatpush1.msra.mxu0 %v361
        %935 = vmatprep.subr.mxu0 %v372
        %936 = vmatpush1.msra.mxu0 %v371
        %937 = vmatprep.subr.mxu0 %v382
        %938 = vmatpush1.msra.mxu0 %v381
        %939 = vmatprep.subr.mxu0 %v392
        %940 = vmatpush1.msra.mxu0 %v391
        %941 = vmatprep.subr.mxu0 %v402
        %942 = vmatpush1.msra.mxu0 %v401
        %943 = vmatprep.subr.mxu0 %v412
        %944 = vmatpush1.msra.mxu0 %v411
        %945 = vmatprep.subr.mxu0 %v422
        %946 = vmatpush1.msra.mxu0 %v421
        %947 = vmatprep.subr.mxu0 %v432
        %948 = vmatpush1.msra.mxu0 %v431
        %949 = vmatprep.subr.mxu0 %v442
        %950 = vmatpush1.msra.mxu0 %v441
        %951 = vmatprep.subr.mxu0 %v452
        %952 = vmatpush1.msra.mxu0 %v451
        %953 = vmatprep.subr.mxu0 %v462
        %954 = vmatpush1.msra.mxu0 %v461
        %955 = vmatprep.subr.mxu0 %v472
        %956 = vmatpush1.msra.mxu0 %v471
        %957 = vmatprep.subr.mxu0 %v482
        %958 = vmatpush1.msra.mxu0 %v481
        %959 = vmatprep.subr.mxu0 %v492
        %960 = vmatpush1.msra.mxu0 %v491
        %961 = vmatprep.subr.mxu0 %v502
        %962 = vmatpush1.msra.mxu0 %v501
        %963 = vmatprep.subr.mxu0 %v512
        %964 = vmatpush1.msra.mxu0 %v511
        %965 = vmatprep.subr.mxu0 %v522
        %966 = vmatpush1.msra.mxu0 %v521
        %967 = vmatprep.subr.mxu0 %v532
        %968 = vmatpush1.msra.mxu0 %v531
        %969 = vmatprep.subr.mxu0 %v542
        %970 = vmatpush1.msra.mxu0 %v541
        %971 = vmatprep.subr.mxu0 %v552
        %972 = vmatpush1.msra.mxu0 %v551
        %973 = vmatprep.subr.mxu0 %v562
        %974 = vmatpush1.msra.mxu0 %v561
        %975 = vmatprep.subr.mxu0 %v572
        %976 = vmatpush1.msra.mxu0 %v571
        %977 = vmatprep.subr.mxu0 %v582
        %978 = vmatpush1.msra.mxu0 %v581
        %979 = vmatprep.subr.mxu0 %v592
        %980 = vmatpush1.msra.mxu0 %v591
        %981 = vmatprep.subr.mxu0 %v602
        %982 = vmatpush1.msra.mxu0 %v601
        %983 = vmatprep.subr.mxu0 %v612
        %984 = vmatpush1.msra.mxu0 %v611
        %985 = vmatprep.subr.mxu0 %v622
        %986 = vmatpush1.msra.mxu0 %v621
        %987 = vmatprep.subr.mxu0 %v632
        %988 = vmatpush1.msra.mxu0 %v631
        %989 = vmatprep.subr.mxu0 %v642
        %990 = vmatpush1.msra.mxu0 %v641
        %991 = vmatprep.mubr.f32.mxu0 %v322
        %992 = vmatmul.mubr.f32.gmra.mrb[0].mxu0 %v321
        %v993 = vpop.f32.mrb[0].mxu0
        %v994 = vadd.f32 0.0, %v993
        %v995 = vpop.f32.mrb[0].mxu0
        %v996 = vadd.f32 0.0, %v995
        %997 = vdwg.mxu0
        %998 = vst [vmem:[#allocation2] sm:$0xff] %v710
        %999 = vst [vmem:[#allocation2 + $0x8] sm:$0xff] %v712
        %1000 = vst [vmem:[#allocation2 + $0x10] sm:$0xff] %v781
        %1001 = vst [vmem:[#allocation2 + $0x18] sm:$0xff] %v783
        %1002 = vst [vmem:[#allocation2 + $0x20] sm:$0xff] %v852
        %1003 = vst [vmem:[#allocation2 + $0x28] sm:$0xff] %v854
        %1004 = vst [vmem:[#allocation2 + $0x30] sm:$0xff] %v923
        %1005 = vst [vmem:[#allocation2 + $0x38] sm:$0xff] %v925
        %1006 = vst [vmem:[#allocation2 + $0x40] sm:$0xff] %v994
        %1007 = vst [vmem:[#allocation2 + $0x48] sm:$0xff] %v996
        %v1008 = vld [vmem:[%s2] sm:$0xff]
        %v1009 = vld [vmem:[#allocation2] sm:$0xff]
        %v1010 = vld [vmem:[#allocation2 + $0x8] sm:$0xff]
        %v1011 = vld [vmem:[#allocation2 + $0x10] sm:$0xff]
        %v1012 = vld [vmem:[#allocation2 + $0x18] sm:$0xff]
        %v1013 = vld [vmem:[#allocation2 + $0x20] sm:$0xff]
        %v1014 = vld [vmem:[#allocation2 + $0x28] sm:$0xff]
        %v1015 = vld [vmem:[#allocation2 + $0x30] sm:$0xff]
        %v1016 = vld [vmem:[#allocation2 + $0x38] sm:$0xff]
        %v1017 = vld [vmem:[#allocation2 + $0x40] sm:$0xff]
        %s1018 = scalar_lea.vmem %s2, 8
        %v1019 = vld [vmem:[%s1018] sm:$0xff]
        %v1020 = vld [vmem:[#allocation2] sm:$0xff]
        %v1021 = vld [vmem:[#allocation2 + $0x8] sm:$0xff]
        %v1022 = vld [vmem:[#allocation2 + $0x10] sm:$0xff]
        %v1023 = vld [vmem:[#allocation2 + $0x18] sm:$0xff]
        %v1024 = vld [vmem:[#allocation2 + $0x20] sm:$0xff]
        %v1025 = vld [vmem:[#allocation2 + $0x28] sm:$0xff]
        %v1026 = vld [vmem:[#allocation2 + $0x30] sm:$0xff]
        %v1027 = vld [vmem:[#allocation2 + $0x38] sm:$0xff]
        %v1028 = vld [vmem:[#allocation2 + $0x40] sm:$0xff]
        %v1029 = vld [vmem:[#allocation2 + $0x48] sm:$0xff]
        %1040 = vrot.lane.b32.xlu0 %v1020, 127
        %v1041 = vpop.permute.xlu0 %1040
        %1042 = vrot.lane.b32.xlu0 %v1021, 127
        %v1043 = vpop.permute.xlu0 %1042
        %1044 = vrot.lane.b32.xlu0 %v1022, 127
        %v1045 = vpop.permute.xlu0 %1044
        %1046 = vrot.lane.b32.xlu0 %v1023, 127
        %v1047 = vpop.permute.xlu0 %1046
        %1048 = vrot.lane.b32.xlu0 %v1024, 127
        %v1049 = vpop.permute.xlu0 %1048
        %1050 = vrot.lane.b32.xlu0 %v1025, 127
        %v1051 = vpop.permute.xlu0 %1050
        %1052 = vrot.lane.b32.xlu0 %v1026, 127
        %v1053 = vpop.permute.xlu0 %1052
        %1054 = vrot.lane.b32.xlu0 %v1027, 127
        %v1055 = vpop.permute.xlu0 %1054
        %1056 = vrot.lane.b32.xlu0 %v1028, 127
        %v1057 = vpop.permute.xlu0 %1056
        %1058 = vrot.lane.b32.xlu0 %v1029, 127
        %v1059 = vpop.permute.xlu0 %1058
        %vm1060 = vcmask 1039360
        %v1061 = vsel %vm1060, %v1041, %v1043
        %v1062 = vsel %vm1060, %v1043, %v1045
        %v1063 = vsel %vm1060, %v1045, %v1047
        %v1064 = vsel %vm1060, %v1047, %v1049
        %v1065 = vsel %vm1060, %v1049, %v1051
        %v1066 = vsel %vm1060, %v1051, %v1053
        %v1067 = vsel %vm1060, %v1053, %v1055
        %v1068 = vsel %vm1060, %v1055, %v1057
        %v1069 = vsel %vm1060, %v1057, %v1059
        %vm1079 = vcmask 64512
        %v1081 = vsel %vm1079, %v1019, 0
        %1083 = vmatprep.subr.mxu0 %v1062
        %1084 = vmatpush1.msra.mxu0 %v1061
        %1085 = vmatprep.subr.mxu0 0.0
        %1086 = vmatpush1.msra.mxu0 0.0
        %1087 = vmatprep.subr.mxu0 0.0
        %1088 = vmatpush1.msra.mxu0 0.0
        %1089 = vmatprep.subr.mxu0 0.0
        %1090 = vmatpush1.msra.mxu0 0.0
        %1091 = vmatprep.subr.mxu0 0.0
        %1092 = vmatpush1.msra.mxu0 0.0
        %1093 = vmatprep.subr.mxu0 0.0
        %1094 = vmatpush1.msra.mxu0 0.0
        %1095 = vmatprep.subr.mxu0 0.0
        %1096 = vmatpush1.msra.mxu0 0.0
        %1097 = vmatprep.subr.mxu0 0.0
        %1098 = vmatpush1.msra.mxu0 0.0
        %1099 = vmatprep.subr.mxu0 0.0
        %1100 = vmatpush1.msra.mxu0 0.0
        %1101 = vmatprep.subr.mxu0 0.0
        %1102 = vmatpush1.msra.mxu0 0.0
        %1103 = vmatprep.subr.mxu0 0.0
        %1104 = vmatpush1.msra.mxu0 0.0
        %1105 = vmatprep.subr.mxu0 0.0
        %1106 = vmatpush1.msra.mxu0 0.0
        %1107 = vmatprep.subr.mxu0 0.0
        %1108 = vmatpush1.msra.mxu0 0.0
        %1109 = vmatprep.subr.mxu0 0.0
        %1110 = vmatpush1.msra.mxu0 0.0
        %1111 = vmatprep.subr.mxu0 0.0
        %1112 = vmatpush1.msra.mxu0 0.0
        %1113 = vmatprep.subr.mxu0 0.0
        %1114 = vmatpush1.msra.mxu0 0.0
        %1115 = vmatprep.subr.mxu0 0.0
        %1116 = vmatpush1.msra.mxu0 0.0
        %1117 = vmatprep.subr.mxu0 0.0
        %1118 = vmatpush1.msra.mxu0 0.0
        %1119 = vmatprep.subr.mxu0 0.0
        %1120 = vmatpush1.msra.mxu0 0.0
        %1121 = vmatprep.subr.mxu0 0.0
        %1122 = vmatpush1.msra.mxu0 0.0
        %1123 = vmatprep.subr.mxu0 0.0
        %1124 = vmatpush1.msra.mxu0 0.0
        %1125 = vmatprep.subr.mxu0 0.0
        %1126 = vmatpush1.msra.mxu0 0.0
        %1127 = vmatprep.subr.mxu0 0.0
        %1128 = vmatpush1.msra.mxu0 0.0
        %1129 = vmatprep.subr.mxu0 0.0
        %1130 = vmatpush1.msra.mxu0 0.0
        %1131 = vmatprep.subr.mxu0 0.0
        %1132 = vmatpush1.msra.mxu0 0.0
        %1133 = vmatprep.subr.mxu0 0.0
        %1134 = vmatpush1.msra.mxu0 0.0
        %1135 = vmatprep.subr.mxu0 0.0
        %1136 = vmatpush1.msra.mxu0 0.0
        %1137 = vmatprep.subr.mxu0 0.0
        %1138 = vmatpush1.msra.mxu0 0.0
        %1139 = vmatprep.subr.mxu0 0.0
        %1140 = vmatpush1.msra.mxu0 0.0
        %1141 = vmatprep.subr.mxu0 0.0
        %1142 = vmatpush1.msra.mxu0 0.0
        %1143 = vmatprep.subr.mxu0 0.0
        %1144 = vmatpush1.msra.mxu0 0.0
        %1145 = vmatprep.subr.mxu0 0.0
        %1146 = vmatpush1.msra.mxu0 0.0
        %1147 = vmatprep.mubr.f32.mxu0 0.0
        %1148 = vmatmul.mubr.f32.gmra.mrb[0].mxu0 %v1081
        %v1149 = vpop.f32.mrb[0].mxu0
        %v1150 = vadd.f32 0.0, %v1149
        %v1151 = vpop.f32.mrb[0].mxu0
        %v1152 = vadd.f32 0.0, %v1151
        %1153 = vdwg.mxu0
        %1154 = vmatprep.subr.mxu0 %v1064
        %1155 = vmatpush1.msra.mxu0 %v1063
        %1156 = vmatprep.subr.mxu0 0.0
        %1157 = vmatpush1.msra.mxu0 0.0
        %1158 = vmatprep.subr.mxu0 0.0
        %1159 = vmatpush1.msra.mxu0 0.0
        %1160 = vmatprep.subr.mxu0 0.0
        %1161 = vmatpush1.msra.mxu0 0.0
        %1162 = vmatprep.subr.mxu0 0.0
        %1163 = vmatpush1.msra.mxu0 0.0
        %1164 = vmatprep.subr.mxu0 0.0
        %1165 = vmatpush1.msra.mxu0 0.0
        %1166 = vmatprep.subr.mxu0 0.0
        %1167 = vmatpush1.msra.mxu0 0.0
        %1168 = vmatprep.subr.mxu0 0.0
        %1169 = vmatpush1.msra.mxu0 0.0
        %1170 = vmatprep.subr.mxu0 0.0
        %1171 = vmatpush1.msra.mxu0 0.0
        %1172 = vmatprep.subr.mxu0 0.0
        %1173 = vmatpush1.msra.mxu0 0.0
        %1174 = vmatprep.subr.mxu0 0.0
        %1175 = vmatpush1.msra.mxu0 0.0
        %1176 = vmatprep.subr.mxu0 0.0
        %1177 = vmatpush1.msra.mxu0 0.0
        %1178 = vmatprep.subr.mxu0 0.0
        %1179 = vmatpush1.msra.mxu0 0.0
        %1180 = vmatprep.subr.mxu0 0.0
        %1181 = vmatpush1.msra.mxu0 0.0
        %1182 = vmatprep.subr.mxu0 0.0
        %1183 = vmatpush1.msra.mxu0 0.0
        %1184 = vmatprep.subr.mxu0 0.0
        %1185 = vmatpush1.msra.mxu0 0.0
        %1186 = vmatprep.subr.mxu0 0.0
        %1187 = vmatpush1.msra.mxu0 0.0
        %1188 = vmatprep.subr.mxu0 0.0
        %1189 = vmatpush1.msra.mxu0 0.0
        %1190 = vmatprep.subr.mxu0 0.0
        %1191 = vmatpush1.msra.mxu0 0.0
        %1192 = vmatprep.subr.mxu0 0.0
        %1193 = vmatpush1.msra.mxu0 0.0
        %1194 = vmatprep.subr.mxu0 0.0
        %1195 = vmatpush1.msra.mxu0 0.0
        %1196 = vmatprep.subr.mxu0 0.0
        %1197 = vmatpush1.msra.mxu0 0.0
        %1198 = vmatprep.subr.mxu0 0.0
        %1199 = vmatpush1.msra.mxu0 0.0
        %1200 = vmatprep.subr.mxu0 0.0
        %1201 = vmatpush1.msra.mxu0 0.0
        %1202 = vmatprep.subr.mxu0 0.0
        %1203 = vmatpush1.msra.mxu0 0.0
        %1204 = vmatprep.subr.mxu0 0.0
        %1205 = vmatpush1.msra.mxu0 0.0
        %1206 = vmatprep.subr.mxu0 0.0
        %1207 = vmatpush1.msra.mxu0 0.0
        %1208 = vmatprep.subr.mxu0 0.0
        %1209 = vmatpush1.msra.mxu0 0.0
        %1210 = vmatprep.subr.mxu0 0.0
        %1211 = vmatpush1.msra.mxu0 0.0
        %1212 = vmatprep.subr.mxu0 0.0
        %1213 = vmatpush1.msra.mxu0 0.0
        %1214 = vmatprep.subr.mxu0 0.0
        %1215 = vmatpush1.msra.mxu0 0.0
        %1216 = vmatprep.subr.mxu0 0.0
        %1217 = vmatpush1.msra.mxu0 0.0
        %1218 = vmatprep.mubr.f32.mxu0 0.0
        %1219 = vmatmul.mubr.f32.gmra.mrb[0].mxu0 %v1081
        %v1220 = vpop.f32.mrb[0].mxu0
        %v1221 = vadd.f32 0.0, %v1220
        %v1222 = vpop.f32.mrb[0].mxu0
        %v1223 = vadd.f32 0.0, %v1222
        %1224 = vdwg.mxu0
        %1225 = vmatprep.subr.mxu0 %v1066
        %1226 = vmatpush1.msra.mxu0 %v1065
        %1227 = vmatprep.subr.mxu0 0.0
        %1228 = vmatpush1.msra.mxu0 0.0
        %1229 = vmatprep.subr.mxu0 0.0
        %1230 = vmatpush1.msra.mxu0 0.0
        %1231 = vmatprep.subr.mxu0 0.0
        %1232 = vmatpush1.msra.mxu0 0.0
        %1233 = vmatprep.subr.mxu0 0.0
        %1234 = vmatpush1.msra.mxu0 0.0
        %1235 = vmatprep.subr.mxu0 0.0
        %1236 = vmatpush1.msra.mxu0 0.0
        %1237 = vmatprep.subr.mxu0 0.0
        %1238 = vmatpush1.msra.mxu0 0.0
        %1239 = vmatprep.subr.mxu0 0.0
        %1240 = vmatpush1.msra.mxu0 0.0
        %1241 = vmatprep.subr.mxu0 0.0
        %1242 = vmatpush1.msra.mxu0 0.0
        %1243 = vmatprep.subr.mxu0 0.0
        %1244 = vmatpush1.msra.mxu0 0.0
        %1245 = vmatprep.subr.mxu0 0.0
        %1246 = vmatpush1.msra.mxu0 0.0
        %1247 = vmatprep.subr.mxu0 0.0
        %1248 = vmatpush1.msra.mxu0 0.0
        %1249 = vmatprep.subr.mxu0 0.0
        %1250 = vmatpush1.msra.mxu0 0.0
        %1251 = vmatprep.subr.mxu0 0.0
        %1252 = vmatpush1.msra.mxu0 0.0
        %1253 = vmatprep.subr.mxu0 0.0
        %1254 = vmatpush1.msra.mxu0 0.0
        %1255 = vmatprep.subr.mxu0 0.0
        %1256 = vmatpush1.msra.mxu0 0.0
        %1257 = vmatprep.subr.mxu0 0.0
        %1258 = vmatpush1.msra.mxu0 0.0
        %1259 = vmatprep.subr.mxu0 0.0
        %1260 = vmatpush1.msra.mxu0 0.0
        %1261 = vmatprep.subr.mxu0 0.0
        %1262 = vmatpush1.msra.mxu0 0.0
        %1263 = vmatprep.subr.mxu0 0.0
        %1264 = vmatpush1.msra.mxu0 0.0
        %1265 = vmatprep.subr.mxu0 0.0
        %1266 = vmatpush1.msra.mxu0 0.0
        %1267 = vmatprep.subr.mxu0 0.0
        %1268 = vmatpush1.msra.mxu0 0.0
        %1269 = vmatprep.subr.mxu0 0.0
        %1270 = vmatpush1.msra.mxu0 0.0
        %1271 = vmatprep.subr.mxu0 0.0
        %1272 = vmatpush1.msra.mxu0 0.0
        %1273 = vmatprep.subr.mxu0 0.0
        %1274 = vmatpush1.msra.mxu0 0.0
        %1275 = vmatprep.subr.mxu0 0.0
        %1276 = vmatpush1.msra.mxu0 0.0
        %1277 = vmatprep.subr.mxu0 0.0
        %1278 = vmatpush1.msra.mxu0 0.0
        %1279 = vmatprep.subr.mxu0 0.0
        %1280 = vmatpush1.msra.mxu0 0.0
        %1281 = vmatprep.subr.mxu0 0.0
        %1282 = vmatpush1.msra.mxu0 0.0
        %1283 = vmatprep.subr.mxu0 0.0
        %1284 = vmatpush1.msra.mxu0 0.0
        %1285 = vmatprep.subr.mxu0 0.0
        %1286 = vmatpush1.msra.mxu0 0.0
        %1287 = vmatprep.subr.mxu0 0.0
        %1288 = vmatpush1.msra.mxu0 0.0
        %1289 = vmatprep.mubr.f32.mxu0 0.0
        %1290 = vmatmul.mubr.f32.gmra.mrb[0].mxu0 %v1081
        %v1291 = vpop.f32.mrb[0].mxu0
        %v1292 = vadd.f32 0.0, %v1291
        %v1293 = vpop.f32.mrb[0].mxu0
        %v1294 = vadd.f32 0.0, %v1293
        %1295 = vdwg.mxu0
        %1296 = vmatprep.subr.mxu0 %v1068
        %1297 = vmatpush1.msra.mxu0 %v1067
        %1298 = vmatprep.subr.mxu0 0.0
        %1299 = vmatpush1.msra.mxu0 0.0
        %1300 = vmatprep.subr.mxu0 0.0
        %1301 = vmatpush1.msra.mxu0 0.0
        %1302 = vmatprep.subr.mxu0 0.0
        %1303 = vmatpush1.msra.mxu0 0.0
        %1304 = vmatprep.subr.mxu0 0.0
        %1305 = vmatpush1.msra.mxu0 0.0
        %1306 = vmatprep.subr.mxu0 0.0
        %1307 = vmatpush1.msra.mxu0 0.0
        %1308 = vmatprep.subr.mxu0 0.0
        %1309 = vmatpush1.msra.mxu0 0.0
        %1310 = vmatprep.subr.mxu0 0.0
        %1311 = vmatpush1.msra.mxu0 0.0
        %1312 = vmatprep.subr.mxu0 0.0
        %1313 = vmatpush1.msra.mxu0 0.0
        %1314 = vmatprep.subr.mxu0 0.0
        %1315 = vmatpush1.msra.mxu0 0.0
        %1316 = vmatprep.subr.mxu0 0.0
        %1317 = vmatpush1.msra.mxu0 0.0
        %1318 = vmatprep.subr.mxu0 0.0
        %1319 = vmatpush1.msra.mxu0 0.0
        %1320 = vmatprep.subr.mxu0 0.0
        %1321 = vmatpush1.msra.mxu0 0.0
        %1322 = vmatprep.subr.mxu0 0.0
        %1323 = vmatpush1.msra.mxu0 0.0
        %1324 = vmatprep.subr.mxu0 0.0
        %1325 = vmatpush1.msra.mxu0 0.0
        %1326 = vmatprep.subr.mxu0 0.0
        %1327 = vmatpush1.msra.mxu0 0.0
        %1328 = vmatprep.subr.mxu0 0.0
        %1329 = vmatpush1.msra.mxu0 0.0
        %1330 = vmatprep.subr.mxu0 0.0
        %1331 = vmatpush1.msra.mxu0 0.0
        %1332 = vmatprep.subr.mxu0 0.0
        %1333 = vmatpush1.msra.mxu0 0.0
        %1334 = vmatprep.subr.mxu0 0.0
        %1335 = vmatpush1.msra.mxu0 0.0
        %1336 = vmatprep.subr.mxu0 0.0
        %1337 = vmatpush1.msra.mxu0 0.0
        %1338 = vmatprep.subr.mxu0 0.0
        %1339 = vmatpush1.msra.mxu0 0.0
        %1340 = vmatprep.subr.mxu0 0.0
        %1341 = vmatpush1.msra.mxu0 0.0
        %1342 = vmatprep.subr.mxu0 0.0
        %1343 = vmatpush1.msra.mxu0 0.0
        %1344 = vmatprep.subr.mxu0 0.0
        %1345 = vmatpush1.msra.mxu0 0.0
        %1346 = vmatprep.subr.mxu0 0.0
        %1347 = vmatpush1.msra.mxu0 0.0
        %1348 = vmatprep.subr.mxu0 0.0
        %1349 = vmatpush1.msra.mxu0 0.0
        %1350 = vmatprep.subr.mxu0 0.0
        %1351 = vmatpush1.msra.mxu0 0.0
        %1352 = vmatprep.subr.mxu0 0.0
        %1353 = vmatpush1.msra.mxu0 0.0
        %1354 = vmatprep.subr.mxu0 0.0
        %1355 = vmatpush1.msra.mxu0 0.0
        %1356 = vmatprep.subr.mxu0 0.0
        %1357 = vmatpush1.msra.mxu0 0.0
        %1358 = vmatprep.subr.mxu0 0.0
        %1359 = vmatpush1.msra.mxu0 0.0
        %1360 = vmatprep.mubr.f32.mxu0 0.0
        %1361 = vmatmul.mubr.f32.gmra.mrb[0].mxu0 %v1081
        %v1362 = vpop.f32.mrb[0].mxu0
        %v1363 = vadd.f32 0.0, %v1362
        %v1364 = vpop.f32.mrb[0].mxu0
        %v1365 = vadd.f32 0.0, %v1364
        %1366 = vdwg.mxu0
        %1367 = vmatprep.subr.mxu0 0.0
        %1368 = vmatpush1.msra.mxu0 %v1069
        %1369 = vmatprep.subr.mxu0 0.0
        %1370 = vmatpush1.msra.mxu0 0.0
        %1371 = vmatprep.subr.mxu0 0.0
        %1372 = vmatpush1.msra.mxu0 0.0
        %1373 = vmatprep.subr.mxu0 0.0
        %1374 = vmatpush1.msra.mxu0 0.0
        %1375 = vmatprep.subr.mxu0 0.0
        %1376 = vmatpush1.msra.mxu0 0.0
        %1377 = vmatprep.subr.mxu0 0.0
        %1378 = vmatpush1.msra.mxu0 0.0
        %1379 = vmatprep.subr.mxu0 0.0
        %1380 = vmatpush1.msra.mxu0 0.0
        %1381 = vmatprep.subr.mxu0 0.0
        %1382 = vmatpush1.msra.mxu0 0.0
        %1383 = vmatprep.subr.mxu0 0.0
        %1384 = vmatpush1.msra.mxu0 0.0
        %1385 = vmatprep.subr.mxu0 0.0
        %1386 = vmatpush1.msra.mxu0 0.0
        %1387 = vmatprep.subr.mxu0 0.0
        %1388 = vmatpush1.msra.mxu0 0.0
        %1389 = vmatprep.subr.mxu0 0.0
        %1390 = vmatpush1.msra.mxu0 0.0
        %1391 = vmatprep.subr.mxu0 0.0
        %1392 = vmatpush1.msra.mxu0 0.0
        %1393 = vmatprep.subr.mxu0 0.0
        %1394 = vmatpush1.msra.mxu0 0.0
        %1395 = vmatprep.subr.mxu0 0.0
        %1396 = vmatpush1.msra.mxu0 0.0
        %1397 = vmatprep.subr.mxu0 0.0
        %1398 = vmatpush1.msra.mxu0 0.0
        %1399 = vmatprep.subr.mxu0 0.0
        %1400 = vmatpush1.msra.mxu0 0.0
        %1401 = vmatprep.subr.mxu0 0.0
        %1402 = vmatpush1.msra.mxu0 0.0
        %1403 = vmatprep.subr.mxu0 0.0
        %1404 = vmatpush1.msra.mxu0 0.0
        %1405 = vmatprep.subr.mxu0 0.0
        %1406 = vmatpush1.msra.mxu0 0.0
        %1407 = vmatprep.subr.mxu0 0.0
        %1408 = vmatpush1.msra.mxu0 0.0
        %1409 = vmatprep.subr.mxu0 0.0
        %1410 = vmatpush1.msra.mxu0 0.0
        %1411 = vmatprep.subr.mxu0 0.0
        %1412 = vmatpush1.msra.mxu0 0.0
        %1413 = vmatprep.subr.mxu0 0.0
        %1414 = vmatpush1.msra.mxu0 0.0
        %1415 = vmatprep.subr.mxu0 0.0
        %1416 = vmatpush1.msra.mxu0 0.0
        %1417 = vmatprep.subr.mxu0 0.0
        %1418 = vmatpush1.msra.mxu0 0.0
        %1419 = vmatprep.subr.mxu0 0.0
        %1420 = vmatpush1.msra.mxu0 0.0
        %1421 = vmatprep.subr.mxu0 0.0
        %1422 = vmatpush1.msra.mxu0 0.0
        %1423 = vmatprep.subr.mxu0 0.0
        %1424 = vmatpush1.msra.mxu0 0.0
        %1425 = vmatprep.subr.mxu0 0.0
        %1426 = vmatpush1.msra.mxu0 0.0
        %1427 = vmatprep.subr.mxu0 0.0
        %1428 = vmatpush1.msra.mxu0 0.0
        %1429 = vmatprep.subr.mxu0 0.0
        %1430 = vmatpush1.msra.mxu0 0.0
        %1431 = vmatprep.mubr.f32.mxu0 0.0
        %1432 = vmatmul.mubr.f32.gmra.mrb[0].mxu0 %v1081
        %v1433 = vpop.f32.mrb[0].mxu0
        %v1434 = vadd.f32 0.0, %v1433
        %v1435 = vpop.f32.mrb[0].mxu0
        %1436 = vdwg.mxu0
        %v1438 = vsel %vm1079, %v1008, 0
        %1440 = vmatprep.subr.mxu0 %v1010
        %1441 = vmatpush1.msra.mxu0 %v1009
        %1442 = vmatprep.subr.mxu0 0.0
        %1443 = vmatpush1.msra.mxu0 0.0
        %1444 = vmatprep.subr.mxu0 0.0
        %1445 = vmatpush1.msra.mxu0 0.0
        %1446 = vmatprep.subr.mxu0 0.0
        %1447 = vmatpush1.msra.mxu0 0.0
        %1448 = vmatprep.subr.mxu0 0.0
        %1449 = vmatpush1.msra.mxu0 0.0
        %1450 = vmatprep.subr.mxu0 0.0
        %1451 = vmatpush1.msra.mxu0 0.0
        %1452 = vmatprep.subr.mxu0 0.0
        %1453 = vmatpush1.msra.mxu0 0.0
        %1454 = vmatprep.subr.mxu0 0.0
        %1455 = vmatpush1.msra.mxu0 0.0
        %1456 = vmatprep.subr.mxu0 0.0
        %1457 = vmatpush1.msra.mxu0 0.0
        %1458 = vmatprep.subr.mxu0 0.0
        %1459 = vmatpush1.msra.mxu0 0.0
        %1460 = vmatprep.subr.mxu0 0.0
        %1461 = vmatpush1.msra.mxu0 0.0
        %1462 = vmatprep.subr.mxu0 0.0
        %1463 = vmatpush1.msra.mxu0 0.0
        %1464 = vmatprep.subr.mxu0 0.0
        %1465 = vmatpush1.msra.mxu0 0.0
        %1466 = vmatprep.subr.mxu0 0.0
        %1467 = vmatpush1.msra.mxu0 0.0
        %1468 = vmatprep.subr.mxu0 0.0
        %1469 = vmatpush1.msra.mxu0 0.0
        %1470 = vmatprep.subr.mxu0 0.0
        %1471 = vmatpush1.msra.mxu0 0.0
        %1472 = vmatprep.subr.mxu0 0.0
        %1473 = vmatpush1.msra.mxu0 0.0
        %1474 = vmatprep.subr.mxu0 0.0
        %1475 = vmatpush1.msra.mxu0 0.0
        %1476 = vmatprep.subr.mxu0 0.0
        %1477 = vmatpush1.msra.mxu0 0.0
        %1478 = vmatprep.subr.mxu0 0.0
        %1479 = vmatpush1.msra.mxu0 0.0
        %1480 = vmatprep.subr.mxu0 0.0
        %1481 = vmatpush1.msra.mxu0 0.0
        %1482 = vmatprep.subr.mxu0 0.0
        %1483 = vmatpush1.msra.mxu0 0.0
        %1484 = vmatprep.subr.mxu0 0.0
        %1485 = vmatpush1.msra.mxu0 0.0
        %1486 = vmatprep.subr.mxu0 0.0
        %1487 = vmatpush1.msra.mxu0 0.0
        %1488 = vmatprep.subr.mxu0 0.0
        %1489 = vmatpush1.msra.mxu0 0.0
        %1490 = vmatprep.subr.mxu0 0.0
        %1491 = vmatpush1.msra.mxu0 0.0
        %1492 = vmatprep.subr.mxu0 0.0
        %1493 = vmatpush1.msra.mxu0 0.0
        %1494 = vmatprep.subr.mxu0 0.0
        %1495 = vmatpush1.msra.mxu0 0.0
        %1496 = vmatprep.subr.mxu0 0.0
        %1497 = vmatpush1.msra.mxu0 0.0
        %1498 = vmatprep.subr.mxu0 0.0
        %1499 = vmatpush1.msra.mxu0 0.0
        %1500 = vmatprep.subr.mxu0 0.0
        %1501 = vmatpush1.msra.mxu0 0.0
        %1502 = vmatprep.subr.mxu0 0.0
        %1503 = vmatpush1.msra.mxu0 0.0
        %1504 = vmatprep.mubr.f32.mxu0 0.0
        %1505 = vmatmul.mubr.f32.gmra.mrb[0].mxu0 %v1438
        %v1506 = vpop.f32.mrb[0].mxu0
        %v1507 = vadd.f32 %v1150, %v1506
        %v1508 = vpop.f32.mrb[0].mxu0
        %v1509 = vadd.f32 %v1152, %v1508
        %1510 = vdwg.mxu0
        %1511 = vmatprep.subr.mxu0 %v1012
        %1512 = vmatpush1.msra.mxu0 %v1011
        %1513 = vmatprep.subr.mxu0 0.0
        %1514 = vmatpush1.msra.mxu0 0.0
        %1515 = vmatprep.subr.mxu0 0.0
        %1516 = vmatpush1.msra.mxu0 0.0
        %1517 = vmatprep.subr.mxu0 0.0
        %1518 = vmatpush1.msra.mxu0 0.0
        %1519 = vmatprep.subr.mxu0 0.0
        %1520 = vmatpush1.msra.mxu0 0.0
        %1521 = vmatprep.subr.mxu0 0.0
        %1522 = vmatpush1.msra.mxu0 0.0
        %1523 = vmatprep.subr.mxu0 0.0
        %1524 = vmatpush1.msra.mxu0 0.0
        %1525 = vmatprep.subr.mxu0 0.0
        %1526 = vmatpush1.msra.mxu0 0.0
        %1527 = vmatprep.subr.mxu0 0.0
        %1528 = vmatpush1.msra.mxu0 0.0
        %1529 = vmatprep.subr.mxu0 0.0
        %1530 = vmatpush1.msra.mxu0 0.0
        %1531 = vmatprep.subr.mxu0 0.0
        %1532 = vmatpush1.msra.mxu0 0.0
        %1533 = vmatprep.subr.mxu0 0.0
        %1534 = vmatpush1.msra.mxu0 0.0
        %1535 = vmatprep.subr.mxu0 0.0
        %1536 = vmatpush1.msra.mxu0 0.0
        %1537 = vmatprep.subr.mxu0 0.0
        %1538 = vmatpush1.msra.mxu0 0.0
        %1539 = vmatprep.subr.mxu0 0.0
        %1540 = vmatpush1.msra.mxu0 0.0
        %1541 = vmatprep.subr.mxu0 0.0
        %1542 = vmatpush1.msra.mxu0 0.0
        %1543 = vmatprep.subr.mxu0 0.0
        %1544 = vmatpush1.msra.mxu0 0.0
        %1545 = vmatprep.subr.mxu0 0.0
        %1546 = vmatpush1.msra.mxu0 0.0
        %1547 = vmatprep.subr.mxu0 0.0
        %1548 = vmatpush1.msra.mxu0 0.0
        %1549 = vmatprep.subr.mxu0 0.0
        %1550 = vmatpush1.msra.mxu0 0.0
        %1551 = vmatprep.subr.mxu0 0.0
        %1552 = vmatpush1.msra.mxu0 0.0
        %1553 = vmatprep.subr.mxu0 0.0
        %1554 = vmatpush1.msra.mxu0 0.0
        %1555 = vmatprep.subr.mxu0 0.0
        %1556 = vmatpush1.msra.mxu0 0.0
        %1557 = vmatprep.subr.mxu0 0.0
        %1558 = vmatpush1.msra.mxu0 0.0
        %1559 = vmatprep.subr.mxu0 0.0
        %1560 = vmatpush1.msra.mxu0 0.0
        %1561 = vmatprep.subr.mxu0 0.0
        %1562 = vmatpush1.msra.mxu0 0.0
        %1563 = vmatprep.subr.mxu0 0.0
        %1564 = vmatpush1.msra.mxu0 0.0
        %1565 = vmatprep.subr.mxu0 0.0
        %1566 = vmatpush1.msra.mxu0 0.0
        %1567 = vmatprep.subr.mxu0 0.0
        %1568 = vmatpush1.msra.mxu0 0.0
        %1569 = vmatprep.subr.mxu0 0.0
        %1570 = vmatpush1.msra.mxu0 0.0
        %1571 = vmatprep.subr.mxu0 0.0
        %1572 = vmatpush1.msra.mxu0 0.0
        %1573 = vmatprep.subr.mxu0 0.0
        %1574 = vmatpush1.msra.mxu0 0.0
        %1575 = vmatprep.mubr.f32.mxu0 0.0
        %1576 = vmatmul.mubr.f32.gmra.mrb[0].mxu0 %v1438
        %v1577 = vpop.f32.mrb[0].mxu0
        %v1578 = vadd.f32 %v1221, %v1577
        %v1579 = vpop.f32.mrb[0].mxu0
        %v1580 = vadd.f32 %v1223, %v1579
        %1581 = vdwg.mxu0
        %1582 = vmatprep.subr.mxu0 %v1014
        %1583 = vmatpush1.msra.mxu0 %v1013
        %1584 = vmatprep.subr.mxu0 0.0
        %1585 = vmatpush1.msra.mxu0 0.0
        %1586 = vmatprep.subr.mxu0 0.0
        %1587 = vmatpush1.msra.mxu0 0.0
        %1588 = vmatprep.subr.mxu0 0.0
        %1589 = vmatpush1.msra.mxu0 0.0
        %1590 = vmatprep.subr.mxu0 0.0
        %1591 = vmatpush1.msra.mxu0 0.0
        %1592 = vmatprep.subr.mxu0 0.0
        %1593 = vmatpush1.msra.mxu0 0.0
        %1594 = vmatprep.subr.mxu0 0.0
        %1595 = vmatpush1.msra.mxu0 0.0
        %1596 = vmatprep.subr.mxu0 0.0
        %1597 = vmatpush1.msra.mxu0 0.0
        %1598 = vmatprep.subr.mxu0 0.0
        %1599 = vmatpush1.msra.mxu0 0.0
        %1600 = vmatprep.subr.mxu0 0.0
        %1601 = vmatpush1.msra.mxu0 0.0
        %1602 = vmatprep.subr.mxu0 0.0
        %1603 = vmatpush1.msra.mxu0 0.0
        %1604 = vmatprep.subr.mxu0 0.0
        %1605 = vmatpush1.msra.mxu0 0.0
        %1606 = vmatprep.subr.mxu0 0.0
        %1607 = vmatpush1.msra.mxu0 0.0
        %1608 = vmatprep.subr.mxu0 0.0
        %1609 = vmatpush1.msra.mxu0 0.0
        %1610 = vmatprep.subr.mxu0 0.0
        %1611 = vmatpush1.msra.mxu0 0.0
        %1612 = vmatprep.subr.mxu0 0.0
        %1613 = vmatpush1.msra.mxu0 0.0
        %1614 = vmatprep.subr.mxu0 0.0
        %1615 = vmatpush1.msra.mxu0 0.0
        %1616 = vmatprep.subr.mxu0 0.0
        %1617 = vmatpush1.msra.mxu0 0.0
        %1618 = vmatprep.subr.mxu0 0.0
        %1619 = vmatpush1.msra.mxu0 0.0
        %1620 = vmatprep.subr.mxu0 0.0
        %1621 = vmatpush1.msra.mxu0 0.0
        %1622 = vmatprep.subr.mxu0 0.0
        %1623 = vmatpush1.msra.mxu0 0.0
        %1624 = vmatprep.subr.mxu0 0.0
        %1625 = vmatpush1.msra.mxu0 0.0
        %1626 = vmatprep.subr.mxu0 0.0
        %1627 = vmatpush1.msra.mxu0 0.0
        %1628 = vmatprep.subr.mxu0 0.0
        %1629 = vmatpush1.msra.mxu0 0.0
        %1630 = vmatprep.subr.mxu0 0.0
        %1631 = vmatpush1.msra.mxu0 0.0
        %1632 = vmatprep.subr.mxu0 0.0
        %1633 = vmatpush1.msra.mxu0 0.0
        %1634 = vmatprep.subr.mxu0 0.0
        %1635 = vmatpush1.msra.mxu0 0.0
        %1636 = vmatprep.subr.mxu0 0.0
        %1637 = vmatpush1.msra.mxu0 0.0
        %1638 = vmatprep.subr.mxu0 0.0
        %1639 = vmatpush1.msra.mxu0 0.0
        %1640 = vmatprep.subr.mxu0 0.0
        %1641 = vmatpush1.msra.mxu0 0.0
        %1642 = vmatprep.subr.mxu0 0.0
        %1643 = vmatpush1.msra.mxu0 0.0
        %1644 = vmatprep.subr.mxu0 0.0
        %1645 = vmatpush1.msra.mxu0 0.0
        %1646 = vmatprep.mubr.f32.mxu0 0.0
        %1647 = vmatmul.mubr.f32.gmra.mrb[0].mxu0 %v1438
        %v1648 = vpop.f32.mrb[0].mxu0
        %v1649 = vadd.f32 %v1292, %v1648
        %v1650 = vpop.f32.mrb[0].mxu0
        %v1651 = vadd.f32 %v1294, %v1650
        %1652 = vdwg.mxu0
        %1653 = vmatprep.subr.mxu0 %v1016
        %1654 = vmatpush1.msra.mxu0 %v1015
        %1655 = vmatprep.subr.mxu0 0.0
        %1656 = vmatpush1.msra.mxu0 0.0
        %1657 = vmatprep.subr.mxu0 0.0
        %1658 = vmatpush1.msra.mxu0 0.0
        %1659 = vmatprep.subr.mxu0 0.0
        %1660 = vmatpush1.msra.mxu0 0.0
        %1661 = vmatprep.subr.mxu0 0.0
        %1662 = vmatpush1.msra.mxu0 0.0
        %1663 = vmatprep.subr.mxu0 0.0
        %1664 = vmatpush1.msra.mxu0 0.0
        %1665 = vmatprep.subr.mxu0 0.0
        %1666 = vmatpush1.msra.mxu0 0.0
        %1667 = vmatprep.subr.mxu0 0.0
        %1668 = vmatpush1.msra.mxu0 0.0
        %1669 = vmatprep.subr.mxu0 0.0
        %1670 = vmatpush1.msra.mxu0 0.0
        %1671 = vmatprep.subr.mxu0 0.0
        %1672 = vmatpush1.msra.mxu0 0.0
        %1673 = vmatprep.subr.mxu0 0.0
        %1674 = vmatpush1.msra.mxu0 0.0
        %1675 = vmatprep.subr.mxu0 0.0
        %1676 = vmatpush1.msra.mxu0 0.0
        %1677 = vmatprep.subr.mxu0 0.0
        %1678 = vmatpush1.msra.mxu0 0.0
        %1679 = vmatprep.subr.mxu0 0.0
        %1680 = vmatpush1.msra.mxu0 0.0
        %1681 = vmatprep.subr.mxu0 0.0
        %1682 = vmatpush1.msra.mxu0 0.0
        %1683 = vmatprep.subr.mxu0 0.0
        %1684 = vmatpush1.msra.mxu0 0.0
        %1685 = vmatprep.subr.mxu0 0.0
        %1686 = vmatpush1.msra.mxu0 0.0
        %1687 = vmatprep.subr.mxu0 0.0
        %1688 = vmatpush1.msra.mxu0 0.0
        %1689 = vmatprep.subr.mxu0 0.0
        %1690 = vmatpush1.msra.mxu0 0.0
        %1691 = vmatprep.subr.mxu0 0.0
        %1692 = vmatpush1.msra.mxu0 0.0
        %1693 = vmatprep.subr.mxu0 0.0
        %1694 = vmatpush1.msra.mxu0 0.0
        %1695 = vmatprep.subr.mxu0 0.0
        %1696 = vmatpush1.msra.mxu0 0.0
        %1697 = vmatprep.subr.mxu0 0.0
        %1698 = vmatpush1.msra.mxu0 0.0
        %1699 = vmatprep.subr.mxu0 0.0
        %1700 = vmatpush1.msra.mxu0 0.0
        %1701 = vmatprep.subr.mxu0 0.0
        %1702 = vmatpush1.msra.mxu0 0.0
        %1703 = vmatprep.subr.mxu0 0.0
        %1704 = vmatpush1.msra.mxu0 0.0
        %1705 = vmatprep.subr.mxu0 0.0
        %1706 = vmatpush1.msra.mxu0 0.0
        %1707 = vmatprep.subr.mxu0 0.0
        %1708 = vmatpush1.msra.mxu0 0.0
        %1709 = vmatprep.subr.mxu0 0.0
        %1710 = vmatpush1.msra.mxu0 0.0
        %1711 = vmatprep.subr.mxu0 0.0
        %1712 = vmatpush1.msra.mxu0 0.0
        %1713 = vmatprep.subr.mxu0 0.0
        %1714 = vmatpush1.msra.mxu0 0.0
        %1715 = vmatprep.subr.mxu0 0.0
        %1716 = vmatpush1.msra.mxu0 0.0
        %1717 = vmatprep.mubr.f32.mxu0 0.0
        %1718 = vmatmul.mubr.f32.gmra.mrb[0].mxu0 %v1438
        %v1719 = vpop.f32.mrb[0].mxu0
        %v1720 = vadd.f32 %v1363, %v1719
        %v1721 = vpop.f32.mrb[0].mxu0
        %v1722 = vadd.f32 %v1365, %v1721
        %1723 = vdwg.mxu0
        %1724 = vmatprep.subr.mxu0 0.0
        %1725 = vmatpush1.msra.mxu0 %v1017
        %1726 = vmatprep.subr.mxu0 0.0
        %1727 = vmatpush1.msra.mxu0 0.0
        %1728 = vmatprep.subr.mxu0 0.0
        %1729 = vmatpush1.msra.mxu0 0.0
        %1730 = vmatprep.subr.mxu0 0.0
        %1731 = vmatpush1.msra.mxu0 0.0
        %1732 = vmatprep.subr.mxu0 0.0
        %1733 = vmatpush1.msra.mxu0 0.0
        %1734 = vmatprep.subr.mxu0 0.0
        %1735 = vmatpush1.msra.mxu0 0.0
        %1736 = vmatprep.subr.mxu0 0.0
        %1737 = vmatpush1.msra.mxu0 0.0
        %1738 = vmatprep.subr.mxu0 0.0
        %1739 = vmatpush1.msra.mxu0 0.0
        %1740 = vmatprep.subr.mxu0 0.0
        %1741 = vmatpush1.msra.mxu0 0.0
        %1742 = vmatprep.subr.mxu0 0.0
        %1743 = vmatpush1.msra.mxu0 0.0
        %1744 = vmatprep.subr.mxu0 0.0
        %1745 = vmatpush1.msra.mxu0 0.0
        %1746 = vmatprep.subr.mxu0 0.0
        %1747 = vmatpush1.msra.mxu0 0.0
        %1748 = vmatprep.subr.mxu0 0.0
        %1749 = vmatpush1.msra.mxu0 0.0
        %1750 = vmatprep.subr.mxu0 0.0
        %1751 = vmatpush1.msra.mxu0 0.0
        %1752 = vmatprep.subr.mxu0 0.0
        %1753 = vmatpush1.msra.mxu0 0.0
        %1754 = vmatprep.subr.mxu0 0.0
        %1755 = vmatpush1.msra.mxu0 0.0
        %1756 = vmatprep.subr.mxu0 0.0
        %1757 = vmatpush1.msra.mxu0 0.0
        %1758 = vmatprep.subr.mxu0 0.0
        %1759 = vmatpush1.msra.mxu0 0.0
        %1760 = vmatprep.subr.mxu0 0.0
        %1761 = vmatpush1.msra.mxu0 0.0
        %1762 = vmatprep.subr.mxu0 0.0
        %1763 = vmatpush1.msra.mxu0 0.0
        %1764 = vmatprep.subr.mxu0 0.0
        %1765 = vmatpush1.msra.mxu0 0.0
        %1766 = vmatprep.subr.mxu0 0.0
        %1767 = vmatpush1.msra.mxu0 0.0
        %1768 = vmatprep.subr.mxu0 0.0
        %1769 = vmatpush1.msra.mxu0 0.0
        %1770 = vmatprep.subr.mxu0 0.0
        %1771 = vmatpush1.msra.mxu0 0.0
        %1772 = vmatprep.subr.mxu0 0.0
        %1773 = vmatpush1.msra.mxu0 0.0
        %1774 = vmatprep.subr.mxu0 0.0
        %1775 = vmatpush1.msra.mxu0 0.0
        %1776 = vmatprep.subr.mxu0 0.0
        %1777 = vmatpush1.msra.mxu0 0.0
        %1778 = vmatprep.subr.mxu0 0.0
        %1779 = vmatpush1.msra.mxu0 0.0
        %1780 = vmatprep.subr.mxu0 0.0
        %1781 = vmatpush1.msra.mxu0 0.0
        %1782 = vmatprep.subr.mxu0 0.0
        %1783 = vmatpush1.msra.mxu0 0.0
        %1784 = vmatprep.subr.mxu0 0.0
        %1785 = vmatpush1.msra.mxu0 0.0
        %1786 = vmatprep.subr.mxu0 0.0
        %1787 = vmatpush1.msra.mxu0 0.0
        %1788 = vmatprep.mubr.f32.mxu0 0.0
        %1789 = vmatmul.mubr.f32.gmra.mrb[0].mxu0 %v1438
        %v1790 = vpop.f32.mrb[0].mxu0
        %v1791 = vadd.f32 %v1434, %v1790
        %v1792 = vpop.f32.mrb[0].mxu0
        %1793 = vdwg.mxu0
        %s1794 = scalar_lea.vmem %s2, 16
        %v1795 = vld [vmem:[%s1794] sm:$0xff]
        %1796 = vrot.lane.b32.xlu0 %v1020, 126
        %v1797 = vpop.permute.xlu0 %1796
        %1798 = vrot.lane.b32.xlu0 %v1021, 126
        %v1799 = vpop.permute.xlu0 %1798
        %1800 = vrot.lane.b32.xlu0 %v1022, 126
        %v1801 = vpop.permute.xlu0 %1800
        %1802 = vrot.lane.b32.xlu0 %v1023, 126
        %v1803 = vpop.permute.xlu0 %1802
        %1804 = vrot.lane.b32.xlu0 %v1024, 126
        %v1805 = vpop.permute.xlu0 %1804
        %1806 = vrot.lane.b32.xlu0 %v1025, 126
        %v1807 = vpop.permute.xlu0 %1806
        %1808 = vrot.lane.b32.xlu0 %v1026, 126
        %v1809 = vpop.permute.xlu0 %1808
        %1810 = vrot.lane.b32.xlu0 %v1027, 126
        %v1811 = vpop.permute.xlu0 %1810
        %1812 = vrot.lane.b32.xlu0 %v1028, 126
        %v1813 = vpop.permute.xlu0 %1812
        %1814 = vrot.lane.b32.xlu0 %v1029, 126
        %v1815 = vpop.permute.xlu0 %1814
        %vm1816 = vcmask 1031168
        %v1817 = vsel %vm1816, %v1797, %v1799
        %v1818 = vsel %vm1816, %v1799, %v1801
        %v1819 = vsel %vm1816, %v1801, %v1803
        %v1820 = vsel %vm1816, %v1803, %v1805
        %v1821 = vsel %vm1816, %v1805, %v1807
        %v1822 = vsel %vm1816, %v1807, %v1809
        %v1823 = vsel %vm1816, %v1809, %v1811
        %v1824 = vsel %vm1816, %v1811, %v1813
        %v1825 = vsel %vm1816, %v1813, %v1815
        %v1836 = vsel %vm1079, %v1795, 0
        %1838 = vmatprep.subr.mxu0 %v1818
        %1839 = vmatpush1.msra.mxu0 %v1817
        %1840 = vmatprep.subr.mxu0 0.0
        %1841 = vmatpush1.msra.mxu0 0.0
        %1842 = vmatprep.subr.mxu0 0.0
        %1843 = vmatpush1.msra.mxu0 0.0
        %1844 = vmatprep.subr.mxu0 0.0
        %1845 = vmatpush1.msra.mxu0 0.0
        %1846 = vmatprep.subr.mxu0 0.0
        %1847 = vmatpush1.msra.mxu0 0.0
        %1848 = vmatprep.subr.mxu0 0.0
        %1849 = vmatpush1.msra.mxu0 0.0
        %1850 = vmatprep.subr.mxu0 0.0
        %1851 = vmatpush1.msra.mxu0 0.0
        %1852 = vmatprep.subr.mxu0 0.0
        %1853 = vmatpush1.msra.mxu0 0.0
        %1854 = vmatprep.subr.mxu0 0.0
        %1855 = vmatpush1.msra.mxu0 0.0
        %1856 = vmatprep.subr.mxu0 0.0
        %1857 = vmatpush1.msra.mxu0 0.0
        %1858 = vmatprep.subr.mxu0 0.0
        %1859 = vmatpush1.msra.mxu0 0.0
        %1860 = vmatprep.subr.mxu0 0.0
        %1861 = vmatpush1.msra.mxu0 0.0
        %1862 = vmatprep.subr.mxu0 0.0
        %1863 = vmatpush1.msra.mxu0 0.0
        %1864 = vmatprep.subr.mxu0 0.0
        %1865 = vmatpush1.msra.mxu0 0.0
        %1866 = vmatprep.subr.mxu0 0.0
        %1867 = vmatpush1.msra.mxu0 0.0
        %1868 = vmatprep.subr.mxu0 0.0
        %1869 = vmatpush1.msra.mxu0 0.0
        %1870 = vmatprep.subr.mxu0 0.0
        %1871 = vmatpush1.msra.mxu0 0.0
        %1872 = vmatprep.subr.mxu0 0.0
        %1873 = vmatpush1.msra.mxu0 0.0
        %1874 = vmatprep.subr.mxu0 0.0
        %1875 = vmatpush1.msra.mxu0 0.0
        %1876 = vmatprep.subr.mxu0 0.0
        %1877 = vmatpush1.msra.mxu0 0.0
        %1878 = vmatprep.subr.mxu0 0.0
        %1879 = vmatpush1.msra.mxu0 0.0
        %1880 = vmatprep.subr.mxu0 0.0
        %1881 = vmatpush1.msra.mxu0 0.0
        %1882 = vmatprep.subr.mxu0 0.0
        %1883 = vmatpush1.msra.mxu0 0.0
        %1884 = vmatprep.subr.mxu0 0.0
        %1885 = vmatpush1.msra.mxu0 0.0
        %1886 = vmatprep.subr.mxu0 0.0
        %1887 = vmatpush1.msra.mxu0 0.0
        %1888 = vmatprep.subr.mxu0 0.0
        %1889 = vmatpush1.msra.mxu0 0.0
        %1890 = vmatprep.subr.mxu0 0.0
        %1891 = vmatpush1.msra.mxu0 0.0
        %1892 = vmatprep.subr.mxu0 0.0
        %1893 = vmatpush1.msra.mxu0 0.0
        %1894 = vmatprep.subr.mxu0 0.0
        %1895 = vmatpush1.msra.mxu0 0.0
        %1896 = vmatprep.subr.mxu0 0.0
        %1897 = vmatpush1.msra.mxu0 0.0
        %1898 = vmatprep.subr.mxu0 0.0
        %1899 = vmatpush1.msra.mxu0 0.0
        %1900 = vmatprep.subr.mxu0 0.0
        %1901 = vmatpush1.msra.mxu0 0.0
        %1902 = vmatprep.mubr.f32.mxu0 0.0
        %1903 = vmatmul.mubr.f32.gmra.mrb[0].mxu0 %v1836
        %v1904 = vpop.f32.mrb[0].mxu0
        %v1905 = vadd.f32 0.0, %v1904
        %v1906 = vpop.f32.mrb[0].mxu0
        %v1907 = vadd.f32 0.0, %v1906
        %1908 = vdwg.mxu0
        %1909 = vmatprep.subr.mxu0 %v1820
        %1910 = vmatpush1.msra.mxu0 %v1819
        %1911 = vmatprep.subr.mxu0 0.0
        %1912 = vmatpush1.msra.mxu0 0.0
        %1913 = vmatprep.subr.mxu0 0.0
        %1914 = vmatpush1.msra.mxu0 0.0
        %1915 = vmatprep.subr.mxu0 0.0
        %1916 = vmatpush1.msra.mxu0 0.0
        %1917 = vmatprep.subr.mxu0 0.0
        %1918 = vmatpush1.msra.mxu0 0.0
        %1919 = vmatprep.subr.mxu0 0.0
        %1920 = vmatpush1.msra.mxu0 0.0
        %1921 = vmatprep.subr.mxu0 0.0
        %1922 = vmatpush1.msra.mxu0 0.0
        %1923 = vmatprep.subr.mxu0 0.0
        %1924 = vmatpush1.msra.mxu0 0.0
        %1925 = vmatprep.subr.mxu0 0.0
        %1926 = vmatpush1.msra.mxu0 0.0
        %1927 = vmatprep.subr.mxu0 0.0
        %1928 = vmatpush1.msra.mxu0 0.0
        %1929 = vmatprep.subr.mxu0 0.0
        %1930 = vmatpush1.msra.mxu0 0.0
        %1931 = vmatprep.subr.mxu0 0.0
        %1932 = vmatpush1.msra.mxu0 0.0
        %1933 = vmatprep.subr.mxu0 0.0
        %1934 = vmatpush1.msra.mxu0 0.0
        %1935 = vmatprep.subr.mxu0 0.0
        %1936 = vmatpush1.msra.mxu0 0.0
        %1937 = vmatprep.subr.mxu0 0.0
        %1938 = vmatpush1.msra.mxu0 0.0
        %1939 = vmatprep.subr.mxu0 0.0
        %1940 = vmatpush1.msra.mxu0 0.0
        %1941 = vmatprep.subr.mxu0 0.0
        %1942 = vmatpush1.msra.mxu0 0.0
        %1943 = vmatprep.subr.mxu0 0.0
        %1944 = vmatpush1.msra.mxu0 0.0
        %1945 = vmatprep.subr.mxu0 0.0
        %1946 = vmatpush1.msra.mxu0 0.0
        %1947 = vmatprep.subr.mxu0 0.0
        %1948 = vmatpush1.msra.mxu0 0.0
        %1949 = vmatprep.subr.mxu0 0.0
        %1950 = vmatpush1.msra.mxu0 0.0
        %1951 = vmatprep.subr.mxu0 0.0
        %1952 = vmatpush1.msra.mxu0 0.0
        %1953 = vmatprep.subr.mxu0 0.0
        %1954 = vmatpush1.msra.mxu0 0.0
        %1955 = vmatprep.subr.mxu0 0.0
        %1956 = vmatpush1.msra.mxu0 0.0
        %1957 = vmatprep.subr.mxu0 0.0
        %1958 = vmatpush1.msra.mxu0 0.0
        %1959 = vmatprep.subr.mxu0 0.0
        %1960 = vmatpush1.msra.mxu0 0.0
        %1961 = vmatprep.subr.mxu0 0.0
        %1962 = vmatpush1.msra.mxu0 0.0
        %1963 = vmatprep.subr.mxu0 0.0
        %1964 = vmatpush1.msra.mxu0 0.0
        %1965 = vmatprep.subr.mxu0 0.0
        %1966 = vmatpush1.msra.mxu0 0.0
        %1967 = vmatprep.subr.mxu0 0.0
        %1968 = vmatpush1.msra.mxu0 0.0
        %1969 = vmatprep.subr.mxu0 0.0
        %1970 = vmatpush1.msra.mxu0 0.0
        %1971 = vmatprep.subr.mxu0 0.0
        %1972 = vmatpush1.msra.mxu0 0.0
        %1973 = vmatprep.mubr.f32.mxu0 0.0
        %1974 = vmatmul.mubr.f32.gmra.mrb[0].mxu0 %v1836
        %v1975 = vpop.f32.mrb[0].mxu0
        %v1976 = vadd.f32 0.0, %v1975
        %v1977 = vpop.f32.mrb[0].mxu0
        %v1978 = vadd.f32 0.0, %v1977
        %1979 = vdwg.mxu0
        %1980 = vmatprep.subr.mxu0 %v1822
        %1981 = vmatpush1.msra.mxu0 %v1821
        %1982 = vmatprep.subr.mxu0 0.0
        %1983 = vmatpush1.msra.mxu0 0.0
        %1984 = vmatprep.subr.mxu0 0.0
        %1985 = vmatpush1.msra.mxu0 0.0
        %1986 = vmatprep.subr.mxu0 0.0
        %1987 = vmatpush1.msra.mxu0 0.0
        %1988 = vmatprep.subr.mxu0 0.0
        %1989 = vmatpush1.msra.mxu0 0.0
        %1990 = vmatprep.subr.mxu0 0.0
        %1991 = vmatpush1.msra.mxu0 0.0
        %1992 = vmatprep.subr.mxu0 0.0
        %1993 = vmatpush1.msra.mxu0 0.0
        %1994 = vmatprep.subr.mxu0 0.0
        %1995 = vmatpush1.msra.mxu0 0.0
        %1996 = vmatprep.subr.mxu0 0.0
        %1997 = vmatpush1.msra.mxu0 0.0
        %1998 = vmatprep.subr.mxu0 0.0
        %1999 = vmatpush1.msra.mxu0 0.0
        %2000 = vmatprep.subr.mxu0 0.0
        %2001 = vmatpush1.msra.mxu0 0.0
        %2002 = vmatprep.subr.mxu0 0.0
        %2003 = vmatpush1.msra.mxu0 0.0
        %2004 = vmatprep.subr.mxu0 0.0
        %2005 = vmatpush1.msra.mxu0 0.0
        %2006 = vmatprep.subr.mxu0 0.0
        %2007 = vmatpush1.msra.mxu0 0.0
        %2008 = vmatprep.subr.mxu0 0.0
        %2009 = vmatpush1.msra.mxu0 0.0
        %2010 = vmatprep.subr.mxu0 0.0
        %2011 = vmatpush1.msra.mxu0 0.0
        %2012 = vmatprep.subr.mxu0 0.0
        %2013 = vmatpush1.msra.mxu0 0.0
        %2014 = vmatprep.subr.mxu0 0.0
        %2015 = vmatpush1.msra.mxu0 0.0
        %2016 = vmatprep.subr.mxu0 0.0
        %2017 = vmatpush1.msra.mxu0 0.0
        %2018 = vmatprep.subr.mxu0 0.0
        %2019 = vmatpush1.msra.mxu0 0.0
        %2020 = vmatprep.subr.mxu0 0.0
        %2021 = vmatpush1.msra.mxu0 0.0
        %2022 = vmatprep.subr.mxu0 0.0
        %2023 = vmatpush1.msra.mxu0 0.0
        %2024 = vmatprep.subr.mxu0 0.0
        %2025 = vmatpush1.msra.mxu0 0.0
        %2026 = vmatprep.subr.mxu0 0.0
        %2027 = vmatpush1.msra.mxu0 0.0
        %2028 = vmatprep.subr.mxu0 0.0
        %2029 = vmatpush1.msra.mxu0 0.0
        %2030 = vmatprep.subr.mxu0 0.0
        %2031 = vmatpush1.msra.mxu0 0.0
        %2032 = vmatprep.subr.mxu0 0.0
        %2033 = vmatpush1.msra.mxu0 0.0
        %2034 = vmatprep.subr.mxu0 0.0
        %2035 = vmatpush1.msra.mxu0 0.0
        %2036 = vmatprep.subr.mxu0 0.0
        %2037 = vmatpush1.msra.mxu0 0.0
        %2038 = vmatprep.subr.mxu0 0.0
        %2039 = vmatpush1.msra.mxu0 0.0
        %2040 = vmatprep.subr.mxu0 0.0
        %2041 = vmatpush1.msra.mxu0 0.0
        %2042 = vmatprep.subr.mxu0 0.0
        %2043 = vmatpush1.msra.mxu0 0.0
        %2044 = vmatprep.mubr.f32.mxu0 0.0
        %2045 = vmatmul.mubr.f32.gmra.mrb[0].mxu0 %v1836
        %v2046 = vpop.f32.mrb[0].mxu0
        %v2047 = vadd.f32 0.0, %v2046
        %v2048 = vpop.f32.mrb[0].mxu0
        %v2049 = vadd.f32 0.0, %v2048
        %2050 = vdwg.mxu0
        %2051 = vmatprep.subr.mxu0 %v1824
        %2052 = vmatpush1.msra.mxu0 %v1823
        %2053 = vmatprep.subr.mxu0 0.0
        %2054 = vmatpush1.msra.mxu0 0.0
        %2055 = vmatprep.subr.mxu0 0.0
        %2056 = vmatpush1.msra.mxu0 0.0
        %2057 = vmatprep.subr.mxu0 0.0
        %2058 = vmatpush1.msra.mxu0 0.0
        %2059 = vmatprep.subr.mxu0 0.0
        %2060 = vmatpush1.msra.mxu0 0.0
        %2061 = vmatprep.subr.mxu0 0.0
        %2062 = vmatpush1.msra.mxu0 0.0
        %2063 = vmatprep.subr.mxu0 0.0
        %2064 = vmatpush1.msra.mxu0 0.0
        %2065 = vmatprep.subr.mxu0 0.0
        %2066 = vmatpush1.msra.mxu0 0.0
        %2067 = vmatprep.subr.mxu0 0.0
        %2068 = vmatpush1.msra.mxu0 0.0
        %2069 = vmatprep.subr.mxu0 0.0
        %2070 = vmatpush1.msra.mxu0 0.0
        %2071 = vmatprep.subr.mxu0 0.0
        %2072 = vmatpush1.msra.mxu0 0.0
        %2073 = vmatprep.subr.mxu0 0.0
        %2074 = vmatpush1.msra.mxu0 0.0
        %2075 = vmatprep.subr.mxu0 0.0
        %2076 = vmatpush1.msra.mxu0 0.0
        %2077 = vmatprep.subr.mxu0 0.0
        %2078 = vmatpush1.msra.mxu0 0.0
        %2079 = vmatprep.subr.mxu0 0.0
        %2080 = vmatpush1.msra.mxu0 0.0
        %2081 = vmatprep.subr.mxu0 0.0
        %2082 = vmatpush1.msra.mxu0 0.0
        %2083 = vmatprep.subr.mxu0 0.0
        %2084 = vmatpush1.msra.mxu0 0.0
        %2085 = vmatprep.subr.mxu0 0.0
        %2086 = vmatpush1.msra.mxu0 0.0
        %2087 = vmatprep.subr.mxu0 0.0
        %2088 = vmatpush1.msra.mxu0 0.0
        %2089 = vmatprep.subr.mxu0 0.0
        %2090 = vmatpush1.msra.mxu0 0.0
        %2091 = vmatprep.subr.mxu0 0.0
        %2092 = vmatpush1.msra.mxu0 0.0
        %2093 = vmatprep.subr.mxu0 0.0
        %2094 = vmatpush1.msra.mxu0 0.0
        %2095 = vmatprep.subr.mxu0 0.0
        %2096 = vmatpush1.msra.mxu0 0.0
        %2097 = vmatprep.subr.mxu0 0.0
        %2098 = vmatpush1.msra.mxu0 0.0
        %2099 = vmatprep.subr.mxu0 0.0
        %2100 = vmatpush1.msra.mxu0 0.0
        %2101 = vmatprep.subr.mxu0 0.0
        %2102 = vmatpush1.msra.mxu0 0.0
        %2103 = vmatprep.subr.mxu0 0.0
        %2104 = vmatpush1.msra.mxu0 0.0
        %2105 = vmatprep.subr.mxu0 0.0
        %2106 = vmatpush1.msra.mxu0 0.0
        %2107 = vmatprep.subr.mxu0 0.0
        %2108 = vmatpush1.msra.mxu0 0.0
        %2109 = vmatprep.subr.mxu0 0.0
        %2110 = vmatpush1.msra.mxu0 0.0
        %2111 = vmatprep.subr.mxu0 0.0
        %2112 = vmatpush1.msra.mxu0 0.0
        %2113 = vmatprep.subr.mxu0 0.0
        %2114 = vmatpush1.msra.mxu0 0.0
        %2115 = vmatprep.mubr.f32.mxu0 0.0
        %2116 = vmatmul.mubr.f32.gmra.mrb[0].mxu0 %v1836
        %v2117 = vpop.f32.mrb[0].mxu0
        %v2118 = vadd.f32 0.0, %v2117
        %v2119 = vpop.f32.mrb[0].mxu0
        %v2120 = vadd.f32 0.0, %v2119
        %2121 = vdwg.mxu0
        %2122 = vmatprep.subr.mxu0 0.0
        %2123 = vmatpush1.msra.mxu0 %v1825
        %2124 = vmatprep.subr.mxu0 0.0
        %2125 = vmatpush1.msra.mxu0 0.0
        %2126 = vmatprep.subr.mxu0 0.0
        %2127 = vmatpush1.msra.mxu0 0.0
        %2128 = vmatprep.subr.mxu0 0.0
        %2129 = vmatpush1.msra.mxu0 0.0
        %2130 = vmatprep.subr.mxu0 0.0
        %2131 = vmatpush1.msra.mxu0 0.0
        %2132 = vmatprep.subr.mxu0 0.0
        %2133 = vmatpush1.msra.mxu0 0.0
        %2134 = vmatprep.subr.mxu0 0.0
        %2135 = vmatpush1.msra.mxu0 0.0
        %2136 = vmatprep.subr.mxu0 0.0
        %2137 = vmatpush1.msra.mxu0 0.0
        %2138 = vmatprep.subr.mxu0 0.0
        %2139 = vmatpush1.msra.mxu0 0.0
        %2140 = vmatprep.subr.mxu0 0.0
        %2141 = vmatpush1.msra.mxu0 0.0
        %2142 = vmatprep.subr.mxu0 0.0
        %2143 = vmatpush1.msra.mxu0 0.0
        %2144 = vmatprep.subr.mxu0 0.0
        %2145 = vmatpush1.msra.mxu0 0.0
        %2146 = vmatprep.subr.mxu0 0.0
        %2147 = vmatpush1.msra.mxu0 0.0
        %2148 = vmatprep.subr.mxu0 0.0
        %2149 = vmatpush1.msra.mxu0 0.0
        %2150 = vmatprep.subr.mxu0 0.0
        %2151 = vmatpush1.msra.mxu0 0.0
        %2152 = vmatprep.subr.mxu0 0.0
        %2153 = vmatpush1.msra.mxu0 0.0
        %2154 = vmatprep.subr.mxu0 0.0
        %2155 = vmatpush1.msra.mxu0 0.0
        %2156 = vmatprep.subr.mxu0 0.0
        %2157 = vmatpush1.msra.mxu0 0.0
        %2158 = vmatprep.subr.mxu0 0.0
        %2159 = vmatpush1.msra.mxu0 0.0
        %2160 = vmatprep.subr.mxu0 0.0
        %2161 = vmatpush1.msra.mxu0 0.0
        %2162 = vmatprep.subr.mxu0 0.0
        %2163 = vmatpush1.msra.mxu0 0.0
        %2164 = vmatprep.subr.mxu0 0.0
        %2165 = vmatpush1.msra.mxu0 0.0
        %2166 = vmatprep.subr.mxu0 0.0
        %2167 = vmatpush1.msra.mxu0 0.0
        %2168 = vmatprep.subr.mxu0 0.0
        %2169 = vmatpush1.msra.mxu0 0.0
        %2170 = vmatprep.subr.mxu0 0.0
        %2171 = vmatpush1.msra.mxu0 0.0
        %2172 = vmatprep.subr.mxu0 0.0
        %2173 = vmatpush1.msra.mxu0 0.0
        %2174 = vmatprep.subr.mxu0 0.0
        %2175 = vmatpush1.msra.mxu0 0.0
        %2176 = vmatprep.subr.mxu0 0.0
        %2177 = vmatpush1.msra.mxu0 0.0
        %2178 = vmatprep.subr.mxu0 0.0
        %2179 = vmatpush1.msra.mxu0 0.0
        %2180 = vmatprep.subr.mxu0 0.0
        %2181 = vmatpush1.msra.mxu0 0.0
        %2182 = vmatprep.subr.mxu0 0.0
        %2183 = vmatpush1.msra.mxu0 0.0
        %2184 = vmatprep.subr.mxu0 0.0
        %2185 = vmatpush1.msra.mxu0 0.0
        %2186 = vmatprep.mubr.f32.mxu0 0.0
        %2187 = vmatmul.mubr.f32.gmra.mrb[0].mxu0 %v1836
        %v2188 = vpop.f32.mrb[0].mxu0
        %v2189 = vadd.f32 0.0, %v2188
        %v2190 = vpop.f32.mrb[0].mxu0
        %2191 = vdwg.mxu0
        %v2192 = vadd.f32 %v1507, %v1905
        %v2193 = vadd.f32 %v1509, %v1907
        %v2194 = vadd.f32 %v1578, %v1976
        %v2195 = vadd.f32 %v1580, %v1978
        %v2196 = vadd.f32 %v1649, %v2047
        %v2197 = vadd.f32 %v1651, %v2049
        %v2198 = vadd.f32 %v1720, %v2118
        %v2199 = vadd.f32 %v1722, %v2120
        %v2200 = vadd.f32 %v1791, %v2189
        %s2201 = scalar_lea.vmem %s2, 24
        %v2202 = vld [vmem:[%s2201] sm:$0xff]
        %2203 = vrot.lane.b32.xlu0 %v1020, 92
        %v2204 = vpop.permute.xlu0 %2203
        %2205 = vrot.lane.b32.xlu0 %v1021, 92
        %v2206 = vpop.permute.xlu0 %2205
        %2207 = vrot.lane.b32.xlu0 %v1022, 92
        %v2208 = vpop.permute.xlu0 %2207
        %2209 = vrot.lane.b32.xlu0 %v1023, 92
        %v2210 = vpop.permute.xlu0 %2209
        %2211 = vrot.lane.b32.xlu0 %v1024, 92
        %v2212 = vpop.permute.xlu0 %2211
        %2213 = vrot.lane.b32.xlu0 %v1025, 92
        %v2214 = vpop.permute.xlu0 %2213
        %2215 = vrot.lane.b32.xlu0 %v1026, 92
        %v2216 = vpop.permute.xlu0 %2215
        %2217 = vrot.lane.b32.xlu0 %v1027, 92
        %v2218 = vpop.permute.xlu0 %2217
        %2219 = vrot.lane.b32.xlu0 %v1028, 92
        %v2220 = vpop.permute.xlu0 %2219
        %2221 = vrot.lane.b32.xlu0 %v1029, 92
        %v2222 = vpop.permute.xlu0 %2221
        %vm2223 = vcmask 752640
        %v2224 = vsel %vm2223, %v2204, %v2206
        %v2225 = vsel %vm2223, %v2206, %v2208
        %v2226 = vsel %vm2223, %v2208, %v2210
        %v2227 = vsel %vm2223, %v2210, %v2212
        %v2228 = vsel %vm2223, %v2212, %v2214
        %v2229 = vsel %vm2223, %v2214, %v2216
        %v2230 = vsel %vm2223, %v2216, %v2218
        %v2231 = vsel %vm2223, %v2218, %v2220
        %v2232 = vsel %vm2223, %v2220, %v2222
        %v2243 = vsel %vm1079, %v2202, 0
        %2245 = vmatprep.subr.mxu0 %v2225
        %2246 = vmatpush1.msra.mxu0 %v2224
        %2247 = vmatprep.subr.mxu0 0.0
        %2248 = vmatpush1.msra.mxu0 0.0
        %2249 = vmatprep.subr.mxu0 0.0
        %2250 = vmatpush1.msra.mxu0 0.0
        %2251 = vmatprep.subr.mxu0 0.0
        %2252 = vmatpush1.msra.mxu0 0.0
        %2253 = vmatprep.subr.mxu0 0.0
        %2254 = vmatpush1.msra.mxu0 0.0
        %2255 = vmatprep.subr.mxu0 0.0
        %2256 = vmatpush1.msra.mxu0 0.0
        %2257 = vmatprep.subr.mxu0 0.0
        %2258 = vmatpush1.msra.mxu0 0.0
        %2259 = vmatprep.subr.mxu0 0.0
        %2260 = vmatpush1.msra.mxu0 0.0
        %2261 = vmatprep.subr.mxu0 0.0
        %2262 = vmatpush1.msra.mxu0 0.0
        %2263 = vmatprep.subr.mxu0 0.0
        %2264 = vmatpush1.msra.mxu0 0.0
        %2265 = vmatprep.subr.mxu0 0.0
        %2266 = vmatpush1.msra.mxu0 0.0
        %2267 = vmatprep.subr.mxu0 0.0
        %2268 = vmatpush1.msra.mxu0 0.0
        %2269 = vmatprep.subr.mxu0 0.0
        %2270 = vmatpush1.msra.mxu0 0.0
        %2271 = vmatprep.subr.mxu0 0.0
        %2272 = vmatpush1.msra.mxu0 0.0
        %2273 = vmatprep.subr.mxu0 0.0
        %2274 = vmatpush1.msra.mxu0 0.0
        %2275 = vmatprep.subr.mxu0 0.0
        %2276 = vmatpush1.msra.mxu0 0.0
        %2277 = vmatprep.subr.mxu0 0.0
        %2278 = vmatpush1.msra.mxu0 0.0
        %2279 = vmatprep.subr.mxu0 0.0
        %2280 = vmatpush1.msra.mxu0 0.0
        %2281 = vmatprep.subr.mxu0 0.0
        %2282 = vmatpush1.msra.mxu0 0.0
        %2283 = vmatprep.subr.mxu0 0.0
        %2284 = vmatpush1.msra.mxu0 0.0
        %2285 = vmatprep.subr.mxu0 0.0
        %2286 = vmatpush1.msra.mxu0 0.0
        %2287 = vmatprep.subr.mxu0 0.0
        %2288 = vmatpush1.msra.mxu0 0.0
        %2289 = vmatprep.subr.mxu0 0.0
        %2290 = vmatpush1.msra.mxu0 0.0
        %2291 = vmatprep.subr.mxu0 0.0
        %2292 = vmatpush1.msra.mxu0 0.0
        %2293 = vmatprep.subr.mxu0 0.0
        %2294 = vmatpush1.msra.mxu0 0.0
        %2295 = vmatprep.subr.mxu0 0.0
        %2296 = vmatpush1.msra.mxu0 0.0
        %2297 = vmatprep.subr.mxu0 0.0
        %2298 = vmatpush1.msra.mxu0 0.0
        %2299 = vmatprep.subr.mxu0 0.0
        %2300 = vmatpush1.msra.mxu0 0.0
        %2301 = vmatprep.subr.mxu0 0.0
        %2302 = vmatpush1.msra.mxu0 0.0
        %2303 = vmatprep.subr.mxu0 0.0
        %2304 = vmatpush1.msra.mxu0 0.0
        %2305 = vmatprep.subr.mxu0 0.0
        %2306 = vmatpush1.msra.mxu0 0.0
        %2307 = vmatprep.subr.mxu0 0.0
        %2308 = vmatpush1.msra.mxu0 0.0
        %2309 = vmatprep.mubr.f32.mxu0 0.0
        %2310 = vmatmul.mubr.f32.gmra.mrb[0].mxu0 %v2243
        %v2311 = vpop.f32.mrb[0].mxu0
        %v2312 = vadd.f32 0.0, %v2311
        %v2313 = vpop.f32.mrb[0].mxu0
        %v2314 = vadd.f32 0.0, %v2313
        %2315 = vdwg.mxu0
        %2316 = vmatprep.subr.mxu0 %v2227
        %2317 = vmatpush1.msra.mxu0 %v2226
        %2318 = vmatprep.subr.mxu0 0.0
        %2319 = vmatpush1.msra.mxu0 0.0
        %2320 = vmatprep.subr.mxu0 0.0
        %2321 = vmatpush1.msra.mxu0 0.0
        %2322 = vmatprep.subr.mxu0 0.0
        %2323 = vmatpush1.msra.mxu0 0.0
        %2324 = vmatprep.subr.mxu0 0.0
        %2325 = vmatpush1.msra.mxu0 0.0
        %2326 = vmatprep.subr.mxu0 0.0
        %2327 = vmatpush1.msra.mxu0 0.0
        %2328 = vmatprep.subr.mxu0 0.0
        %2329 = vmatpush1.msra.mxu0 0.0
        %2330 = vmatprep.subr.mxu0 0.0
        %2331 = vmatpush1.msra.mxu0 0.0
        %2332 = vmatprep.subr.mxu0 0.0
        %2333 = vmatpush1.msra.mxu0 0.0
        %2334 = vmatprep.subr.mxu0 0.0
        %2335 = vmatpush1.msra.mxu0 0.0
        %2336 = vmatprep.subr.mxu0 0.0
        %2337 = vmatpush1.msra.mxu0 0.0
        %2338 = vmatprep.subr.mxu0 0.0
        %2339 = vmatpush1.msra.mxu0 0.0
        %2340 = vmatprep.subr.mxu0 0.0
        %2341 = vmatpush1.msra.mxu0 0.0
        %2342 = vmatprep.subr.mxu0 0.0
        %2343 = vmatpush1.msra.mxu0 0.0
        %2344 = vmatprep.subr.mxu0 0.0
        %2345 = vmatpush1.msra.mxu0 0.0
        %2346 = vmatprep.subr.mxu0 0.0
        %2347 = vmatpush1.msra.mxu0 0.0
        %2348 = vmatprep.subr.mxu0 0.0
        %2349 = vmatpush1.msra.mxu0 0.0
        %2350 = vmatprep.subr.mxu0 0.0
        %2351 = vmatpush1.msra.mxu0 0.0
        %2352 = vmatprep.subr.mxu0 0.0
        %2353 = vmatpush1.msra.mxu0 0.0
        %2354 = vmatprep.subr.mxu0 0.0
        %2355 = vmatpush1.msra.mxu0 0.0
        %2356 = vmatprep.subr.mxu0 0.0
        %2357 = vmatpush1.msra.mxu0 0.0
        %2358 = vmatprep.subr.mxu0 0.0
        %2359 = vmatpush1.msra.mxu0 0.0
        %2360 = vmatprep.subr.mxu0 0.0
        %2361 = vmatpush1.msra.mxu0 0.0
        %2362 = vmatprep.subr.mxu0 0.0
        %2363 = vmatpush1.msra.mxu0 0.0
        %2364 = vmatprep.subr.mxu0 0.0
        %2365 = vmatpush1.msra.mxu0 0.0
        %2366 = vmatprep.subr.mxu0 0.0
        %2367 = vmatpush1.msra.mxu0 0.0
        %2368 = vmatprep.subr.mxu0 0.0
        %2369 = vmatpush1.msra.mxu0 0.0
        %2370 = vmatprep.subr.mxu0 0.0
        %2371 = vmatpush1.msra.mxu0 0.0
        %2372 = vmatprep.subr.mxu0 0.0
        %2373 = vmatpush1.msra.mxu0 0.0
        %2374 = vmatprep.subr.mxu0 0.0
        %2375 = vmatpush1.msra.mxu0 0.0
        %2376 = vmatprep.subr.mxu0 0.0
        %2377 = vmatpush1.msra.mxu0 0.0
        %2378 = vmatprep.subr.mxu0 0.0
        %2379 = vmatpush1.msra.mxu0 0.0
        %2380 = vmatprep.mubr.f32.mxu0 0.0
        %2381 = vmatmul.mubr.f32.gmra.mrb[0].mxu0 %v2243
        %v2382 = vpop.f32.mrb[0].mxu0
        %v2383 = vadd.f32 0.0, %v2382
        %v2384 = vpop.f32.mrb[0].mxu0
        %v2385 = vadd.f32 0.0, %v2384
        %2386 = vdwg.mxu0
        %2387 = vmatprep.subr.mxu0 %v2229
        %2388 = vmatpush1.msra.mxu0 %v2228
        %2389 = vmatprep.subr.mxu0 0.0
        %2390 = vmatpush1.msra.mxu0 0.0
        %2391 = vmatprep.subr.mxu0 0.0
        %2392 = vmatpush1.msra.mxu0 0.0
        %2393 = vmatprep.subr.mxu0 0.0
        %2394 = vmatpush1.msra.mxu0 0.0
        %2395 = vmatprep.subr.mxu0 0.0
        %2396 = vmatpush1.msra.mxu0 0.0
        %2397 = vmatprep.subr.mxu0 0.0
        %2398 = vmatpush1.msra.mxu0 0.0
        %2399 = vmatprep.subr.mxu0 0.0
        %2400 = vmatpush1.msra.mxu0 0.0
        %2401 = vmatprep.subr.mxu0 0.0
        %2402 = vmatpush1.msra.mxu0 0.0
        %2403 = vmatprep.subr.mxu0 0.0
        %2404 = vmatpush1.msra.mxu0 0.0
        %2405 = vmatprep.subr.mxu0 0.0
        %2406 = vmatpush1.msra.mxu0 0.0
        %2407 = vmatprep.subr.mxu0 0.0
        %2408 = vmatpush1.msra.mxu0 0.0
        %2409 = vmatprep.subr.mxu0 0.0
        %2410 = vmatpush1.msra.mxu0 0.0
        %2411 = vmatprep.subr.mxu0 0.0
        %2412 = vmatpush1.msra.mxu0 0.0
        %2413 = vmatprep.subr.mxu0 0.0
        %2414 = vmatpush1.msra.mxu0 0.0
        %2415 = vmatprep.subr.mxu0 0.0
        %2416 = vmatpush1.msra.mxu0 0.0
        %2417 = vmatprep.subr.mxu0 0.0
        %2418 = vmatpush1.msra.mxu0 0.0
        %2419 = vmatprep.subr.mxu0 0.0
        %2420 = vmatpush1.msra.mxu0 0.0
        %2421 = vmatprep.subr.mxu0 0.0
        %2422 = vmatpush1.msra.mxu0 0.0
        %2423 = vmatprep.subr.mxu0 0.0
        %2424 = vmatpush1.msra.mxu0 0.0
        %2425 = vmatprep.subr.mxu0 0.0
        %2426 = vmatpush1.msra.mxu0 0.0
        %2427 = vmatprep.subr.mxu0 0.0
        %2428 = vmatpush1.msra.mxu0 0.0
        %2429 = vmatprep.subr.mxu0 0.0
        %2430 = vmatpush1.msra.mxu0 0.0
        %2431 = vmatprep.subr.mxu0 0.0
        %2432 = vmatpush1.msra.mxu0 0.0
        %2433 = vmatprep.subr.mxu0 0.0
        %2434 = vmatpush1.msra.mxu0 0.0
        %2435 = vmatprep.subr.mxu0 0.0
        %2436 = vmatpush1.msra.mxu0 0.0
        %2437 = vmatprep.subr.mxu0 0.0
        %2438 = vmatpush1.msra.mxu0 0.0
        %2439 = vmatprep.subr.mxu0 0.0
        %2440 = vmatpush1.msra.mxu0 0.0
        %2441 = vmatprep.subr.mxu0 0.0
        %2442 = vmatpush1.msra.mxu0 0.0
        %2443 = vmatprep.subr.mxu0 0.0
        %2444 = vmatpush1.msra.mxu0 0.0
        %2445 = vmatprep.subr.mxu0 0.0
        %2446 = vmatpush1.msra.mxu0 0.0
        %2447 = vmatprep.subr.mxu0 0.0
        %2448 = vmatpush1.msra.mxu0 0.0
        %2449 = vmatprep.subr.mxu0 0.0
        %2450 = vmatpush1.msra.mxu0 0.0
        %2451 = vmatprep.mubr.f32.mxu0 0.0
        %2452 = vmatmul.mubr.f32.gmra.mrb[0].mxu0 %v2243
        %v2453 = vpop.f32.mrb[0].mxu0
        %v2454 = vadd.f32 0.0, %v2453
        %v2455 = vpop.f32.mrb[0].mxu0
        %v2456 = vadd.f32 0.0, %v2455
        %2457 = vdwg.mxu0
        %2458 = vmatprep.subr.mxu0 %v2231
        %2459 = vmatpush1.msra.mxu0 %v2230
        %2460 = vmatprep.subr.mxu0 0.0
        %2461 = vmatpush1.msra.mxu0 0.0
        %2462 = vmatprep.subr.mxu0 0.0
        %2463 = vmatpush1.msra.mxu0 0.0
        %2464 = vmatprep.subr.mxu0 0.0
        %2465 = vmatpush1.msra.mxu0 0.0
        %2466 = vmatprep.subr.mxu0 0.0
        %2467 = vmatpush1.msra.mxu0 0.0
        %2468 = vmatprep.subr.mxu0 0.0
        %2469 = vmatpush1.msra.mxu0 0.0
        %2470 = vmatprep.subr.mxu0 0.0
        %2471 = vmatpush1.msra.mxu0 0.0
        %2472 = vmatprep.subr.mxu0 0.0
        %2473 = vmatpush1.msra.mxu0 0.0
        %2474 = vmatprep.subr.mxu0 0.0
        %2475 = vmatpush1.msra.mxu0 0.0
        %2476 = vmatprep.subr.mxu0 0.0
        %2477 = vmatpush1.msra.mxu0 0.0
        %2478 = vmatprep.subr.mxu0 0.0
        %2479 = vmatpush1.msra.mxu0 0.0
        %2480 = vmatprep.subr.mxu0 0.0
        %2481 = vmatpush1.msra.mxu0 0.0
        %2482 = vmatprep.subr.mxu0 0.0
        %2483 = vmatpush1.msra.mxu0 0.0
        %2484 = vmatprep.subr.mxu0 0.0
        %2485 = vmatpush1.msra.mxu0 0.0
        %2486 = vmatprep.subr.mxu0 0.0
        %2487 = vmatpush1.msra.mxu0 0.0
        %2488 = vmatprep.subr.mxu0 0.0
        %2489 = vmatpush1.msra.mxu0 0.0
        %2490 = vmatprep.subr.mxu0 0.0
        %2491 = vmatpush1.msra.mxu0 0.0
        %2492 = vmatprep.subr.mxu0 0.0
        %2493 = vmatpush1.msra.mxu0 0.0
        %2494 = vmatprep.subr.mxu0 0.0
        %2495 = vmatpush1.msra.mxu0 0.0
        %2496 = vmatprep.subr.mxu0 0.0
        %2497 = vmatpush1.msra.mxu0 0.0
        %2498 = vmatprep.subr.mxu0 0.0
        %2499 = vmatpush1.msra.mxu0 0.0
        %2500 = vmatprep.subr.mxu0 0.0
        %2501 = vmatpush1.msra.mxu0 0.0
        %2502 = vmatprep.subr.mxu0 0.0
        %2503 = vmatpush1.msra.mxu0 0.0
        %2504 = vmatprep.subr.mxu0 0.0
        %2505 = vmatpush1.msra.mxu0 0.0
        %2506 = vmatprep.subr.mxu0 0.0
        %2507 = vmatpush1.msra.mxu0 0.0
        %2508 = vmatprep.subr.mxu0 0.0
        %2509 = vmatpush1.msra.mxu0 0.0
        %2510 = vmatprep.subr.mxu0 0.0
        %2511 = vmatpush1.msra.mxu0 0.0
        %2512 = vmatprep.subr.mxu0 0.0
        %2513 = vmatpush1.msra.mxu0 0.0
        %2514 = vmatprep.subr.mxu0 0.0
        %2515 = vmatpush1.msra.mxu0 0.0
        %2516 = vmatprep.subr.mxu0 0.0
        %2517 = vmatpush1.msra.mxu0 0.0
        %2518 = vmatprep.subr.mxu0 0.0
        %2519 = vmatpush1.msra.mxu0 0.0
        %2520 = vmatprep.subr.mxu0 0.0
        %2521 = vmatpush1.msra.mxu0 0.0
        %2522 = vmatprep.mubr.f32.mxu0 0.0
        %2523 = vmatmul.mubr.f32.gmra.mrb[0].mxu0 %v2243
        %v2524 = vpop.f32.mrb[0].mxu0
        %v2525 = vadd.f32 0.0, %v2524
        %v2526 = vpop.f32.mrb[0].mxu0
        %v2527 = vadd.f32 0.0, %v2526
        %2528 = vdwg.mxu0
        %2529 = vmatprep.subr.mxu0 0.0
        %2530 = vmatpush1.msra.mxu0 %v2232
        %2531 = vmatprep.subr.mxu0 0.0
        %2532 = vmatpush1.msra.mxu0 0.0
        %2533 = vmatprep.subr.mxu0 0.0
        %2534 = vmatpush1.msra.mxu0 0.0
        %2535 = vmatprep.subr.mxu0 0.0
        %2536 = vmatpush1.msra.mxu0 0.0
        %2537 = vmatprep.subr.mxu0 0.0
        %2538 = vmatpush1.msra.mxu0 0.0
        %2539 = vmatprep.subr.mxu0 0.0
        %2540 = vmatpush1.msra.mxu0 0.0
        %2541 = vmatprep.subr.mxu0 0.0
        %2542 = vmatpush1.msra.mxu0 0.0
        %2543 = vmatprep.subr.mxu0 0.0
        %2544 = vmatpush1.msra.mxu0 0.0
        %2545 = vmatprep.subr.mxu0 0.0
        %2546 = vmatpush1.msra.mxu0 0.0
        %2547 = vmatprep.subr.mxu0 0.0
        %2548 = vmatpush1.msra.mxu0 0.0
        %2549 = vmatprep.subr.mxu0 0.0
        %2550 = vmatpush1.msra.mxu0 0.0
        %2551 = vmatprep.subr.mxu0 0.0
        %2552 = vmatpush1.msra.mxu0 0.0
        %2553 = vmatprep.subr.mxu0 0.0
        %2554 = vmatpush1.msra.mxu0 0.0
        %2555 = vmatprep.subr.mxu0 0.0
        %2556 = vmatpush1.msra.mxu0 0.0
        %2557 = vmatprep.subr.mxu0 0.0
        %2558 = vmatpush1.msra.mxu0 0.0
        %2559 = vmatprep.subr.mxu0 0.0
        %2560 = vmatpush1.msra.mxu0 0.0
        %2561 = vmatprep.subr.mxu0 0.0
        %2562 = vmatpush1.msra.mxu0 0.0
        %2563 = vmatprep.subr.mxu0 0.0
        %2564 = vmatpush1.msra.mxu0 0.0
        %2565 = vmatprep.subr.mxu0 0.0
        %2566 = vmatpush1.msra.mxu0 0.0
        %2567 = vmatprep.subr.mxu0 0.0
        %2568 = vmatpush1.msra.mxu0 0.0
        %2569 = vmatprep.subr.mxu0 0.0
        %2570 = vmatpush1.msra.mxu0 0.0
        %2571 = vmatprep.subr.mxu0 0.0
        %2572 = vmatpush1.msra.mxu0 0.0
        %2573 = vmatprep.subr.mxu0 0.0
        %2574 = vmatpush1.msra.mxu0 0.0
        %2575 = vmatprep.subr.mxu0 0.0
        %2576 = vmatpush1.msra.mxu0 0.0
        %2577 = vmatprep.subr.mxu0 0.0
        %2578 = vmatpush1.msra.mxu0 0.0
        %2579 = vmatprep.subr.mxu0 0.0
        %2580 = vmatpush1.msra.mxu0 0.0
        %2581 = vmatprep.subr.mxu0 0.0
        %2582 = vmatpush1.msra.mxu0 0.0
        %2583 = vmatprep.subr.mxu0 0.0
        %2584 = vmatpush1.msra.mxu0 0.0
        %2585 = vmatprep.subr.mxu0 0.0
        %2586 = vmatpush1.msra.mxu0 0.0
        %2587 = vmatprep.subr.mxu0 0.0
        %2588 = vmatpush1.msra.mxu0 0.0
        %2589 = vmatprep.subr.mxu0 0.0
        %2590 = vmatpush1.msra.mxu0 0.0
        %2591 = vmatprep.subr.mxu0 0.0
        %2592 = vmatpush1.msra.mxu0 0.0
        %2593 = vmatprep.mubr.f32.mxu0 0.0
        %2594 = vmatmul.mubr.f32.gmra.mrb[0].mxu0 %v2243
        %v2595 = vpop.f32.mrb[0].mxu0
        %v2596 = vadd.f32 0.0, %v2595
        %v2597 = vpop.f32.mrb[0].mxu0
        %2598 = vdwg.mxu0
        %v2599 = vadd.f32 %v2192, %v2312
        %v2600 = vadd.f32 %v2193, %v2314
        %v2601 = vadd.f32 %v2194, %v2383
        %v2602 = vadd.f32 %v2195, %v2385
        %v2603 = vadd.f32 %v2196, %v2454
        %v2604 = vadd.f32 %v2197, %v2456
        %v2605 = vadd.f32 %v2198, %v2525
        %v2606 = vadd.f32 %v2199, %v2527
        %v2607 = vadd.f32 %v2200, %v2596
        %s2608 = scalar_lea.vmem %s2, 32
        %v2609 = vld [vmem:[%s2608] sm:$0xff]
        %2610 = vrot.lane.b32.xlu0 %v1020, 91
        %v2611 = vpop.permute.xlu0 %2610
        %2612 = vrot.lane.b32.xlu0 %v1021, 91
        %v2613 = vpop.permute.xlu0 %2612
        %2614 = vrot.lane.b32.xlu0 %v1022, 91
        %v2615 = vpop.permute.xlu0 %2614
        %2616 = vrot.lane.b32.xlu0 %v1023, 91
        %v2617 = vpop.permute.xlu0 %2616
        %2618 = vrot.lane.b32.xlu0 %v1024, 91
        %v2619 = vpop.permute.xlu0 %2618
        %2620 = vrot.lane.b32.xlu0 %v1025, 91
        %v2621 = vpop.permute.xlu0 %2620
        %2622 = vrot.lane.b32.xlu0 %v1026, 91
        %v2623 = vpop.permute.xlu0 %2622
        %2624 = vrot.lane.b32.xlu0 %v1027, 91
        %v2625 = vpop.permute.xlu0 %2624
        %2626 = vrot.lane.b32.xlu0 %v1028, 91
        %v2627 = vpop.permute.xlu0 %2626
        %2628 = vrot.lane.b32.xlu0 %v1029, 91
        %v2629 = vpop.permute.xlu0 %2628
        %vm2630 = vcmask 744448
        %v2631 = vsel %vm2630, %v2611, %v2613
        %v2632 = vsel %vm2630, %v2613, %v2615
        %v2633 = vsel %vm2630, %v2615, %v2617
        %v2634 = vsel %vm2630, %v2617, %v2619
        %v2635 = vsel %vm2630, %v2619, %v2621
        %v2636 = vsel %vm2630, %v2621, %v2623
        %v2637 = vsel %vm2630, %v2623, %v2625
        %v2638 = vsel %vm2630, %v2625, %v2627
        %v2639 = vsel %vm2630, %v2627, %v2629
        %v2650 = vsel %vm1079, %v2609, 0
        %2652 = vmatprep.subr.mxu0 %v2632
        %2653 = vmatpush1.msra.mxu0 %v2631
        %2654 = vmatprep.subr.mxu0 0.0
        %2655 = vmatpush1.msra.mxu0 0.0
        %2656 = vmatprep.subr.mxu0 0.0
        %2657 = vmatpush1.msra.mxu0 0.0
        %2658 = vmatprep.subr.mxu0 0.0
        %2659 = vmatpush1.msra.mxu0 0.0
        %2660 = vmatprep.subr.mxu0 0.0
        %2661 = vmatpush1.msra.mxu0 0.0
        %2662 = vmatprep.subr.mxu0 0.0
        %2663 = vmatpush1.msra.mxu0 0.0
        %2664 = vmatprep.subr.mxu0 0.0
        %2665 = vmatpush1.msra.mxu0 0.0
        %2666 = vmatprep.subr.mxu0 0.0
        %2667 = vmatpush1.msra.mxu0 0.0
        %2668 = vmatprep.subr.mxu0 0.0
        %2669 = vmatpush1.msra.mxu0 0.0
        %2670 = vmatprep.subr.mxu0 0.0
        %2671 = vmatpush1.msra.mxu0 0.0
        %2672 = vmatprep.subr.mxu0 0.0
        %2673 = vmatpush1.msra.mxu0 0.0
        %2674 = vmatprep.subr.mxu0 0.0
        %2675 = vmatpush1.msra.mxu0 0.0
        %2676 = vmatprep.subr.mxu0 0.0
        %2677 = vmatpush1.msra.mxu0 0.0
        %2678 = vmatprep.subr.mxu0 0.0
        %2679 = vmatpush1.msra.mxu0 0.0
        %2680 = vmatprep.subr.mxu0 0.0
        %2681 = vmatpush1.msra.mxu0 0.0
        %2682 = vmatprep.subr.mxu0 0.0
        %2683 = vmatpush1.msra.mxu0 0.0
        %2684 = vmatprep.subr.mxu0 0.0
        %2685 = vmatpush1.msra.mxu0 0.0
        %2686 = vmatprep.subr.mxu0 0.0
        %2687 = vmatpush1.msra.mxu0 0.0
        %2688 = vmatprep.subr.mxu0 0.0
        %2689 = vmatpush1.msra.mxu0 0.0
        %2690 = vmatprep.subr.mxu0 0.0
        %2691 = vmatpush1.msra.mxu0 0.0
        %2692 = vmatprep.subr.mxu0 0.0
        %2693 = vmatpush1.msra.mxu0 0.0
        %2694 = vmatprep.subr.mxu0 0.0
        %2695 = vmatpush1.msra.mxu0 0.0
        %2696 = vmatprep.subr.mxu0 0.0
        %2697 = vmatpush1.msra.mxu0 0.0
        %2698 = vmatprep.subr.mxu0 0.0
        %2699 = vmatpush1.msra.mxu0 0.0
        %2700 = vmatprep.subr.mxu0 0.0
        %2701 = vmatpush1.msra.mxu0 0.0
        %2702 = vmatprep.subr.mxu0 0.0
        %2703 = vmatpush1.msra.mxu0 0.0
        %2704 = vmatprep.subr.mxu0 0.0
        %2705 = vmatpush1.msra.mxu0 0.0
        %2706 = vmatprep.subr.mxu0 0.0
        %2707 = vmatpush1.msra.mxu0 0.0
        %2708 = vmatprep.subr.mxu0 0.0
        %2709 = vmatpush1.msra.mxu0 0.0
        %2710 = vmatprep.subr.mxu0 0.0
        %2711 = vmatpush1.msra.mxu0 0.0
        %2712 = vmatprep.subr.mxu0 0.0
        %2713 = vmatpush1.msra.mxu0 0.0
        %2714 = vmatprep.subr.mxu0 0.0
        %2715 = vmatpush1.msra.mxu0 0.0
        %2716 = vmatprep.mubr.f32.mxu0 0.0
        %2717 = vmatmul.mubr.f32.gmra.mrb[0].mxu0 %v2650
        %v2718 = vpop.f32.mrb[0].mxu0
        %v2719 = vadd.f32 0.0, %v2718
        %v2720 = vpop.f32.mrb[0].mxu0
        %v2721 = vadd.f32 0.0, %v2720
        %2722 = vdwg.mxu0
        %2723 = vmatprep.subr.mxu0 %v2634
        %2724 = vmatpush1.msra.mxu0 %v2633
        %2725 = vmatprep.subr.mxu0 0.0
        %2726 = vmatpush1.msra.mxu0 0.0
        %2727 = vmatprep.subr.mxu0 0.0
        %2728 = vmatpush1.msra.mxu0 0.0
        %2729 = vmatprep.subr.mxu0 0.0
        %2730 = vmatpush1.msra.mxu0 0.0
        %2731 = vmatprep.subr.mxu0 0.0
        %2732 = vmatpush1.msra.mxu0 0.0
        %2733 = vmatprep.subr.mxu0 0.0
        %2734 = vmatpush1.msra.mxu0 0.0
        %2735 = vmatprep.subr.mxu0 0.0
        %2736 = vmatpush1.msra.mxu0 0.0
        %2737 = vmatprep.subr.mxu0 0.0
        %2738 = vmatpush1.msra.mxu0 0.0
        %2739 = vmatprep.subr.mxu0 0.0
        %2740 = vmatpush1.msra.mxu0 0.0
        %2741 = vmatprep.subr.mxu0 0.0
        %2742 = vmatpush1.msra.mxu0 0.0
        %2743 = vmatprep.subr.mxu0 0.0
        %2744 = vmatpush1.msra.mxu0 0.0
        %2745 = vmatprep.subr.mxu0 0.0
        %2746 = vmatpush1.msra.mxu0 0.0
        %2747 = vmatprep.subr.mxu0 0.0
        %2748 = vmatpush1.msra.mxu0 0.0
        %2749 = vmatprep.subr.mxu0 0.0
        %2750 = vmatpush1.msra.mxu0 0.0
        %2751 = vmatprep.subr.mxu0 0.0
        %2752 = vmatpush1.msra.mxu0 0.0
        %2753 = vmatprep.subr.mxu0 0.0
        %2754 = vmatpush1.msra.mxu0 0.0
        %2755 = vmatprep.subr.mxu0 0.0
        %2756 = vmatpush1.msra.mxu0 0.0
        %2757 = vmatprep.subr.mxu0 0.0
        %2758 = vmatpush1.msra.mxu0 0.0
        %2759 = vmatprep.subr.mxu0 0.0
        %2760 = vmatpush1.msra.mxu0 0.0
        %2761 = vmatprep.subr.mxu0 0.0
        %2762 = vmatpush1.msra.mxu0 0.0
        %2763 = vmatprep.subr.mxu0 0.0
        %2764 = vmatpush1.msra.mxu0 0.0
        %2765 = vmatprep.subr.mxu0 0.0
        %2766 = vmatpush1.msra.mxu0 0.0
        %2767 = vmatprep.subr.mxu0 0.0
        %2768 = vmatpush1.msra.mxu0 0.0
        %2769 = vmatprep.subr.mxu0 0.0
        %2770 = vmatpush1.msra.mxu0 0.0
        %2771 = vmatprep.subr.mxu0 0.0
        %2772 = vmatpush1.msra.mxu0 0.0
        %2773 = vmatprep.subr.mxu0 0.0
        %2774 = vmatpush1.msra.mxu0 0.0
        %2775 = vmatprep.subr.mxu0 0.0
        %2776 = vmatpush1.msra.mxu0 0.0
        %2777 = vmatprep.subr.mxu0 0.0
        %2778 = vmatpush1.msra.mxu0 0.0
        %2779 = vmatprep.subr.mxu0 0.0
        %2780 = vmatpush1.msra.mxu0 0.0
        %2781 = vmatprep.subr.mxu0 0.0
        %2782 = vmatpush1.msra.mxu0 0.0
        %2783 = vmatprep.subr.mxu0 0.0
        %2784 = vmatpush1.msra.mxu0 0.0
        %2785 = vmatprep.subr.mxu0 0.0
        %2786 = vmatpush1.msra.mxu0 0.0
        %2787 = vmatprep.mubr.f32.mxu0 0.0
        %2788 = vmatmul.mubr.f32.gmra.mrb[0].mxu0 %v2650
        %v2789 = vpop.f32.mrb[0].mxu0
        %v2790 = vadd.f32 0.0, %v2789
        %v2791 = vpop.f32.mrb[0].mxu0
        %v2792 = vadd.f32 0.0, %v2791
        %2793 = vdwg.mxu0
        %2794 = vmatprep.subr.mxu0 %v2636
        %2795 = vmatpush1.msra.mxu0 %v2635
        %2796 = vmatprep.subr.mxu0 0.0
        %2797 = vmatpush1.msra.mxu0 0.0
        %2798 = vmatprep.subr.mxu0 0.0
        %2799 = vmatpush1.msra.mxu0 0.0
        %2800 = vmatprep.subr.mxu0 0.0
        %2801 = vmatpush1.msra.mxu0 0.0
        %2802 = vmatprep.subr.mxu0 0.0
        %2803 = vmatpush1.msra.mxu0 0.0
        %2804 = vmatprep.subr.mxu0 0.0
        %2805 = vmatpush1.msra.mxu0 0.0
        %2806 = vmatprep.subr.mxu0 0.0
        %2807 = vmatpush1.msra.mxu0 0.0
        %2808 = vmatprep.subr.mxu0 0.0
        %2809 = vmatpush1.msra.mxu0 0.0
        %2810 = vmatprep.subr.mxu0 0.0
        %2811 = vmatpush1.msra.mxu0 0.0
        %2812 = vmatprep.subr.mxu0 0.0
        %2813 = vmatpush1.msra.mxu0 0.0
        %2814 = vmatprep.subr.mxu0 0.0
        %2815 = vmatpush1.msra.mxu0 0.0
        %2816 = vmatprep.subr.mxu0 0.0
        %2817 = vmatpush1.msra.mxu0 0.0
        %2818 = vmatprep.subr.mxu0 0.0
        %2819 = vmatpush1.msra.mxu0 0.0
        %2820 = vmatprep.subr.mxu0 0.0
        %2821 = vmatpush1.msra.mxu0 0.0
        %2822 = vmatprep.subr.mxu0 0.0
        %2823 = vmatpush1.msra.mxu0 0.0
        %2824 = vmatprep.subr.mxu0 0.0
        %2825 = vmatpush1.msra.mxu0 0.0
        %2826 = vmatprep.subr.mxu0 0.0
        %2827 = vmatpush1.msra.mxu0 0.0
        %2828 = vmatprep.subr.mxu0 0.0
        %2829 = vmatpush1.msra.mxu0 0.0
        %2830 = vmatprep.subr.mxu0 0.0
        %2831 = vmatpush1.msra.mxu0 0.0
        %2832 = vmatprep.subr.mxu0 0.0
        %2833 = vmatpush1.msra.mxu0 0.0
        %2834 = vmatprep.subr.mxu0 0.0
        %2835 = vmatpush1.msra.mxu0 0.0
        %2836 = vmatprep.subr.mxu0 0.0
        %2837 = vmatpush1.msra.mxu0 0.0
        %2838 = vmatprep.subr.mxu0 0.0
        %2839 = vmatpush1.msra.mxu0 0.0
        %2840 = vmatprep.subr.mxu0 0.0
        %2841 = vmatpush1.msra.mxu0 0.0
        %2842 = vmatprep.subr.mxu0 0.0
        %2843 = vmatpush1.msra.mxu0 0.0
        %2844 = vmatprep.subr.mxu0 0.0
        %2845 = vmatpush1.msra.mxu0 0.0
        %2846 = vmatprep.subr.mxu0 0.0
        %2847 = vmatpush1.msra.mxu0 0.0
        %2848 = vmatprep.subr.mxu0 0.0
        %2849 = vmatpush1.msra.mxu0 0.0
        %2850 = vmatprep.subr.mxu0 0.0
        %2851 = vmatpush1.msra.mxu0 0.0
        %2852 = vmatprep.subr.mxu0 0.0
        %2853 = vmatpush1.msra.mxu0 0.0
        %2854 = vmatprep.subr.mxu0 0.0
        %2855 = vmatpush1.msra.mxu0 0.0
        %2856 = vmatprep.subr.mxu0 0.0
        %2857 = vmatpush1.msra.mxu0 0.0
        %2858 = vmatprep.mubr.f32.mxu0 0.0
        %2859 = vmatmul.mubr.f32.gmra.mrb[0].mxu0 %v2650
        %v2860 = vpop.f32.mrb[0].mxu0
        %v2861 = vadd.f32 0.0, %v2860
        %v2862 = vpop.f32.mrb[0].mxu0
        %v2863 = vadd.f32 0.0, %v2862
        %2864 = vdwg.mxu0
        %2865 = vmatprep.subr.mxu0 %v2638
        %2866 = vmatpush1.msra.mxu0 %v2637
        %2867 = vmatprep.subr.mxu0 0.0
        %2868 = vmatpush1.msra.mxu0 0.0
        %2869 = vmatprep.subr.mxu0 0.0
        %2870 = vmatpush1.msra.mxu0 0.0
        %2871 = vmatprep.subr.mxu0 0.0
        %2872 = vmatpush1.msra.mxu0 0.0
        %2873 = vmatprep.subr.mxu0 0.0
        %2874 = vmatpush1.msra.mxu0 0.0
        %2875 = vmatprep.subr.mxu0 0.0
        %2876 = vmatpush1.msra.mxu0 0.0
        %2877 = vmatprep.subr.mxu0 0.0
        %2878 = vmatpush1.msra.mxu0 0.0
        %2879 = vmatprep.subr.mxu0 0.0
        %2880 = vmatpush1.msra.mxu0 0.0
        %2881 = vmatprep.subr.mxu0 0.0
        %2882 = vmatpush1.msra.mxu0 0.0
        %2883 = vmatprep.subr.mxu0 0.0
        %2884 = vmatpush1.msra.mxu0 0.0
        %2885 = vmatprep.subr.mxu0 0.0
        %2886 = vmatpush1.msra.mxu0 0.0
        %2887 = vmatprep.subr.mxu0 0.0
        %2888 = vmatpush1.msra.mxu0 0.0
        %2889 = vmatprep.subr.mxu0 0.0
        %2890 = vmatpush1.msra.mxu0 0.0
        %2891 = vmatprep.subr.mxu0 0.0
        %2892 = vmatpush1.msra.mxu0 0.0
        %2893 = vmatprep.subr.mxu0 0.0
        %2894 = vmatpush1.msra.mxu0 0.0
        %2895 = vmatprep.subr.mxu0 0.0
        %2896 = vmatpush1.msra.mxu0 0.0
        %2897 = vmatprep.subr.mxu0 0.0
        %2898 = vmatpush1.msra.mxu0 0.0
        %2899 = vmatprep.subr.mxu0 0.0
        %2900 = vmatpush1.msra.mxu0 0.0
        %2901 = vmatprep.subr.mxu0 0.0
        %2902 = vmatpush1.msra.mxu0 0.0
        %2903 = vmatprep.subr.mxu0 0.0
        %2904 = vmatpush1.msra.mxu0 0.0
        %2905 = vmatprep.subr.mxu0 0.0
        %2906 = vmatpush1.msra.mxu0 0.0
        %2907 = vmatprep.subr.mxu0 0.0
        %2908 = vmatpush1.msra.mxu0 0.0
        %2909 = vmatprep.subr.mxu0 0.0
        %2910 = vmatpush1.msra.mxu0 0.0
        %2911 = vmatprep.subr.mxu0 0.0
        %2912 = vmatpush1.msra.mxu0 0.0
        %2913 = vmatprep.subr.mxu0 0.0
        %2914 = vmatpush1.msra.mxu0 0.0
        %2915 = vmatprep.subr.mxu0 0.0
        %2916 = vmatpush1.msra.mxu0 0.0
        %2917 = vmatprep.subr.mxu0 0.0
        %2918 = vmatpush1.msra.mxu0 0.0
        %2919 = vmatprep.subr.mxu0 0.0
        %2920 = vmatpush1.msra.mxu0 0.0
        %2921 = vmatprep.subr.mxu0 0.0
        %2922 = vmatpush1.msra.mxu0 0.0
        %2923 = vmatprep.subr.mxu0 0.0
        %2924 = vmatpush1.msra.mxu0 0.0
        %2925 = vmatprep.subr.mxu0 0.0
        %2926 = vmatpush1.msra.mxu0 0.0
        %2927 = vmatprep.subr.mxu0 0.0
        %2928 = vmatpush1.msra.mxu0 0.0
        %2929 = vmatprep.mubr.f32.mxu0 0.0
        %2930 = vmatmul.mubr.f32.gmra.mrb[0].mxu0 %v2650
        %v2931 = vpop.f32.mrb[0].mxu0
        %v2932 = vadd.f32 0.0, %v2931
        %v2933 = vpop.f32.mrb[0].mxu0
        %v2934 = vadd.f32 0.0, %v2933
        %2935 = vdwg.mxu0
        %2936 = vmatprep.subr.mxu0 0.0
        %2937 = vmatpush1.msra.mxu0 %v2639
        %2938 = vmatprep.subr.mxu0 0.0
        %2939 = vmatpush1.msra.mxu0 0.0
        %2940 = vmatprep.subr.mxu0 0.0
        %2941 = vmatpush1.msra.mxu0 0.0
        %2942 = vmatprep.subr.mxu0 0.0
        %2943 = vmatpush1.msra.mxu0 0.0
        %2944 = vmatprep.subr.mxu0 0.0
        %2945 = vmatpush1.msra.mxu0 0.0
        %2946 = vmatprep.subr.mxu0 0.0
        %2947 = vmatpush1.msra.mxu0 0.0
        %2948 = vmatprep.subr.mxu0 0.0
        %2949 = vmatpush1.msra.mxu0 0.0
        %2950 = vmatprep.subr.mxu0 0.0
        %2951 = vmatpush1.msra.mxu0 0.0
        %2952 = vmatprep.subr.mxu0 0.0
        %2953 = vmatpush1.msra.mxu0 0.0
        %2954 = vmatprep.subr.mxu0 0.0
        %2955 = vmatpush1.msra.mxu0 0.0
        %2956 = vmatprep.subr.mxu0 0.0
        %2957 = vmatpush1.msra.mxu0 0.0
        %2958 = vmatprep.subr.mxu0 0.0
        %2959 = vmatpush1.msra.mxu0 0.0
        %2960 = vmatprep.subr.mxu0 0.0
        %2961 = vmatpush1.msra.mxu0 0.0
        %2962 = vmatprep.subr.mxu0 0.0
        %2963 = vmatpush1.msra.mxu0 0.0
        %2964 = vmatprep.subr.mxu0 0.0
        %2965 = vmatpush1.msra.mxu0 0.0
        %2966 = vmatprep.subr.mxu0 0.0
        %2967 = vmatpush1.msra.mxu0 0.0
        %2968 = vmatprep.subr.mxu0 0.0
        %2969 = vmatpush1.msra.mxu0 0.0
        %2970 = vmatprep.subr.mxu0 0.0
        %2971 = vmatpush1.msra.mxu0 0.0
        %2972 = vmatprep.subr.mxu0 0.0
        %2973 = vmatpush1.msra.mxu0 0.0
        %2974 = vmatprep.subr.mxu0 0.0
        %2975 = vmatpush1.msra.mxu0 0.0
        %2976 = vmatprep.subr.mxu0 0.0
        %2977 = vmatpush1.msra.mxu0 0.0
        %2978 = vmatprep.subr.mxu0 0.0
        %2979 = vmatpush1.msra.mxu0 0.0
        %2980 = vmatprep.subr.mxu0 0.0
        %2981 = vmatpush1.msra.mxu0 0.0
        %2982 = vmatprep.subr.mxu0 0.0
        %2983 = vmatpush1.msra.mxu0 0.0
        %2984 = vmatprep.subr.mxu0 0.0
        %2985 = vmatpush1.msra.mxu0 0.0
        %2986 = vmatprep.subr.mxu0 0.0
        %2987 = vmatpush1.msra.mxu0 0.0
        %2988 = vmatprep.subr.mxu0 0.0
        %2989 = vmatpush1.msra.mxu0 0.0
        %2990 = vmatprep.subr.mxu0 0.0
        %2991 = vmatpush1.msra.mxu0 0.0
        %2992 = vmatprep.subr.mxu0 0.0
        %2993 = vmatpush1.msra.mxu0 0.0
        %2994 = vmatprep.subr.mxu0 0.0
        %2995 = vmatpush1.msra.mxu0 0.0
        %2996 = vmatprep.subr.mxu0 0.0
        %2997 = vmatpush1.msra.mxu0 0.0
        %2998 = vmatprep.subr.mxu0 0.0
        %2999 = vmatpush1.msra.mxu0 0.0
        %3000 = vmatprep.mubr.f32.mxu0 0.0
        %3001 = vmatmul.mubr.f32.gmra.mrb[0].mxu0 %v2650
        %v3002 = vpop.f32.mrb[0].mxu0
        %v3003 = vadd.f32 0.0, %v3002
        %v3004 = vpop.f32.mrb[0].mxu0
        %3005 = vdwg.mxu0
        %v3006 = vadd.f32 %v2599, %v2719
        %v3007 = vadd.f32 %v2600, %v2721
        %v3008 = vadd.f32 %v2601, %v2790
        %v3009 = vadd.f32 %v2602, %v2792
        %v3010 = vadd.f32 %v2603, %v2861
        %v3011 = vadd.f32 %v2604, %v2863
        %v3012 = vadd.f32 %v2605, %v2932
        %v3013 = vadd.f32 %v2606, %v2934
        %v3014 = vadd.f32 %v2607, %v3003
        %s3015 = scalar_lea.vmem %s2, 40
        %v3016 = vld [vmem:[%s3015] sm:$0xff]
        %3017 = vrot.lane.b32.xlu0 %v1020, 90
        %v3018 = vpop.permute.xlu0 %3017
        %3019 = vrot.lane.b32.xlu0 %v1021, 90
        %v3020 = vpop.permute.xlu0 %3019
        %3021 = vrot.lane.b32.xlu0 %v1022, 90
        %v3022 = vpop.permute.xlu0 %3021
        %3023 = vrot.lane.b32.xlu0 %v1023, 90
        %v3024 = vpop.permute.xlu0 %3023
        %3025 = vrot.lane.b32.xlu0 %v1024, 90
        %v3026 = vpop.permute.xlu0 %3025
        %3027 = vrot.lane.b32.xlu0 %v1025, 90
        %v3028 = vpop.permute.xlu0 %3027
        %3029 = vrot.lane.b32.xlu0 %v1026, 90
        %v3030 = vpop.permute.xlu0 %3029
        %3031 = vrot.lane.b32.xlu0 %v1027, 90
        %v3032 = vpop.permute.xlu0 %3031
        %3033 = vrot.lane.b32.xlu0 %v1028, 90
        %v3034 = vpop.permute.xlu0 %3033
        %3035 = vrot.lane.b32.xlu0 %v1029, 90
        %v3036 = vpop.permute.xlu0 %3035
        %vm3037 = vcmask 736256
        %v3038 = vsel %vm3037, %v3018, %v3020
        %v3039 = vsel %vm3037, %v3020, %v3022
        %v3040 = vsel %vm3037, %v3022, %v3024
        %v3041 = vsel %vm3037, %v3024, %v3026
        %v3042 = vsel %vm3037, %v3026, %v3028
        %v3043 = vsel %vm3037, %v3028, %v3030
        %v3044 = vsel %vm3037, %v3030, %v3032
        %v3045 = vsel %vm3037, %v3032, %v3034
        %v3046 = vsel %vm3037, %v3034, %v3036
        %v3057 = vsel %vm1079, %v3016, 0
        %3059 = vmatprep.subr.mxu0 %v3039
        %3060 = vmatpush1.msra.mxu0 %v3038
        %3061 = vmatprep.subr.mxu0 0.0
        %3062 = vmatpush1.msra.mxu0 0.0
        %3063 = vmatprep.subr.mxu0 0.0
        %3064 = vmatpush1.msra.mxu0 0.0
        %3065 = vmatprep.subr.mxu0 0.0
        %3066 = vmatpush1.msra.mxu0 0.0
        %3067 = vmatprep.subr.mxu0 0.0
        %3068 = vmatpush1.msra.mxu0 0.0
        %3069 = vmatprep.subr.mxu0 0.0
        %3070 = vmatpush1.msra.mxu0 0.0
        %3071 = vmatprep.subr.mxu0 0.0
        %3072 = vmatpush1.msra.mxu0 0.0
        %3073 = vmatprep.subr.mxu0 0.0
        %3074 = vmatpush1.msra.mxu0 0.0
        %3075 = vmatprep.subr.mxu0 0.0
        %3076 = vmatpush1.msra.mxu0 0.0
        %3077 = vmatprep.subr.mxu0 0.0
        %3078 = vmatpush1.msra.mxu0 0.0
        %3079 = vmatprep.subr.mxu0 0.0
        %3080 = vmatpush1.msra.mxu0 0.0
        %3081 = vmatprep.subr.mxu0 0.0
        %3082 = vmatpush1.msra.mxu0 0.0
        %3083 = vmatprep.subr.mxu0 0.0
        %3084 = vmatpush1.msra.mxu0 0.0
        %3085 = vmatprep.subr.mxu0 0.0
        %3086 = vmatpush1.msra.mxu0 0.0
        %3087 = vmatprep.subr.mxu0 0.0
        %3088 = vmatpush1.msra.mxu0 0.0
        %3089 = vmatprep.subr.mxu0 0.0
        %3090 = vmatpush1.msra.mxu0 0.0
        %3091 = vmatprep.subr.mxu0 0.0
        %3092 = vmatpush1.msra.mxu0 0.0
        %3093 = vmatprep.subr.mxu0 0.0
        %3094 = vmatpush1.msra.mxu0 0.0
        %3095 = vmatprep.subr.mxu0 0.0
        %3096 = vmatpush1.msra.mxu0 0.0
        %3097 = vmatprep.subr.mxu0 0.0
        %3098 = vmatpush1.msra.mxu0 0.0
        %3099 = vmatprep.subr.mxu0 0.0
        %3100 = vmatpush1.msra.mxu0 0.0
        %3101 = vmatprep.subr.mxu0 0.0
        %3102 = vmatpush1.msra.mxu0 0.0
        %3103 = vmatprep.subr.mxu0 0.0
        %3104 = vmatpush1.msra.mxu0 0.0
        %3105 = vmatprep.subr.mxu0 0.0
        %3106 = vmatpush1.msra.mxu0 0.0
        %3107 = vmatprep.subr.mxu0 0.0
        %3108 = vmatpush1.msra.mxu0 0.0
        %3109 = vmatprep.subr.mxu0 0.0
        %3110 = vmatpush1.msra.mxu0 0.0
        %3111 = vmatprep.subr.mxu0 0.0
        %3112 = vmatpush1.msra.mxu0 0.0
        %3113 = vmatprep.subr.mxu0 0.0
        %3114 = vmatpush1.msra.mxu0 0.0
        %3115 = vmatprep.subr.mxu0 0.0
        %3116 = vmatpush1.msra.mxu0 0.0
        %3117 = vmatprep.subr.mxu0 0.0
        %3118 = vmatpush1.msra.mxu0 0.0
        %3119 = vmatprep.subr.mxu0 0.0
        %3120 = vmatpush1.msra.mxu0 0.0
        %3121 = vmatprep.subr.mxu0 0.0
        %3122 = vmatpush1.msra.mxu0 0.0
        %3123 = vmatprep.mubr.f32.mxu0 0.0
        %3124 = vmatmul.mubr.f32.gmra.mrb[0].mxu0 %v3057
        %v3125 = vpop.f32.mrb[0].mxu0
        %v3126 = vadd.f32 0.0, %v3125
        %v3127 = vpop.f32.mrb[0].mxu0
        %v3128 = vadd.f32 0.0, %v3127
        %3129 = vdwg.mxu0
        %3130 = vmatprep.subr.mxu0 %v3041
        %3131 = vmatpush1.msra.mxu0 %v3040
        %3132 = vmatprep.subr.mxu0 0.0
        %3133 = vmatpush1.msra.mxu0 0.0
        %3134 = vmatprep.subr.mxu0 0.0
        %3135 = vmatpush1.msra.mxu0 0.0
        %3136 = vmatprep.subr.mxu0 0.0
        %3137 = vmatpush1.msra.mxu0 0.0
        %3138 = vmatprep.subr.mxu0 0.0
        %3139 = vmatpush1.msra.mxu0 0.0
        %3140 = vmatprep.subr.mxu0 0.0
        %3141 = vmatpush1.msra.mxu0 0.0
        %3142 = vmatprep.subr.mxu0 0.0
        %3143 = vmatpush1.msra.mxu0 0.0
        %3144 = vmatprep.subr.mxu0 0.0
        %3145 = vmatpush1.msra.mxu0 0.0
        %3146 = vmatprep.subr.mxu0 0.0
        %3147 = vmatpush1.msra.mxu0 0.0
        %3148 = vmatprep.subr.mxu0 0.0
        %3149 = vmatpush1.msra.mxu0 0.0
        %3150 = vmatprep.subr.mxu0 0.0
        %3151 = vmatpush1.msra.mxu0 0.0
        %3152 = vmatprep.subr.mxu0 0.0
        %3153 = vmatpush1.msra.mxu0 0.0
        %3154 = vmatprep.subr.mxu0 0.0
        %3155 = vmatpush1.msra.mxu0 0.0
        %3156 = vmatprep.subr.mxu0 0.0
        %3157 = vmatpush1.msra.mxu0 0.0
        %3158 = vmatprep.subr.mxu0 0.0
        %3159 = vmatpush1.msra.mxu0 0.0
        %3160 = vmatprep.subr.mxu0 0.0
        %3161 = vmatpush1.msra.mxu0 0.0
        %3162 = vmatprep.subr.mxu0 0.0
        %3163 = vmatpush1.msra.mxu0 0.0
        %3164 = vmatprep.subr.mxu0 0.0
        %3165 = vmatpush1.msra.mxu0 0.0
        %3166 = vmatprep.subr.mxu0 0.0
        %3167 = vmatpush1.msra.mxu0 0.0
        %3168 = vmatprep.subr.mxu0 0.0
        %3169 = vmatpush1.msra.mxu0 0.0
        %3170 = vmatprep.subr.mxu0 0.0
        %3171 = vmatpush1.msra.mxu0 0.0
        %3172 = vmatprep.subr.mxu0 0.0
        %3173 = vmatpush1.msra.mxu0 0.0
        %3174 = vmatprep.subr.mxu0 0.0
        %3175 = vmatpush1.msra.mxu0 0.0
        %3176 = vmatprep.subr.mxu0 0.0
        %3177 = vmatpush1.msra.mxu0 0.0
        %3178 = vmatprep.subr.mxu0 0.0
        %3179 = vmatpush1.msra.mxu0 0.0
        %3180 = vmatprep.subr.mxu0 0.0
        %3181 = vmatpush1.msra.mxu0 0.0
        %3182 = vmatprep.subr.mxu0 0.0
        %3183 = vmatpush1.msra.mxu0 0.0
        %3184 = vmatprep.subr.mxu0 0.0
        %3185 = vmatpush1.msra.mxu0 0.0
        %3186 = vmatprep.subr.mxu0 0.0
        %3187 = vmatpush1.msra.mxu0 0.0
        %3188 = vmatprep.subr.mxu0 0.0
        %3189 = vmatpush1.msra.mxu0 0.0
        %3190 = vmatprep.subr.mxu0 0.0
        %3191 = vmatpush1.msra.mxu0 0.0
        %3192 = vmatprep.subr.mxu0 0.0
        %3193 = vmatpush1.msra.mxu0 0.0
        %3194 = vmatprep.mubr.f32.mxu0 0.0
        %3195 = vmatmul.mubr.f32.gmra.mrb[0].mxu0 %v3057
        %v3196 = vpop.f32.mrb[0].mxu0
        %v3197 = vadd.f32 0.0, %v3196
        %v3198 = vpop.f32.mrb[0].mxu0
        %v3199 = vadd.f32 0.0, %v3198
        %3200 = vdwg.mxu0
        %3201 = vmatprep.subr.mxu0 %v3043
        %3202 = vmatpush1.msra.mxu0 %v3042
        %3203 = vmatprep.subr.mxu0 0.0
        %3204 = vmatpush1.msra.mxu0 0.0
        %3205 = vmatprep.subr.mxu0 0.0
        %3206 = vmatpush1.msra.mxu0 0.0
        %3207 = vmatprep.subr.mxu0 0.0
        %3208 = vmatpush1.msra.mxu0 0.0
        %3209 = vmatprep.subr.mxu0 0.0
        %3210 = vmatpush1.msra.mxu0 0.0
        %3211 = vmatprep.subr.mxu0 0.0
        %3212 = vmatpush1.msra.mxu0 0.0
        %3213 = vmatprep.subr.mxu0 0.0
        %3214 = vmatpush1.msra.mxu0 0.0
        %3215 = vmatprep.subr.mxu0 0.0
        %3216 = vmatpush1.msra.mxu0 0.0
        %3217 = vmatprep.subr.mxu0 0.0
        %3218 = vmatpush1.msra.mxu0 0.0
        %3219 = vmatprep.subr.mxu0 0.0
        %3220 = vmatpush1.msra.mxu0 0.0
        %3221 = vmatprep.subr.mxu0 0.0
        %3222 = vmatpush1.msra.mxu0 0.0
        %3223 = vmatprep.subr.mxu0 0.0
        %3224 = vmatpush1.msra.mxu0 0.0
        %3225 = vmatprep.subr.mxu0 0.0
        %3226 = vmatpush1.msra.mxu0 0.0
        %3227 = vmatprep.subr.mxu0 0.0
        %3228 = vmatpush1.msra.mxu0 0.0
        %3229 = vmatprep.subr.mxu0 0.0
        %3230 = vmatpush1.msra.mxu0 0.0
        %3231 = vmatprep.subr.mxu0 0.0
        %3232 = vmatpush1.msra.mxu0 0.0
        %3233 = vmatprep.subr.mxu0 0.0
        %3234 = vmatpush1.msra.mxu0 0.0
        %3235 = vmatprep.subr.mxu0 0.0
        %3236 = vmatpush1.msra.mxu0 0.0
        %3237 = vmatprep.subr.mxu0 0.0
        %3238 = vmatpush1.msra.mxu0 0.0
        %3239 = vmatprep.subr.mxu0 0.0
        %3240 = vmatpush1.msra.mxu0 0.0
        %3241 = vmatprep.subr.mxu0 0.0
        %3242 = vmatpush1.msra.mxu0 0.0
        %3243 = vmatprep.subr.mxu0 0.0
        %3244 = vmatpush1.msra.mxu0 0.0
        %3245 = vmatprep.subr.mxu0 0.0
        %3246 = vmatpush1.msra.mxu0 0.0
        %3247 = vmatprep.subr.mxu0 0.0
        %3248 = vmatpush1.msra.mxu0 0.0
        %3249 = vmatprep.subr.mxu0 0.0
        %3250 = vmatpush1.msra.mxu0 0.0
        %3251 = vmatprep.subr.mxu0 0.0
        %3252 = vmatpush1.msra.mxu0 0.0
        %3253 = vmatprep.subr.mxu0 0.0
        %3254 = vmatpush1.msra.mxu0 0.0
        %3255 = vmatprep.subr.mxu0 0.0
        %3256 = vmatpush1.msra.mxu0 0.0
        %3257 = vmatprep.subr.mxu0 0.0
        %3258 = vmatpush1.msra.mxu0 0.0
        %3259 = vmatprep.subr.mxu0 0.0
        %3260 = vmatpush1.msra.mxu0 0.0
        %3261 = vmatprep.subr.mxu0 0.0
        %3262 = vmatpush1.msra.mxu0 0.0
        %3263 = vmatprep.subr.mxu0 0.0
        %3264 = vmatpush1.msra.mxu0 0.0
        %3265 = vmatprep.mubr.f32.mxu0 0.0
        %3266 = vmatmul.mubr.f32.gmra.mrb[0].mxu0 %v3057
        %v3267 = vpop.f32.mrb[0].mxu0
        %v3268 = vadd.f32 0.0, %v3267
        %v3269 = vpop.f32.mrb[0].mxu0
        %v3270 = vadd.f32 0.0, %v3269
        %3271 = vdwg.mxu0
        %3272 = vmatprep.subr.mxu0 %v3045
        %3273 = vmatpush1.msra.mxu0 %v3044
        %3274 = vmatprep.subr.mxu0 0.0
        %3275 = vmatpush1.msra.mxu0 0.0
        %3276 = vmatprep.subr.mxu0 0.0
        %3277 = vmatpush1.msra.mxu0 0.0
        %3278 = vmatprep.subr.mxu0 0.0
        %3279 = vmatpush1.msra.mxu0 0.0
        %3280 = vmatprep.subr.mxu0 0.0
        %3281 = vmatpush1.msra.mxu0 0.0
        %3282 = vmatprep.subr.mxu0 0.0
        %3283 = vmatpush1.msra.mxu0 0.0
        %3284 = vmatprep.subr.mxu0 0.0
        %3285 = vmatpush1.msra.mxu0 0.0
        %3286 = vmatprep.subr.mxu0 0.0
        %3287 = vmatpush1.msra.mxu0 0.0
        %3288 = vmatprep.subr.mxu0 0.0
        %3289 = vmatpush1.msra.mxu0 0.0
        %3290 = vmatprep.subr.mxu0 0.0
        %3291 = vmatpush1.msra.mxu0 0.0
        %3292 = vmatprep.subr.mxu0 0.0
        %3293 = vmatpush1.msra.mxu0 0.0
        %3294 = vmatprep.subr.mxu0 0.0
        %3295 = vmatpush1.msra.mxu0 0.0
        %3296 = vmatprep.subr.mxu0 0.0
        %3297 = vmatpush1.msra.mxu0 0.0
        %3298 = vmatprep.subr.mxu0 0.0
        %3299 = vmatpush1.msra.mxu0 0.0
        %3300 = vmatprep.subr.mxu0 0.0
        %3301 = vmatpush1.msra.mxu0 0.0
        %3302 = vmatprep.subr.mxu0 0.0
        %3303 = vmatpush1.msra.mxu0 0.0
        %3304 = vmatprep.subr.mxu0 0.0
        %3305 = vmatpush1.msra.mxu0 0.0
        %3306 = vmatprep.subr.mxu0 0.0
        %3307 = vmatpush1.msra.mxu0 0.0
        %3308 = vmatprep.subr.mxu0 0.0
        %3309 = vmatpush1.msra.mxu0 0.0
        %3310 = vmatprep.subr.mxu0 0.0
        %3311 = vmatpush1.msra.mxu0 0.0
        %3312 = vmatprep.subr.mxu0 0.0
        %3313 = vmatpush1.msra.mxu0 0.0
        %3314 = vmatprep.subr.mxu0 0.0
        %3315 = vmatpush1.msra.mxu0 0.0
        %3316 = vmatprep.subr.mxu0 0.0
        %3317 = vmatpush1.msra.mxu0 0.0
        %3318 = vmatprep.subr.mxu0 0.0
        %3319 = vmatpush1.msra.mxu0 0.0
        %3320 = vmatprep.subr.mxu0 0.0
        %3321 = vmatpush1.msra.mxu0 0.0
        %3322 = vmatprep.subr.mxu0 0.0
        %3323 = vmatpush1.msra.mxu0 0.0
        %3324 = vmatprep.subr.mxu0 0.0
        %3325 = vmatpush1.msra.mxu0 0.0
        %3326 = vmatprep.subr.mxu0 0.0
        %3327 = vmatpush1.msra.mxu0 0.0
        %3328 = vmatprep.subr.mxu0 0.0
        %3329 = vmatpush1.msra.mxu0 0.0
        %3330 = vmatprep.subr.mxu0 0.0
        %3331 = vmatpush1.msra.mxu0 0.0
        %3332 = vmatprep.subr.mxu0 0.0
        %3333 = vmatpush1.msra.mxu0 0.0
        %3334 = vmatprep.subr.mxu0 0.0
        %3335 = vmatpush1.msra.mxu0 0.0
        %3336 = vmatprep.mubr.f32.mxu0 0.0
        %3337 = vmatmul.mubr.f32.gmra.mrb[0].mxu0 %v3057
        %v3338 = vpop.f32.mrb[0].mxu0
        %v3339 = vadd.f32 0.0, %v3338
        %v3340 = vpop.f32.mrb[0].mxu0
        %v3341 = vadd.f32 0.0, %v3340
        %3342 = vdwg.mxu0
        %3343 = vmatprep.subr.mxu0 0.0
        %3344 = vmatpush1.msra.mxu0 %v3046
        %3345 = vmatprep.subr.mxu0 0.0
        %3346 = vmatpush1.msra.mxu0 0.0
        %3347 = vmatprep.subr.mxu0 0.0
        %3348 = vmatpush1.msra.mxu0 0.0
        %3349 = vmatprep.subr.mxu0 0.0
        %3350 = vmatpush1.msra.mxu0 0.0
        %3351 = vmatprep.subr.mxu0 0.0
        %3352 = vmatpush1.msra.mxu0 0.0
        %3353 = vmatprep.subr.mxu0 0.0
        %3354 = vmatpush1.msra.mxu0 0.0
        %3355 = vmatprep.subr.mxu0 0.0
        %3356 = vmatpush1.msra.mxu0 0.0
        %3357 = vmatprep.subr.mxu0 0.0
        %3358 = vmatpush1.msra.mxu0 0.0
        %3359 = vmatprep.subr.mxu0 0.0
        %3360 = vmatpush1.msra.mxu0 0.0
        %3361 = vmatprep.subr.mxu0 0.0
        %3362 = vmatpush1.msra.mxu0 0.0
        %3363 = vmatprep.subr.mxu0 0.0
        %3364 = vmatpush1.msra.mxu0 0.0
        %3365 = vmatprep.subr.mxu0 0.0
        %3366 = vmatpush1.msra.mxu0 0.0
        %3367 = vmatprep.subr.mxu0 0.0
        %3368 = vmatpush1.msra.mxu0 0.0
        %3369 = vmatprep.subr.mxu0 0.0
        %3370 = vmatpush1.msra.mxu0 0.0
        %3371 = vmatprep.subr.mxu0 0.0
        %3372 = vmatpush1.msra.mxu0 0.0
        %3373 = vmatprep.subr.mxu0 0.0
        %3374 = vmatpush1.msra.mxu0 0.0
        %3375 = vmatprep.subr.mxu0 0.0
        %3376 = vmatpush1.msra.mxu0 0.0
        %3377 = vmatprep.subr.mxu0 0.0
        %3378 = vmatpush1.msra.mxu0 0.0
        %3379 = vmatprep.subr.mxu0 0.0
        %3380 = vmatpush1.msra.mxu0 0.0
        %3381 = vmatprep.subr.mxu0 0.0
        %3382 = vmatpush1.msra.mxu0 0.0
        %3383 = vmatprep.subr.mxu0 0.0
        %3384 = vmatpush1.msra.mxu0 0.0
        %3385 = vmatprep.subr.mxu0 0.0
        %3386 = vmatpush1.msra.mxu0 0.0
        %3387 = vmatprep.subr.mxu0 0.0
        %3388 = vmatpush1.msra.mxu0 0.0
        %3389 = vmatprep.subr.mxu0 0.0
        %3390 = vmatpush1.msra.mxu0 0.0
        %3391 = vmatprep.subr.mxu0 0.0
        %3392 = vmatpush1.msra.mxu0 0.0
        %3393 = vmatprep.subr.mxu0 0.0
        %3394 = vmatpush1.msra.mxu0 0.0
        %3395 = vmatprep.subr.mxu0 0.0
        %3396 = vmatpush1.msra.mxu0 0.0
        %3397 = vmatprep.subr.mxu0 0.0
        %3398 = vmatpush1.msra.mxu0 0.0
        %3399 = vmatprep.subr.mxu0 0.0
        %3400 = vmatpush1.msra.mxu0 0.0
        %3401 = vmatprep.subr.mxu0 0.0
        %3402 = vmatpush1.msra.mxu0 0.0
        %3403 = vmatprep.subr.mxu0 0.0
        %3404 = vmatpush1.msra.mxu0 0.0
        %3405 = vmatprep.subr.mxu0 0.0
        %3406 = vmatpush1.msra.mxu0 0.0
        %3407 = vmatprep.mubr.f32.mxu0 0.0
        %3408 = vmatmul.mubr.f32.gmra.mrb[0].mxu0 %v3057
        %v3409 = vpop.f32.mrb[0].mxu0
        %v3410 = vadd.f32 0.0, %v3409
        %v3411 = vpop.f32.mrb[0].mxu0
        %3412 = vdwg.mxu0
        %v3413 = vadd.f32 %v3006, %v3126
        %v3414 = vadd.f32 %v3007, %v3128
        %v3415 = vadd.f32 %v3008, %v3197
        %v3416 = vadd.f32 %v3009, %v3199
        %v3417 = vadd.f32 %v3010, %v3268
        %v3418 = vadd.f32 %v3011, %v3270
        %v3419 = vadd.f32 %v3012, %v3339
        %v3420 = vadd.f32 %v3013, %v3341
        %v3421 = vadd.f32 %v3014, %v3410
        %s3422 = scalar_lea.vmem %s2, 48
        %v3423 = vld [vmem:[%s3422] sm:$0xff]
        %3424 = vrot.lane.b32.xlu0 %v1020, 56
        %v3425 = vpop.permute.xlu0 %3424
        %3426 = vrot.lane.b32.xlu0 %v1021, 56
        %v3427 = vpop.permute.xlu0 %3426
        %3428 = vrot.lane.b32.xlu0 %v1022, 56
        %v3429 = vpop.permute.xlu0 %3428
        %3430 = vrot.lane.b32.xlu0 %v1023, 56
        %v3431 = vpop.permute.xlu0 %3430
        %3432 = vrot.lane.b32.xlu0 %v1024, 56
        %v3433 = vpop.permute.xlu0 %3432
        %3434 = vrot.lane.b32.xlu0 %v1025, 56
        %v3435 = vpop.permute.xlu0 %3434
        %3436 = vrot.lane.b32.xlu0 %v1026, 56
        %v3437 = vpop.permute.xlu0 %3436
        %3438 = vrot.lane.b32.xlu0 %v1027, 56
        %v3439 = vpop.permute.xlu0 %3438
        %3440 = vrot.lane.b32.xlu0 %v1028, 56
        %v3441 = vpop.permute.xlu0 %3440
        %3442 = vrot.lane.b32.xlu0 %v1029, 56
        %v3443 = vpop.permute.xlu0 %3442
        %vm3444 = vcmask 457728
        %v3445 = vsel %vm3444, %v3425, %v3427
        %v3446 = vsel %vm3444, %v3427, %v3429
        %v3447 = vsel %vm3444, %v3429, %v3431
        %v3448 = vsel %vm3444, %v3431, %v3433
        %v3449 = vsel %vm3444, %v3433, %v3435
        %v3450 = vsel %vm3444, %v3435, %v3437
        %v3451 = vsel %vm3444, %v3437, %v3439
        %v3452 = vsel %vm3444, %v3439, %v3441
        %v3453 = vsel %vm3444, %v3441, %v3443
        %v3464 = vsel %vm1079, %v3423, 0
        %3466 = vmatprep.subr.mxu0 %v3446
        %3467 = vmatpush1.msra.mxu0 %v3445
        %3468 = vmatprep.subr.mxu0 0.0
        %3469 = vmatpush1.msra.mxu0 0.0
        %3470 = vmatprep.subr.mxu0 0.0
        %3471 = vmatpush1.msra.mxu0 0.0
        %3472 = vmatprep.subr.mxu0 0.0
        %3473 = vmatpush1.msra.mxu0 0.0
        %3474 = vmatprep.subr.mxu0 0.0
        %3475 = vmatpush1.msra.mxu0 0.0
        %3476 = vmatprep.subr.mxu0 0.0
        %3477 = vmatpush1.msra.mxu0 0.0
        %3478 = vmatprep.subr.mxu0 0.0
        %3479 = vmatpush1.msra.mxu0 0.0
        %3480 = vmatprep.subr.mxu0 0.0
        %3481 = vmatpush1.msra.mxu0 0.0
        %3482 = vmatprep.subr.mxu0 0.0
        %3483 = vmatpush1.msra.mxu0 0.0
        %3484 = vmatprep.subr.mxu0 0.0
        %3485 = vmatpush1.msra.mxu0 0.0
        %3486 = vmatprep.subr.mxu0 0.0
        %3487 = vmatpush1.msra.mxu0 0.0
        %3488 = vmatprep.subr.mxu0 0.0
        %3489 = vmatpush1.msra.mxu0 0.0
        %3490 = vmatprep.subr.mxu0 0.0
        %3491 = vmatpush1.msra.mxu0 0.0
        %3492 = vmatprep.subr.mxu0 0.0
        %3493 = vmatpush1.msra.mxu0 0.0
        %3494 = vmatprep.subr.mxu0 0.0
        %3495 = vmatpush1.msra.mxu0 0.0
        %3496 = vmatprep.subr.mxu0 0.0
        %3497 = vmatpush1.msra.mxu0 0.0
        %3498 = vmatprep.subr.mxu0 0.0
        %3499 = vmatpush1.msra.mxu0 0.0
        %3500 = vmatprep.subr.mxu0 0.0
        %3501 = vmatpush1.msra.mxu0 0.0
        %3502 = vmatprep.subr.mxu0 0.0
        %3503 = vmatpush1.msra.mxu0 0.0
        %3504 = vmatprep.subr.mxu0 0.0
        %3505 = vmatpush1.msra.mxu0 0.0
        %3506 = vmatprep.subr.mxu0 0.0
        %3507 = vmatpush1.msra.mxu0 0.0
        %3508 = vmatprep.subr.mxu0 0.0
        %3509 = vmatpush1.msra.mxu0 0.0
        %3510 = vmatprep.subr.mxu0 0.0
        %3511 = vmatpush1.msra.mxu0 0.0
        %3512 = vmatprep.subr.mxu0 0.0
        %3513 = vmatpush1.msra.mxu0 0.0
        %3514 = vmatprep.subr.mxu0 0.0
        %3515 = vmatpush1.msra.mxu0 0.0
        %3516 = vmatprep.subr.mxu0 0.0
        %3517 = vmatpush1.msra.mxu0 0.0
        %3518 = vmatprep.subr.mxu0 0.0
        %3519 = vmatpush1.msra.mxu0 0.0
        %3520 = vmatprep.subr.mxu0 0.0
        %3521 = vmatpush1.msra.mxu0 0.0
        %3522 = vmatprep.subr.mxu0 0.0
        %3523 = vmatpush1.msra.mxu0 0.0
        %3524 = vmatprep.subr.mxu0 0.0
        %3525 = vmatpush1.msra.mxu0 0.0
        %3526 = vmatprep.subr.mxu0 0.0
        %3527 = vmatpush1.msra.mxu0 0.0
        %3528 = vmatprep.subr.mxu0 0.0
        %3529 = vmatpush1.msra.mxu0 0.0
        %3530 = vmatprep.mubr.f32.mxu0 0.0
        %3531 = vmatmul.mubr.f32.gmra.mrb[0].mxu0 %v3464
        %v3532 = vpop.f32.mrb[0].mxu0
        %v3533 = vadd.f32 0.0, %v3532
        %v3534 = vpop.f32.mrb[0].mxu0
        %v3535 = vadd.f32 0.0, %v3534
        %3536 = vdwg.mxu0
        %3537 = vmatprep.subr.mxu0 %v3448
        %3538 = vmatpush1.msra.mxu0 %v3447
        %3539 = vmatprep.subr.mxu0 0.0
        %3540 = vmatpush1.msra.mxu0 0.0
        %3541 = vmatprep.subr.mxu0 0.0
        %3542 = vmatpush1.msra.mxu0 0.0
        %3543 = vmatprep.subr.mxu0 0.0
        %3544 = vmatpush1.msra.mxu0 0.0
        %3545 = vmatprep.subr.mxu0 0.0
        %3546 = vmatpush1.msra.mxu0 0.0
        %3547 = vmatprep.subr.mxu0 0.0
        %3548 = vmatpush1.msra.mxu0 0.0
        %3549 = vmatprep.subr.mxu0 0.0
        %3550 = vmatpush1.msra.mxu0 0.0
        %3551 = vmatprep.subr.mxu0 0.0
        %3552 = vmatpush1.msra.mxu0 0.0
        %3553 = vmatprep.subr.mxu0 0.0
        %3554 = vmatpush1.msra.mxu0 0.0
        %3555 = vmatprep.subr.mxu0 0.0
        %3556 = vmatpush1.msra.mxu0 0.0
        %3557 = vmatprep.subr.mxu0 0.0
        %3558 = vmatpush1.msra.mxu0 0.0
        %3559 = vmatprep.subr.mxu0 0.0
        %3560 = vmatpush1.msra.mxu0 0.0
        %3561 = vmatprep.subr.mxu0 0.0
        %3562 = vmatpush1.msra.mxu0 0.0
        %3563 = vmatprep.subr.mxu0 0.0
        %3564 = vmatpush1.msra.mxu0 0.0
        %3565 = vmatprep.subr.mxu0 0.0
        %3566 = vmatpush1.msra.mxu0 0.0
        %3567 = vmatprep.subr.mxu0 0.0
        %3568 = vmatpush1.msra.mxu0 0.0
        %3569 = vmatprep.subr.mxu0 0.0
        %3570 = vmatpush1.msra.mxu0 0.0
        %3571 = vmatprep.subr.mxu0 0.0
        %3572 = vmatpush1.msra.mxu0 0.0
        %3573 = vmatprep.subr.mxu0 0.0
        %3574 = vmatpush1.msra.mxu0 0.0
        %3575 = vmatprep.subr.mxu0 0.0
        %3576 = vmatpush1.msra.mxu0 0.0
        %3577 = vmatprep.subr.mxu0 0.0
        %3578 = vmatpush1.msra.mxu0 0.0
        %3579 = vmatprep.subr.mxu0 0.0
        %3580 = vmatpush1.msra.mxu0 0.0
        %3581 = vmatprep.subr.mxu0 0.0
        %3582 = vmatpush1.msra.mxu0 0.0
        %3583 = vmatprep.subr.mxu0 0.0
        %3584 = vmatpush1.msra.mxu0 0.0
        %3585 = vmatprep.subr.mxu0 0.0
        %3586 = vmatpush1.msra.mxu0 0.0
        %3587 = vmatprep.subr.mxu0 0.0
        %3588 = vmatpush1.msra.mxu0 0.0
        %3589 = vmatprep.subr.mxu0 0.0
        %3590 = vmatpush1.msra.mxu0 0.0
        %3591 = vmatprep.subr.mxu0 0.0
        %3592 = vmatpush1.msra.mxu0 0.0
        %3593 = vmatprep.subr.mxu0 0.0
        %3594 = vmatpush1.msra.mxu0 0.0
        %3595 = vmatprep.subr.mxu0 0.0
        %3596 = vmatpush1.msra.mxu0 0.0
        %3597 = vmatprep.subr.mxu0 0.0
        %3598 = vmatpush1.msra.mxu0 0.0
        %3599 = vmatprep.subr.mxu0 0.0
        %3600 = vmatpush1.msra.mxu0 0.0
        %3601 = vmatprep.mubr.f32.mxu0 0.0
        %3602 = vmatmul.mubr.f32.gmra.mrb[0].mxu0 %v3464
        %v3603 = vpop.f32.mrb[0].mxu0
        %v3604 = vadd.f32 0.0, %v3603
        %v3605 = vpop.f32.mrb[0].mxu0
        %v3606 = vadd.f32 0.0, %v3605
        %3607 = vdwg.mxu0
        %3608 = vmatprep.subr.mxu0 %v3450
        %3609 = vmatpush1.msra.mxu0 %v3449
        %3610 = vmatprep.subr.mxu0 0.0
        %3611 = vmatpush1.msra.mxu0 0.0
        %3612 = vmatprep.subr.mxu0 0.0
        %3613 = vmatpush1.msra.mxu0 0.0
        %3614 = vmatprep.subr.mxu0 0.0
        %3615 = vmatpush1.msra.mxu0 0.0
        %3616 = vmatprep.subr.mxu0 0.0
        %3617 = vmatpush1.msra.mxu0 0.0
        %3618 = vmatprep.subr.mxu0 0.0
        %3619 = vmatpush1.msra.mxu0 0.0
        %3620 = vmatprep.subr.mxu0 0.0
        %3621 = vmatpush1.msra.mxu0 0.0
        %3622 = vmatprep.subr.mxu0 0.0
        %3623 = vmatpush1.msra.mxu0 0.0
        %3624 = vmatprep.subr.mxu0 0.0
        %3625 = vmatpush1.msra.mxu0 0.0
        %3626 = vmatprep.subr.mxu0 0.0
        %3627 = vmatpush1.msra.mxu0 0.0
        %3628 = vmatprep.subr.mxu0 0.0
        %3629 = vmatpush1.msra.mxu0 0.0
        %3630 = vmatprep.subr.mxu0 0.0
        %3631 = vmatpush1.msra.mxu0 0.0
        %3632 = vmatprep.subr.mxu0 0.0
        %3633 = vmatpush1.msra.mxu0 0.0
        %3634 = vmatprep.subr.mxu0 0.0
        %3635 = vmatpush1.msra.mxu0 0.0
        %3636 = vmatprep.subr.mxu0 0.0
        %3637 = vmatpush1.msra.mxu0 0.0
        %3638 = vmatprep.subr.mxu0 0.0
        %3639 = vmatpush1.msra.mxu0 0.0
        %3640 = vmatprep.subr.mxu0 0.0
        %3641 = vmatpush1.msra.mxu0 0.0
        %3642 = vmatprep.subr.mxu0 0.0
        %3643 = vmatpush1.msra.mxu0 0.0
        %3644 = vmatprep.subr.mxu0 0.0
        %3645 = vmatpush1.msra.mxu0 0.0
        %3646 = vmatprep.subr.mxu0 0.0
        %3647 = vmatpush1.msra.mxu0 0.0
        %3648 = vmatprep.subr.mxu0 0.0
        %3649 = vmatpush1.msra.mxu0 0.0
        %3650 = vmatprep.subr.mxu0 0.0
        %3651 = vmatpush1.msra.mxu0 0.0
        %3652 = vmatprep.subr.mxu0 0.0
        %3653 = vmatpush1.msra.mxu0 0.0
        %3654 = vmatprep.subr.mxu0 0.0
        %3655 = vmatpush1.msra.mxu0 0.0
        %3656 = vmatprep.subr.mxu0 0.0
        %3657 = vmatpush1.msra.mxu0 0.0
        %3658 = vmatprep.subr.mxu0 0.0
        %3659 = vmatpush1.msra.mxu0 0.0
        %3660 = vmatprep.subr.mxu0 0.0
        %3661 = vmatpush1.msra.mxu0 0.0
        %3662 = vmatprep.subr.mxu0 0.0
        %3663 = vmatpush1.msra.mxu0 0.0
        %3664 = vmatprep.subr.mxu0 0.0
        %3665 = vmatpush1.msra.mxu0 0.0
        %3666 = vmatprep.subr.mxu0 0.0
        %3667 = vmatpush1.msra.mxu0 0.0
        %3668 = vmatprep.subr.mxu0 0.0
        %3669 = vmatpush1.msra.mxu0 0.0
        %3670 = vmatprep.subr.mxu0 0.0
        %3671 = vmatpush1.msra.mxu0 0.0
        %3672 = vmatprep.mubr.f32.mxu0 0.0
        %3673 = vmatmul.mubr.f32.gmra.mrb[0].mxu0 %v3464
        %v3674 = vpop.f32.mrb[0].mxu0
        %v3675 = vadd.f32 0.0, %v3674
        %v3676 = vpop.f32.mrb[0].mxu0
        %v3677 = vadd.f32 0.0, %v3676
        %3678 = vdwg.mxu0
        %3679 = vmatprep.subr.mxu0 %v3452
        %3680 = vmatpush1.msra.mxu0 %v3451
        %3681 = vmatprep.subr.mxu0 0.0
        %3682 = vmatpush1.msra.mxu0 0.0
        %3683 = vmatprep.subr.mxu0 0.0
        %3684 = vmatpush1.msra.mxu0 0.0
        %3685 = vmatprep.subr.mxu0 0.0
        %3686 = vmatpush1.msra.mxu0 0.0
        %3687 = vmatprep.subr.mxu0 0.0
        %3688 = vmatpush1.msra.mxu0 0.0
        %3689 = vmatprep.subr.mxu0 0.0
        %3690 = vmatpush1.msra.mxu0 0.0
        %3691 = vmatprep.subr.mxu0 0.0
        %3692 = vmatpush1.msra.mxu0 0.0
        %3693 = vmatprep.subr.mxu0 0.0
        %3694 = vmatpush1.msra.mxu0 0.0
        %3695 = vmatprep.subr.mxu0 0.0
        %3696 = vmatpush1.msra.mxu0 0.0
        %3697 = vmatprep.subr.mxu0 0.0
        %3698 = vmatpush1.msra.mxu0 0.0
        %3699 = vmatprep.subr.mxu0 0.0
        %3700 = vmatpush1.msra.mxu0 0.0
        %3701 = vmatprep.subr.mxu0 0.0
        %3702 = vmatpush1.msra.mxu0 0.0
        %3703 = vmatprep.subr.mxu0 0.0
        %3704 = vmatpush1.msra.mxu0 0.0
        %3705 = vmatprep.subr.mxu0 0.0
        %3706 = vmatpush1.msra.mxu0 0.0
        %3707 = vmatprep.subr.mxu0 0.0
        %3708 = vmatpush1.msra.mxu0 0.0
        %3709 = vmatprep.subr.mxu0 0.0
        %3710 = vmatpush1.msra.mxu0 0.0
        %3711 = vmatprep.subr.mxu0 0.0
        %3712 = vmatpush1.msra.mxu0 0.0
        %3713 = vmatprep.subr.mxu0 0.0
        %3714 = vmatpush1.msra.mxu0 0.0
        %3715 = vmatprep.subr.mxu0 0.0
        %3716 = vmatpush1.msra.mxu0 0.0
        %3717 = vmatprep.subr.mxu0 0.0
        %3718 = vmatpush1.msra.mxu0 0.0
        %3719 = vmatprep.subr.mxu0 0.0
        %3720 = vmatpush1.msra.mxu0 0.0
        %3721 = vmatprep.subr.mxu0 0.0
        %3722 = vmatpush1.msra.mxu0 0.0
        %3723 = vmatprep.subr.mxu0 0.0
        %3724 = vmatpush1.msra.mxu0 0.0
        %3725 = vmatprep.subr.mxu0 0.0
        %3726 = vmatpush1.msra.mxu0 0.0
        %3727 = vmatprep.subr.mxu0 0.0
        %3728 = vmatpush1.msra.mxu0 0.0
        %3729 = vmatprep.subr.mxu0 0.0
        %3730 = vmatpush1.msra.mxu0 0.0
        %3731 = vmatprep.subr.mxu0 0.0
        %3732 = vmatpush1.msra.mxu0 0.0
        %3733 = vmatprep.subr.mxu0 0.0
        %3734 = vmatpush1.msra.mxu0 0.0
        %3735 = vmatprep.subr.mxu0 0.0
        %3736 = vmatpush1.msra.mxu0 0.0
        %3737 = vmatprep.subr.mxu0 0.0
        %3738 = vmatpush1.msra.mxu0 0.0
        %3739 = vmatprep.subr.mxu0 0.0
        %3740 = vmatpush1.msra.mxu0 0.0
        %3741 = vmatprep.subr.mxu0 0.0
        %3742 = vmatpush1.msra.mxu0 0.0
        %3743 = vmatprep.mubr.f32.mxu0 0.0
        %3744 = vmatmul.mubr.f32.gmra.mrb[0].mxu0 %v3464
        %v3745 = vpop.f32.mrb[0].mxu0
        %v3746 = vadd.f32 0.0, %v3745
        %v3747 = vpop.f32.mrb[0].mxu0
        %v3748 = vadd.f32 0.0, %v3747
        %3749 = vdwg.mxu0
        %3750 = vmatprep.subr.mxu0 0.0
        %3751 = vmatpush1.msra.mxu0 %v3453
        %3752 = vmatprep.subr.mxu0 0.0
        %3753 = vmatpush1.msra.mxu0 0.0
        %3754 = vmatprep.subr.mxu0 0.0
        %3755 = vmatpush1.msra.mxu0 0.0
        %3756 = vmatprep.subr.mxu0 0.0
        %3757 = vmatpush1.msra.mxu0 0.0
        %3758 = vmatprep.subr.mxu0 0.0
        %3759 = vmatpush1.msra.mxu0 0.0
        %3760 = vmatprep.subr.mxu0 0.0
        %3761 = vmatpush1.msra.mxu0 0.0
        %3762 = vmatprep.subr.mxu0 0.0
        %3763 = vmatpush1.msra.mxu0 0.0
        %3764 = vmatprep.subr.mxu0 0.0
        %3765 = vmatpush1.msra.mxu0 0.0
        %3766 = vmatprep.subr.mxu0 0.0
        %3767 = vmatpush1.msra.mxu0 0.0
        %3768 = vmatprep.subr.mxu0 0.0
        %3769 = vmatpush1.msra.mxu0 0.0
        %3770 = vmatprep.subr.mxu0 0.0
        %3771 = vmatpush1.msra.mxu0 0.0
        %3772 = vmatprep.subr.mxu0 0.0
        %3773 = vmatpush1.msra.mxu0 0.0
        %3774 = vmatprep.subr.mxu0 0.0
        %3775 = vmatpush1.msra.mxu0 0.0
        %3776 = vmatprep.subr.mxu0 0.0
        %3777 = vmatpush1.msra.mxu0 0.0
        %3778 = vmatprep.subr.mxu0 0.0
        %3779 = vmatpush1.msra.mxu0 0.0
        %3780 = vmatprep.subr.mxu0 0.0
        %3781 = vmatpush1.msra.mxu0 0.0
        %3782 = vmatprep.subr.mxu0 0.0
        %3783 = vmatpush1.msra.mxu0 0.0
        %3784 = vmatprep.subr.mxu0 0.0
        %3785 = vmatpush1.msra.mxu0 0.0
        %3786 = vmatprep.subr.mxu0 0.0
        %3787 = vmatpush1.msra.mxu0 0.0
        %3788 = vmatprep.subr.mxu0 0.0
        %3789 = vmatpush1.msra.mxu0 0.0
        %3790 = vmatprep.subr.mxu0 0.0
        %3791 = vmatpush1.msra.mxu0 0.0
        %3792 = vmatprep.subr.mxu0 0.0
        %3793 = vmatpush1.msra.mxu0 0.0
        %3794 = vmatprep.subr.mxu0 0.0
        %3795 = vmatpush1.msra.mxu0 0.0
        %3796 = vmatprep.subr.mxu0 0.0
        %3797 = vmatpush1.msra.mxu0 0.0
        %3798 = vmatprep.subr.mxu0 0.0
        %3799 = vmatpush1.msra.mxu0 0.0
        %3800 = vmatprep.subr.mxu0 0.0
        %3801 = vmatpush1.msra.mxu0 0.0
        %3802 = vmatprep.subr.mxu0 0.0
        %3803 = vmatpush1.msra.mxu0 0.0
        %3804 = vmatprep.subr.mxu0 0.0
        %3805 = vmatpush1.msra.mxu0 0.0
        %3806 = vmatprep.subr.mxu0 0.0
        %3807 = vmatpush1.msra.mxu0 0.0
        %3808 = vmatprep.subr.mxu0 0.0
        %3809 = vmatpush1.msra.mxu0 0.0
        %3810 = vmatprep.subr.mxu0 0.0
        %3811 = vmatpush1.msra.mxu0 0.0
        %3812 = vmatprep.subr.mxu0 0.0
        %3813 = vmatpush1.msra.mxu0 0.0
        %3814 = vmatprep.mubr.f32.mxu0 0.0
        %3815 = vmatmul.mubr.f32.gmra.mrb[0].mxu0 %v3464
        %v3816 = vpop.f32.mrb[0].mxu0
        %v3817 = vadd.f32 0.0, %v3816
        %v3818 = vpop.f32.mrb[0].mxu0
        %3819 = vdwg.mxu0
        %v3820 = vadd.f32 %v3413, %v3533
        %v3821 = vadd.f32 %v3414, %v3535
        %v3822 = vadd.f32 %v3415, %v3604
        %v3823 = vadd.f32 %v3416, %v3606
        %v3824 = vadd.f32 %v3417, %v3675
        %v3825 = vadd.f32 %v3418, %v3677
        %v3826 = vadd.f32 %v3419, %v3746
        %v3827 = vadd.f32 %v3420, %v3748
        %v3828 = vadd.f32 %v3421, %v3817
        %s3829 = scalar_lea.vmem %s2, 56
        %v3830 = vld [vmem:[%s3829] sm:$0xff]
        %3831 = vrot.lane.b32.xlu0 %v1020, 55
        %v3832 = vpop.permute.xlu0 %3831
        %3833 = vrot.lane.b32.xlu0 %v1021, 55
        %v3834 = vpop.permute.xlu0 %3833
        %3835 = vrot.lane.b32.xlu0 %v1022, 55
        %v3836 = vpop.permute.xlu0 %3835
        %3837 = vrot.lane.b32.xlu0 %v1023, 55
        %v3838 = vpop.permute.xlu0 %3837
        %3839 = vrot.lane.b32.xlu0 %v1024, 55
        %v3840 = vpop.permute.xlu0 %3839
        %3841 = vrot.lane.b32.xlu0 %v1025, 55
        %v3842 = vpop.permute.xlu0 %3841
        %3843 = vrot.lane.b32.xlu0 %v1026, 55
        %v3844 = vpop.permute.xlu0 %3843
        %3845 = vrot.lane.b32.xlu0 %v1027, 55
        %v3846 = vpop.permute.xlu0 %3845
        %3847 = vrot.lane.b32.xlu0 %v1028, 55
        %v3848 = vpop.permute.xlu0 %3847
        %3849 = vrot.lane.b32.xlu0 %v1029, 55
        %v3850 = vpop.permute.xlu0 %3849
        %vm3851 = vcmask 449536
        %v3852 = vsel %vm3851, %v3832, %v3834
        %v3853 = vsel %vm3851, %v3834, %v3836
        %v3854 = vsel %vm3851, %v3836, %v3838
        %v3855 = vsel %vm3851, %v3838, %v3840
        %v3856 = vsel %vm3851, %v3840, %v3842
        %v3857 = vsel %vm3851, %v3842, %v3844
        %v3858 = vsel %vm3851, %v3844, %v3846
        %v3859 = vsel %vm3851, %v3846, %v3848
        %v3860 = vsel %vm3851, %v3848, %v3850
        %v3871 = vsel %vm1079, %v3830, 0
        %3873 = vmatprep.subr.mxu0 %v3853
        %3874 = vmatpush1.msra.mxu0 %v3852
        %3875 = vmatprep.subr.mxu0 0.0
        %3876 = vmatpush1.msra.mxu0 0.0
        %3877 = vmatprep.subr.mxu0 0.0
        %3878 = vmatpush1.msra.mxu0 0.0
        %3879 = vmatprep.subr.mxu0 0.0
        %3880 = vmatpush1.msra.mxu0 0.0
        %3881 = vmatprep.subr.mxu0 0.0
        %3882 = vmatpush1.msra.mxu0 0.0
        %3883 = vmatprep.subr.mxu0 0.0
        %3884 = vmatpush1.msra.mxu0 0.0
        %3885 = vmatprep.subr.mxu0 0.0
        %3886 = vmatpush1.msra.mxu0 0.0
        %3887 = vmatprep.subr.mxu0 0.0
        %3888 = vmatpush1.msra.mxu0 0.0
        %3889 = vmatprep.subr.mxu0 0.0
        %3890 = vmatpush1.msra.mxu0 0.0
        %3891 = vmatprep.subr.mxu0 0.0
        %3892 = vmatpush1.msra.mxu0 0.0
        %3893 = vmatprep.subr.mxu0 0.0
        %3894 = vmatpush1.msra.mxu0 0.0
        %3895 = vmatprep.subr.mxu0 0.0
        %3896 = vmatpush1.msra.mxu0 0.0
        %3897 = vmatprep.subr.mxu0 0.0
        %3898 = vmatpush1.msra.mxu0 0.0
        %3899 = vmatprep.subr.mxu0 0.0
        %3900 = vmatpush1.msra.mxu0 0.0
        %3901 = vmatprep.subr.mxu0 0.0
        %3902 = vmatpush1.msra.mxu0 0.0
        %3903 = vmatprep.subr.mxu0 0.0
        %3904 = vmatpush1.msra.mxu0 0.0
        %3905 = vmatprep.subr.mxu0 0.0
        %3906 = vmatpush1.msra.mxu0 0.0
        %3907 = vmatprep.subr.mxu0 0.0
        %3908 = vmatpush1.msra.mxu0 0.0
        %3909 = vmatprep.subr.mxu0 0.0
        %3910 = vmatpush1.msra.mxu0 0.0
        %3911 = vmatprep.subr.mxu0 0.0
        %3912 = vmatpush1.msra.mxu0 0.0
        %3913 = vmatprep.subr.mxu0 0.0
        %3914 = vmatpush1.msra.mxu0 0.0
        %3915 = vmatprep.subr.mxu0 0.0
        %3916 = vmatpush1.msra.mxu0 0.0
        %3917 = vmatprep.subr.mxu0 0.0
        %3918 = vmatpush1.msra.mxu0 0.0
        %3919 = vmatprep.subr.mxu0 0.0
        %3920 = vmatpush1.msra.mxu0 0.0
        %3921 = vmatprep.subr.mxu0 0.0
        %3922 = vmatpush1.msra.mxu0 0.0
        %3923 = vmatprep.subr.mxu0 0.0
        %3924 = vmatpush1.msra.mxu0 0.0
        %3925 = vmatprep.subr.mxu0 0.0
        %3926 = vmatpush1.msra.mxu0 0.0
        %3927 = vmatprep.subr.mxu0 0.0
        %3928 = vmatpush1.msra.mxu0 0.0
        %3929 = vmatprep.subr.mxu0 0.0
        %3930 = vmatpush1.msra.mxu0 0.0
        %3931 = vmatprep.subr.mxu0 0.0
        %3932 = vmatpush1.msra.mxu0 0.0
        %3933 = vmatprep.subr.mxu0 0.0
        %3934 = vmatpush1.msra.mxu0 0.0
        %3935 = vmatprep.subr.mxu0 0.0
        %3936 = vmatpush1.msra.mxu0 0.0
        %3937 = vmatprep.mubr.f32.mxu0 0.0
        %3938 = vmatmul.mubr.f32.gmra.mrb[0].mxu0 %v3871
        %v3939 = vpop.f32.mrb[0].mxu0
        %v3940 = vadd.f32 0.0, %v3939
        %v3941 = vpop.f32.mrb[0].mxu0
        %v3942 = vadd.f32 0.0, %v3941
        %3943 = vdwg.mxu0
        %3944 = vmatprep.subr.mxu0 %v3855
        %3945 = vmatpush1.msra.mxu0 %v3854
        %3946 = vmatprep.subr.mxu0 0.0
        %3947 = vmatpush1.msra.mxu0 0.0
        %3948 = vmatprep.subr.mxu0 0.0
        %3949 = vmatpush1.msra.mxu0 0.0
        %3950 = vmatprep.subr.mxu0 0.0
        %3951 = vmatpush1.msra.mxu0 0.0
        %3952 = vmatprep.subr.mxu0 0.0
        %3953 = vmatpush1.msra.mxu0 0.0
        %3954 = vmatprep.subr.mxu0 0.0
        %3955 = vmatpush1.msra.mxu0 0.0
        %3956 = vmatprep.subr.mxu0 0.0
        %3957 = vmatpush1.msra.mxu0 0.0
        %3958 = vmatprep.subr.mxu0 0.0
        %3959 = vmatpush1.msra.mxu0 0.0
        %3960 = vmatprep.subr.mxu0 0.0
        %3961 = vmatpush1.msra.mxu0 0.0
        %3962 = vmatprep.subr.mxu0 0.0
        %3963 = vmatpush1.msra.mxu0 0.0
        %3964 = vmatprep.subr.mxu0 0.0
        %3965 = vmatpush1.msra.mxu0 0.0
        %3966 = vmatprep.subr.mxu0 0.0
        %3967 = vmatpush1.msra.mxu0 0.0
        %3968 = vmatprep.subr.mxu0 0.0
        %3969 = vmatpush1.msra.mxu0 0.0
        %3970 = vmatprep.subr.mxu0 0.0
        %3971 = vmatpush1.msra.mxu0 0.0
        %3972 = vmatprep.subr.mxu0 0.0
        %3973 = vmatpush1.msra.mxu0 0.0
        %3974 = vmatprep.subr.mxu0 0.0
        %3975 = vmatpush1.msra.mxu0 0.0
        %3976 = vmatprep.subr.mxu0 0.0
        %3977 = vmatpush1.msra.mxu0 0.0
        %3978 = vmatprep.subr.mxu0 0.0
        %3979 = vmatpush1.msra.mxu0 0.0
        %3980 = vmatprep.subr.mxu0 0.0
        %3981 = vmatpush1.msra.mxu0 0.0
        %3982 = vmatprep.subr.mxu0 0.0
        %3983 = vmatpush1.msra.mxu0 0.0
        %3984 = vmatprep.subr.mxu0 0.0
        %3985 = vmatpush1.msra.mxu0 0.0
        %3986 = vmatprep.subr.mxu0 0.0
        %3987 = vmatpush1.msra.mxu0 0.0
        %3988 = vmatprep.subr.mxu0 0.0
        %3989 = vmatpush1.msra.mxu0 0.0
        %3990 = vmatprep.subr.mxu0 0.0
        %3991 = vmatpush1.msra.mxu0 0.0
        %3992 = vmatprep.subr.mxu0 0.0
        %3993 = vmatpush1.msra.mxu0 0.0
        %3994 = vmatprep.subr.mxu0 0.0
        %3995 = vmatpush1.msra.mxu0 0.0
        %3996 = vmatprep.subr.mxu0 0.0
        %3997 = vmatpush1.msra.mxu0 0.0
        %3998 = vmatprep.subr.mxu0 0.0
        %3999 = vmatpush1.msra.mxu0 0.0
        %4000 = vmatprep.subr.mxu0 0.0
        %4001 = vmatpush1.msra.mxu0 0.0
        %4002 = vmatprep.subr.mxu0 0.0
        %4003 = vmatpush1.msra.mxu0 0.0
        %4004 = vmatprep.subr.mxu0 0.0
        %4005 = vmatpush1.msra.mxu0 0.0
        %4006 = vmatprep.subr.mxu0 0.0
        %4007 = vmatpush1.msra.mxu0 0.0
        %4008 = vmatprep.mubr.f32.mxu0 0.0
        %4009 = vmatmul.mubr.f32.gmra.mrb[0].mxu0 %v3871
        %v4010 = vpop.f32.mrb[0].mxu0
        %v4011 = vadd.f32 0.0, %v4010
        %v4012 = vpop.f32.mrb[0].mxu0
        %v4013 = vadd.f32 0.0, %v4012
        %4014 = vdwg.mxu0
        %4015 = vmatprep.subr.mxu0 %v3857
        %4016 = vmatpush1.msra.mxu0 %v3856
        %4017 = vmatprep.subr.mxu0 0.0
        %4018 = vmatpush1.msra.mxu0 0.0
        %4019 = vmatprep.subr.mxu0 0.0
        %4020 = vmatpush1.msra.mxu0 0.0
        %4021 = vmatprep.subr.mxu0 0.0
        %4022 = vmatpush1.msra.mxu0 0.0
        %4023 = vmatprep.subr.mxu0 0.0
        %4024 = vmatpush1.msra.mxu0 0.0
        %4025 = vmatprep.subr.mxu0 0.0
        %4026 = vmatpush1.msra.mxu0 0.0
        %4027 = vmatprep.subr.mxu0 0.0
        %4028 = vmatpush1.msra.mxu0 0.0
        %4029 = vmatprep.subr.mxu0 0.0
        %4030 = vmatpush1.msra.mxu0 0.0
        %4031 = vmatprep.subr.mxu0 0.0
        %4032 = vmatpush1.msra.mxu0 0.0
        %4033 = vmatprep.subr.mxu0 0.0
        %4034 = vmatpush1.msra.mxu0 0.0
        %4035 = vmatprep.subr.mxu0 0.0
        %4036 = vmatpush1.msra.mxu0 0.0
        %4037 = vmatprep.subr.mxu0 0.0
        %4038 = vmatpush1.msra.mxu0 0.0
        %4039 = vmatprep.subr.mxu0 0.0
        %4040 = vmatpush1.msra.mxu0 0.0
        %4041 = vmatprep.subr.mxu0 0.0
        %4042 = vmatpush1.msra.mxu0 0.0
        %4043 = vmatprep.subr.mxu0 0.0
        %4044 = vmatpush1.msra.mxu0 0.0
        %4045 = vmatprep.subr.mxu0 0.0
        %4046 = vmatpush1.msra.mxu0 0.0
        %4047 = vmatprep.subr.mxu0 0.0
        %4048 = vmatpush1.msra.mxu0 0.0
        %4049 = vmatprep.subr.mxu0 0.0
        %4050 = vmatpush1.msra.mxu0 0.0
        %4051 = vmatprep.subr.mxu0 0.0
        %4052 = vmatpush1.msra.mxu0 0.0
        %4053 = vmatprep.subr.mxu0 0.0
        %4054 = vmatpush1.msra.mxu0 0.0
        %4055 = vmatprep.subr.mxu0 0.0
        %4056 = vmatpush1.msra.mxu0 0.0
        %4057 = vmatprep.subr.mxu0 0.0
        %4058 = vmatpush1.msra.mxu0 0.0
        %4059 = vmatprep.subr.mxu0 0.0
        %4060 = vmatpush1.msra.mxu0 0.0
        %4061 = vmatprep.subr.mxu0 0.0
        %4062 = vmatpush1.msra.mxu0 0.0
        %4063 = vmatprep.subr.mxu0 0.0
        %4064 = vmatpush1.msra.mxu0 0.0
        %4065 = vmatprep.subr.mxu0 0.0
        %4066 = vmatpush1.msra.mxu0 0.0
        %4067 = vmatprep.subr.mxu0 0.0
        %4068 = vmatpush1.msra.mxu0 0.0
        %4069 = vmatprep.subr.mxu0 0.0
        %4070 = vmatpush1.msra.mxu0 0.0
        %4071 = vmatprep.subr.mxu0 0.0
        %4072 = vmatpush1.msra.mxu0 0.0
        %4073 = vmatprep.subr.mxu0 0.0
        %4074 = vmatpush1.msra.mxu0 0.0
        %4075 = vmatprep.subr.mxu0 0.0
        %4076 = vmatpush1.msra.mxu0 0.0
        %4077 = vmatprep.subr.mxu0 0.0
        %4078 = vmatpush1.msra.mxu0 0.0
        %4079 = vmatprep.mubr.f32.mxu0 0.0
        %4080 = vmatmul.mubr.f32.gmra.mrb[0].mxu0 %v3871
        %v4081 = vpop.f32.mrb[0].mxu0
        %v4082 = vadd.f32 0.0, %v4081
        %v4083 = vpop.f32.mrb[0].mxu0
        %v4084 = vadd.f32 0.0, %v4083
        %4085 = vdwg.mxu0
        %4086 = vmatprep.subr.mxu0 %v3859
        %4087 = vmatpush1.msra.mxu0 %v3858
        %4088 = vmatprep.subr.mxu0 0.0
        %4089 = vmatpush1.msra.mxu0 0.0
        %4090 = vmatprep.subr.mxu0 0.0
        %4091 = vmatpush1.msra.mxu0 0.0
        %4092 = vmatprep.subr.mxu0 0.0
        %4093 = vmatpush1.msra.mxu0 0.0
        %4094 = vmatprep.subr.mxu0 0.0
        %4095 = vmatpush1.msra.mxu0 0.0
        %4096 = vmatprep.subr.mxu0 0.0
        %4097 = vmatpush1.msra.mxu0 0.0
        %4098 = vmatprep.subr.mxu0 0.0
        %4099 = vmatpush1.msra.mxu0 0.0
        %4100 = vmatprep.subr.mxu0 0.0
        %4101 = vmatpush1.msra.mxu0 0.0
        %4102 = vmatprep.subr.mxu0 0.0
        %4103 = vmatpush1.msra.mxu0 0.0
        %4104 = vmatprep.subr.mxu0 0.0
        %4105 = vmatpush1.msra.mxu0 0.0
        %4106 = vmatprep.subr.mxu0 0.0
        %4107 = vmatpush1.msra.mxu0 0.0
        %4108 = vmatprep.subr.mxu0 0.0
        %4109 = vmatpush1.msra.mxu0 0.0
        %4110 = vmatprep.subr.mxu0 0.0
        %4111 = vmatpush1.msra.mxu0 0.0
        %4112 = vmatprep.subr.mxu0 0.0
        %4113 = vmatpush1.msra.mxu0 0.0
        %4114 = vmatprep.subr.mxu0 0.0
        %4115 = vmatpush1.msra.mxu0 0.0
        %4116 = vmatprep.subr.mxu0 0.0
        %4117 = vmatpush1.msra.mxu0 0.0
        %4118 = vmatprep.subr.mxu0 0.0
        %4119 = vmatpush1.msra.mxu0 0.0
        %4120 = vmatprep.subr.mxu0 0.0
        %4121 = vmatpush1.msra.mxu0 0.0
        %4122 = vmatprep.subr.mxu0 0.0
        %4123 = vmatpush1.msra.mxu0 0.0
        %4124 = vmatprep.subr.mxu0 0.0
        %4125 = vmatpush1.msra.mxu0 0.0
        %4126 = vmatprep.subr.mxu0 0.0
        %4127 = vmatpush1.msra.mxu0 0.0
        %4128 = vmatprep.subr.mxu0 0.0
        %4129 = vmatpush1.msra.mxu0 0.0
        %4130 = vmatprep.subr.mxu0 0.0
        %4131 = vmatpush1.msra.mxu0 0.0
        %4132 = vmatprep.subr.mxu0 0.0
        %4133 = vmatpush1.msra.mxu0 0.0
        %4134 = vmatprep.subr.mxu0 0.0
        %4135 = vmatpush1.msra.mxu0 0.0
        %4136 = vmatprep.subr.mxu0 0.0
        %4137 = vmatpush1.msra.mxu0 0.0
        %4138 = vmatprep.subr.mxu0 0.0
        %4139 = vmatpush1.msra.mxu0 0.0
        %4140 = vmatprep.subr.mxu0 0.0
        %4141 = vmatpush1.msra.mxu0 0.0
        %4142 = vmatprep.subr.mxu0 0.0
        %4143 = vmatpush1.msra.mxu0 0.0
        %4144 = vmatprep.subr.mxu0 0.0
        %4145 = vmatpush1.msra.mxu0 0.0
        %4146 = vmatprep.subr.mxu0 0.0
        %4147 = vmatpush1.msra.mxu0 0.0
        %4148 = vmatprep.subr.mxu0 0.0
        %4149 = vmatpush1.msra.mxu0 0.0
        %4150 = vmatprep.mubr.f32.mxu0 0.0
        %4151 = vmatmul.mubr.f32.gmra.mrb[0].mxu0 %v3871
        %v4152 = vpop.f32.mrb[0].mxu0
        %v4153 = vadd.f32 0.0, %v4152
        %v4154 = vpop.f32.mrb[0].mxu0
        %v4155 = vadd.f32 0.0, %v4154
        %4156 = vdwg.mxu0
        %4157 = vmatprep.subr.mxu0 0.0
        %4158 = vmatpush1.msra.mxu0 %v3860
        %4159 = vmatprep.subr.mxu0 0.0
        %4160 = vmatpush1.msra.mxu0 0.0
        %4161 = vmatprep.subr.mxu0 0.0
        %4162 = vmatpush1.msra.mxu0 0.0
        %4163 = vmatprep.subr.mxu0 0.0
        %4164 = vmatpush1.msra.mxu0 0.0
        %4165 = vmatprep.subr.mxu0 0.0
        %4166 = vmatpush1.msra.mxu0 0.0
        %4167 = vmatprep.subr.mxu0 0.0
        %4168 = vmatpush1.msra.mxu0 0.0
        %4169 = vmatprep.subr.mxu0 0.0
        %4170 = vmatpush1.msra.mxu0 0.0
        %4171 = vmatprep.subr.mxu0 0.0
        %4172 = vmatpush1.msra.mxu0 0.0
        %4173 = vmatprep.subr.mxu0 0.0
        %4174 = vmatpush1.msra.mxu0 0.0
        %4175 = vmatprep.subr.mxu0 0.0
        %4176 = vmatpush1.msra.mxu0 0.0
        %4177 = vmatprep.subr.mxu0 0.0
        %4178 = vmatpush1.msra.mxu0 0.0
        %4179 = vmatprep.subr.mxu0 0.0
        %4180 = vmatpush1.msra.mxu0 0.0
        %4181 = vmatprep.subr.mxu0 0.0
        %4182 = vmatpush1.msra.mxu0 0.0
        %4183 = vmatprep.subr.mxu0 0.0
        %4184 = vmatpush1.msra.mxu0 0.0
        %4185 = vmatprep.subr.mxu0 0.0
        %4186 = vmatpush1.msra.mxu0 0.0
        %4187 = vmatprep.subr.mxu0 0.0
        %4188 = vmatpush1.msra.mxu0 0.0
        %4189 = vmatprep.subr.mxu0 0.0
        %4190 = vmatpush1.msra.mxu0 0.0
        %4191 = vmatprep.subr.mxu0 0.0
        %4192 = vmatpush1.msra.mxu0 0.0
        %4193 = vmatprep.subr.mxu0 0.0
        %4194 = vmatpush1.msra.mxu0 0.0
        %4195 = vmatprep.subr.mxu0 0.0
        %4196 = vmatpush1.msra.mxu0 0.0
        %4197 = vmatprep.subr.mxu0 0.0
        %4198 = vmatpush1.msra.mxu0 0.0
        %4199 = vmatprep.subr.mxu0 0.0
        %4200 = vmatpush1.msra.mxu0 0.0
        %4201 = vmatprep.subr.mxu0 0.0
        %4202 = vmatpush1.msra.mxu0 0.0
        %4203 = vmatprep.subr.mxu0 0.0
        %4204 = vmatpush1.msra.mxu0 0.0
        %4205 = vmatprep.subr.mxu0 0.0
        %4206 = vmatpush1.msra.mxu0 0.0
        %4207 = vmatprep.subr.mxu0 0.0
        %4208 = vmatpush1.msra.mxu0 0.0
        %4209 = vmatprep.subr.mxu0 0.0
        %4210 = vmatpush1.msra.mxu0 0.0
        %4211 = vmatprep.subr.mxu0 0.0
        %4212 = vmatpush1.msra.mxu0 0.0
        %4213 = vmatprep.subr.mxu0 0.0
        %4214 = vmatpush1.msra.mxu0 0.0
        %4215 = vmatprep.subr.mxu0 0.0
        %4216 = vmatpush1.msra.mxu0 0.0
        %4217 = vmatprep.subr.mxu0 0.0
        %4218 = vmatpush1.msra.mxu0 0.0
        %4219 = vmatprep.subr.mxu0 0.0
        %4220 = vmatpush1.msra.mxu0 0.0
        %4221 = vmatprep.mubr.f32.mxu0 0.0
        %4222 = vmatmul.mubr.f32.gmra.mrb[0].mxu0 %v3871
        %v4223 = vpop.f32.mrb[0].mxu0
        %v4224 = vadd.f32 0.0, %v4223
        %v4225 = vpop.f32.mrb[0].mxu0
        %4226 = vdwg.mxu0
        %v4227 = vadd.f32 %v3820, %v3940
        %v4228 = vadd.f32 %v3821, %v3942
        %v4229 = vadd.f32 %v3822, %v4011
        %v4230 = vadd.f32 %v3823, %v4013
        %v4231 = vadd.f32 %v3824, %v4082
        %v4232 = vadd.f32 %v3825, %v4084
        %v4233 = vadd.f32 %v3826, %v4153
        %v4234 = vadd.f32 %v3827, %v4155
        %v4235 = vadd.f32 %v3828, %v4224
        %s4236 = scalar_lea.vmem %s2, 64
        %v4237 = vld [vmem:[%s4236] sm:$0xff]
        %4238 = vrot.lane.b32.xlu0 %v1020, 54
        %v4239 = vpop.permute.xlu0 %4238
        %4240 = vrot.lane.b32.xlu0 %v1021, 54
        %v4241 = vpop.permute.xlu0 %4240
        %4242 = vrot.lane.b32.xlu0 %v1022, 54
        %v4243 = vpop.permute.xlu0 %4242
        %4244 = vrot.lane.b32.xlu0 %v1023, 54
        %v4245 = vpop.permute.xlu0 %4244
        %4246 = vrot.lane.b32.xlu0 %v1024, 54
        %v4247 = vpop.permute.xlu0 %4246
        %4248 = vrot.lane.b32.xlu0 %v1025, 54
        %v4249 = vpop.permute.xlu0 %4248
        %4250 = vrot.lane.b32.xlu0 %v1026, 54
        %v4251 = vpop.permute.xlu0 %4250
        %4252 = vrot.lane.b32.xlu0 %v1027, 54
        %v4253 = vpop.permute.xlu0 %4252
        %4254 = vrot.lane.b32.xlu0 %v1028, 54
        %v4255 = vpop.permute.xlu0 %4254
        %4256 = vrot.lane.b32.xlu0 %v1029, 54
        %v4257 = vpop.permute.xlu0 %4256
        %vm4258 = vcmask 441344
        %v4259 = vsel %vm4258, %v4239, %v4241
        %v4260 = vsel %vm4258, %v4241, %v4243
        %v4261 = vsel %vm4258, %v4243, %v4245
        %v4262 = vsel %vm4258, %v4245, %v4247
        %v4263 = vsel %vm4258, %v4247, %v4249
        %v4264 = vsel %vm4258, %v4249, %v4251
        %v4265 = vsel %vm4258, %v4251, %v4253
        %v4266 = vsel %vm4258, %v4253, %v4255
        %v4267 = vsel %vm4258, %v4255, %v4257
        %v4278 = vsel %vm1079, %v4237, 0
        %4280 = vmatprep.subr.mxu0 %v4260
        %4281 = vmatpush1.msra.mxu0 %v4259
        %4282 = vmatprep.subr.mxu0 0.0
        %4283 = vmatpush1.msra.mxu0 0.0
        %4284 = vmatprep.subr.mxu0 0.0
        %4285 = vmatpush1.msra.mxu0 0.0
        %4286 = vmatprep.subr.mxu0 0.0
        %4287 = vmatpush1.msra.mxu0 0.0
        %4288 = vmatprep.subr.mxu0 0.0
        %4289 = vmatpush1.msra.mxu0 0.0
        %4290 = vmatprep.subr.mxu0 0.0
        %4291 = vmatpush1.msra.mxu0 0.0
        %4292 = vmatprep.subr.mxu0 0.0
        %4293 = vmatpush1.msra.mxu0 0.0
        %4294 = vmatprep.subr.mxu0 0.0
        %4295 = vmatpush1.msra.mxu0 0.0
        %4296 = vmatprep.subr.mxu0 0.0
        %4297 = vmatpush1.msra.mxu0 0.0
        %4298 = vmatprep.subr.mxu0 0.0
        %4299 = vmatpush1.msra.mxu0 0.0
        %4300 = vmatprep.subr.mxu0 0.0
        %4301 = vmatpush1.msra.mxu0 0.0
        %4302 = vmatprep.subr.mxu0 0.0
        %4303 = vmatpush1.msra.mxu0 0.0
        %4304 = vmatprep.subr.mxu0 0.0
        %4305 = vmatpush1.msra.mxu0 0.0
        %4306 = vmatprep.subr.mxu0 0.0
        %4307 = vmatpush1.msra.mxu0 0.0
        %4308 = vmatprep.subr.mxu0 0.0
        %4309 = vmatpush1.msra.mxu0 0.0
        %4310 = vmatprep.subr.mxu0 0.0
        %4311 = vmatpush1.msra.mxu0 0.0
        %4312 = vmatprep.subr.mxu0 0.0
        %4313 = vmatpush1.msra.mxu0 0.0
        %4314 = vmatprep.subr.mxu0 0.0
        %4315 = vmatpush1.msra.mxu0 0.0
        %4316 = vmatprep.subr.mxu0 0.0
        %4317 = vmatpush1.msra.mxu0 0.0
        %4318 = vmatprep.subr.mxu0 0.0
        %4319 = vmatpush1.msra.mxu0 0.0
        %4320 = vmatprep.subr.mxu0 0.0
        %4321 = vmatpush1.msra.mxu0 0.0
        %4322 = vmatprep.subr.mxu0 0.0
        %4323 = vmatpush1.msra.mxu0 0.0
        %4324 = vmatprep.subr.mxu0 0.0
        %4325 = vmatpush1.msra.mxu0 0.0
        %4326 = vmatprep.subr.mxu0 0.0
        %4327 = vmatpush1.msra.mxu0 0.0
        %4328 = vmatprep.subr.mxu0 0.0
        %4329 = vmatpush1.msra.mxu0 0.0
        %4330 = vmatprep.subr.mxu0 0.0
        %4331 = vmatpush1.msra.mxu0 0.0
        %4332 = vmatprep.subr.mxu0 0.0
        %4333 = vmatpush1.msra.mxu0 0.0
        %4334 = vmatprep.subr.mxu0 0.0
        %4335 = vmatpush1.msra.mxu0 0.0
        %4336 = vmatprep.subr.mxu0 0.0
        %4337 = vmatpush1.msra.mxu0 0.0
        %4338 = vmatprep.subr.mxu0 0.0
        %4339 = vmatpush1.msra.mxu0 0.0
        %4340 = vmatprep.subr.mxu0 0.0
        %4341 = vmatpush1.msra.mxu0 0.0
        %4342 = vmatprep.subr.mxu0 0.0
        %4343 = vmatpush1.msra.mxu0 0.0
        %4344 = vmatprep.mubr.f32.mxu0 0.0
        %4345 = vmatmul.mubr.f32.gmra.mrb[0].mxu0 %v4278
        %v4346 = vpop.f32.mrb[0].mxu0
        %v4347 = vadd.f32 0.0, %v4346
        %v4348 = vpop.f32.mrb[0].mxu0
        %v4349 = vadd.f32 0.0, %v4348
        %4350 = vdwg.mxu0
        %4351 = vmatprep.subr.mxu0 %v4262
        %4352 = vmatpush1.msra.mxu0 %v4261
        %4353 = vmatprep.subr.mxu0 0.0
        %4354 = vmatpush1.msra.mxu0 0.0
        %4355 = vmatprep.subr.mxu0 0.0
        %4356 = vmatpush1.msra.mxu0 0.0
        %4357 = vmatprep.subr.mxu0 0.0
        %4358 = vmatpush1.msra.mxu0 0.0
        %4359 = vmatprep.subr.mxu0 0.0
        %4360 = vmatpush1.msra.mxu0 0.0
        %4361 = vmatprep.subr.mxu0 0.0
        %4362 = vmatpush1.msra.mxu0 0.0
        %4363 = vmatprep.subr.mxu0 0.0
        %4364 = vmatpush1.msra.mxu0 0.0
        %4365 = vmatprep.subr.mxu0 0.0
        %4366 = vmatpush1.msra.mxu0 0.0
        %4367 = vmatprep.subr.mxu0 0.0
        %4368 = vmatpush1.msra.mxu0 0.0
        %4369 = vmatprep.subr.mxu0 0.0
        %4370 = vmatpush1.msra.mxu0 0.0
        %4371 = vmatprep.subr.mxu0 0.0
        %4372 = vmatpush1.msra.mxu0 0.0
        %4373 = vmatprep.subr.mxu0 0.0
        %4374 = vmatpush1.msra.mxu0 0.0
        %4375 = vmatprep.subr.mxu0 0.0
        %4376 = vmatpush1.msra.mxu0 0.0
        %4377 = vmatprep.subr.mxu0 0.0
        %4378 = vmatpush1.msra.mxu0 0.0
        %4379 = vmatprep.subr.mxu0 0.0
        %4380 = vmatpush1.msra.mxu0 0.0
        %4381 = vmatprep.subr.mxu0 0.0
        %4382 = vmatpush1.msra.mxu0 0.0
        %4383 = vmatprep.subr.mxu0 0.0
        %4384 = vmatpush1.msra.mxu0 0.0
        %4385 = vmatprep.subr.mxu0 0.0
        %4386 = vmatpush1.msra.mxu0 0.0
        %4387 = vmatprep.subr.mxu0 0.0
        %4388 = vmatpush1.msra.mxu0 0.0
        %4389 = vmatprep.subr.mxu0 0.0
        %4390 = vmatpush1.msra.mxu0 0.0
        %4391 = vmatprep.subr.mxu0 0.0
        %4392 = vmatpush1.msra.mxu0 0.0
        %4393 = vmatprep.subr.mxu0 0.0
        %4394 = vmatpush1.msra.mxu0 0.0
        %4395 = vmatprep.subr.mxu0 0.0
        %4396 = vmatpush1.msra.mxu0 0.0
        %4397 = vmatprep.subr.mxu0 0.0
        %4398 = vmatpush1.msra.mxu0 0.0
        %4399 = vmatprep.subr.mxu0 0.0
        %4400 = vmatpush1.msra.mxu0 0.0
        %4401 = vmatprep.subr.mxu0 0.0
        %4402 = vmatpush1.msra.mxu0 0.0
        %4403 = vmatprep.subr.mxu0 0.0
        %4404 = vmatpush1.msra.mxu0 0.0
        %4405 = vmatprep.subr.mxu0 0.0
        %4406 = vmatpush1.msra.mxu0 0.0
        %4407 = vmatprep.subr.mxu0 0.0
        %4408 = vmatpush1.msra.mxu0 0.0
        %4409 = vmatprep.subr.mxu0 0.0
        %4410 = vmatpush1.msra.mxu0 0.0
        %4411 = vmatprep.subr.mxu0 0.0
        %4412 = vmatpush1.msra.mxu0 0.0
        %4413 = vmatprep.subr.mxu0 0.0
        %4414 = vmatpush1.msra.mxu0 0.0
        %4415 = vmatprep.mubr.f32.mxu0 0.0
        %4416 = vmatmul.mubr.f32.gmra.mrb[0].mxu0 %v4278
        %v4417 = vpop.f32.mrb[0].mxu0
        %v4418 = vadd.f32 0.0, %v4417
        %v4419 = vpop.f32.mrb[0].mxu0
        %v4420 = vadd.f32 0.0, %v4419
        %4421 = vdwg.mxu0
        %4422 = vmatprep.subr.mxu0 %v4264
        %4423 = vmatpush1.msra.mxu0 %v4263
        %4424 = vmatprep.subr.mxu0 0.0
        %4425 = vmatpush1.msra.mxu0 0.0
        %4426 = vmatprep.subr.mxu0 0.0
        %4427 = vmatpush1.msra.mxu0 0.0
        %4428 = vmatprep.subr.mxu0 0.0
        %4429 = vmatpush1.msra.mxu0 0.0
        %4430 = vmatprep.subr.mxu0 0.0
        %4431 = vmatpush1.msra.mxu0 0.0
        %4432 = vmatprep.subr.mxu0 0.0
        %4433 = vmatpush1.msra.mxu0 0.0
        %4434 = vmatprep.subr.mxu0 0.0
        %4435 = vmatpush1.msra.mxu0 0.0
        %4436 = vmatprep.subr.mxu0 0.0
        %4437 = vmatpush1.msra.mxu0 0.0
        %4438 = vmatprep.subr.mxu0 0.0
        %4439 = vmatpush1.msra.mxu0 0.0
        %4440 = vmatprep.subr.mxu0 0.0
        %4441 = vmatpush1.msra.mxu0 0.0
        %4442 = vmatprep.subr.mxu0 0.0
        %4443 = vmatpush1.msra.mxu0 0.0
        %4444 = vmatprep.subr.mxu0 0.0
        %4445 = vmatpush1.msra.mxu0 0.0
        %4446 = vmatprep.subr.mxu0 0.0
        %4447 = vmatpush1.msra.mxu0 0.0
        %4448 = vmatprep.subr.mxu0 0.0
        %4449 = vmatpush1.msra.mxu0 0.0
        %4450 = vmatprep.subr.mxu0 0.0
        %4451 = vmatpush1.msra.mxu0 0.0
        %4452 = vmatprep.subr.mxu0 0.0
        %4453 = vmatpush1.msra.mxu0 0.0
        %4454 = vmatprep.subr.mxu0 0.0
        %4455 = vmatpush1.msra.mxu0 0.0
        %4456 = vmatprep.subr.mxu0 0.0
        %4457 = vmatpush1.msra.mxu0 0.0
        %4458 = vmatprep.subr.mxu0 0.0
        %4459 = vmatpush1.msra.mxu0 0.0
        %4460 = vmatprep.subr.mxu0 0.0
        %4461 = vmatpush1.msra.mxu0 0.0
        %4462 = vmatprep.subr.mxu0 0.0
        %4463 = vmatpush1.msra.mxu0 0.0
        %4464 = vmatprep.subr.mxu0 0.0
        %4465 = vmatpush1.msra.mxu0 0.0
        %4466 = vmatprep.subr.mxu0 0.0
        %4467 = vmatpush1.msra.mxu0 0.0
        %4468 = vmatprep.subr.mxu0 0.0
        %4469 = vmatpush1.msra.mxu0 0.0
        %4470 = vmatprep.subr.mxu0 0.0
        %4471 = vmatpush1.msra.mxu0 0.0
        %4472 = vmatprep.subr.mxu0 0.0
        %4473 = vmatpush1.msra.mxu0 0.0
        %4474 = vmatprep.subr.mxu0 0.0
        %4475 = vmatpush1.msra.mxu0 0.0
        %4476 = vmatprep.subr.mxu0 0.0
        %4477 = vmatpush1.msra.mxu0 0.0
        %4478 = vmatprep.subr.mxu0 0.0
        %4479 = vmatpush1.msra.mxu0 0.0
        %4480 = vmatprep.subr.mxu0 0.0
        %4481 = vmatpush1.msra.mxu0 0.0
        %4482 = vmatprep.subr.mxu0 0.0
        %4483 = vmatpush1.msra.mxu0 0.0
        %4484 = vmatprep.subr.mxu0 0.0
        %4485 = vmatpush1.msra.mxu0 0.0
        %4486 = vmatprep.mubr.f32.mxu0 0.0
        %4487 = vmatmul.mubr.f32.gmra.mrb[0].mxu0 %v4278
        %v4488 = vpop.f32.mrb[0].mxu0
        %v4489 = vadd.f32 0.0, %v4488
        %v4490 = vpop.f32.mrb[0].mxu0
        %v4491 = vadd.f32 0.0, %v4490
        %4492 = vdwg.mxu0
        %4493 = vmatprep.subr.mxu0 %v4266
        %4494 = vmatpush1.msra.mxu0 %v4265
        %4495 = vmatprep.subr.mxu0 0.0
        %4496 = vmatpush1.msra.mxu0 0.0
        %4497 = vmatprep.subr.mxu0 0.0
        %4498 = vmatpush1.msra.mxu0 0.0
        %4499 = vmatprep.subr.mxu0 0.0
        %4500 = vmatpush1.msra.mxu0 0.0
        %4501 = vmatprep.subr.mxu0 0.0
        %4502 = vmatpush1.msra.mxu0 0.0
        %4503 = vmatprep.subr.mxu0 0.0
        %4504 = vmatpush1.msra.mxu0 0.0
        %4505 = vmatprep.subr.mxu0 0.0
        %4506 = vmatpush1.msra.mxu0 0.0
        %4507 = vmatprep.subr.mxu0 0.0
        %4508 = vmatpush1.msra.mxu0 0.0
        %4509 = vmatprep.subr.mxu0 0.0
        %4510 = vmatpush1.msra.mxu0 0.0
        %4511 = vmatprep.subr.mxu0 0.0
        %4512 = vmatpush1.msra.mxu0 0.0
        %4513 = vmatprep.subr.mxu0 0.0
        %4514 = vmatpush1.msra.mxu0 0.0
        %4515 = vmatprep.subr.mxu0 0.0
        %4516 = vmatpush1.msra.mxu0 0.0
        %4517 = vmatprep.subr.mxu0 0.0
        %4518 = vmatpush1.msra.mxu0 0.0
        %4519 = vmatprep.subr.mxu0 0.0
        %4520 = vmatpush1.msra.mxu0 0.0
        %4521 = vmatprep.subr.mxu0 0.0
        %4522 = vmatpush1.msra.mxu0 0.0
        %4523 = vmatprep.subr.mxu0 0.0
        %4524 = vmatpush1.msra.mxu0 0.0
        %4525 = vmatprep.subr.mxu0 0.0
        %4526 = vmatpush1.msra.mxu0 0.0
        %4527 = vmatprep.subr.mxu0 0.0
        %4528 = vmatpush1.msra.mxu0 0.0
        %4529 = vmatprep.subr.mxu0 0.0
        %4530 = vmatpush1.msra.mxu0 0.0
        %4531 = vmatprep.subr.mxu0 0.0
        %4532 = vmatpush1.msra.mxu0 0.0
        %4533 = vmatprep.subr.mxu0 0.0
        %4534 = vmatpush1.msra.mxu0 0.0
        %4535 = vmatprep.subr.mxu0 0.0
        %4536 = vmatpush1.msra.mxu0 0.0
        %4537 = vmatprep.subr.mxu0 0.0
        %4538 = vmatpush1.msra.mxu0 0.0
        %4539 = vmatprep.subr.mxu0 0.0
        %4540 = vmatpush1.msra.mxu0 0.0
        %4541 = vmatprep.subr.mxu0 0.0
        %4542 = vmatpush1.msra.mxu0 0.0
        %4543 = vmatprep.subr.mxu0 0.0
        %4544 = vmatpush1.msra.mxu0 0.0
        %4545 = vmatprep.subr.mxu0 0.0
        %4546 = vmatpush1.msra.mxu0 0.0
        %4547 = vmatprep.subr.mxu0 0.0
        %4548 = vmatpush1.msra.mxu0 0.0
        %4549 = vmatprep.subr.mxu0 0.0
        %4550 = vmatpush1.msra.mxu0 0.0
        %4551 = vmatprep.subr.mxu0 0.0
        %4552 = vmatpush1.msra.mxu0 0.0
        %4553 = vmatprep.subr.mxu0 0.0
        %4554 = vmatpush1.msra.mxu0 0.0
        %4555 = vmatprep.subr.mxu0 0.0
        %4556 = vmatpush1.msra.mxu0 0.0
        %4557 = vmatprep.mubr.f32.mxu0 0.0
        %4558 = vmatmul.mubr.f32.gmra.mrb[0].mxu0 %v4278
        %v4559 = vpop.f32.mrb[0].mxu0
        %v4560 = vadd.f32 0.0, %v4559
        %v4561 = vpop.f32.mrb[0].mxu0
        %v4562 = vadd.f32 0.0, %v4561
        %4563 = vdwg.mxu0
        %4564 = vmatprep.subr.mxu0 0.0
        %4565 = vmatpush1.msra.mxu0 %v4267
        %4566 = vmatprep.subr.mxu0 0.0
        %4567 = vmatpush1.msra.mxu0 0.0
        %4568 = vmatprep.subr.mxu0 0.0
        %4569 = vmatpush1.msra.mxu0 0.0
        %4570 = vmatprep.subr.mxu0 0.0
        %4571 = vmatpush1.msra.mxu0 0.0
        %4572 = vmatprep.subr.mxu0 0.0
        %4573 = vmatpush1.msra.mxu0 0.0
        %4574 = vmatprep.subr.mxu0 0.0
        %4575 = vmatpush1.msra.mxu0 0.0
        %4576 = vmatprep.subr.mxu0 0.0
        %4577 = vmatpush1.msra.mxu0 0.0
        %4578 = vmatprep.subr.mxu0 0.0
        %4579 = vmatpush1.msra.mxu0 0.0
        %4580 = vmatprep.subr.mxu0 0.0
        %4581 = vmatpush1.msra.mxu0 0.0
        %4582 = vmatprep.subr.mxu0 0.0
        %4583 = vmatpush1.msra.mxu0 0.0
        %4584 = vmatprep.subr.mxu0 0.0
        %4585 = vmatpush1.msra.mxu0 0.0
        %4586 = vmatprep.subr.mxu0 0.0
        %4587 = vmatpush1.msra.mxu0 0.0
        %4588 = vmatprep.subr.mxu0 0.0
        %4589 = vmatpush1.msra.mxu0 0.0
        %4590 = vmatprep.subr.mxu0 0.0
        %4591 = vmatpush1.msra.mxu0 0.0
        %4592 = vmatprep.subr.mxu0 0.0
        %4593 = vmatpush1.msra.mxu0 0.0
        %4594 = vmatprep.subr.mxu0 0.0
        %4595 = vmatpush1.msra.mxu0 0.0
        %4596 = vmatprep.subr.mxu0 0.0
        %4597 = vmatpush1.msra.mxu0 0.0
        %4598 = vmatprep.subr.mxu0 0.0
        %4599 = vmatpush1.msra.mxu0 0.0
        %4600 = vmatprep.subr.mxu0 0.0
        %4601 = vmatpush1.msra.mxu0 0.0
        %4602 = vmatprep.subr.mxu0 0.0
        %4603 = vmatpush1.msra.mxu0 0.0
        %4604 = vmatprep.subr.mxu0 0.0
        %4605 = vmatpush1.msra.mxu0 0.0
        %4606 = vmatprep.subr.mxu0 0.0
        %4607 = vmatpush1.msra.mxu0 0.0
        %4608 = vmatprep.subr.mxu0 0.0
        %4609 = vmatpush1.msra.mxu0 0.0
        %4610 = vmatprep.subr.mxu0 0.0
        %4611 = vmatpush1.msra.mxu0 0.0
        %4612 = vmatprep.subr.mxu0 0.0
        %4613 = vmatpush1.msra.mxu0 0.0
        %4614 = vmatprep.subr.mxu0 0.0
        %4615 = vmatpush1.msra.mxu0 0.0
        %4616 = vmatprep.subr.mxu0 0.0
        %4617 = vmatpush1.msra.mxu0 0.0
        %4618 = vmatprep.subr.mxu0 0.0
        %4619 = vmatpush1.msra.mxu0 0.0
        %4620 = vmatprep.subr.mxu0 0.0
        %4621 = vmatpush1.msra.mxu0 0.0
        %4622 = vmatprep.subr.mxu0 0.0
        %4623 = vmatpush1.msra.mxu0 0.0
        %4624 = vmatprep.subr.mxu0 0.0
        %4625 = vmatpush1.msra.mxu0 0.0
        %4626 = vmatprep.subr.mxu0 0.0
        %4627 = vmatpush1.msra.mxu0 0.0
        %4628 = vmatprep.mubr.f32.mxu0 0.0
        %4629 = vmatmul.mubr.f32.gmra.mrb[0].mxu0 %v4278
        %v4630 = vpop.f32.mrb[0].mxu0
        %v4631 = vadd.f32 0.0, %v4630
        %v4632 = vpop.f32.mrb[0].mxu0
        %4633 = vdwg.mxu0
        %v4634 = vadd.f32 %v4227, %v4347
        %v4635 = vadd.f32 %v4228, %v4349
        %v4636 = vadd.f32 %v4229, %v4418
        %v4637 = vadd.f32 %v4230, %v4420
        %v4638 = vadd.f32 %v4231, %v4489
        %v4639 = vadd.f32 %v4232, %v4491
        %v4640 = vadd.f32 %v4233, %v4560
        %v4641 = vadd.f32 %v4234, %v4562
        %v4642 = vadd.f32 %v4235, %v4631
        %v4643 = vld [vmem:[%s3] sm:$0xff]
        %4645 = vset.pattern.permute.xlu0 0
        %4646 = vperm.xlu0 %4645, %v4643
        %v4647 = vpop.permute.xlu0 %4646
        %v4649 = vadd.f32 %v4634, %v4647
        %v4650 = vadd.f32 %v4635, %v4647
        %v4651 = vadd.f32 %v4636, %v4647
        %v4652 = vadd.f32 %v4637, %v4647
        %v4653 = vadd.f32 %v4638, %v4647
        %v4654 = vadd.f32 %v4639, %v4647
        %v4655 = vadd.f32 %v4640, %v4647
        %v4656 = vadd.f32 %v4641, %v4647
        %v4657 = vadd.f32 %v4642, %v4647
        %4658 = vst [vmem:[%s320] sm:$0xff] %v4649
        %4659 = vst [vmem:[%s320 + $0x8] sm:$0xff] %v4650
        %4660 = vst [vmem:[%s320 + $0x10] sm:$0xff] %v4651
        %4661 = vst [vmem:[%s320 + $0x18] sm:$0xff] %v4652
        %4662 = vst [vmem:[%s320 + $0x20] sm:$0xff] %v4653
        %4663 = vst [vmem:[%s320 + $0x28] sm:$0xff] %v4654
        %4664 = vst [vmem:[%s320 + $0x30] sm:$0xff] %v4655
        %4665 = vst [vmem:[%s320 + $0x38] sm:$0xff] %v4656
        %4666 = vst [vmem:[%s320 + $0x40] sm:$0xff] %v4657
        %4667 = vst [vmem:[#allocation3] sm:$0xff] 0.0
        %4668 = vst [vmem:[#allocation3 + $0x50] sm:$0xff] 0.0
        %v4669 = vmax.f32 %v4649, 0.0
        %v4670 = vmax.f32 %v4650, 0.0
        %v4671 = vmax.f32 %v4651, 0.0
        %v4672 = vmax.f32 %v4652, 0.0
        %v4673 = vmax.f32 %v4653, 0.0
        %v4674 = vmax.f32 %v4654, 0.0
        %v4675 = vmax.f32 %v4655, 0.0
        %v4676 = vmax.f32 %v4656, 0.0
        %v4677 = vmax.f32 %v4657, 0.0
        %v4678 = vld [vmem:[#allocation8] sm:$0xff]
        %v4679 = vld [vmem:[#allocation8 + $0x8] sm:$0x1]
        %v4682 = vlaneseq
        %v4683 = vshrl.u32 %v4682, 7
        %v4684 = vsub.s32 0, %v4683
        %v4685 = vrot.slane %v4678, %v4684
        %v4686 = vlaneseq
        %v4687 = vshrl.u32 %v4686, 7
        %v4688 = vsub.s32 1, %v4687
        %v4689 = vrot.slane %v4678, %v4688
        %v4690 = vlaneseq
        %v4691 = vshrl.u32 %v4690, 7
        %v4692 = vsub.s32 2, %v4691
        %v4693 = vrot.slane %v4678, %v4692
        %v4694 = vlaneseq
        %v4695 = vshrl.u32 %v4694, 7
        %v4696 = vsub.s32 3, %v4695
        %v4697 = vrot.slane %v4678, %v4696
        %v4698 = vlaneseq
        %v4699 = vshrl.u32 %v4698, 7
        %v4700 = vsub.s32 4, %v4699
        %v4701 = vrot.slane %v4678, %v4700
        %v4702 = vlaneseq
        %v4703 = vshrl.u32 %v4702, 7
        %v4704 = vsub.s32 5, %v4703
        %v4705 = vrot.slane %v4678, %v4704
        %v4706 = vlaneseq
        %v4707 = vshrl.u32 %v4706, 7
        %v4708 = vsub.s32 6, %v4707
        %v4709 = vrot.slane %v4678, %v4708
        %v4710 = vlaneseq
        %v4711 = vshrl.u32 %v4710, 7
        %v4712 = vsub.s32 7, %v4711
        %v4713 = vrot.slane %v4678, %v4712
        %v4714 = vlaneseq
        %v4715 = vshrl.u32 %v4714, 7
        %v4716 = vsub.s32 0, %v4715
        %v4717 = vrot.slane %v4679, %v4716
        %v4727 = vmul.f32 %v4669, %v4685
        %v4728 = vmul.f32 %v4670, %v4689
        %v4729 = vmul.f32 %v4671, %v4693
        %v4730 = vmul.f32 %v4672, %v4697
        %v4731 = vmul.f32 %v4673, %v4701
        %v4732 = vmul.f32 %v4674, %v4705
        %v4733 = vmul.f32 %v4675, %v4709
        %v4734 = vmul.f32 %v4676, %v4713
        %v4735 = vmul.f32 %v4677, %v4717
        %4736 = vst [vmem:[#allocation3 + $0x8] sm:$0xff] %v4727
        %4737 = vst [vmem:[#allocation3 + $0x10] sm:$0xff] %v4728
        %4738 = vst [vmem:[#allocation3 + $0x18] sm:$0xff] %v4729
        %4739 = vst [vmem:[#allocation3 + $0x20] sm:$0xff] %v4730
        %4740 = vst [vmem:[#allocation3 + $0x28] sm:$0xff] %v4731
        %4741 = vst [vmem:[#allocation3 + $0x30] sm:$0xff] %v4732
        %4742 = vst [vmem:[#allocation3 + $0x38] sm:$0xff] %v4733
        %4743 = vst [vmem:[#allocation3 + $0x40] sm:$0xff] %v4734
        %4744 = vst [vmem:[#allocation3 + $0x48] sm:$0xff] %v4735
        %v4745 = vld [vmem:[%s320] sm:$0xff]
        %v4746 = vld [vmem:[%s320 + $0x8] sm:$0xff]
        %v4747 = vld [vmem:[%s320 + $0x10] sm:$0xff]
        %v4748 = vld [vmem:[%s320 + $0x18] sm:$0xff]
        %v4749 = vld [vmem:[%s320 + $0x20] sm:$0xff]
        %v4750 = vld [vmem:[%s320 + $0x28] sm:$0xff]
        %v4751 = vld [vmem:[%s320 + $0x30] sm:$0xff]
        %v4752 = vld [vmem:[%s320 + $0x38] sm:$0xff]
        %v4753 = vld [vmem:[%s320 + $0x40] sm:$0xff]
        %v4754 = vld [vmem:[#allocation6] sm:$0xff]
        %v4755 = vld [vmem:[#allocation3] sm:$0xff]
        %v4756 = vld [vmem:[#allocation3 + $0x8] sm:$0xff]
        %v4757 = vld [vmem:[#allocation3 + $0x10] sm:$0xff]
        %v4758 = vld [vmem:[#allocation3 + $0x18] sm:$0xff]
        %v4759 = vld [vmem:[#allocation3 + $0x20] sm:$0xff]
        %v4760 = vld [vmem:[#allocation3 + $0x28] sm:$0xff]
        %v4761 = vld [vmem:[#allocation3 + $0x30] sm:$0xff]
        %v4762 = vld [vmem:[#allocation3 + $0x38] sm:$0xff]
        %v4763 = vld [vmem:[#allocation3 + $0x40] sm:$0xff]
        %v4764 = vld [vmem:[#allocation3 + $0x48] sm:$0xff]
        %s4765 = scalar_lea.vmem [#allocation6], 8
        %v4766 = vld [vmem:[%s4765] sm:$0xff]
        %4777 = vrot.lane.b32.xlu0 %v4755, 36
        %v4778 = vpop.permute.xlu0 %4777
        %4779 = vrot.lane.b32.xlu0 %v4756, 36
        %v4780 = vpop.permute.xlu0 %4779
        %4781 = vrot.lane.b32.xlu0 %v4757, 36
        %v4782 = vpop.permute.xlu0 %4781
        %4783 = vrot.lane.b32.xlu0 %v4758, 36
        %v4784 = vpop.permute.xlu0 %4783
        %4785 = vrot.lane.b32.xlu0 %v4759, 36
        %v4786 = vpop.permute.xlu0 %4785
        %4787 = vrot.lane.b32.xlu0 %v4760, 36
        %v4788 = vpop.permute.xlu0 %4787
        %4789 = vrot.lane.b32.xlu0 %v4761, 36
        %v4790 = vpop.permute.xlu0 %4789
        %4791 = vrot.lane.b32.xlu0 %v4762, 36
        %v4792 = vpop.permute.xlu0 %4791
        %4793 = vrot.lane.b32.xlu0 %v4763, 36
        %v4794 = vpop.permute.xlu0 %4793
        %4795 = vrot.lane.b32.xlu0 %v4764, 36
        %v4796 = vpop.permute.xlu0 %4795
        %vm4797 = vcmask 293888
        %v4798 = vsel %vm4797, %v4778, %v4780
        %v4799 = vsel %vm4797, %v4780, %v4782
        %v4800 = vsel %vm4797, %v4782, %v4784
        %v4801 = vsel %vm4797, %v4784, %v4786
        %v4802 = vsel %vm4797, %v4786, %v4788
        %v4803 = vsel %vm4797, %v4788, %v4790
        %v4804 = vsel %vm4797, %v4790, %v4792
        %v4805 = vsel %vm4797, %v4792, %v4794
        %v4806 = vsel %vm4797, %v4794, %v4796
        %v4817 = vsel %vm1079, %v4766, 0
        %4819 = vmatprep.subr.mxu0 %v4799
        %4820 = vmatpush1.msra.mxu0 %v4798
        %4821 = vmatprep.subr.mxu0 0.0
        %4822 = vmatpush1.msra.mxu0 0.0
        %4823 = vmatprep.subr.mxu0 0.0
        %4824 = vmatpush1.msra.mxu0 0.0
        %4825 = vmatprep.subr.mxu0 0.0
        %4826 = vmatpush1.msra.mxu0 0.0
        %4827 = vmatprep.subr.mxu0 0.0
        %4828 = vmatpush1.msra.mxu0 0.0
        %4829 = vmatprep.subr.mxu0 0.0
        %4830 = vmatpush1.msra.mxu0 0.0
        %4831 = vmatprep.subr.mxu0 0.0
        %4832 = vmatpush1.msra.mxu0 0.0
        %4833 = vmatprep.subr.mxu0 0.0
        %4834 = vmatpush1.msra.mxu0 0.0
        %4835 = vmatprep.subr.mxu0 0.0
        %4836 = vmatpush1.msra.mxu0 0.0
        %4837 = vmatprep.subr.mxu0 0.0
        %4838 = vmatpush1.msra.mxu0 0.0
        %4839 = vmatprep.subr.mxu0 0.0
        %4840 = vmatpush1.msra.mxu0 0.0
        %4841 = vmatprep.subr.mxu0 0.0
        %4842 = vmatpush1.msra.mxu0 0.0
        %4843 = vmatprep.subr.mxu0 0.0
        %4844 = vmatpush1.msra.mxu0 0.0
        %4845 = vmatprep.subr.mxu0 0.0
        %4846 = vmatpush1.msra.mxu0 0.0
        %4847 = vmatprep.subr.mxu0 0.0
        %4848 = vmatpush1.msra.mxu0 0.0
        %4849 = vmatprep.subr.mxu0 0.0
        %4850 = vmatpush1.msra.mxu0 0.0
        %4851 = vmatprep.subr.mxu0 0.0
        %4852 = vmatpush1.msra.mxu0 0.0
        %4853 = vmatprep.subr.mxu0 0.0
        %4854 = vmatpush1.msra.mxu0 0.0
        %4855 = vmatprep.subr.mxu0 0.0
        %4856 = vmatpush1.msra.mxu0 0.0
        %4857 = vmatprep.subr.mxu0 0.0
        %4858 = vmatpush1.msra.mxu0 0.0
        %4859 = vmatprep.subr.mxu0 0.0
        %4860 = vmatpush1.msra.mxu0 0.0
        %4861 = vmatprep.subr.mxu0 0.0
        %4862 = vmatpush1.msra.mxu0 0.0
        %4863 = vmatprep.subr.mxu0 0.0
        %4864 = vmatpush1.msra.mxu0 0.0
        %4865 = vmatprep.subr.mxu0 0.0
        %4866 = vmatpush1.msra.mxu0 0.0
        %4867 = vmatprep.subr.mxu0 0.0
        %4868 = vmatpush1.msra.mxu0 0.0
        %4869 = vmatprep.subr.mxu0 0.0
        %4870 = vmatpush1.msra.mxu0 0.0
        %4871 = vmatprep.subr.mxu0 0.0
        %4872 = vmatpush1.msra.mxu0 0.0
        %4873 = vmatprep.subr.mxu0 0.0
        %4874 = vmatpush1.msra.mxu0 0.0
        %4875 = vmatprep.subr.mxu0 0.0
        %4876 = vmatpush1.msra.mxu0 0.0
        %4877 = vmatprep.subr.mxu0 0.0
        %4878 = vmatpush1.msra.mxu0 0.0
        %4879 = vmatprep.subr.mxu0 0.0
        %4880 = vmatpush1.msra.mxu0 0.0
        %4881 = vmatprep.subr.mxu0 0.0
        %4882 = vmatpush1.msra.mxu0 0.0
        %4883 = vmatprep.mubr.f32.mxu0 0.0
        %4884 = vmatmul.mubr.f32.gmra.mrb[0].mxu0 %v4817
        %v4885 = vpop.f32.mrb[0].mxu0
        %v4886 = vadd.f32 0.0, %v4885
        %v4887 = vpop.f32.mrb[0].mxu0
        %v4888 = vadd.f32 0.0, %v4887
        %4889 = vdwg.mxu0
        %4890 = vmatprep.subr.mxu0 %v4801
        %4891 = vmatpush1.msra.mxu0 %v4800
        %4892 = vmatprep.subr.mxu0 0.0
        %4893 = vmatpush1.msra.mxu0 0.0
        %4894 = vmatprep.subr.mxu0 0.0
        %4895 = vmatpush1.msra.mxu0 0.0
        %4896 = vmatprep.subr.mxu0 0.0
        %4897 = vmatpush1.msra.mxu0 0.0
        %4898 = vmatprep.subr.mxu0 0.0
        %4899 = vmatpush1.msra.mxu0 0.0
        %4900 = vmatprep.subr.mxu0 0.0
        %4901 = vmatpush1.msra.mxu0 0.0
        %4902 = vmatprep.subr.mxu0 0.0
        %4903 = vmatpush1.msra.mxu0 0.0
        %4904 = vmatprep.subr.mxu0 0.0
        %4905 = vmatpush1.msra.mxu0 0.0
        %4906 = vmatprep.subr.mxu0 0.0
        %4907 = vmatpush1.msra.mxu0 0.0
        %4908 = vmatprep.subr.mxu0 0.0
        %4909 = vmatpush1.msra.mxu0 0.0
        %4910 = vmatprep.subr.mxu0 0.0
        %4911 = vmatpush1.msra.mxu0 0.0
        %4912 = vmatprep.subr.mxu0 0.0
        %4913 = vmatpush1.msra.mxu0 0.0
        %4914 = vmatprep.subr.mxu0 0.0
        %4915 = vmatpush1.msra.mxu0 0.0
        %4916 = vmatprep.subr.mxu0 0.0
        %4917 = vmatpush1.msra.mxu0 0.0
        %4918 = vmatprep.subr.mxu0 0.0
        %4919 = vmatpush1.msra.mxu0 0.0
        %4920 = vmatprep.subr.mxu0 0.0
        %4921 = vmatpush1.msra.mxu0 0.0
        %4922 = vmatprep.subr.mxu0 0.0
        %4923 = vmatpush1.msra.mxu0 0.0
        %4924 = vmatprep.subr.mxu0 0.0
        %4925 = vmatpush1.msra.mxu0 0.0
        %4926 = vmatprep.subr.mxu0 0.0
        %4927 = vmatpush1.msra.mxu0 0.0
        %4928 = vmatprep.subr.mxu0 0.0
        %4929 = vmatpush1.msra.mxu0 0.0
        %4930 = vmatprep.subr.mxu0 0.0
        %4931 = vmatpush1.msra.mxu0 0.0
        %4932 = vmatprep.subr.mxu0 0.0
        %4933 = vmatpush1.msra.mxu0 0.0
        %4934 = vmatprep.subr.mxu0 0.0
        %4935 = vmatpush1.msra.mxu0 0.0
        %4936 = vmatprep.subr.mxu0 0.0
        %4937 = vmatpush1.msra.mxu0 0.0
        %4938 = vmatprep.subr.mxu0 0.0
        %4939 = vmatpush1.msra.mxu0 0.0
        %4940 = vmatprep.subr.mxu0 0.0
        %4941 = vmatpush1.msra.mxu0 0.0
        %4942 = vmatprep.subr.mxu0 0.0
        %4943 = vmatpush1.msra.mxu0 0.0
        %4944 = vmatprep.subr.mxu0 0.0
        %4945 = vmatpush1.msra.mxu0 0.0
        %4946 = vmatprep.subr.mxu0 0.0
        %4947 = vmatpush1.msra.mxu0 0.0
        %4948 = vmatprep.subr.mxu0 0.0
        %4949 = vmatpush1.msra.mxu0 0.0
        %4950 = vmatprep.subr.mxu0 0.0
        %4951 = vmatpush1.msra.mxu0 0.0
        %4952 = vmatprep.subr.mxu0 0.0
        %4953 = vmatpush1.msra.mxu0 0.0
        %4954 = vmatprep.mubr.f32.mxu0 0.0
        %4955 = vmatmul.mubr.f32.gmra.mrb[0].mxu0 %v4817
        %v4956 = vpop.f32.mrb[0].mxu0
        %v4957 = vadd.f32 0.0, %v4956
        %v4958 = vpop.f32.mrb[0].mxu0
        %v4959 = vadd.f32 0.0, %v4958
        %4960 = vdwg.mxu0
        %4961 = vmatprep.subr.mxu0 %v4803
        %4962 = vmatpush1.msra.mxu0 %v4802
        %4963 = vmatprep.subr.mxu0 0.0
        %4964 = vmatpush1.msra.mxu0 0.0
        %4965 = vmatprep.subr.mxu0 0.0
        %4966 = vmatpush1.msra.mxu0 0.0
        %4967 = vmatprep.subr.mxu0 0.0
        %4968 = vmatpush1.msra.mxu0 0.0
        %4969 = vmatprep.subr.mxu0 0.0
        %4970 = vmatpush1.msra.mxu0 0.0
        %4971 = vmatprep.subr.mxu0 0.0
        %4972 = vmatpush1.msra.mxu0 0.0
        %4973 = vmatprep.subr.mxu0 0.0
        %4974 = vmatpush1.msra.mxu0 0.0
        %4975 = vmatprep.subr.mxu0 0.0
        %4976 = vmatpush1.msra.mxu0 0.0
        %4977 = vmatprep.subr.mxu0 0.0
        %4978 = vmatpush1.msra.mxu0 0.0
        %4979 = vmatprep.subr.mxu0 0.0
        %4980 = vmatpush1.msra.mxu0 0.0
        %4981 = vmatprep.subr.mxu0 0.0
        %4982 = vmatpush1.msra.mxu0 0.0
        %4983 = vmatprep.subr.mxu0 0.0
        %4984 = vmatpush1.msra.mxu0 0.0
        %4985 = vmatprep.subr.mxu0 0.0
        %4986 = vmatpush1.msra.mxu0 0.0
        %4987 = vmatprep.subr.mxu0 0.0
        %4988 = vmatpush1.msra.mxu0 0.0
        %4989 = vmatprep.subr.mxu0 0.0
        %4990 = vmatpush1.msra.mxu0 0.0
        %4991 = vmatprep.subr.mxu0 0.0
        %4992 = vmatpush1.msra.mxu0 0.0
        %4993 = vmatprep.subr.mxu0 0.0
        %4994 = vmatpush1.msra.mxu0 0.0
        %4995 = vmatprep.subr.mxu0 0.0
        %4996 = vmatpush1.msra.mxu0 0.0
        %4997 = vmatprep.subr.mxu0 0.0
        %4998 = vmatpush1.msra.mxu0 0.0
        %4999 = vmatprep.subr.mxu0 0.0
        %5000 = vmatpush1.msra.mxu0 0.0
        %5001 = vmatprep.subr.mxu0 0.0
        %5002 = vmatpush1.msra.mxu0 0.0
        %5003 = vmatprep.subr.mxu0 0.0
        %5004 = vmatpush1.msra.mxu0 0.0
        %5005 = vmatprep.subr.mxu0 0.0
        %5006 = vmatpush1.msra.mxu0 0.0
        %5007 = vmatprep.subr.mxu0 0.0
        %5008 = vmatpush1.msra.mxu0 0.0
        %5009 = vmatprep.subr.mxu0 0.0
        %5010 = vmatpush1.msra.mxu0 0.0
        %5011 = vmatprep.subr.mxu0 0.0
        %5012 = vmatpush1.msra.mxu0 0.0
        %5013 = vmatprep.subr.mxu0 0.0
        %5014 = vmatpush1.msra.mxu0 0.0
        %5015 = vmatprep.subr.mxu0 0.0
        %5016 = vmatpush1.msra.mxu0 0.0
        %5017 = vmatprep.subr.mxu0 0.0
        %5018 = vmatpush1.msra.mxu0 0.0
        %5019 = vmatprep.subr.mxu0 0.0
        %5020 = vmatpush1.msra.mxu0 0.0
        %5021 = vmatprep.subr.mxu0 0.0
        %5022 = vmatpush1.msra.mxu0 0.0
        %5023 = vmatprep.subr.mxu0 0.0
        %5024 = vmatpush1.msra.mxu0 0.0
        %5025 = vmatprep.mubr.f32.mxu0 0.0
        %5026 = vmatmul.mubr.f32.gmra.mrb[0].mxu0 %v4817
        %v5027 = vpop.f32.mrb[0].mxu0
        %v5028 = vadd.f32 0.0, %v5027
        %v5029 = vpop.f32.mrb[0].mxu0
        %v5030 = vadd.f32 0.0, %v5029
        %5031 = vdwg.mxu0
        %5032 = vmatprep.subr.mxu0 %v4805
        %5033 = vmatpush1.msra.mxu0 %v4804
        %5034 = vmatprep.subr.mxu0 0.0
        %5035 = vmatpush1.msra.mxu0 0.0
        %5036 = vmatprep.subr.mxu0 0.0
        %5037 = vmatpush1.msra.mxu0 0.0
        %5038 = vmatprep.subr.mxu0 0.0
        %5039 = vmatpush1.msra.mxu0 0.0
        %5040 = vmatprep.subr.mxu0 0.0
        %5041 = vmatpush1.msra.mxu0 0.0
        %5042 = vmatprep.subr.mxu0 0.0
        %5043 = vmatpush1.msra.mxu0 0.0
        %5044 = vmatprep.subr.mxu0 0.0
        %5045 = vmatpush1.msra.mxu0 0.0
        %5046 = vmatprep.subr.mxu0 0.0
        %5047 = vmatpush1.msra.mxu0 0.0
        %5048 = vmatprep.subr.mxu0 0.0
        %5049 = vmatpush1.msra.mxu0 0.0
        %5050 = vmatprep.subr.mxu0 0.0
        %5051 = vmatpush1.msra.mxu0 0.0
        %5052 = vmatprep.subr.mxu0 0.0
        %5053 = vmatpush1.msra.mxu0 0.0
        %5054 = vmatprep.subr.mxu0 0.0
        %5055 = vmatpush1.msra.mxu0 0.0
        %5056 = vmatprep.subr.mxu0 0.0
        %5057 = vmatpush1.msra.mxu0 0.0
        %5058 = vmatprep.subr.mxu0 0.0
        %5059 = vmatpush1.msra.mxu0 0.0
        %5060 = vmatprep.subr.mxu0 0.0
        %5061 = vmatpush1.msra.mxu0 0.0
        %5062 = vmatprep.subr.mxu0 0.0
        %5063 = vmatpush1.msra.mxu0 0.0
        %5064 = vmatprep.subr.mxu0 0.0
        %5065 = vmatpush1.msra.mxu0 0.0
        %5066 = vmatprep.subr.mxu0 0.0
        %5067 = vmatpush1.msra.mxu0 0.0
        %5068 = vmatprep.subr.mxu0 0.0
        %5069 = vmatpush1.msra.mxu0 0.0
        %5070 = vmatprep.subr.mxu0 0.0
        %5071 = vmatpush1.msra.mxu0 0.0
        %5072 = vmatprep.subr.mxu0 0.0
        %5073 = vmatpush1.msra.mxu0 0.0
        %5074 = vmatprep.subr.mxu0 0.0
        %5075 = vmatpush1.msra.mxu0 0.0
        %5076 = vmatprep.subr.mxu0 0.0
        %5077 = vmatpush1.msra.mxu0 0.0
        %5078 = vmatprep.subr.mxu0 0.0
        %5079 = vmatpush1.msra.mxu0 0.0
        %5080 = vmatprep.subr.mxu0 0.0
        %5081 = vmatpush1.msra.mxu0 0.0
        %5082 = vmatprep.subr.mxu0 0.0
        %5083 = vmatpush1.msra.mxu0 0.0
        %5084 = vmatprep.subr.mxu0 0.0
        %5085 = vmatpush1.msra.mxu0 0.0
        %5086 = vmatprep.subr.mxu0 0.0
        %5087 = vmatpush1.msra.mxu0 0.0
        %5088 = vmatprep.subr.mxu0 0.0
        %5089 = vmatpush1.msra.mxu0 0.0
        %5090 = vmatprep.subr.mxu0 0.0
        %5091 = vmatpush1.msra.mxu0 0.0
        %5092 = vmatprep.subr.mxu0 0.0
        %5093 = vmatpush1.msra.mxu0 0.0
        %5094 = vmatprep.subr.mxu0 0.0
        %5095 = vmatpush1.msra.mxu0 0.0
        %5096 = vmatprep.mubr.f32.mxu0 0.0
        %5097 = vmatmul.mubr.f32.gmra.mrb[0].mxu0 %v4817
        %v5098 = vpop.f32.mrb[0].mxu0
        %v5099 = vadd.f32 0.0, %v5098
        %v5100 = vpop.f32.mrb[0].mxu0
        %v5101 = vadd.f32 0.0, %v5100
        %5102 = vdwg.mxu0
        %5103 = vmatprep.subr.mxu0 0.0
        %5104 = vmatpush1.msra.mxu0 %v4806
        %5105 = vmatprep.subr.mxu0 0.0
        %5106 = vmatpush1.msra.mxu0 0.0
        %5107 = vmatprep.subr.mxu0 0.0
        %5108 = vmatpush1.msra.mxu0 0.0
        %5109 = vmatprep.subr.mxu0 0.0
        %5110 = vmatpush1.msra.mxu0 0.0
        %5111 = vmatprep.subr.mxu0 0.0
        %5112 = vmatpush1.msra.mxu0 0.0
        %5113 = vmatprep.subr.mxu0 0.0
        %5114 = vmatpush1.msra.mxu0 0.0
        %5115 = vmatprep.subr.mxu0 0.0
        %5116 = vmatpush1.msra.mxu0 0.0
        %5117 = vmatprep.subr.mxu0 0.0
        %5118 = vmatpush1.msra.mxu0 0.0
        %5119 = vmatprep.subr.mxu0 0.0
        %5120 = vmatpush1.msra.mxu0 0.0
        %5121 = vmatprep.subr.mxu0 0.0
        %5122 = vmatpush1.msra.mxu0 0.0
        %5123 = vmatprep.subr.mxu0 0.0
        %5124 = vmatpush1.msra.mxu0 0.0
        %5125 = vmatprep.subr.mxu0 0.0
        %5126 = vmatpush1.msra.mxu0 0.0
        %5127 = vmatprep.subr.mxu0 0.0
        %5128 = vmatpush1.msra.mxu0 0.0
        %5129 = vmatprep.subr.mxu0 0.0
        %5130 = vmatpush1.msra.mxu0 0.0
        %5131 = vmatprep.subr.mxu0 0.0
        %5132 = vmatpush1.msra.mxu0 0.0
        %5133 = vmatprep.subr.mxu0 0.0
        %5134 = vmatpush1.msra.mxu0 0.0
        %5135 = vmatprep.subr.mxu0 0.0
        %5136 = vmatpush1.msra.mxu0 0.0
        %5137 = vmatprep.subr.mxu0 0.0
        %5138 = vmatpush1.msra.mxu0 0.0
        %5139 = vmatprep.subr.mxu0 0.0
        %5140 = vmatpush1.msra.mxu0 0.0
        %5141 = vmatprep.subr.mxu0 0.0
        %5142 = vmatpush1.msra.mxu0 0.0
        %5143 = vmatprep.subr.mxu0 0.0
        %5144 = vmatpush1.msra.mxu0 0.0
        %5145 = vmatprep.subr.mxu0 0.0
        %5146 = vmatpush1.msra.mxu0 0.0
        %5147 = vmatprep.subr.mxu0 0.0
        %5148 = vmatpush1.msra.mxu0 0.0
        %5149 = vmatprep.subr.mxu0 0.0
        %5150 = vmatpush1.msra.mxu0 0.0
        %5151 = vmatprep.subr.mxu0 0.0
        %5152 = vmatpush1.msra.mxu0 0.0
        %5153 = vmatprep.subr.mxu0 0.0
        %5154 = vmatpush1.msra.mxu0 0.0
        %5155 = vmatprep.subr.mxu0 0.0
        %5156 = vmatpush1.msra.mxu0 0.0
        %5157 = vmatprep.subr.mxu0 0.0
        %5158 = vmatpush1.msra.mxu0 0.0
        %5159 = vmatprep.subr.mxu0 0.0
        %5160 = vmatpush1.msra.mxu0 0.0
        %5161 = vmatprep.subr.mxu0 0.0
        %5162 = vmatpush1.msra.mxu0 0.0
        %5163 = vmatprep.subr.mxu0 0.0
        %5164 = vmatpush1.msra.mxu0 0.0
        %5165 = vmatprep.subr.mxu0 0.0
        %5166 = vmatpush1.msra.mxu0 0.0
        %5167 = vmatprep.mubr.f32.mxu0 0.0
        %5168 = vmatmul.mubr.f32.gmra.mrb[0].mxu0 %v4817
        %v5169 = vpop.f32.mrb[0].mxu0
        %v5170 = vadd.f32 0.0, %v5169
        %v5171 = vpop.f32.mrb[0].mxu0
        %5172 = vdwg.mxu0
        %5173 = vrot.lane.b32.xlu0 %v4755, 37
        %v5174 = vpop.permute.xlu0 %5173
        %5175 = vrot.lane.b32.xlu0 %v4756, 37
        %v5176 = vpop.permute.xlu0 %5175
        %5177 = vrot.lane.b32.xlu0 %v4757, 37
        %v5178 = vpop.permute.xlu0 %5177
        %5179 = vrot.lane.b32.xlu0 %v4758, 37
        %v5180 = vpop.permute.xlu0 %5179
        %5181 = vrot.lane.b32.xlu0 %v4759, 37
        %v5182 = vpop.permute.xlu0 %5181
        %5183 = vrot.lane.b32.xlu0 %v4760, 37
        %v5184 = vpop.permute.xlu0 %5183
        %5185 = vrot.lane.b32.xlu0 %v4761, 37
        %v5186 = vpop.permute.xlu0 %5185
        %5187 = vrot.lane.b32.xlu0 %v4762, 37
        %v5188 = vpop.permute.xlu0 %5187
        %5189 = vrot.lane.b32.xlu0 %v4763, 37
        %v5190 = vpop.permute.xlu0 %5189
        %5191 = vrot.lane.b32.xlu0 %v4764, 37
        %v5192 = vpop.permute.xlu0 %5191
        %vm5193 = vcmask 302080
        %v5194 = vsel %vm5193, %v5174, %v5176
        %v5195 = vsel %vm5193, %v5176, %v5178
        %v5196 = vsel %vm5193, %v5178, %v5180
        %v5197 = vsel %vm5193, %v5180, %v5182
        %v5198 = vsel %vm5193, %v5182, %v5184
        %v5199 = vsel %vm5193, %v5184, %v5186
        %v5200 = vsel %vm5193, %v5186, %v5188
        %v5201 = vsel %vm5193, %v5188, %v5190
        %v5202 = vsel %vm5193, %v5190, %v5192
        %v5213 = vsel %vm1079, %v4754, 0
        %5215 = vmatprep.subr.mxu0 %v5195
        %5216 = vmatpush1.msra.mxu0 %v5194
        %5217 = vmatprep.subr.mxu0 0.0
        %5218 = vmatpush1.msra.mxu0 0.0
        %5219 = vmatprep.subr.mxu0 0.0
        %5220 = vmatpush1.msra.mxu0 0.0
        %5221 = vmatprep.subr.mxu0 0.0
        %5222 = vmatpush1.msra.mxu0 0.0
        %5223 = vmatprep.subr.mxu0 0.0
        %5224 = vmatpush1.msra.mxu0 0.0
        %5225 = vmatprep.subr.mxu0 0.0
        %5226 = vmatpush1.msra.mxu0 0.0
        %5227 = vmatprep.subr.mxu0 0.0
        %5228 = vmatpush1.msra.mxu0 0.0
        %5229 = vmatprep.subr.mxu0 0.0
        %5230 = vmatpush1.msra.mxu0 0.0
        %5231 = vmatprep.subr.mxu0 0.0
        %5232 = vmatpush1.msra.mxu0 0.0
        %5233 = vmatprep.subr.mxu0 0.0
        %5234 = vmatpush1.msra.mxu0 0.0
        %5235 = vmatprep.subr.mxu0 0.0
        %5236 = vmatpush1.msra.mxu0 0.0
        %5237 = vmatprep.subr.mxu0 0.0
        %5238 = vmatpush1.msra.mxu0 0.0
        %5239 = vmatprep.subr.mxu0 0.0
        %5240 = vmatpush1.msra.mxu0 0.0
        %5241 = vmatprep.subr.mxu0 0.0
        %5242 = vmatpush1.msra.mxu0 0.0
        %5243 = vmatprep.subr.mxu0 0.0
        %5244 = vmatpush1.msra.mxu0 0.0
        %5245 = vmatprep.subr.mxu0 0.0
        %5246 = vmatpush1.msra.mxu0 0.0
        %5247 = vmatprep.subr.mxu0 0.0
        %5248 = vmatpush1.msra.mxu0 0.0
        %5249 = vmatprep.subr.mxu0 0.0
        %5250 = vmatpush1.msra.mxu0 0.0
        %5251 = vmatprep.subr.mxu0 0.0
        %5252 = vmatpush1.msra.mxu0 0.0
        %5253 = vmatprep.subr.mxu0 0.0
        %5254 = vmatpush1.msra.mxu0 0.0
        %5255 = vmatprep.subr.mxu0 0.0
        %5256 = vmatpush1.msra.mxu0 0.0
        %5257 = vmatprep.subr.mxu0 0.0
        %5258 = vmatpush1.msra.mxu0 0.0
        %5259 = vmatprep.subr.mxu0 0.0
        %5260 = vmatpush1.msra.mxu0 0.0
        %5261 = vmatprep.subr.mxu0 0.0
        %5262 = vmatpush1.msra.mxu0 0.0
        %5263 = vmatprep.subr.mxu0 0.0
        %5264 = vmatpush1.msra.mxu0 0.0
        %5265 = vmatprep.subr.mxu0 0.0
        %5266 = vmatpush1.msra.mxu0 0.0
        %5267 = vmatprep.subr.mxu0 0.0
        %5268 = vmatpush1.msra.mxu0 0.0
        %5269 = vmatprep.subr.mxu0 0.0
        %5270 = vmatpush1.msra.mxu0 0.0
        %5271 = vmatprep.subr.mxu0 0.0
        %5272 = vmatpush1.msra.mxu0 0.0
        %5273 = vmatprep.subr.mxu0 0.0
        %5274 = vmatpush1.msra.mxu0 0.0
        %5275 = vmatprep.subr.mxu0 0.0
        %5276 = vmatpush1.msra.mxu0 0.0
        %5277 = vmatprep.subr.mxu0 0.0
        %5278 = vmatpush1.msra.mxu0 0.0
        %5279 = vmatprep.mubr.f32.mxu0 0.0
        %5280 = vmatmul.mubr.f32.gmra.mrb[0].mxu0 %v5213
        %v5281 = vpop.f32.mrb[0].mxu0
        %v5282 = vadd.f32 %v4886, %v5281
        %v5283 = vpop.f32.mrb[0].mxu0
        %v5284 = vadd.f32 %v4888, %v5283
        %5285 = vdwg.mxu0
        %5286 = vmatprep.subr.mxu0 %v5197
        %5287 = vmatpush1.msra.mxu0 %v5196
        %5288 = vmatprep.subr.mxu0 0.0
        %5289 = vmatpush1.msra.mxu0 0.0
        %5290 = vmatprep.subr.mxu0 0.0
        %5291 = vmatpush1.msra.mxu0 0.0
        %5292 = vmatprep.subr.mxu0 0.0
        %5293 = vmatpush1.msra.mxu0 0.0
        %5294 = vmatprep.subr.mxu0 0.0
        %5295 = vmatpush1.msra.mxu0 0.0
        %5296 = vmatprep.subr.mxu0 0.0
        %5297 = vmatpush1.msra.mxu0 0.0
        %5298 = vmatprep.subr.mxu0 0.0
        %5299 = vmatpush1.msra.mxu0 0.0
        %5300 = vmatprep.subr.mxu0 0.0
        %5301 = vmatpush1.msra.mxu0 0.0
        %5302 = vmatprep.subr.mxu0 0.0
        %5303 = vmatpush1.msra.mxu0 0.0
        %5304 = vmatprep.subr.mxu0 0.0
        %5305 = vmatpush1.msra.mxu0 0.0
        %5306 = vmatprep.subr.mxu0 0.0
        %5307 = vmatpush1.msra.mxu0 0.0
        %5308 = vmatprep.subr.mxu0 0.0
        %5309 = vmatpush1.msra.mxu0 0.0
        %5310 = vmatprep.subr.mxu0 0.0
        %5311 = vmatpush1.msra.mxu0 0.0
        %5312 = vmatprep.subr.mxu0 0.0
        %5313 = vmatpush1.msra.mxu0 0.0
        %5314 = vmatprep.subr.mxu0 0.0
        %5315 = vmatpush1.msra.mxu0 0.0
        %5316 = vmatprep.subr.mxu0 0.0
        %5317 = vmatpush1.msra.mxu0 0.0
        %5318 = vmatprep.subr.mxu0 0.0
        %5319 = vmatpush1.msra.mxu0 0.0
        %5320 = vmatprep.subr.mxu0 0.0
        %5321 = vmatpush1.msra.mxu0 0.0
        %5322 = vmatprep.subr.mxu0 0.0
        %5323 = vmatpush1.msra.mxu0 0.0
        %5324 = vmatprep.subr.mxu0 0.0
        %5325 = vmatpush1.msra.mxu0 0.0
        %5326 = vmatprep.subr.mxu0 0.0
        %5327 = vmatpush1.msra.mxu0 0.0
        %5328 = vmatprep.subr.mxu0 0.0
        %5329 = vmatpush1.msra.mxu0 0.0
        %5330 = vmatprep.subr.mxu0 0.0
        %5331 = vmatpush1.msra.mxu0 0.0
        %5332 = vmatprep.subr.mxu0 0.0
        %5333 = vmatpush1.msra.mxu0 0.0
        %5334 = vmatprep.subr.mxu0 0.0
        %5335 = vmatpush1.msra.mxu0 0.0
        %5336 = vmatprep.subr.mxu0 0.0
        %5337 = vmatpush1.msra.mxu0 0.0
        %5338 = vmatprep.subr.mxu0 0.0
        %5339 = vmatpush1.msra.mxu0 0.0
        %5340 = vmatprep.subr.mxu0 0.0
        %5341 = vmatpush1.msra.mxu0 0.0
        %5342 = vmatprep.subr.mxu0 0.0
        %5343 = vmatpush1.msra.mxu0 0.0
        %5344 = vmatprep.subr.mxu0 0.0
        %5345 = vmatpush1.msra.mxu0 0.0
        %5346 = vmatprep.subr.mxu0 0.0
        %5347 = vmatpush1.msra.mxu0 0.0
        %5348 = vmatprep.subr.mxu0 0.0
        %5349 = vmatpush1.msra.mxu0 0.0
        %5350 = vmatprep.mubr.f32.mxu0 0.0
        %5351 = vmatmul.mubr.f32.gmra.mrb[0].mxu0 %v5213
        %v5352 = vpop.f32.mrb[0].mxu0
        %v5353 = vadd.f32 %v4957, %v5352
        %v5354 = vpop.f32.mrb[0].mxu0
        %v5355 = vadd.f32 %v4959, %v5354
        %5356 = vdwg.mxu0
        %5357 = vmatprep.subr.mxu0 %v5199
        %5358 = vmatpush1.msra.mxu0 %v5198
        %5359 = vmatprep.subr.mxu0 0.0
        %5360 = vmatpush1.msra.mxu0 0.0
        %5361 = vmatprep.subr.mxu0 0.0
        %5362 = vmatpush1.msra.mxu0 0.0
        %5363 = vmatprep.subr.mxu0 0.0
        %5364 = vmatpush1.msra.mxu0 0.0
        %5365 = vmatprep.subr.mxu0 0.0
        %5366 = vmatpush1.msra.mxu0 0.0
        %5367 = vmatprep.subr.mxu0 0.0
        %5368 = vmatpush1.msra.mxu0 0.0
        %5369 = vmatprep.subr.mxu0 0.0
        %5370 = vmatpush1.msra.mxu0 0.0
        %5371 = vmatprep.subr.mxu0 0.0
        %5372 = vmatpush1.msra.mxu0 0.0
        %5373 = vmatprep.subr.mxu0 0.0
        %5374 = vmatpush1.msra.mxu0 0.0
        %5375 = vmatprep.subr.mxu0 0.0
        %5376 = vmatpush1.msra.mxu0 0.0
        %5377 = vmatprep.subr.mxu0 0.0
        %5378 = vmatpush1.msra.mxu0 0.0
        %5379 = vmatprep.subr.mxu0 0.0
        %5380 = vmatpush1.msra.mxu0 0.0
        %5381 = vmatprep.subr.mxu0 0.0
        %5382 = vmatpush1.msra.mxu0 0.0
        %5383 = vmatprep.subr.mxu0 0.0
        %5384 = vmatpush1.msra.mxu0 0.0
        %5385 = vmatprep.subr.mxu0 0.0
        %5386 = vmatpush1.msra.mxu0 0.0
        %5387 = vmatprep.subr.mxu0 0.0
        %5388 = vmatpush1.msra.mxu0 0.0
        %5389 = vmatprep.subr.mxu0 0.0
        %5390 = vmatpush1.msra.mxu0 0.0
        %5391 = vmatprep.subr.mxu0 0.0
        %5392 = vmatpush1.msra.mxu0 0.0
        %5393 = vmatprep.subr.mxu0 0.0
        %5394 = vmatpush1.msra.mxu0 0.0
        %5395 = vmatprep.subr.mxu0 0.0
        %5396 = vmatpush1.msra.mxu0 0.0
        %5397 = vmatprep.subr.mxu0 0.0
        %5398 = vmatpush1.msra.mxu0 0.0
        %5399 = vmatprep.subr.mxu0 0.0
        %5400 = vmatpush1.msra.mxu0 0.0
        %5401 = vmatprep.subr.mxu0 0.0
        %5402 = vmatpush1.msra.mxu0 0.0
        %5403 = vmatprep.subr.mxu0 0.0
        %5404 = vmatpush1.msra.mxu0 0.0
        %5405 = vmatprep.subr.mxu0 0.0
        %5406 = vmatpush1.msra.mxu0 0.0
        %5407 = vmatprep.subr.mxu0 0.0
        %5408 = vmatpush1.msra.mxu0 0.0
        %5409 = vmatprep.subr.mxu0 0.0
        %5410 = vmatpush1.msra.mxu0 0.0
        %5411 = vmatprep.subr.mxu0 0.0
        %5412 = vmatpush1.msra.mxu0 0.0
        %5413 = vmatprep.subr.mxu0 0.0
        %5414 = vmatpush1.msra.mxu0 0.0
        %5415 = vmatprep.subr.mxu0 0.0
        %5416 = vmatpush1.msra.mxu0 0.0
        %5417 = vmatprep.subr.mxu0 0.0
        %5418 = vmatpush1.msra.mxu0 0.0
        %5419 = vmatprep.subr.mxu0 0.0
        %5420 = vmatpush1.msra.mxu0 0.0
        %5421 = vmatprep.mubr.f32.mxu0 0.0
        %5422 = vmatmul.mubr.f32.gmra.mrb[0].mxu0 %v5213
        %v5423 = vpop.f32.mrb[0].mxu0
        %v5424 = vadd.f32 %v5028, %v5423
        %v5425 = vpop.f32.mrb[0].mxu0
        %v5426 = vadd.f32 %v5030, %v5425
        %5427 = vdwg.mxu0
        %5428 = vmatprep.subr.mxu0 %v5201
        %5429 = vmatpush1.msra.mxu0 %v5200
        %5430 = vmatprep.subr.mxu0 0.0
        %5431 = vmatpush1.msra.mxu0 0.0
        %5432 = vmatprep.subr.mxu0 0.0
        %5433 = vmatpush1.msra.mxu0 0.0
        %5434 = vmatprep.subr.mxu0 0.0
        %5435 = vmatpush1.msra.mxu0 0.0
        %5436 = vmatprep.subr.mxu0 0.0
        %5437 = vmatpush1.msra.mxu0 0.0
        %5438 = vmatprep.subr.mxu0 0.0
        %5439 = vmatpush1.msra.mxu0 0.0
        %5440 = vmatprep.subr.mxu0 0.0
        %5441 = vmatpush1.msra.mxu0 0.0
        %5442 = vmatprep.subr.mxu0 0.0
        %5443 = vmatpush1.msra.mxu0 0.0
        %5444 = vmatprep.subr.mxu0 0.0
        %5445 = vmatpush1.msra.mxu0 0.0
        %5446 = vmatprep.subr.mxu0 0.0
        %5447 = vmatpush1.msra.mxu0 0.0
        %5448 = vmatprep.subr.mxu0 0.0
        %5449 = vmatpush1.msra.mxu0 0.0
        %5450 = vmatprep.subr.mxu0 0.0
        %5451 = vmatpush1.msra.mxu0 0.0
        %5452 = vmatprep.subr.mxu0 0.0
        %5453 = vmatpush1.msra.mxu0 0.0
        %5454 = vmatprep.subr.mxu0 0.0
        %5455 = vmatpush1.msra.mxu0 0.0
        %5456 = vmatprep.subr.mxu0 0.0
        %5457 = vmatpush1.msra.mxu0 0.0
        %5458 = vmatprep.subr.mxu0 0.0
        %5459 = vmatpush1.msra.mxu0 0.0
        %5460 = vmatprep.subr.mxu0 0.0
        %5461 = vmatpush1.msra.mxu0 0.0
        %5462 = vmatprep.subr.mxu0 0.0
        %5463 = vmatpush1.msra.mxu0 0.0
        %5464 = vmatprep.subr.mxu0 0.0
        %5465 = vmatpush1.msra.mxu0 0.0
        %5466 = vmatprep.subr.mxu0 0.0
        %5467 = vmatpush1.msra.mxu0 0.0
        %5468 = vmatprep.subr.mxu0 0.0
        %5469 = vmatpush1.msra.mxu0 0.0
        %5470 = vmatprep.subr.mxu0 0.0
        %5471 = vmatpush1.msra.mxu0 0.0
        %5472 = vmatprep.subr.mxu0 0.0
        %5473 = vmatpush1.msra.mxu0 0.0
        %5474 = vmatprep.subr.mxu0 0.0
        %5475 = vmatpush1.msra.mxu0 0.0
        %5476 = vmatprep.subr.mxu0 0.0
        %5477 = vmatpush1.msra.mxu0 0.0
        %5478 = vmatprep.subr.mxu0 0.0
        %5479 = vmatpush1.msra.mxu0 0.0
        %5480 = vmatprep.subr.mxu0 0.0
        %5481 = vmatpush1.msra.mxu0 0.0
        %5482 = vmatprep.subr.mxu0 0.0
        %5483 = vmatpush1.msra.mxu0 0.0
        %5484 = vmatprep.subr.mxu0 0.0
        %5485 = vmatpush1.msra.mxu0 0.0
        %5486 = vmatprep.subr.mxu0 0.0
        %5487 = vmatpush1.msra.mxu0 0.0
        %5488 = vmatprep.subr.mxu0 0.0
        %5489 = vmatpush1.msra.mxu0 0.0
        %5490 = vmatprep.subr.mxu0 0.0
        %5491 = vmatpush1.msra.mxu0 0.0
        %5492 = vmatprep.mubr.f32.mxu0 0.0
        %5493 = vmatmul.mubr.f32.gmra.mrb[0].mxu0 %v5213
        %v5494 = vpop.f32.mrb[0].mxu0
        %v5495 = vadd.f32 %v5099, %v5494
        %v5496 = vpop.f32.mrb[0].mxu0
        %v5497 = vadd.f32 %v5101, %v5496
        %5498 = vdwg.mxu0
        %5499 = vmatprep.subr.mxu0 0.0
        %5500 = vmatpush1.msra.mxu0 %v5202
        %5501 = vmatprep.subr.mxu0 0.0
        %5502 = vmatpush1.msra.mxu0 0.0
        %5503 = vmatprep.subr.mxu0 0.0
        %5504 = vmatpush1.msra.mxu0 0.0
        %5505 = vmatprep.subr.mxu0 0.0
        %5506 = vmatpush1.msra.mxu0 0.0
        %5507 = vmatprep.subr.mxu0 0.0
        %5508 = vmatpush1.msra.mxu0 0.0
        %5509 = vmatprep.subr.mxu0 0.0
        %5510 = vmatpush1.msra.mxu0 0.0
        %5511 = vmatprep.subr.mxu0 0.0
        %5512 = vmatpush1.msra.mxu0 0.0
        %5513 = vmatprep.subr.mxu0 0.0
        %5514 = vmatpush1.msra.mxu0 0.0
        %5515 = vmatprep.subr.mxu0 0.0
        %5516 = vmatpush1.msra.mxu0 0.0
        %5517 = vmatprep.subr.mxu0 0.0
        %5518 = vmatpush1.msra.mxu0 0.0
        %5519 = vmatprep.subr.mxu0 0.0
        %5520 = vmatpush1.msra.mxu0 0.0
        %5521 = vmatprep.subr.mxu0 0.0
        %5522 = vmatpush1.msra.mxu0 0.0
        %5523 = vmatprep.subr.mxu0 0.0
        %5524 = vmatpush1.msra.mxu0 0.0
        %5525 = vmatprep.subr.mxu0 0.0
        %5526 = vmatpush1.msra.mxu0 0.0
        %5527 = vmatprep.subr.mxu0 0.0
        %5528 = vmatpush1.msra.mxu0 0.0
        %5529 = vmatprep.subr.mxu0 0.0
        %5530 = vmatpush1.msra.mxu0 0.0
        %5531 = vmatprep.subr.mxu0 0.0
        %5532 = vmatpush1.msra.mxu0 0.0
        %5533 = vmatprep.subr.mxu0 0.0
        %5534 = vmatpush1.msra.mxu0 0.0
        %5535 = vmatprep.subr.mxu0 0.0
        %5536 = vmatpush1.msra.mxu0 0.0
        %5537 = vmatprep.subr.mxu0 0.0
        %5538 = vmatpush1.msra.mxu0 0.0
        %5539 = vmatprep.subr.mxu0 0.0
        %5540 = vmatpush1.msra.mxu0 0.0
        %5541 = vmatprep.subr.mxu0 0.0
        %5542 = vmatpush1.msra.mxu0 0.0
        %5543 = vmatprep.subr.mxu0 0.0
        %5544 = vmatpush1.msra.mxu0 0.0
        %5545 = vmatprep.subr.mxu0 0.0
        %5546 = vmatpush1.msra.mxu0 0.0
        %5547 = vmatprep.subr.mxu0 0.0
        %5548 = vmatpush1.msra.mxu0 0.0
        %5549 = vmatprep.subr.mxu0 0.0
        %5550 = vmatpush1.msra.mxu0 0.0
        %5551 = vmatprep.subr.mxu0 0.0
        %5552 = vmatpush1.msra.mxu0 0.0
        %5553 = vmatprep.subr.mxu0 0.0
        %5554 = vmatpush1.msra.mxu0 0.0
        %5555 = vmatprep.subr.mxu0 0.0
        %5556 = vmatpush1.msra.mxu0 0.0
        %5557 = vmatprep.subr.mxu0 0.0
        %5558 = vmatpush1.msra.mxu0 0.0
        %5559 = vmatprep.subr.mxu0 0.0
        %5560 = vmatpush1.msra.mxu0 0.0
        %5561 = vmatprep.subr.mxu0 0.0
        %5562 = vmatpush1.msra.mxu0 0.0
        %5563 = vmatprep.mubr.f32.mxu0 0.0
        %5564 = vmatmul.mubr.f32.gmra.mrb[0].mxu0 %v5213
        %v5565 = vpop.f32.mrb[0].mxu0
        %v5566 = vadd.f32 %v5170, %v5565
        %v5567 = vpop.f32.mrb[0].mxu0
        %5568 = vdwg.mxu0
        %s5569 = scalar_lea.vmem [#allocation6], 16
        %v5570 = vld [vmem:[%s5569] sm:$0xff]
        %5571 = vrot.lane.b32.xlu0 %v4755, 35
        %v5572 = vpop.permute.xlu0 %5571
        %5573 = vrot.lane.b32.xlu0 %v4756, 35
        %v5574 = vpop.permute.xlu0 %5573
        %5575 = vrot.lane.b32.xlu0 %v4757, 35
        %v5576 = vpop.permute.xlu0 %5575
        %5577 = vrot.lane.b32.xlu0 %v4758, 35
        %v5578 = vpop.permute.xlu0 %5577
        %5579 = vrot.lane.b32.xlu0 %v4759, 35
        %v5580 = vpop.permute.xlu0 %5579
        %5581 = vrot.lane.b32.xlu0 %v4760, 35
        %v5582 = vpop.permute.xlu0 %5581
        %5583 = vrot.lane.b32.xlu0 %v4761, 35
        %v5584 = vpop.permute.xlu0 %5583
        %5585 = vrot.lane.b32.xlu0 %v4762, 35
        %v5586 = vpop.permute.xlu0 %5585
        %5587 = vrot.lane.b32.xlu0 %v4763, 35
        %v5588 = vpop.permute.xlu0 %5587
        %5589 = vrot.lane.b32.xlu0 %v4764, 35
        %v5590 = vpop.permute.xlu0 %5589
        %vm5591 = vcmask 285696
        %v5592 = vsel %vm5591, %v5572, %v5574
        %v5593 = vsel %vm5591, %v5574, %v5576
        %v5594 = vsel %vm5591, %v5576, %v5578
        %v5595 = vsel %vm5591, %v5578, %v5580
        %v5596 = vsel %vm5591, %v5580, %v5582
        %v5597 = vsel %vm5591, %v5582, %v5584
        %v5598 = vsel %vm5591, %v5584, %v5586
        %v5599 = vsel %vm5591, %v5586, %v5588
        %v5600 = vsel %vm5591, %v5588, %v5590
        %v5611 = vsel %vm1079, %v5570, 0
        %5613 = vmatprep.subr.mxu0 %v5593
        %5614 = vmatpush1.msra.mxu0 %v5592
        %5615 = vmatprep.subr.mxu0 0.0
        %5616 = vmatpush1.msra.mxu0 0.0
        %5617 = vmatprep.subr.mxu0 0.0
        %5618 = vmatpush1.msra.mxu0 0.0
        %5619 = vmatprep.subr.mxu0 0.0
        %5620 = vmatpush1.msra.mxu0 0.0
        %5621 = vmatprep.subr.mxu0 0.0
        %5622 = vmatpush1.msra.mxu0 0.0
        %5623 = vmatprep.subr.mxu0 0.0
        %5624 = vmatpush1.msra.mxu0 0.0
        %5625 = vmatprep.subr.mxu0 0.0
        %5626 = vmatpush1.msra.mxu0 0.0
        %5627 = vmatprep.subr.mxu0 0.0
        %5628 = vmatpush1.msra.mxu0 0.0
        %5629 = vmatprep.subr.mxu0 0.0
        %5630 = vmatpush1.msra.mxu0 0.0
        %5631 = vmatprep.subr.mxu0 0.0
        %5632 = vmatpush1.msra.mxu0 0.0
        %5633 = vmatprep.subr.mxu0 0.0
        %5634 = vmatpush1.msra.mxu0 0.0
        %5635 = vmatprep.subr.mxu0 0.0
        %5636 = vmatpush1.msra.mxu0 0.0
        %5637 = vmatprep.subr.mxu0 0.0
        %5638 = vmatpush1.msra.mxu0 0.0
        %5639 = vmatprep.subr.mxu0 0.0
        %5640 = vmatpush1.msra.mxu0 0.0
        %5641 = vmatprep.subr.mxu0 0.0
        %5642 = vmatpush1.msra.mxu0 0.0
        %5643 = vmatprep.subr.mxu0 0.0
        %5644 = vmatpush1.msra.mxu0 0.0
        %5645 = vmatprep.subr.mxu0 0.0
        %5646 = vmatpush1.msra.mxu0 0.0
        %5647 = vmatprep.subr.mxu0 0.0
        %5648 = vmatpush1.msra.mxu0 0.0
        %5649 = vmatprep.subr.mxu0 0.0
        %5650 = vmatpush1.msra.mxu0 0.0
        %5651 = vmatprep.subr.mxu0 0.0
        %5652 = vmatpush1.msra.mxu0 0.0
        %5653 = vmatprep.subr.mxu0 0.0
        %5654 = vmatpush1.msra.mxu0 0.0
        %5655 = vmatprep.subr.mxu0 0.0
        %5656 = vmatpush1.msra.mxu0 0.0
        %5657 = vmatprep.subr.mxu0 0.0
        %5658 = vmatpush1.msra.mxu0 0.0
        %5659 = vmatprep.subr.mxu0 0.0
        %5660 = vmatpush1.msra.mxu0 0.0
        %5661 = vmatprep.subr.mxu0 0.0
        %5662 = vmatpush1.msra.mxu0 0.0
        %5663 = vmatprep.subr.mxu0 0.0
        %5664 = vmatpush1.msra.mxu0 0.0
        %5665 = vmatprep.subr.mxu0 0.0
        %5666 = vmatpush1.msra.mxu0 0.0
        %5667 = vmatprep.subr.mxu0 0.0
        %5668 = vmatpush1.msra.mxu0 0.0
        %5669 = vmatprep.subr.mxu0 0.0
        %5670 = vmatpush1.msra.mxu0 0.0
        %5671 = vmatprep.subr.mxu0 0.0
        %5672 = vmatpush1.msra.mxu0 0.0
        %5673 = vmatprep.subr.mxu0 0.0
        %5674 = vmatpush1.msra.mxu0 0.0
        %5675 = vmatprep.subr.mxu0 0.0
        %5676 = vmatpush1.msra.mxu0 0.0
        %5677 = vmatprep.mubr.f32.mxu0 0.0
        %5678 = vmatmul.mubr.f32.gmra.mrb[0].mxu0 %v5611
        %v5679 = vpop.f32.mrb[0].mxu0
        %v5680 = vadd.f32 0.0, %v5679
        %v5681 = vpop.f32.mrb[0].mxu0
        %v5682 = vadd.f32 0.0, %v5681
        %5683 = vdwg.mxu0
        %5684 = vmatprep.subr.mxu0 %v5595
        %5685 = vmatpush1.msra.mxu0 %v5594
        %5686 = vmatprep.subr.mxu0 0.0
        %5687 = vmatpush1.msra.mxu0 0.0
        %5688 = vmatprep.subr.mxu0 0.0
        %5689 = vmatpush1.msra.mxu0 0.0
        %5690 = vmatprep.subr.mxu0 0.0
        %5691 = vmatpush1.msra.mxu0 0.0
        %5692 = vmatprep.subr.mxu0 0.0
        %5693 = vmatpush1.msra.mxu0 0.0
        %5694 = vmatprep.subr.mxu0 0.0
        %5695 = vmatpush1.msra.mxu0 0.0
        %5696 = vmatprep.subr.mxu0 0.0
        %5697 = vmatpush1.msra.mxu0 0.0
        %5698 = vmatprep.subr.mxu0 0.0
        %5699 = vmatpush1.msra.mxu0 0.0
        %5700 = vmatprep.subr.mxu0 0.0
        %5701 = vmatpush1.msra.mxu0 0.0
        %5702 = vmatprep.subr.mxu0 0.0
        %5703 = vmatpush1.msra.mxu0 0.0
        %5704 = vmatprep.subr.mxu0 0.0
        %5705 = vmatpush1.msra.mxu0 0.0
        %5706 = vmatprep.subr.mxu0 0.0
        %5707 = vmatpush1.msra.mxu0 0.0
        %5708 = vmatprep.subr.mxu0 0.0
        %5709 = vmatpush1.msra.mxu0 0.0
        %5710 = vmatprep.subr.mxu0 0.0
        %5711 = vmatpush1.msra.mxu0 0.0
        %5712 = vmatprep.subr.mxu0 0.0
        %5713 = vmatpush1.msra.mxu0 0.0
        %5714 = vmatprep.subr.mxu0 0.0
        %5715 = vmatpush1.msra.mxu0 0.0
        %5716 = vmatprep.subr.mxu0 0.0
        %5717 = vmatpush1.msra.mxu0 0.0
        %5718 = vmatprep.subr.mxu0 0.0
        %5719 = vmatpush1.msra.mxu0 0.0
        %5720 = vmatprep.subr.mxu0 0.0
        %5721 = vmatpush1.msra.mxu0 0.0
        %5722 = vmatprep.subr.mxu0 0.0
        %5723 = vmatpush1.msra.mxu0 0.0
        %5724 = vmatprep.subr.mxu0 0.0
        %5725 = vmatpush1.msra.mxu0 0.0
        %5726 = vmatprep.subr.mxu0 0.0
        %5727 = vmatpush1.msra.mxu0 0.0
        %5728 = vmatprep.subr.mxu0 0.0
        %5729 = vmatpush1.msra.mxu0 0.0
        %5730 = vmatprep.subr.mxu0 0.0
        %5731 = vmatpush1.msra.mxu0 0.0
        %5732 = vmatprep.subr.mxu0 0.0
        %5733 = vmatpush1.msra.mxu0 0.0
        %5734 = vmatprep.subr.mxu0 0.0
        %5735 = vmatpush1.msra.mxu0 0.0
        %5736 = vmatprep.subr.mxu0 0.0
        %5737 = vmatpush1.msra.mxu0 0.0
        %5738 = vmatprep.subr.mxu0 0.0
        %5739 = vmatpush1.msra.mxu0 0.0
        %5740 = vmatprep.subr.mxu0 0.0
        %5741 = vmatpush1.msra.mxu0 0.0
        %5742 = vmatprep.subr.mxu0 0.0
        %5743 = vmatpush1.msra.mxu0 0.0
        %5744 = vmatprep.subr.mxu0 0.0
        %5745 = vmatpush1.msra.mxu0 0.0
        %5746 = vmatprep.subr.mxu0 0.0
        %5747 = vmatpush1.msra.mxu0 0.0
        %5748 = vmatprep.mubr.f32.mxu0 0.0
        %5749 = vmatmul.mubr.f32.gmra.mrb[0].mxu0 %v5611
        %v5750 = vpop.f32.mrb[0].mxu0
        %v5751 = vadd.f32 0.0, %v5750
        %v5752 = vpop.f32.mrb[0].mxu0
        %v5753 = vadd.f32 0.0, %v5752
        %5754 = vdwg.mxu0
        %5755 = vmatprep.subr.mxu0 %v5597
        %5756 = vmatpush1.msra.mxu0 %v5596
        %5757 = vmatprep.subr.mxu0 0.0
        %5758 = vmatpush1.msra.mxu0 0.0
        %5759 = vmatprep.subr.mxu0 0.0
        %5760 = vmatpush1.msra.mxu0 0.0
        %5761 = vmatprep.subr.mxu0 0.0
        %5762 = vmatpush1.msra.mxu0 0.0
        %5763 = vmatprep.subr.mxu0 0.0
        %5764 = vmatpush1.msra.mxu0 0.0
        %5765 = vmatprep.subr.mxu0 0.0
        %5766 = vmatpush1.msra.mxu0 0.0
        %5767 = vmatprep.subr.mxu0 0.0
        %5768 = vmatpush1.msra.mxu0 0.0
        %5769 = vmatprep.subr.mxu0 0.0
        %5770 = vmatpush1.msra.mxu0 0.0
        %5771 = vmatprep.subr.mxu0 0.0
        %5772 = vmatpush1.msra.mxu0 0.0
        %5773 = vmatprep.subr.mxu0 0.0
        %5774 = vmatpush1.msra.mxu0 0.0
        %5775 = vmatprep.subr.mxu0 0.0
        %5776 = vmatpush1.msra.mxu0 0.0
        %5777 = vmatprep.subr.mxu0 0.0
        %5778 = vmatpush1.msra.mxu0 0.0
        %5779 = vmatprep.subr.mxu0 0.0
        %5780 = vmatpush1.msra.mxu0 0.0
        %5781 = vmatprep.subr.mxu0 0.0
        %5782 = vmatpush1.msra.mxu0 0.0
        %5783 = vmatprep.subr.mxu0 0.0
        %5784 = vmatpush1.msra.mxu0 0.0
        %5785 = vmatprep.subr.mxu0 0.0
        %5786 = vmatpush1.msra.mxu0 0.0
        %5787 = vmatprep.subr.mxu0 0.0
        %5788 = vmatpush1.msra.mxu0 0.0
        %5789 = vmatprep.subr.mxu0 0.0
        %5790 = vmatpush1.msra.mxu0 0.0
        %5791 = vmatprep.subr.mxu0 0.0
        %5792 = vmatpush1.msra.mxu0 0.0
        %5793 = vmatprep.subr.mxu0 0.0
        %5794 = vmatpush1.msra.mxu0 0.0
        %5795 = vmatprep.subr.mxu0 0.0
        %5796 = vmatpush1.msra.mxu0 0.0
        %5797 = vmatprep.subr.mxu0 0.0
        %5798 = vmatpush1.msra.mxu0 0.0
        %5799 = vmatprep.subr.mxu0 0.0
        %5800 = vmatpush1.msra.mxu0 0.0
        %5801 = vmatprep.subr.mxu0 0.0
        %5802 = vmatpush1.msra.mxu0 0.0
        %5803 = vmatprep.subr.mxu0 0.0
        %5804 = vmatpush1.msra.mxu0 0.0
        %5805 = vmatprep.subr.mxu0 0.0
        %5806 = vmatpush1.msra.mxu0 0.0
        %5807 = vmatprep.subr.mxu0 0.0
        %5808 = vmatpush1.msra.mxu0 0.0
        %5809 = vmatprep.subr.mxu0 0.0
        %5810 = vmatpush1.msra.mxu0 0.0
        %5811 = vmatprep.subr.mxu0 0.0
        %5812 = vmatpush1.msra.mxu0 0.0
        %5813 = vmatprep.subr.mxu0 0.0
        %5814 = vmatpush1.msra.mxu0 0.0
        %5815 = vmatprep.subr.mxu0 0.0
        %5816 = vmatpush1.msra.mxu0 0.0
        %5817 = vmatprep.subr.mxu0 0.0
        %5818 = vmatpush1.msra.mxu0 0.0
        %5819 = vmatprep.mubr.f32.mxu0 0.0
        %5820 = vmatmul.mubr.f32.gmra.mrb[0].mxu0 %v5611
        %v5821 = vpop.f32.mrb[0].mxu0
        %v5822 = vadd.f32 0.0, %v5821
        %v5823 = vpop.f32.mrb[0].mxu0
        %v5824 = vadd.f32 0.0, %v5823
        %5825 = vdwg.mxu0
        %5826 = vmatprep.subr.mxu0 %v5599
        %5827 = vmatpush1.msra.mxu0 %v5598
        %5828 = vmatprep.subr.mxu0 0.0
        %5829 = vmatpush1.msra.mxu0 0.0
        %5830 = vmatprep.subr.mxu0 0.0
        %5831 = vmatpush1.msra.mxu0 0.0
        %5832 = vmatprep.subr.mxu0 0.0
        %5833 = vmatpush1.msra.mxu0 0.0
        %5834 = vmatprep.subr.mxu0 0.0
        %5835 = vmatpush1.msra.mxu0 0.0
        %5836 = vmatprep.subr.mxu0 0.0
        %5837 = vmatpush1.msra.mxu0 0.0
        %5838 = vmatprep.subr.mxu0 0.0
        %5839 = vmatpush1.msra.mxu0 0.0
        %5840 = vmatprep.subr.mxu0 0.0
        %5841 = vmatpush1.msra.mxu0 0.0
        %5842 = vmatprep.subr.mxu0 0.0
        %5843 = vmatpush1.msra.mxu0 0.0
        %5844 = vmatprep.subr.mxu0 0.0
        %5845 = vmatpush1.msra.mxu0 0.0
        %5846 = vmatprep.subr.mxu0 0.0
        %5847 = vmatpush1.msra.mxu0 0.0
        %5848 = vmatprep.subr.mxu0 0.0
        %5849 = vmatpush1.msra.mxu0 0.0
        %5850 = vmatprep.subr.mxu0 0.0
        %5851 = vmatpush1.msra.mxu0 0.0
        %5852 = vmatprep.subr.mxu0 0.0
        %5853 = vmatpush1.msra.mxu0 0.0
        %5854 = vmatprep.subr.mxu0 0.0
        %5855 = vmatpush1.msra.mxu0 0.0
        %5856 = vmatprep.subr.mxu0 0.0
        %5857 = vmatpush1.msra.mxu0 0.0
        %5858 = vmatprep.subr.mxu0 0.0
        %5859 = vmatpush1.msra.mxu0 0.0
        %5860 = vmatprep.subr.mxu0 0.0
        %5861 = vmatpush1.msra.mxu0 0.0
        %5862 = vmatprep.subr.mxu0 0.0
        %5863 = vmatpush1.msra.mxu0 0.0
        %5864 = vmatprep.subr.mxu0 0.0
        %5865 = vmatpush1.msra.mxu0 0.0
        %5866 = vmatprep.subr.mxu0 0.0
        %5867 = vmatpush1.msra.mxu0 0.0
        %5868 = vmatprep.subr.mxu0 0.0
        %5869 = vmatpush1.msra.mxu0 0.0
        %5870 = vmatprep.subr.mxu0 0.0
        %5871 = vmatpush1.msra.mxu0 0.0
        %5872 = vmatprep.subr.mxu0 0.0
        %5873 = vmatpush1.msra.mxu0 0.0
        %5874 = vmatprep.subr.mxu0 0.0
        %5875 = vmatpush1.msra.mxu0 0.0
        %5876 = vmatprep.subr.mxu0 0.0
        %5877 = vmatpush1.msra.mxu0 0.0
        %5878 = vmatprep.subr.mxu0 0.0
        %5879 = vmatpush1.msra.mxu0 0.0
        %5880 = vmatprep.subr.mxu0 0.0
        %5881 = vmatpush1.msra.mxu0 0.0
        %5882 = vmatprep.subr.mxu0 0.0
        %5883 = vmatpush1.msra.mxu0 0.0
        %5884 = vmatprep.subr.mxu0 0.0
        %5885 = vmatpush1.msra.mxu0 0.0
        %5886 = vmatprep.subr.mxu0 0.0
        %5887 = vmatpush1.msra.mxu0 0.0
        %5888 = vmatprep.subr.mxu0 0.0
        %5889 = vmatpush1.msra.mxu0 0.0
        %5890 = vmatprep.mubr.f32.mxu0 0.0
        %5891 = vmatmul.mubr.f32.gmra.mrb[0].mxu0 %v5611
        %v5892 = vpop.f32.mrb[0].mxu0
        %v5893 = vadd.f32 0.0, %v5892
        %v5894 = vpop.f32.mrb[0].mxu0
        %v5895 = vadd.f32 0.0, %v5894
        %5896 = vdwg.mxu0
        %5897 = vmatprep.subr.mxu0 0.0
        %5898 = vmatpush1.msra.mxu0 %v5600
        %5899 = vmatprep.subr.mxu0 0.0
        %5900 = vmatpush1.msra.mxu0 0.0
        %5901 = vmatprep.subr.mxu0 0.0
        %5902 = vmatpush1.msra.mxu0 0.0
        %5903 = vmatprep.subr.mxu0 0.0
        %5904 = vmatpush1.msra.mxu0 0.0
        %5905 = vmatprep.subr.mxu0 0.0
        %5906 = vmatpush1.msra.mxu0 0.0
        %5907 = vmatprep.subr.mxu0 0.0
        %5908 = vmatpush1.msra.mxu0 0.0
        %5909 = vmatprep.subr.mxu0 0.0
        %5910 = vmatpush1.msra.mxu0 0.0
        %5911 = vmatprep.subr.mxu0 0.0
        %5912 = vmatpush1.msra.mxu0 0.0
        %5913 = vmatprep.subr.mxu0 0.0
        %5914 = vmatpush1.msra.mxu0 0.0
        %5915 = vmatprep.subr.mxu0 0.0
        %5916 = vmatpush1.msra.mxu0 0.0
        %5917 = vmatprep.subr.mxu0 0.0
        %5918 = vmatpush1.msra.mxu0 0.0
        %5919 = vmatprep.subr.mxu0 0.0
        %5920 = vmatpush1.msra.mxu0 0.0
        %5921 = vmatprep.subr.mxu0 0.0
        %5922 = vmatpush1.msra.mxu0 0.0
        %5923 = vmatprep.subr.mxu0 0.0
        %5924 = vmatpush1.msra.mxu0 0.0
        %5925 = vmatprep.subr.mxu0 0.0
        %5926 = vmatpush1.msra.mxu0 0.0
        %5927 = vmatprep.subr.mxu0 0.0
        %5928 = vmatpush1.msra.mxu0 0.0
        %5929 = vmatprep.subr.mxu0 0.0
        %5930 = vmatpush1.msra.mxu0 0.0
        %5931 = vmatprep.subr.mxu0 0.0
        %5932 = vmatpush1.msra.mxu0 0.0
        %5933 = vmatprep.subr.mxu0 0.0
        %5934 = vmatpush1.msra.mxu0 0.0
        %5935 = vmatprep.subr.mxu0 0.0
        %5936 = vmatpush1.msra.mxu0 0.0
        %5937 = vmatprep.subr.mxu0 0.0
        %5938 = vmatpush1.msra.mxu0 0.0
        %5939 = vmatprep.subr.mxu0 0.0
        %5940 = vmatpush1.msra.mxu0 0.0
        %5941 = vmatprep.subr.mxu0 0.0
        %5942 = vmatpush1.msra.mxu0 0.0
        %5943 = vmatprep.subr.mxu0 0.0
        %5944 = vmatpush1.msra.mxu0 0.0
        %5945 = vmatprep.subr.mxu0 0.0
        %5946 = vmatpush1.msra.mxu0 0.0
        %5947 = vmatprep.subr.mxu0 0.0
        %5948 = vmatpush1.msra.mxu0 0.0
        %5949 = vmatprep.subr.mxu0 0.0
        %5950 = vmatpush1.msra.mxu0 0.0
        %5951 = vmatprep.subr.mxu0 0.0
        %5952 = vmatpush1.msra.mxu0 0.0
        %5953 = vmatprep.subr.mxu0 0.0
        %5954 = vmatpush1.msra.mxu0 0.0
        %5955 = vmatprep.subr.mxu0 0.0
        %5956 = vmatpush1.msra.mxu0 0.0
        %5957 = vmatprep.subr.mxu0 0.0
        %5958 = vmatpush1.msra.mxu0 0.0
        %5959 = vmatprep.subr.mxu0 0.0
        %5960 = vmatpush1.msra.mxu0 0.0
        %5961 = vmatprep.mubr.f32.mxu0 0.0
        %5962 = vmatmul.mubr.f32.gmra.mrb[0].mxu0 %v5611
        %v5963 = vpop.f32.mrb[0].mxu0
        %v5964 = vadd.f32 0.0, %v5963
        %v5965 = vpop.f32.mrb[0].mxu0
        %5966 = vdwg.mxu0
        %v5967 = vadd.f32 %v5282, %v5680
        %v5968 = vadd.f32 %v5284, %v5682
        %v5969 = vadd.f32 %v5353, %v5751
        %v5970 = vadd.f32 %v5355, %v5753
        %v5971 = vadd.f32 %v5424, %v5822
        %v5972 = vadd.f32 %v5426, %v5824
        %v5973 = vadd.f32 %v5495, %v5893
        %v5974 = vadd.f32 %v5497, %v5895
        %v5975 = vadd.f32 %v5566, %v5964
        %s5976 = scalar_lea.vmem [#allocation6], 24
        %v5977 = vld [vmem:[%s5976] sm:$0xff]
        %5978 = vrot.lane.b32.xlu0 %v4755, 1
        %v5979 = vpop.permute.xlu0 %5978
        %5980 = vrot.lane.b32.xlu0 %v4756, 1
        %v5981 = vpop.permute.xlu0 %5980
        %5982 = vrot.lane.b32.xlu0 %v4757, 1
        %v5983 = vpop.permute.xlu0 %5982
        %5984 = vrot.lane.b32.xlu0 %v4758, 1
        %v5985 = vpop.permute.xlu0 %5984
        %5986 = vrot.lane.b32.xlu0 %v4759, 1
        %v5987 = vpop.permute.xlu0 %5986
        %5988 = vrot.lane.b32.xlu0 %v4760, 1
        %v5989 = vpop.permute.xlu0 %5988
        %5990 = vrot.lane.b32.xlu0 %v4761, 1
        %v5991 = vpop.permute.xlu0 %5990
        %5992 = vrot.lane.b32.xlu0 %v4762, 1
        %v5993 = vpop.permute.xlu0 %5992
        %5994 = vrot.lane.b32.xlu0 %v4763, 1
        %v5995 = vpop.permute.xlu0 %5994
        %5996 = vrot.lane.b32.xlu0 %v4764, 1
        %v5997 = vpop.permute.xlu0 %5996
        %vm5998 = vcmask 7168
        %v5999 = vsel %vm5998, %v5979, %v5981
        %v6000 = vsel %vm5998, %v5981, %v5983
        %v6001 = vsel %vm5998, %v5983, %v5985
        %v6002 = vsel %vm5998, %v5985, %v5987
        %v6003 = vsel %vm5998, %v5987, %v5989
        %v6004 = vsel %vm5998, %v5989, %v5991
        %v6005 = vsel %vm5998, %v5991, %v5993
        %v6006 = vsel %vm5998, %v5993, %v5995
        %v6007 = vsel %vm5998, %v5995, %v5997
        %v6018 = vsel %vm1079, %v5977, 0
        %6020 = vmatprep.subr.mxu0 %v6000
        %6021 = vmatpush1.msra.mxu0 %v5999
        %6022 = vmatprep.subr.mxu0 0.0
        %6023 = vmatpush1.msra.mxu0 0.0
        %6024 = vmatprep.subr.mxu0 0.0
        %6025 = vmatpush1.msra.mxu0 0.0
        %6026 = vmatprep.subr.mxu0 0.0
        %6027 = vmatpush1.msra.mxu0 0.0
        %6028 = vmatprep.subr.mxu0 0.0
        %6029 = vmatpush1.msra.mxu0 0.0
        %6030 = vmatprep.subr.mxu0 0.0
        %6031 = vmatpush1.msra.mxu0 0.0
        %6032 = vmatprep.subr.mxu0 0.0
        %6033 = vmatpush1.msra.mxu0 0.0
        %6034 = vmatprep.subr.mxu0 0.0
        %6035 = vmatpush1.msra.mxu0 0.0
        %6036 = vmatprep.subr.mxu0 0.0
        %6037 = vmatpush1.msra.mxu0 0.0
        %6038 = vmatprep.subr.mxu0 0.0
        %6039 = vmatpush1.msra.mxu0 0.0
        %6040 = vmatprep.subr.mxu0 0.0
        %6041 = vmatpush1.msra.mxu0 0.0
        %6042 = vmatprep.subr.mxu0 0.0
        %6043 = vmatpush1.msra.mxu0 0.0
        %6044 = vmatprep.subr.mxu0 0.0
        %6045 = vmatpush1.msra.mxu0 0.0
        %6046 = vmatprep.subr.mxu0 0.0
        %6047 = vmatpush1.msra.mxu0 0.0
        %6048 = vmatprep.subr.mxu0 0.0
        %6049 = vmatpush1.msra.mxu0 0.0
        %6050 = vmatprep.subr.mxu0 0.0
        %6051 = vmatpush1.msra.mxu0 0.0
        %6052 = vmatprep.subr.mxu0 0.0
        %6053 = vmatpush1.msra.mxu0 0.0
        %6054 = vmatprep.subr.mxu0 0.0
        %6055 = vmatpush1.msra.mxu0 0.0
        %6056 = vmatprep.subr.mxu0 0.0
        %6057 = vmatpush1.msra.mxu0 0.0
        %6058 = vmatprep.subr.mxu0 0.0
        %6059 = vmatpush1.msra.mxu0 0.0
        %6060 = vmatprep.subr.mxu0 0.0
        %6061 = vmatpush1.msra.mxu0 0.0
        %6062 = vmatprep.subr.mxu0 0.0
        %6063 = vmatpush1.msra.mxu0 0.0
        %6064 = vmatprep.subr.mxu0 0.0
        %6065 = vmatpush1.msra.mxu0 0.0
        %6066 = vmatprep.subr.mxu0 0.0
        %6067 = vmatpush1.msra.mxu0 0.0
        %6068 = vmatprep.subr.mxu0 0.0
        %6069 = vmatpush1.msra.mxu0 0.0
        %6070 = vmatprep.subr.mxu0 0.0
        %6071 = vmatpush1.msra.mxu0 0.0
        %6072 = vmatprep.subr.mxu0 0.0
        %6073 = vmatpush1.msra.mxu0 0.0
        %6074 = vmatprep.subr.mxu0 0.0
        %6075 = vmatpush1.msra.mxu0 0.0
        %6076 = vmatprep.subr.mxu0 0.0
        %6077 = vmatpush1.msra.mxu0 0.0
        %6078 = vmatprep.subr.mxu0 0.0
        %6079 = vmatpush1.msra.mxu0 0.0
        %6080 = vmatprep.subr.mxu0 0.0
        %6081 = vmatpush1.msra.mxu0 0.0
        %6082 = vmatprep.subr.mxu0 0.0
        %6083 = vmatpush1.msra.mxu0 0.0
        %6084 = vmatprep.mubr.f32.mxu0 0.0
        %6085 = vmatmul.mubr.f32.gmra.mrb[0].mxu0 %v6018
        %v6086 = vpop.f32.mrb[0].mxu0
        %v6087 = vadd.f32 0.0, %v6086
        %v6088 = vpop.f32.mrb[0].mxu0
        %v6089 = vadd.f32 0.0, %v6088
        %6090 = vdwg.mxu0
        %6091 = vmatprep.subr.mxu0 %v6002
        %6092 = vmatpush1.msra.mxu0 %v6001
        %6093 = vmatprep.subr.mxu0 0.0
        %6094 = vmatpush1.msra.mxu0 0.0
        %6095 = vmatprep.subr.mxu0 0.0
        %6096 = vmatpush1.msra.mxu0 0.0
        %6097 = vmatprep.subr.mxu0 0.0
        %6098 = vmatpush1.msra.mxu0 0.0
        %6099 = vmatprep.subr.mxu0 0.0
        %6100 = vmatpush1.msra.mxu0 0.0
        %6101 = vmatprep.subr.mxu0 0.0
        %6102 = vmatpush1.msra.mxu0 0.0
        %6103 = vmatprep.subr.mxu0 0.0
        %6104 = vmatpush1.msra.mxu0 0.0
        %6105 = vmatprep.subr.mxu0 0.0
        %6106 = vmatpush1.msra.mxu0 0.0
        %6107 = vmatprep.subr.mxu0 0.0
        %6108 = vmatpush1.msra.mxu0 0.0
        %6109 = vmatprep.subr.mxu0 0.0
        %6110 = vmatpush1.msra.mxu0 0.0
        %6111 = vmatprep.subr.mxu0 0.0
        %6112 = vmatpush1.msra.mxu0 0.0
        %6113 = vmatprep.subr.mxu0 0.0
        %6114 = vmatpush1.msra.mxu0 0.0
        %6115 = vmatprep.subr.mxu0 0.0
        %6116 = vmatpush1.msra.mxu0 0.0
        %6117 = vmatprep.subr.mxu0 0.0
        %6118 = vmatpush1.msra.mxu0 0.0
        %6119 = vmatprep.subr.mxu0 0.0
        %6120 = vmatpush1.msra.mxu0 0.0
        %6121 = vmatprep.subr.mxu0 0.0
        %6122 = vmatpush1.msra.mxu0 0.0
        %6123 = vmatprep.subr.mxu0 0.0
        %6124 = vmatpush1.msra.mxu0 0.0
        %6125 = vmatprep.subr.mxu0 0.0
        %6126 = vmatpush1.msra.mxu0 0.0
        %6127 = vmatprep.subr.mxu0 0.0
        %6128 = vmatpush1.msra.mxu0 0.0
        %6129 = vmatprep.subr.mxu0 0.0
        %6130 = vmatpush1.msra.mxu0 0.0
        %6131 = vmatprep.subr.mxu0 0.0
        %6132 = vmatpush1.msra.mxu0 0.0
        %6133 = vmatprep.subr.mxu0 0.0
        %6134 = vmatpush1.msra.mxu0 0.0
        %6135 = vmatprep.subr.mxu0 0.0
        %6136 = vmatpush1.msra.mxu0 0.0
        %6137 = vmatprep.subr.mxu0 0.0
        %6138 = vmatpush1.msra.mxu0 0.0
        %6139 = vmatprep.subr.mxu0 0.0
        %6140 = vmatpush1.msra.mxu0 0.0
        %6141 = vmatprep.subr.mxu0 0.0
        %6142 = vmatpush1.msra.mxu0 0.0
        %6143 = vmatprep.subr.mxu0 0.0
        %6144 = vmatpush1.msra.mxu0 0.0
        %6145 = vmatprep.subr.mxu0 0.0
        %6146 = vmatpush1.msra.mxu0 0.0
        %6147 = vmatprep.subr.mxu0 0.0
        %6148 = vmatpush1.msra.mxu0 0.0
        %6149 = vmatprep.subr.mxu0 0.0
        %6150 = vmatpush1.msra.mxu0 0.0
        %6151 = vmatprep.subr.mxu0 0.0
        %6152 = vmatpush1.msra.mxu0 0.0
        %6153 = vmatprep.subr.mxu0 0.0
        %6154 = vmatpush1.msra.mxu0 0.0
        %6155 = vmatprep.mubr.f32.mxu0 0.0
        %6156 = vmatmul.mubr.f32.gmra.mrb[0].mxu0 %v6018
        %v6157 = vpop.f32.mrb[0].mxu0
        %v6158 = vadd.f32 0.0, %v6157
        %v6159 = vpop.f32.mrb[0].mxu0
        %v6160 = vadd.f32 0.0, %v6159
        %6161 = vdwg.mxu0
        %6162 = vmatprep.subr.mxu0 %v6004
        %6163 = vmatpush1.msra.mxu0 %v6003
        %6164 = vmatprep.subr.mxu0 0.0
        %6165 = vmatpush1.msra.mxu0 0.0
        %6166 = vmatprep.subr.mxu0 0.0
        %6167 = vmatpush1.msra.mxu0 0.0
        %6168 = vmatprep.subr.mxu0 0.0
        %6169 = vmatpush1.msra.mxu0 0.0
        %6170 = vmatprep.subr.mxu0 0.0
        %6171 = vmatpush1.msra.mxu0 0.0
        %6172 = vmatprep.subr.mxu0 0.0
        %6173 = vmatpush1.msra.mxu0 0.0
        %6174 = vmatprep.subr.mxu0 0.0
        %6175 = vmatpush1.msra.mxu0 0.0
        %6176 = vmatprep.subr.mxu0 0.0
        %6177 = vmatpush1.msra.mxu0 0.0
        %6178 = vmatprep.subr.mxu0 0.0
        %6179 = vmatpush1.msra.mxu0 0.0
        %6180 = vmatprep.subr.mxu0 0.0
        %6181 = vmatpush1.msra.mxu0 0.0
        %6182 = vmatprep.subr.mxu0 0.0
        %6183 = vmatpush1.msra.mxu0 0.0
        %6184 = vmatprep.subr.mxu0 0.0
        %6185 = vmatpush1.msra.mxu0 0.0
        %6186 = vmatprep.subr.mxu0 0.0
        %6187 = vmatpush1.msra.mxu0 0.0
        %6188 = vmatprep.subr.mxu0 0.0
        %6189 = vmatpush1.msra.mxu0 0.0
        %6190 = vmatprep.subr.mxu0 0.0
        %6191 = vmatpush1.msra.mxu0 0.0
        %6192 = vmatprep.subr.mxu0 0.0
        %6193 = vmatpush1.msra.mxu0 0.0
        %6194 = vmatprep.subr.mxu0 0.0
        %6195 = vmatpush1.msra.mxu0 0.0
        %6196 = vmatprep.subr.mxu0 0.0
        %6197 = vmatpush1.msra.mxu0 0.0
        %6198 = vmatprep.subr.mxu0 0.0
        %6199 = vmatpush1.msra.mxu0 0.0
        %6200 = vmatprep.subr.mxu0 0.0
        %6201 = vmatpush1.msra.mxu0 0.0
        %6202 = vmatprep.subr.mxu0 0.0
        %6203 = vmatpush1.msra.mxu0 0.0
        %6204 = vmatprep.subr.mxu0 0.0
        %6205 = vmatpush1.msra.mxu0 0.0
        %6206 = vmatprep.subr.mxu0 0.0
        %6207 = vmatpush1.msra.mxu0 0.0
        %6208 = vmatprep.subr.mxu0 0.0
        %6209 = vmatpush1.msra.mxu0 0.0
        %6210 = vmatprep.subr.mxu0 0.0
        %6211 = vmatpush1.msra.mxu0 0.0
        %6212 = vmatprep.subr.mxu0 0.0
        %6213 = vmatpush1.msra.mxu0 0.0
        %6214 = vmatprep.subr.mxu0 0.0
        %6215 = vmatpush1.msra.mxu0 0.0
        %6216 = vmatprep.subr.mxu0 0.0
        %6217 = vmatpush1.msra.mxu0 0.0
        %6218 = vmatprep.subr.mxu0 0.0
        %6219 = vmatpush1.msra.mxu0 0.0
        %6220 = vmatprep.subr.mxu0 0.0
        %6221 = vmatpush1.msra.mxu0 0.0
        %6222 = vmatprep.subr.mxu0 0.0
        %6223 = vmatpush1.msra.mxu0 0.0
        %6224 = vmatprep.subr.mxu0 0.0
        %6225 = vmatpush1.msra.mxu0 0.0
        %6226 = vmatprep.mubr.f32.mxu0 0.0
        %6227 = vmatmul.mubr.f32.gmra.mrb[0].mxu0 %v6018
        %v6228 = vpop.f32.mrb[0].mxu0
        %v6229 = vadd.f32 0.0, %v6228
        %v6230 = vpop.f32.mrb[0].mxu0
        %v6231 = vadd.f32 0.0, %v6230
        %6232 = vdwg.mxu0
        %6233 = vmatprep.subr.mxu0 %v6006
        %6234 = vmatpush1.msra.mxu0 %v6005
        %6235 = vmatprep.subr.mxu0 0.0
        %6236 = vmatpush1.msra.mxu0 0.0
        %6237 = vmatprep.subr.mxu0 0.0
        %6238 = vmatpush1.msra.mxu0 0.0
        %6239 = vmatprep.subr.mxu0 0.0
        %6240 = vmatpush1.msra.mxu0 0.0
        %6241 = vmatprep.subr.mxu0 0.0
        %6242 = vmatpush1.msra.mxu0 0.0
        %6243 = vmatprep.subr.mxu0 0.0
        %6244 = vmatpush1.msra.mxu0 0.0
        %6245 = vmatprep.subr.mxu0 0.0
        %6246 = vmatpush1.msra.mxu0 0.0
        %6247 = vmatprep.subr.mxu0 0.0
        %6248 = vmatpush1.msra.mxu0 0.0
        %6249 = vmatprep.subr.mxu0 0.0
        %6250 = vmatpush1.msra.mxu0 0.0
        %6251 = vmatprep.subr.mxu0 0.0
        %6252 = vmatpush1.msra.mxu0 0.0
        %6253 = vmatprep.subr.mxu0 0.0
        %6254 = vmatpush1.msra.mxu0 0.0
        %6255 = vmatprep.subr.mxu0 0.0
        %6256 = vmatpush1.msra.mxu0 0.0
        %6257 = vmatprep.subr.mxu0 0.0
        %6258 = vmatpush1.msra.mxu0 0.0
        %6259 = vmatprep.subr.mxu0 0.0
        %6260 = vmatpush1.msra.mxu0 0.0
        %6261 = vmatprep.subr.mxu0 0.0
        %6262 = vmatpush1.msra.mxu0 0.0
        %6263 = vmatprep.subr.mxu0 0.0
        %6264 = vmatpush1.msra.mxu0 0.0
        %6265 = vmatprep.subr.mxu0 0.0
        %6266 = vmatpush1.msra.mxu0 0.0
        %6267 = vmatprep.subr.mxu0 0.0
        %6268 = vmatpush1.msra.mxu0 0.0
        %6269 = vmatprep.subr.mxu0 0.0
        %6270 = vmatpush1.msra.mxu0 0.0
        %6271 = vmatprep.subr.mxu0 0.0
        %6272 = vmatpush1.msra.mxu0 0.0
        %6273 = vmatprep.subr.mxu0 0.0
        %6274 = vmatpush1.msra.mxu0 0.0
        %6275 = vmatprep.subr.mxu0 0.0
        %6276 = vmatpush1.msra.mxu0 0.0
        %6277 = vmatprep.subr.mxu0 0.0
        %6278 = vmatpush1.msra.mxu0 0.0
        %6279 = vmatprep.subr.mxu0 0.0
        %6280 = vmatpush1.msra.mxu0 0.0
        %6281 = vmatprep.subr.mxu0 0.0
        %6282 = vmatpush1.msra.mxu0 0.0
        %6283 = vmatprep.subr.mxu0 0.0
        %6284 = vmatpush1.msra.mxu0 0.0
        %6285 = vmatprep.subr.mxu0 0.0
        %6286 = vmatpush1.msra.mxu0 0.0
        %6287 = vmatprep.subr.mxu0 0.0
        %6288 = vmatpush1.msra.mxu0 0.0
        %6289 = vmatprep.subr.mxu0 0.0
        %6290 = vmatpush1.msra.mxu0 0.0
        %6291 = vmatprep.subr.mxu0 0.0
        %6292 = vmatpush1.msra.mxu0 0.0
        %6293 = vmatprep.subr.mxu0 0.0
        %6294 = vmatpush1.msra.mxu0 0.0
        %6295 = vmatprep.subr.mxu0 0.0
        %6296 = vmatpush1.msra.mxu0 0.0
        %6297 = vmatprep.mubr.f32.mxu0 0.0
        %6298 = vmatmul.mubr.f32.gmra.mrb[0].mxu0 %v6018
        %v6299 = vpop.f32.mrb[0].mxu0
        %v6300 = vadd.f32 0.0, %v6299
        %v6301 = vpop.f32.mrb[0].mxu0
        %v6302 = vadd.f32 0.0, %v6301
        %6303 = vdwg.mxu0
        %6304 = vmatprep.subr.mxu0 0.0
        %6305 = vmatpush1.msra.mxu0 %v6007
        %6306 = vmatprep.subr.mxu0 0.0
        %6307 = vmatpush1.msra.mxu0 0.0
        %6308 = vmatprep.subr.mxu0 0.0
        %6309 = vmatpush1.msra.mxu0 0.0
        %6310 = vmatprep.subr.mxu0 0.0
        %6311 = vmatpush1.msra.mxu0 0.0
        %6312 = vmatprep.subr.mxu0 0.0
        %6313 = vmatpush1.msra.mxu0 0.0
        %6314 = vmatprep.subr.mxu0 0.0
        %6315 = vmatpush1.msra.mxu0 0.0
        %6316 = vmatprep.subr.mxu0 0.0
        %6317 = vmatpush1.msra.mxu0 0.0
        %6318 = vmatprep.subr.mxu0 0.0
        %6319 = vmatpush1.msra.mxu0 0.0
        %6320 = vmatprep.subr.mxu0 0.0
        %6321 = vmatpush1.msra.mxu0 0.0
        %6322 = vmatprep.subr.mxu0 0.0
        %6323 = vmatpush1.msra.mxu0 0.0
        %6324 = vmatprep.subr.mxu0 0.0
        %6325 = vmatpush1.msra.mxu0 0.0
        %6326 = vmatprep.subr.mxu0 0.0
        %6327 = vmatpush1.msra.mxu0 0.0
        %6328 = vmatprep.subr.mxu0 0.0
        %6329 = vmatpush1.msra.mxu0 0.0
        %6330 = vmatprep.subr.mxu0 0.0
        %6331 = vmatpush1.msra.mxu0 0.0
        %6332 = vmatprep.subr.mxu0 0.0
        %6333 = vmatpush1.msra.mxu0 0.0
        %6334 = vmatprep.subr.mxu0 0.0
        %6335 = vmatpush1.msra.mxu0 0.0
        %6336 = vmatprep.subr.mxu0 0.0
        %6337 = vmatpush1.msra.mxu0 0.0
        %6338 = vmatprep.subr.mxu0 0.0
        %6339 = vmatpush1.msra.mxu0 0.0
        %6340 = vmatprep.subr.mxu0 0.0
        %6341 = vmatpush1.msra.mxu0 0.0
        %6342 = vmatprep.subr.mxu0 0.0
        %6343 = vmatpush1.msra.mxu0 0.0
        %6344 = vmatprep.subr.mxu0 0.0
        %6345 = vmatpush1.msra.mxu0 0.0
        %6346 = vmatprep.subr.mxu0 0.0
        %6347 = vmatpush1.msra.mxu0 0.0
        %6348 = vmatprep.subr.mxu0 0.0
        %6349 = vmatpush1.msra.mxu0 0.0
        %6350 = vmatprep.subr.mxu0 0.0
        %6351 = vmatpush1.msra.mxu0 0.0
        %6352 = vmatprep.subr.mxu0 0.0
        %6353 = vmatpush1.msra.mxu0 0.0
        %6354 = vmatprep.subr.mxu0 0.0
        %6355 = vmatpush1.msra.mxu0 0.0
        %6356 = vmatprep.subr.mxu0 0.0
        %6357 = vmatpush1.msra.mxu0 0.0
        %6358 = vmatprep.subr.mxu0 0.0
        %6359 = vmatpush1.msra.mxu0 0.0
        %6360 = vmatprep.subr.mxu0 0.0
        %6361 = vmatpush1.msra.mxu0 0.0
        %6362 = vmatprep.subr.mxu0 0.0
        %6363 = vmatpush1.msra.mxu0 0.0
        %6364 = vmatprep.subr.mxu0 0.0
        %6365 = vmatpush1.msra.mxu0 0.0
        %6366 = vmatprep.subr.mxu0 0.0
        %6367 = vmatpush1.msra.mxu0 0.0
        %6368 = vmatprep.mubr.f32.mxu0 0.0
        %6369 = vmatmul.mubr.f32.gmra.mrb[0].mxu0 %v6018
        %v6370 = vpop.f32.mrb[0].mxu0
        %v6371 = vadd.f32 0.0, %v6370
        %v6372 = vpop.f32.mrb[0].mxu0
        %6373 = vdwg.mxu0
        %v6374 = vadd.f32 %v5967, %v6087
        %v6375 = vadd.f32 %v5968, %v6089
        %v6376 = vadd.f32 %v5969, %v6158
        %v6377 = vadd.f32 %v5970, %v6160
        %v6378 = vadd.f32 %v5971, %v6229
        %v6379 = vadd.f32 %v5972, %v6231
        %v6380 = vadd.f32 %v5973, %v6300
        %v6381 = vadd.f32 %v5974, %v6302
        %v6382 = vadd.f32 %v5975, %v6371
        %s6383 = scalar_lea.vmem [#allocation6], 32
        %v6384 = vld [vmem:[%s6383] sm:$0xff]
        %v6386 = vsel %vm1079, %v6384, 0
        %6388 = vmatprep.subr.mxu0 %v4757
        %6389 = vmatpush1.msra.mxu0 %v4756
        %6390 = vmatprep.subr.mxu0 0.0
        %6391 = vmatpush1.msra.mxu0 0.0
        %6392 = vmatprep.subr.mxu0 0.0
        %6393 = vmatpush1.msra.mxu0 0.0
        %6394 = vmatprep.subr.mxu0 0.0
        %6395 = vmatpush1.msra.mxu0 0.0
        %6396 = vmatprep.subr.mxu0 0.0
        %6397 = vmatpush1.msra.mxu0 0.0
        %6398 = vmatprep.subr.mxu0 0.0
        %6399 = vmatpush1.msra.mxu0 0.0
        %6400 = vmatprep.subr.mxu0 0.0
        %6401 = vmatpush1.msra.mxu0 0.0
        %6402 = vmatprep.subr.mxu0 0.0
        %6403 = vmatpush1.msra.mxu0 0.0
        %6404 = vmatprep.subr.mxu0 0.0
        %6405 = vmatpush1.msra.mxu0 0.0
        %6406 = vmatprep.subr.mxu0 0.0
        %6407 = vmatpush1.msra.mxu0 0.0
        %6408 = vmatprep.subr.mxu0 0.0
        %6409 = vmatpush1.msra.mxu0 0.0
        %6410 = vmatprep.subr.mxu0 0.0
        %6411 = vmatpush1.msra.mxu0 0.0
        %6412 = vmatprep.subr.mxu0 0.0
        %6413 = vmatpush1.msra.mxu0 0.0
        %6414 = vmatprep.subr.mxu0 0.0
        %6415 = vmatpush1.msra.mxu0 0.0
        %6416 = vmatprep.subr.mxu0 0.0
        %6417 = vmatpush1.msra.mxu0 0.0
        %6418 = vmatprep.subr.mxu0 0.0
        %6419 = vmatpush1.msra.mxu0 0.0
        %6420 = vmatprep.subr.mxu0 0.0
        %6421 = vmatpush1.msra.mxu0 0.0
        %6422 = vmatprep.subr.mxu0 0.0
        %6423 = vmatpush1.msra.mxu0 0.0
        %6424 = vmatprep.subr.mxu0 0.0
        %6425 = vmatpush1.msra.mxu0 0.0
        %6426 = vmatprep.subr.mxu0 0.0
        %6427 = vmatpush1.msra.mxu0 0.0
        %6428 = vmatprep.subr.mxu0 0.0
        %6429 = vmatpush1.msra.mxu0 0.0
        %6430 = vmatprep.subr.mxu0 0.0
        %6431 = vmatpush1.msra.mxu0 0.0
        %6432 = vmatprep.subr.mxu0 0.0
        %6433 = vmatpush1.msra.mxu0 0.0
        %6434 = vmatprep.subr.mxu0 0.0
        %6435 = vmatpush1.msra.mxu0 0.0
        %6436 = vmatprep.subr.mxu0 0.0
        %6437 = vmatpush1.msra.mxu0 0.0
        %6438 = vmatprep.subr.mxu0 0.0
        %6439 = vmatpush1.msra.mxu0 0.0
        %6440 = vmatprep.subr.mxu0 0.0
        %6441 = vmatpush1.msra.mxu0 0.0
        %6442 = vmatprep.subr.mxu0 0.0
        %6443 = vmatpush1.msra.mxu0 0.0
        %6444 = vmatprep.subr.mxu0 0.0
        %6445 = vmatpush1.msra.mxu0 0.0
        %6446 = vmatprep.subr.mxu0 0.0
        %6447 = vmatpush1.msra.mxu0 0.0
        %6448 = vmatprep.subr.mxu0 0.0
        %6449 = vmatpush1.msra.mxu0 0.0
        %6450 = vmatprep.subr.mxu0 0.0
        %6451 = vmatpush1.msra.mxu0 0.0
        %6452 = vmatprep.mubr.f32.mxu0 0.0
        %6453 = vmatmul.mubr.f32.gmra.mrb[0].mxu0 %v6386
        %v6454 = vpop.f32.mrb[0].mxu0
        %v6455 = vadd.f32 0.0, %v6454
        %v6456 = vpop.f32.mrb[0].mxu0
        %v6457 = vadd.f32 0.0, %v6456
        %6458 = vdwg.mxu0
        %6459 = vmatprep.subr.mxu0 %v4759
        %6460 = vmatpush1.msra.mxu0 %v4758
        %6461 = vmatprep.subr.mxu0 0.0
        %6462 = vmatpush1.msra.mxu0 0.0
        %6463 = vmatprep.subr.mxu0 0.0
        %6464 = vmatpush1.msra.mxu0 0.0
        %6465 = vmatprep.subr.mxu0 0.0
        %6466 = vmatpush1.msra.mxu0 0.0
        %6467 = vmatprep.subr.mxu0 0.0
        %6468 = vmatpush1.msra.mxu0 0.0
        %6469 = vmatprep.subr.mxu0 0.0
        %6470 = vmatpush1.msra.mxu0 0.0
        %6471 = vmatprep.subr.mxu0 0.0
        %6472 = vmatpush1.msra.mxu0 0.0
        %6473 = vmatprep.subr.mxu0 0.0
        %6474 = vmatpush1.msra.mxu0 0.0
        %6475 = vmatprep.subr.mxu0 0.0
        %6476 = vmatpush1.msra.mxu0 0.0
        %6477 = vmatprep.subr.mxu0 0.0
        %6478 = vmatpush1.msra.mxu0 0.0
        %6479 = vmatprep.subr.mxu0 0.0
        %6480 = vmatpush1.msra.mxu0 0.0
        %6481 = vmatprep.subr.mxu0 0.0
        %6482 = vmatpush1.msra.mxu0 0.0
        %6483 = vmatprep.subr.mxu0 0.0
        %6484 = vmatpush1.msra.mxu0 0.0
        %6485 = vmatprep.subr.mxu0 0.0
        %6486 = vmatpush1.msra.mxu0 0.0
        %6487 = vmatprep.subr.mxu0 0.0
        %6488 = vmatpush1.msra.mxu0 0.0
        %6489 = vmatprep.subr.mxu0 0.0
        %6490 = vmatpush1.msra.mxu0 0.0
        %6491 = vmatprep.subr.mxu0 0.0
        %6492 = vmatpush1.msra.mxu0 0.0
        %6493 = vmatprep.subr.mxu0 0.0
        %6494 = vmatpush1.msra.mxu0 0.0
        %6495 = vmatprep.subr.mxu0 0.0
        %6496 = vmatpush1.msra.mxu0 0.0
        %6497 = vmatprep.subr.mxu0 0.0
        %6498 = vmatpush1.msra.mxu0 0.0
        %6499 = vmatprep.subr.mxu0 0.0
        %6500 = vmatpush1.msra.mxu0 0.0
        %6501 = vmatprep.subr.mxu0 0.0
        %6502 = vmatpush1.msra.mxu0 0.0
        %6503 = vmatprep.subr.mxu0 0.0
        %6504 = vmatpush1.msra.mxu0 0.0
        %6505 = vmatprep.subr.mxu0 0.0
        %6506 = vmatpush1.msra.mxu0 0.0
        %6507 = vmatprep.subr.mxu0 0.0
        %6508 = vmatpush1.msra.mxu0 0.0
        %6509 = vmatprep.subr.mxu0 0.0
        %6510 = vmatpush1.msra.mxu0 0.0
        %6511 = vmatprep.subr.mxu0 0.0
        %6512 = vmatpush1.msra.mxu0 0.0
        %6513 = vmatprep.subr.mxu0 0.0
        %6514 = vmatpush1.msra.mxu0 0.0
        %6515 = vmatprep.subr.mxu0 0.0
        %6516 = vmatpush1.msra.mxu0 0.0
        %6517 = vmatprep.subr.mxu0 0.0
        %6518 = vmatpush1.msra.mxu0 0.0
        %6519 = vmatprep.subr.mxu0 0.0
        %6520 = vmatpush1.msra.mxu0 0.0
        %6521 = vmatprep.subr.mxu0 0.0
        %6522 = vmatpush1.msra.mxu0 0.0
        %6523 = vmatprep.mubr.f32.mxu0 0.0
        %6524 = vmatmul.mubr.f32.gmra.mrb[0].mxu0 %v6386
        %v6525 = vpop.f32.mrb[0].mxu0
        %v6526 = vadd.f32 0.0, %v6525
        %v6527 = vpop.f32.mrb[0].mxu0
        %v6528 = vadd.f32 0.0, %v6527
        %6529 = vdwg.mxu0
        %6530 = vmatprep.subr.mxu0 %v4761
        %6531 = vmatpush1.msra.mxu0 %v4760
        %6532 = vmatprep.subr.mxu0 0.0
        %6533 = vmatpush1.msra.mxu0 0.0
        %6534 = vmatprep.subr.mxu0 0.0
        %6535 = vmatpush1.msra.mxu0 0.0
        %6536 = vmatprep.subr.mxu0 0.0
        %6537 = vmatpush1.msra.mxu0 0.0
        %6538 = vmatprep.subr.mxu0 0.0
        %6539 = vmatpush1.msra.mxu0 0.0
        %6540 = vmatprep.subr.mxu0 0.0
        %6541 = vmatpush1.msra.mxu0 0.0
        %6542 = vmatprep.subr.mxu0 0.0
        %6543 = vmatpush1.msra.mxu0 0.0
        %6544 = vmatprep.subr.mxu0 0.0
        %6545 = vmatpush1.msra.mxu0 0.0
        %6546 = vmatprep.subr.mxu0 0.0
        %6547 = vmatpush1.msra.mxu0 0.0
        %6548 = vmatprep.subr.mxu0 0.0
        %6549 = vmatpush1.msra.mxu0 0.0
        %6550 = vmatprep.subr.mxu0 0.0
        %6551 = vmatpush1.msra.mxu0 0.0
        %6552 = vmatprep.subr.mxu0 0.0
        %6553 = vmatpush1.msra.mxu0 0.0
        %6554 = vmatprep.subr.mxu0 0.0
        %6555 = vmatpush1.msra.mxu0 0.0
        %6556 = vmatprep.subr.mxu0 0.0
        %6557 = vmatpush1.msra.mxu0 0.0
        %6558 = vmatprep.subr.mxu0 0.0
        %6559 = vmatpush1.msra.mxu0 0.0
        %6560 = vmatprep.subr.mxu0 0.0
        %6561 = vmatpush1.msra.mxu0 0.0
        %6562 = vmatprep.subr.mxu0 0.0
        %6563 = vmatpush1.msra.mxu0 0.0
        %6564 = vmatprep.subr.mxu0 0.0
        %6565 = vmatpush1.msra.mxu0 0.0
        %6566 = vmatprep.subr.mxu0 0.0
        %6567 = vmatpush1.msra.mxu0 0.0
        %6568 = vmatprep.subr.mxu0 0.0
        %6569 = vmatpush1.msra.mxu0 0.0
        %6570 = vmatprep.subr.mxu0 0.0
        %6571 = vmatpush1.msra.mxu0 0.0
        %6572 = vmatprep.subr.mxu0 0.0
        %6573 = vmatpush1.msra.mxu0 0.0
        %6574 = vmatprep.subr.mxu0 0.0
        %6575 = vmatpush1.msra.mxu0 0.0
        %6576 = vmatprep.subr.mxu0 0.0
        %6577 = vmatpush1.msra.mxu0 0.0
        %6578 = vmatprep.subr.mxu0 0.0
        %6579 = vmatpush1.msra.mxu0 0.0
        %6580 = vmatprep.subr.mxu0 0.0
        %6581 = vmatpush1.msra.mxu0 0.0
        %6582 = vmatprep.subr.mxu0 0.0
        %6583 = vmatpush1.msra.mxu0 0.0
        %6584 = vmatprep.subr.mxu0 0.0
        %6585 = vmatpush1.msra.mxu0 0.0
        %6586 = vmatprep.subr.mxu0 0.0
        %6587 = vmatpush1.msra.mxu0 0.0
        %6588 = vmatprep.subr.mxu0 0.0
        %6589 = vmatpush1.msra.mxu0 0.0
        %6590 = vmatprep.subr.mxu0 0.0
        %6591 = vmatpush1.msra.mxu0 0.0
        %6592 = vmatprep.subr.mxu0 0.0
        %6593 = vmatpush1.msra.mxu0 0.0
        %6594 = vmatprep.mubr.f32.mxu0 0.0
        %6595 = vmatmul.mubr.f32.gmra.mrb[0].mxu0 %v6386
        %v6596 = vpop.f32.mrb[0].mxu0
        %v6597 = vadd.f32 0.0, %v6596
        %v6598 = vpop.f32.mrb[0].mxu0
        %v6599 = vadd.f32 0.0, %v6598
        %6600 = vdwg.mxu0
        %6601 = vmatprep.subr.mxu0 %v4763
        %6602 = vmatpush1.msra.mxu0 %v4762
        %6603 = vmatprep.subr.mxu0 0.0
        %6604 = vmatpush1.msra.mxu0 0.0
        %6605 = vmatprep.subr.mxu0 0.0
        %6606 = vmatpush1.msra.mxu0 0.0
        %6607 = vmatprep.subr.mxu0 0.0
        %6608 = vmatpush1.msra.mxu0 0.0
        %6609 = vmatprep.subr.mxu0 0.0
        %6610 = vmatpush1.msra.mxu0 0.0
        %6611 = vmatprep.subr.mxu0 0.0
        %6612 = vmatpush1.msra.mxu0 0.0
        %6613 = vmatprep.subr.mxu0 0.0
        %6614 = vmatpush1.msra.mxu0 0.0
        %6615 = vmatprep.subr.mxu0 0.0
        %6616 = vmatpush1.msra.mxu0 0.0
        %6617 = vmatprep.subr.mxu0 0.0
        %6618 = vmatpush1.msra.mxu0 0.0
        %6619 = vmatprep.subr.mxu0 0.0
        %6620 = vmatpush1.msra.mxu0 0.0
        %6621 = vmatprep.subr.mxu0 0.0
        %6622 = vmatpush1.msra.mxu0 0.0
        %6623 = vmatprep.subr.mxu0 0.0
        %6624 = vmatpush1.msra.mxu0 0.0
        %6625 = vmatprep.subr.mxu0 0.0
        %6626 = vmatpush1.msra.mxu0 0.0
        %6627 = vmatprep.subr.mxu0 0.0
        %6628 = vmatpush1.msra.mxu0 0.0
        %6629 = vmatprep.subr.mxu0 0.0
        %6630 = vmatpush1.msra.mxu0 0.0
        %6631 = vmatprep.subr.mxu0 0.0
        %6632 = vmatpush1.msra.mxu0 0.0
        %6633 = vmatprep.subr.mxu0 0.0
        %6634 = vmatpush1.msra.mxu0 0.0
        %6635 = vmatprep.subr.mxu0 0.0
        %6636 = vmatpush1.msra.mxu0 0.0
        %6637 = vmatprep.subr.mxu0 0.0
        %6638 = vmatpush1.msra.mxu0 0.0
        %6639 = vmatprep.subr.mxu0 0.0
        %6640 = vmatpush1.msra.mxu0 0.0
        %6641 = vmatprep.subr.mxu0 0.0
        %6642 = vmatpush1.msra.mxu0 0.0
        %6643 = vmatprep.subr.mxu0 0.0
        %6644 = vmatpush1.msra.mxu0 0.0
        %6645 = vmatprep.subr.mxu0 0.0
        %6646 = vmatpush1.msra.mxu0 0.0
        %6647 = vmatprep.subr.mxu0 0.0
        %6648 = vmatpush1.msra.mxu0 0.0
        %6649 = vmatprep.subr.mxu0 0.0
        %6650 = vmatpush1.msra.mxu0 0.0
        %6651 = vmatprep.subr.mxu0 0.0
        %6652 = vmatpush1.msra.mxu0 0.0
        %6653 = vmatprep.subr.mxu0 0.0
        %6654 = vmatpush1.msra.mxu0 0.0
        %6655 = vmatprep.subr.mxu0 0.0
        %6656 = vmatpush1.msra.mxu0 0.0
        %6657 = vmatprep.subr.mxu0 0.0
        %6658 = vmatpush1.msra.mxu0 0.0
        %6659 = vmatprep.subr.mxu0 0.0
        %6660 = vmatpush1.msra.mxu0 0.0
        %6661 = vmatprep.subr.mxu0 0.0
        %6662 = vmatpush1.msra.mxu0 0.0
        %6663 = vmatprep.subr.mxu0 0.0
        %6664 = vmatpush1.msra.mxu0 0.0
        %6665 = vmatprep.mubr.f32.mxu0 0.0
        %6666 = vmatmul.mubr.f32.gmra.mrb[0].mxu0 %v6386
        %v6667 = vpop.f32.mrb[0].mxu0
        %v6668 = vadd.f32 0.0, %v6667
        %v6669 = vpop.f32.mrb[0].mxu0
        %v6670 = vadd.f32 0.0, %v6669
        %6671 = vdwg.mxu0
        %6672 = vmatprep.subr.mxu0 0.0
        %6673 = vmatpush1.msra.mxu0 %v4764
        %6674 = vmatprep.subr.mxu0 0.0
        %6675 = vmatpush1.msra.mxu0 0.0
        %6676 = vmatprep.subr.mxu0 0.0
        %6677 = vmatpush1.msra.mxu0 0.0
        %6678 = vmatprep.subr.mxu0 0.0
        %6679 = vmatpush1.msra.mxu0 0.0
        %6680 = vmatprep.subr.mxu0 0.0
        %6681 = vmatpush1.msra.mxu0 0.0
        %6682 = vmatprep.subr.mxu0 0.0
        %6683 = vmatpush1.msra.mxu0 0.0
        %6684 = vmatprep.subr.mxu0 0.0
        %6685 = vmatpush1.msra.mxu0 0.0
        %6686 = vmatprep.subr.mxu0 0.0
        %6687 = vmatpush1.msra.mxu0 0.0
        %6688 = vmatprep.subr.mxu0 0.0
        %6689 = vmatpush1.msra.mxu0 0.0
        %6690 = vmatprep.subr.mxu0 0.0
        %6691 = vmatpush1.msra.mxu0 0.0
        %6692 = vmatprep.subr.mxu0 0.0
        %6693 = vmatpush1.msra.mxu0 0.0
        %6694 = vmatprep.subr.mxu0 0.0
        %6695 = vmatpush1.msra.mxu0 0.0
        %6696 = vmatprep.subr.mxu0 0.0
        %6697 = vmatpush1.msra.mxu0 0.0
        %6698 = vmatprep.subr.mxu0 0.0
        %6699 = vmatpush1.msra.mxu0 0.0
        %6700 = vmatprep.subr.mxu0 0.0
        %6701 = vmatpush1.msra.mxu0 0.0
        %6702 = vmatprep.subr.mxu0 0.0
        %6703 = vmatpush1.msra.mxu0 0.0
        %6704 = vmatprep.subr.mxu0 0.0
        %6705 = vmatpush1.msra.mxu0 0.0
        %6706 = vmatprep.subr.mxu0 0.0
        %6707 = vmatpush1.msra.mxu0 0.0
        %6708 = vmatprep.subr.mxu0 0.0
        %6709 = vmatpush1.msra.mxu0 0.0
        %6710 = vmatprep.subr.mxu0 0.0
        %6711 = vmatpush1.msra.mxu0 0.0
        %6712 = vmatprep.subr.mxu0 0.0
        %6713 = vmatpush1.msra.mxu0 0.0
        %6714 = vmatprep.subr.mxu0 0.0
        %6715 = vmatpush1.msra.mxu0 0.0
        %6716 = vmatprep.subr.mxu0 0.0
        %6717 = vmatpush1.msra.mxu0 0.0
        %6718 = vmatprep.subr.mxu0 0.0
        %6719 = vmatpush1.msra.mxu0 0.0
        %6720 = vmatprep.subr.mxu0 0.0
        %6721 = vmatpush1.msra.mxu0 0.0
        %6722 = vmatprep.subr.mxu0 0.0
        %6723 = vmatpush1.msra.mxu0 0.0
        %6724 = vmatprep.subr.mxu0 0.0
        %6725 = vmatpush1.msra.mxu0 0.0
        %6726 = vmatprep.subr.mxu0 0.0
        %6727 = vmatpush1.msra.mxu0 0.0
        %6728 = vmatprep.subr.mxu0 0.0
        %6729 = vmatpush1.msra.mxu0 0.0
        %6730 = vmatprep.subr.mxu0 0.0
        %6731 = vmatpush1.msra.mxu0 0.0
        %6732 = vmatprep.subr.mxu0 0.0
        %6733 = vmatpush1.msra.mxu0 0.0
        %6734 = vmatprep.subr.mxu0 0.0
        %6735 = vmatpush1.msra.mxu0 0.0
        %6736 = vmatprep.mubr.f32.mxu0 0.0
        %6737 = vmatmul.mubr.f32.gmra.mrb[0].mxu0 %v6386
        %v6738 = vpop.f32.mrb[0].mxu0
        %v6739 = vadd.f32 0.0, %v6738
        %v6740 = vpop.f32.mrb[0].mxu0
        %6741 = vdwg.mxu0
        %v6742 = vadd.f32 %v6374, %v6455
        %v6743 = vadd.f32 %v6375, %v6457
        %v6744 = vadd.f32 %v6376, %v6526
        %v6745 = vadd.f32 %v6377, %v6528
        %v6746 = vadd.f32 %v6378, %v6597
        %v6747 = vadd.f32 %v6379, %v6599
        %v6748 = vadd.f32 %v6380, %v6668
        %v6749 = vadd.f32 %v6381, %v6670
        %v6750 = vadd.f32 %v6382, %v6739
        %s6751 = scalar_lea.vmem [#allocation6], 40
        %v6752 = vld [vmem:[%s6751] sm:$0xff]
        %v6753 = vld [vmem:[#allocation3 + $0x8] sm:$0xff]
        %v6754 = vld [vmem:[#allocation3 + $0x10] sm:$0xff]
        %v6755 = vld [vmem:[#allocation3 + $0x18] sm:$0xff]
        %v6756 = vld [vmem:[#allocation3 + $0x20] sm:$0xff]
        %v6757 = vld [vmem:[#allocation3 + $0x28] sm:$0xff]
        %v6758 = vld [vmem:[#allocation3 + $0x30] sm:$0xff]
        %v6759 = vld [vmem:[#allocation3 + $0x38] sm:$0xff]
        %v6760 = vld [vmem:[#allocation3 + $0x40] sm:$0xff]
        %v6761 = vld [vmem:[#allocation3 + $0x48] sm:$0xff]
        %v6762 = vld [vmem:[#allocation3 + $0x50] sm:$0xff]
        %6773 = vrot.lane.b32.xlu0 %v6753, 127
        %v6774 = vpop.permute.xlu0 %6773
        %6775 = vrot.lane.b32.xlu0 %v6754, 127
        %v6776 = vpop.permute.xlu0 %6775
        %6777 = vrot.lane.b32.xlu0 %v6755, 127
        %v6778 = vpop.permute.xlu0 %6777
        %6779 = vrot.lane.b32.xlu0 %v6756, 127
        %v6780 = vpop.permute.xlu0 %6779
        %6781 = vrot.lane.b32.xlu0 %v6757, 127
        %v6782 = vpop.permute.xlu0 %6781
        %6783 = vrot.lane.b32.xlu0 %v6758, 127
        %v6784 = vpop.permute.xlu0 %6783
        %6785 = vrot.lane.b32.xlu0 %v6759, 127
        %v6786 = vpop.permute.xlu0 %6785
        %6787 = vrot.lane.b32.xlu0 %v6760, 127
        %v6788 = vpop.permute.xlu0 %6787
        %6789 = vrot.lane.b32.xlu0 %v6761, 127
        %v6790 = vpop.permute.xlu0 %6789
        %6791 = vrot.lane.b32.xlu0 %v6762, 127
        %v6792 = vpop.permute.xlu0 %6791
        %v6793 = vsel %vm1060, %v6774, %v6776
        %v6794 = vsel %vm1060, %v6776, %v6778
        %v6795 = vsel %vm1060, %v6778, %v6780
        %v6796 = vsel %vm1060, %v6780, %v6782
        %v6797 = vsel %vm1060, %v6782, %v6784
        %v6798 = vsel %vm1060, %v6784, %v6786
        %v6799 = vsel %vm1060, %v6786, %v6788
        %v6800 = vsel %vm1060, %v6788, %v6790
        %v6801 = vsel %vm1060, %v6790, %v6792
        %v6812 = vsel %vm1079, %v6752, 0
        %6814 = vmatprep.subr.mxu0 %v6794
        %6815 = vmatpush1.msra.mxu0 %v6793
        %6816 = vmatprep.subr.mxu0 0.0
        %6817 = vmatpush1.msra.mxu0 0.0
        %6818 = vmatprep.subr.mxu0 0.0
        %6819 = vmatpush1.msra.mxu0 0.0
        %6820 = vmatprep.subr.mxu0 0.0
        %6821 = vmatpush1.msra.mxu0 0.0
        %6822 = vmatprep.subr.mxu0 0.0
        %6823 = vmatpush1.msra.mxu0 0.0
        %6824 = vmatprep.subr.mxu0 0.0
        %6825 = vmatpush1.msra.mxu0 0.0
        %6826 = vmatprep.subr.mxu0 0.0
        %6827 = vmatpush1.msra.mxu0 0.0
        %6828 = vmatprep.subr.mxu0 0.0
        %6829 = vmatpush1.msra.mxu0 0.0
        %6830 = vmatprep.subr.mxu0 0.0
        %6831 = vmatpush1.msra.mxu0 0.0
        %6832 = vmatprep.subr.mxu0 0.0
        %6833 = vmatpush1.msra.mxu0 0.0
        %6834 = vmatprep.subr.mxu0 0.0
        %6835 = vmatpush1.msra.mxu0 0.0
        %6836 = vmatprep.subr.mxu0 0.0
        %6837 = vmatpush1.msra.mxu0 0.0
        %6838 = vmatprep.subr.mxu0 0.0
        %6839 = vmatpush1.msra.mxu0 0.0
        %6840 = vmatprep.subr.mxu0 0.0
        %6841 = vmatpush1.msra.mxu0 0.0
        %6842 = vmatprep.subr.mxu0 0.0
        %6843 = vmatpush1.msra.mxu0 0.0
        %6844 = vmatprep.subr.mxu0 0.0
        %6845 = vmatpush1.msra.mxu0 0.0
        %6846 = vmatprep.subr.mxu0 0.0
        %6847 = vmatpush1.msra.mxu0 0.0
        %6848 = vmatprep.subr.mxu0 0.0
        %6849 = vmatpush1.msra.mxu0 0.0
        %6850 = vmatprep.subr.mxu0 0.0
        %6851 = vmatpush1.msra.mxu0 0.0
        %6852 = vmatprep.subr.mxu0 0.0
        %6853 = vmatpush1.msra.mxu0 0.0
        %6854 = vmatprep.subr.mxu0 0.0
        %6855 = vmatpush1.msra.mxu0 0.0
        %6856 = vmatprep.subr.mxu0 0.0
        %6857 = vmatpush1.msra.mxu0 0.0
        %6858 = vmatprep.subr.mxu0 0.0
        %6859 = vmatpush1.msra.mxu0 0.0
        %6860 = vmatprep.subr.mxu0 0.0
        %6861 = vmatpush1.msra.mxu0 0.0
        %6862 = vmatprep.subr.mxu0 0.0
        %6863 = vmatpush1.msra.mxu0 0.0
        %6864 = vmatprep.subr.mxu0 0.0
        %6865 = vmatpush1.msra.mxu0 0.0
        %6866 = vmatprep.subr.mxu0 0.0
        %6867 = vmatpush1.msra.mxu0 0.0
        %6868 = vmatprep.subr.mxu0 0.0
        %6869 = vmatpush1.msra.mxu0 0.0
        %6870 = vmatprep.subr.mxu0 0.0
        %6871 = vmatpush1.msra.mxu0 0.0
        %6872 = vmatprep.subr.mxu0 0.0
        %6873 = vmatpush1.msra.mxu0 0.0
        %6874 = vmatprep.subr.mxu0 0.0
        %6875 = vmatpush1.msra.mxu0 0.0
        %6876 = vmatprep.subr.mxu0 0.0
        %6877 = vmatpush1.msra.mxu0 0.0
        %6878 = vmatprep.mubr.f32.mxu0 0.0
        %6879 = vmatmul.mubr.f32.gmra.mrb[0].mxu0 %v6812
        %v6880 = vpop.f32.mrb[0].mxu0
        %v6881 = vadd.f32 0.0, %v6880
        %v6882 = vpop.f32.mrb[0].mxu0
        %v6883 = vadd.f32 0.0, %v6882
        %6884 = vdwg.mxu0
        %6885 = vmatprep.subr.mxu0 %v6796
        %6886 = vmatpush1.msra.mxu0 %v6795
        %6887 = vmatprep.subr.mxu0 0.0
        %6888 = vmatpush1.msra.mxu0 0.0
        %6889 = vmatprep.subr.mxu0 0.0
        %6890 = vmatpush1.msra.mxu0 0.0
        %6891 = vmatprep.subr.mxu0 0.0
        %6892 = vmatpush1.msra.mxu0 0.0
        %6893 = vmatprep.subr.mxu0 0.0
        %6894 = vmatpush1.msra.mxu0 0.0
        %6895 = vmatprep.subr.mxu0 0.0
        %6896 = vmatpush1.msra.mxu0 0.0
        %6897 = vmatprep.subr.mxu0 0.0
        %6898 = vmatpush1.msra.mxu0 0.0
        %6899 = vmatprep.subr.mxu0 0.0
        %6900 = vmatpush1.msra.mxu0 0.0
        %6901 = vmatprep.subr.mxu0 0.0
        %6902 = vmatpush1.msra.mxu0 0.0
        %6903 = vmatprep.subr.mxu0 0.0
        %6904 = vmatpush1.msra.mxu0 0.0
        %6905 = vmatprep.subr.mxu0 0.0
        %6906 = vmatpush1.msra.mxu0 0.0
        %6907 = vmatprep.subr.mxu0 0.0
        %6908 = vmatpush1.msra.mxu0 0.0
        %6909 = vmatprep.subr.mxu0 0.0
        %6910 = vmatpush1.msra.mxu0 0.0
        %6911 = vmatprep.subr.mxu0 0.0
        %6912 = vmatpush1.msra.mxu0 0.0
        %6913 = vmatprep.subr.mxu0 0.0
        %6914 = vmatpush1.msra.mxu0 0.0
        %6915 = vmatprep.subr.mxu0 0.0
        %6916 = vmatpush1.msra.mxu0 0.0
        %6917 = vmatprep.subr.mxu0 0.0
        %6918 = vmatpush1.msra.mxu0 0.0
        %6919 = vmatprep.subr.mxu0 0.0
        %6920 = vmatpush1.msra.mxu0 0.0
        %6921 = vmatprep.subr.mxu0 0.0
        %6922 = vmatpush1.msra.mxu0 0.0
        %6923 = vmatprep.subr.mxu0 0.0
        %6924 = vmatpush1.msra.mxu0 0.0
        %6925 = vmatprep.subr.mxu0 0.0
        %6926 = vmatpush1.msra.mxu0 0.0
        %6927 = vmatprep.subr.mxu0 0.0
        %6928 = vmatpush1.msra.mxu0 0.0
        %6929 = vmatprep.subr.mxu0 0.0
        %6930 = vmatpush1.msra.mxu0 0.0
        %6931 = vmatprep.subr.mxu0 0.0
        %6932 = vmatpush1.msra.mxu0 0.0
        %6933 = vmatprep.subr.mxu0 0.0
        %6934 = vmatpush1.msra.mxu0 0.0
        %6935 = vmatprep.subr.mxu0 0.0
        %6936 = vmatpush1.msra.mxu0 0.0
        %6937 = vmatprep.subr.mxu0 0.0
        %6938 = vmatpush1.msra.mxu0 0.0
        %6939 = vmatprep.subr.mxu0 0.0
        %6940 = vmatpush1.msra.mxu0 0.0
        %6941 = vmatprep.subr.mxu0 0.0
        %6942 = vmatpush1.msra.mxu0 0.0
        %6943 = vmatprep.subr.mxu0 0.0
        %6944 = vmatpush1.msra.mxu0 0.0
        %6945 = vmatprep.subr.mxu0 0.0
        %6946 = vmatpush1.msra.mxu0 0.0
        %6947 = vmatprep.subr.mxu0 0.0
        %6948 = vmatpush1.msra.mxu0 0.0
        %6949 = vmatprep.mubr.f32.mxu0 0.0
        %6950 = vmatmul.mubr.f32.gmra.mrb[0].mxu0 %v6812
        %v6951 = vpop.f32.mrb[0].mxu0
        %v6952 = vadd.f32 0.0, %v6951
        %v6953 = vpop.f32.mrb[0].mxu0
        %v6954 = vadd.f32 0.0, %v6953
        %6955 = vdwg.mxu0
        %6956 = vmatprep.subr.mxu0 %v6798
        %6957 = vmatpush1.msra.mxu0 %v6797
        %6958 = vmatprep.subr.mxu0 0.0
        %6959 = vmatpush1.msra.mxu0 0.0
        %6960 = vmatprep.subr.mxu0 0.0
        %6961 = vmatpush1.msra.mxu0 0.0
        %6962 = vmatprep.subr.mxu0 0.0
        %6963 = vmatpush1.msra.mxu0 0.0
        %6964 = vmatprep.subr.mxu0 0.0
        %6965 = vmatpush1.msra.mxu0 0.0
        %6966 = vmatprep.subr.mxu0 0.0
        %6967 = vmatpush1.msra.mxu0 0.0
        %6968 = vmatprep.subr.mxu0 0.0
        %6969 = vmatpush1.msra.mxu0 0.0
        %6970 = vmatprep.subr.mxu0 0.0
        %6971 = vmatpush1.msra.mxu0 0.0
        %6972 = vmatprep.subr.mxu0 0.0
        %6973 = vmatpush1.msra.mxu0 0.0
        %6974 = vmatprep.subr.mxu0 0.0
        %6975 = vmatpush1.msra.mxu0 0.0
        %6976 = vmatprep.subr.mxu0 0.0
        %6977 = vmatpush1.msra.mxu0 0.0
        %6978 = vmatprep.subr.mxu0 0.0
        %6979 = vmatpush1.msra.mxu0 0.0
        %6980 = vmatprep.subr.mxu0 0.0
        %6981 = vmatpush1.msra.mxu0 0.0
        %6982 = vmatprep.subr.mxu0 0.0
        %6983 = vmatpush1.msra.mxu0 0.0
        %6984 = vmatprep.subr.mxu0 0.0
        %6985 = vmatpush1.msra.mxu0 0.0
        %6986 = vmatprep.subr.mxu0 0.0
        %6987 = vmatpush1.msra.mxu0 0.0
        %6988 = vmatprep.subr.mxu0 0.0
        %6989 = vmatpush1.msra.mxu0 0.0
        %6990 = vmatprep.subr.mxu0 0.0
        %6991 = vmatpush1.msra.mxu0 0.0
        %6992 = vmatprep.subr.mxu0 0.0
        %6993 = vmatpush1.msra.mxu0 0.0
        %6994 = vmatprep.subr.mxu0 0.0
        %6995 = vmatpush1.msra.mxu0 0.0
        %6996 = vmatprep.subr.mxu0 0.0
        %6997 = vmatpush1.msra.mxu0 0.0
        %6998 = vmatprep.subr.mxu0 0.0
        %6999 = vmatpush1.msra.mxu0 0.0
        %7000 = vmatprep.subr.mxu0 0.0
        %7001 = vmatpush1.msra.mxu0 0.0
        %7002 = vmatprep.subr.mxu0 0.0
        %7003 = vmatpush1.msra.mxu0 0.0
        %7004 = vmatprep.subr.mxu0 0.0
        %7005 = vmatpush1.msra.mxu0 0.0
        %7006 = vmatprep.subr.mxu0 0.0
        %7007 = vmatpush1.msra.mxu0 0.0
        %7008 = vmatprep.subr.mxu0 0.0
        %7009 = vmatpush1.msra.mxu0 0.0
        %7010 = vmatprep.subr.mxu0 0.0
        %7011 = vmatpush1.msra.mxu0 0.0
        %7012 = vmatprep.subr.mxu0 0.0
        %7013 = vmatpush1.msra.mxu0 0.0
        %7014 = vmatprep.subr.mxu0 0.0
        %7015 = vmatpush1.msra.mxu0 0.0
        %7016 = vmatprep.subr.mxu0 0.0
        %7017 = vmatpush1.msra.mxu0 0.0
        %7018 = vmatprep.subr.mxu0 0.0
        %7019 = vmatpush1.msra.mxu0 0.0
        %7020 = vmatprep.mubr.f32.mxu0 0.0
        %7021 = vmatmul.mubr.f32.gmra.mrb[0].mxu0 %v6812
        %v7022 = vpop.f32.mrb[0].mxu0
        %v7023 = vadd.f32 0.0, %v7022
        %v7024 = vpop.f32.mrb[0].mxu0
        %v7025 = vadd.f32 0.0, %v7024
        %7026 = vdwg.mxu0
        %7027 = vmatprep.subr.mxu0 %v6800
        %7028 = vmatpush1.msra.mxu0 %v6799
        %7029 = vmatprep.subr.mxu0 0.0
        %7030 = vmatpush1.msra.mxu0 0.0
        %7031 = vmatprep.subr.mxu0 0.0
        %7032 = vmatpush1.msra.mxu0 0.0
        %7033 = vmatprep.subr.mxu0 0.0
        %7034 = vmatpush1.msra.mxu0 0.0
        %7035 = vmatprep.subr.mxu0 0.0
        %7036 = vmatpush1.msra.mxu0 0.0
        %7037 = vmatprep.subr.mxu0 0.0
        %7038 = vmatpush1.msra.mxu0 0.0
        %7039 = vmatprep.subr.mxu0 0.0
        %7040 = vmatpush1.msra.mxu0 0.0
        %7041 = vmatprep.subr.mxu0 0.0
        %7042 = vmatpush1.msra.mxu0 0.0
        %7043 = vmatprep.subr.mxu0 0.0
        %7044 = vmatpush1.msra.mxu0 0.0
        %7045 = vmatprep.subr.mxu0 0.0
        %7046 = vmatpush1.msra.mxu0 0.0
        %7047 = vmatprep.subr.mxu0 0.0
        %7048 = vmatpush1.msra.mxu0 0.0
        %7049 = vmatprep.subr.mxu0 0.0
        %7050 = vmatpush1.msra.mxu0 0.0
        %7051 = vmatprep.subr.mxu0 0.0
        %7052 = vmatpush1.msra.mxu0 0.0
        %7053 = vmatprep.subr.mxu0 0.0
        %7054 = vmatpush1.msra.mxu0 0.0
        %7055 = vmatprep.subr.mxu0 0.0
        %7056 = vmatpush1.msra.mxu0 0.0
        %7057 = vmatprep.subr.mxu0 0.0
        %7058 = vmatpush1.msra.mxu0 0.0
        %7059 = vmatprep.subr.mxu0 0.0
        %7060 = vmatpush1.msra.mxu0 0.0
        %7061 = vmatprep.subr.mxu0 0.0
        %7062 = vmatpush1.msra.mxu0 0.0
        %7063 = vmatprep.subr.mxu0 0.0
        %7064 = vmatpush1.msra.mxu0 0.0
        %7065 = vmatprep.subr.mxu0 0.0
        %7066 = vmatpush1.msra.mxu0 0.0
        %7067 = vmatprep.subr.mxu0 0.0
        %7068 = vmatpush1.msra.mxu0 0.0
        %7069 = vmatprep.subr.mxu0 0.0
        %7070 = vmatpush1.msra.mxu0 0.0
        %7071 = vmatprep.subr.mxu0 0.0
        %7072 = vmatpush1.msra.mxu0 0.0
        %7073 = vmatprep.subr.mxu0 0.0
        %7074 = vmatpush1.msra.mxu0 0.0
        %7075 = vmatprep.subr.mxu0 0.0
        %7076 = vmatpush1.msra.mxu0 0.0
        %7077 = vmatprep.subr.mxu0 0.0
        %7078 = vmatpush1.msra.mxu0 0.0
        %7079 = vmatprep.subr.mxu0 0.0
        %7080 = vmatpush1.msra.mxu0 0.0
        %7081 = vmatprep.subr.mxu0 0.0
        %7082 = vmatpush1.msra.mxu0 0.0
        %7083 = vmatprep.subr.mxu0 0.0
        %7084 = vmatpush1.msra.mxu0 0.0
        %7085 = vmatprep.subr.mxu0 0.0
        %7086 = vmatpush1.msra.mxu0 0.0
        %7087 = vmatprep.subr.mxu0 0.0
        %7088 = vmatpush1.msra.mxu0 0.0
        %7089 = vmatprep.subr.mxu0 0.0
        %7090 = vmatpush1.msra.mxu0 0.0
        %7091 = vmatprep.mubr.f32.mxu0 0.0
        %7092 = vmatmul.mubr.f32.gmra.mrb[0].mxu0 %v6812
        %v7093 = vpop.f32.mrb[0].mxu0
        %v7094 = vadd.f32 0.0, %v7093
        %v7095 = vpop.f32.mrb[0].mxu0
        %v7096 = vadd.f32 0.0, %v7095
        %7097 = vdwg.mxu0
        %7098 = vmatprep.subr.mxu0 0.0
        %7099 = vmatpush1.msra.mxu0 %v6801
        %7100 = vmatprep.subr.mxu0 0.0
        %7101 = vmatpush1.msra.mxu0 0.0
        %7102 = vmatprep.subr.mxu0 0.0
        %7103 = vmatpush1.msra.mxu0 0.0
        %7104 = vmatprep.subr.mxu0 0.0
        %7105 = vmatpush1.msra.mxu0 0.0
        %7106 = vmatprep.subr.mxu0 0.0
        %7107 = vmatpush1.msra.mxu0 0.0
        %7108 = vmatprep.subr.mxu0 0.0
        %7109 = vmatpush1.msra.mxu0 0.0
        %7110 = vmatprep.subr.mxu0 0.0
        %7111 = vmatpush1.msra.mxu0 0.0
        %7112 = vmatprep.subr.mxu0 0.0
        %7113 = vmatpush1.msra.mxu0 0.0
        %7114 = vmatprep.subr.mxu0 0.0
        %7115 = vmatpush1.msra.mxu0 0.0
        %7116 = vmatprep.subr.mxu0 0.0
        %7117 = vmatpush1.msra.mxu0 0.0
        %7118 = vmatprep.subr.mxu0 0.0
        %7119 = vmatpush1.msra.mxu0 0.0
        %7120 = vmatprep.subr.mxu0 0.0
        %7121 = vmatpush1.msra.mxu0 0.0
        %7122 = vmatprep.subr.mxu0 0.0
        %7123 = vmatpush1.msra.mxu0 0.0
        %7124 = vmatprep.subr.mxu0 0.0
        %7125 = vmatpush1.msra.mxu0 0.0
        %7126 = vmatprep.subr.mxu0 0.0
        %7127 = vmatpush1.msra.mxu0 0.0
        %7128 = vmatprep.subr.mxu0 0.0
        %7129 = vmatpush1.msra.mxu0 0.0
        %7130 = vmatprep.subr.mxu0 0.0
        %7131 = vmatpush1.msra.mxu0 0.0
        %7132 = vmatprep.subr.mxu0 0.0
        %7133 = vmatpush1.msra.mxu0 0.0
        %7134 = vmatprep.subr.mxu0 0.0
        %7135 = vmatpush1.msra.mxu0 0.0
        %7136 = vmatprep.subr.mxu0 0.0
        %7137 = vmatpush1.msra.mxu0 0.0
        %7138 = vmatprep.subr.mxu0 0.0
        %7139 = vmatpush1.msra.mxu0 0.0
        %7140 = vmatprep.subr.mxu0 0.0
        %7141 = vmatpush1.msra.mxu0 0.0
        %7142 = vmatprep.subr.mxu0 0.0
        %7143 = vmatpush1.msra.mxu0 0.0
        %7144 = vmatprep.subr.mxu0 0.0
        %7145 = vmatpush1.msra.mxu0 0.0
        %7146 = vmatprep.subr.mxu0 0.0
        %7147 = vmatpush1.msra.mxu0 0.0
        %7148 = vmatprep.subr.mxu0 0.0
        %7149 = vmatpush1.msra.mxu0 0.0
        %7150 = vmatprep.subr.mxu0 0.0
        %7151 = vmatpush1.msra.mxu0 0.0
        %7152 = vmatprep.subr.mxu0 0.0
        %7153 = vmatpush1.msra.mxu0 0.0
        %7154 = vmatprep.subr.mxu0 0.0
        %7155 = vmatpush1.msra.mxu0 0.0
        %7156 = vmatprep.subr.mxu0 0.0
        %7157 = vmatpush1.msra.mxu0 0.0
        %7158 = vmatprep.subr.mxu0 0.0
        %7159 = vmatpush1.msra.mxu0 0.0
        %7160 = vmatprep.subr.mxu0 0.0
        %7161 = vmatpush1.msra.mxu0 0.0
        %7162 = vmatprep.mubr.f32.mxu0 0.0
        %7163 = vmatmul.mubr.f32.gmra.mrb[0].mxu0 %v6812
        %v7164 = vpop.f32.mrb[0].mxu0
        %v7165 = vadd.f32 0.0, %v7164
        %v7166 = vpop.f32.mrb[0].mxu0
        %7167 = vdwg.mxu0
        %v7168 = vadd.f32 %v6742, %v6881
        %v7169 = vadd.f32 %v6743, %v6883
        %v7170 = vadd.f32 %v6744, %v6952
        %v7171 = vadd.f32 %v6745, %v6954
        %v7172 = vadd.f32 %v6746, %v7023
        %v7173 = vadd.f32 %v6747, %v7025
        %v7174 = vadd.f32 %v6748, %v7094
        %v7175 = vadd.f32 %v6749, %v7096
        %v7176 = vadd.f32 %v6750, %v7165
        %s7177 = scalar_lea.vmem [#allocation6], 48
        %v7178 = vld [vmem:[%s7177] sm:$0xff]
        %7179 = vrot.lane.b32.xlu0 %v6753, 93
        %v7180 = vpop.permute.xlu0 %7179
        %7181 = vrot.lane.b32.xlu0 %v6754, 93
        %v7182 = vpop.permute.xlu0 %7181
        %7183 = vrot.lane.b32.xlu0 %v6755, 93
        %v7184 = vpop.permute.xlu0 %7183
        %7185 = vrot.lane.b32.xlu0 %v6756, 93
        %v7186 = vpop.permute.xlu0 %7185
        %7187 = vrot.lane.b32.xlu0 %v6757, 93
        %v7188 = vpop.permute.xlu0 %7187
        %7189 = vrot.lane.b32.xlu0 %v6758, 93
        %v7190 = vpop.permute.xlu0 %7189
        %7191 = vrot.lane.b32.xlu0 %v6759, 93
        %v7192 = vpop.permute.xlu0 %7191
        %7193 = vrot.lane.b32.xlu0 %v6760, 93
        %v7194 = vpop.permute.xlu0 %7193
        %7195 = vrot.lane.b32.xlu0 %v6761, 93
        %v7196 = vpop.permute.xlu0 %7195
        %7197 = vrot.lane.b32.xlu0 %v6762, 93
        %v7198 = vpop.permute.xlu0 %7197
        %vm7199 = vcmask 760832
        %v7200 = vsel %vm7199, %v7180, %v7182
        %v7201 = vsel %vm7199, %v7182, %v7184
        %v7202 = vsel %vm7199, %v7184, %v7186
        %v7203 = vsel %vm7199, %v7186, %v7188
        %v7204 = vsel %vm7199, %v7188, %v7190
        %v7205 = vsel %vm7199, %v7190, %v7192
        %v7206 = vsel %vm7199, %v7192, %v7194
        %v7207 = vsel %vm7199, %v7194, %v7196
        %v7208 = vsel %vm7199, %v7196, %v7198
        %v7219 = vsel %vm1079, %v7178, 0
        %7221 = vmatprep.subr.mxu0 %v7201
        %7222 = vmatpush1.msra.mxu0 %v7200
        %7223 = vmatprep.subr.mxu0 0.0
        %7224 = vmatpush1.msra.mxu0 0.0
        %7225 = vmatprep.subr.mxu0 0.0
        %7226 = vmatpush1.msra.mxu0 0.0
        %7227 = vmatprep.subr.mxu0 0.0
        %7228 = vmatpush1.msra.mxu0 0.0
        %7229 = vmatprep.subr.mxu0 0.0
        %7230 = vmatpush1.msra.mxu0 0.0
        %7231 = vmatprep.subr.mxu0 0.0
        %7232 = vmatpush1.msra.mxu0 0.0
        %7233 = vmatprep.subr.mxu0 0.0
        %7234 = vmatpush1.msra.mxu0 0.0
        %7235 = vmatprep.subr.mxu0 0.0
        %7236 = vmatpush1.msra.mxu0 0.0
        %7237 = vmatprep.subr.mxu0 0.0
        %7238 = vmatpush1.msra.mxu0 0.0
        %7239 = vmatprep.subr.mxu0 0.0
        %7240 = vmatpush1.msra.mxu0 0.0
        %7241 = vmatprep.subr.mxu0 0.0
        %7242 = vmatpush1.msra.mxu0 0.0
        %7243 = vmatprep.subr.mxu0 0.0
        %7244 = vmatpush1.msra.mxu0 0.0
        %7245 = vmatprep.subr.mxu0 0.0
        %7246 = vmatpush1.msra.mxu0 0.0
        %7247 = vmatprep.subr.mxu0 0.0
        %7248 = vmatpush1.msra.mxu0 0.0
        %7249 = vmatprep.subr.mxu0 0.0
        %7250 = vmatpush1.msra.mxu0 0.0
        %7251 = vmatprep.subr.mxu0 0.0
        %7252 = vmatpush1.msra.mxu0 0.0
        %7253 = vmatprep.subr.mxu0 0.0
        %7254 = vmatpush1.msra.mxu0 0.0
        %7255 = vmatprep.subr.mxu0 0.0
        %7256 = vmatpush1.msra.mxu0 0.0
        %7257 = vmatprep.subr.mxu0 0.0
        %7258 = vmatpush1.msra.mxu0 0.0
        %7259 = vmatprep.subr.mxu0 0.0
        %7260 = vmatpush1.msra.mxu0 0.0
        %7261 = vmatprep.subr.mxu0 0.0
        %7262 = vmatpush1.msra.mxu0 0.0
        %7263 = vmatprep.subr.mxu0 0.0
        %7264 = vmatpush1.msra.mxu0 0.0
        %7265 = vmatprep.subr.mxu0 0.0
        %7266 = vmatpush1.msra.mxu0 0.0
        %7267 = vmatprep.subr.mxu0 0.0
        %7268 = vmatpush1.msra.mxu0 0.0
        %7269 = vmatprep.subr.mxu0 0.0
        %7270 = vmatpush1.msra.mxu0 0.0
        %7271 = vmatprep.subr.mxu0 0.0
        %7272 = vmatpush1.msra.mxu0 0.0
        %7273 = vmatprep.subr.mxu0 0.0
        %7274 = vmatpush1.msra.mxu0 0.0
        %7275 = vmatprep.subr.mxu0 0.0
        %7276 = vmatpush1.msra.mxu0 0.0
        %7277 = vmatprep.subr.mxu0 0.0
        %7278 = vmatpush1.msra.mxu0 0.0
        %7279 = vmatprep.subr.mxu0 0.0
        %7280 = vmatpush1.msra.mxu0 0.0
        %7281 = vmatprep.subr.mxu0 0.0
        %7282 = vmatpush1.msra.mxu0 0.0
        %7283 = vmatprep.subr.mxu0 0.0
        %7284 = vmatpush1.msra.mxu0 0.0
        %7285 = vmatprep.mubr.f32.mxu0 0.0
        %7286 = vmatmul.mubr.f32.gmra.mrb[0].mxu0 %v7219
        %v7287 = vpop.f32.mrb[0].mxu0
        %v7288 = vadd.f32 0.0, %v7287
        %v7289 = vpop.f32.mrb[0].mxu0
        %v7290 = vadd.f32 0.0, %v7289
        %7291 = vdwg.mxu0
        %7292 = vmatprep.subr.mxu0 %v7203
        %7293 = vmatpush1.msra.mxu0 %v7202
        %7294 = vmatprep.subr.mxu0 0.0
        %7295 = vmatpush1.msra.mxu0 0.0
        %7296 = vmatprep.subr.mxu0 0.0
        %7297 = vmatpush1.msra.mxu0 0.0
        %7298 = vmatprep.subr.mxu0 0.0
        %7299 = vmatpush1.msra.mxu0 0.0
        %7300 = vmatprep.subr.mxu0 0.0
        %7301 = vmatpush1.msra.mxu0 0.0
        %7302 = vmatprep.subr.mxu0 0.0
        %7303 = vmatpush1.msra.mxu0 0.0
        %7304 = vmatprep.subr.mxu0 0.0
        %7305 = vmatpush1.msra.mxu0 0.0
        %7306 = vmatprep.subr.mxu0 0.0
        %7307 = vmatpush1.msra.mxu0 0.0
        %7308 = vmatprep.subr.mxu0 0.0
        %7309 = vmatpush1.msra.mxu0 0.0
        %7310 = vmatprep.subr.mxu0 0.0
        %7311 = vmatpush1.msra.mxu0 0.0
        %7312 = vmatprep.subr.mxu0 0.0
        %7313 = vmatpush1.msra.mxu0 0.0
        %7314 = vmatprep.subr.mxu0 0.0
        %7315 = vmatpush1.msra.mxu0 0.0
        %7316 = vmatprep.subr.mxu0 0.0
        %7317 = vmatpush1.msra.mxu0 0.0
        %7318 = vmatprep.subr.mxu0 0.0
        %7319 = vmatpush1.msra.mxu0 0.0
        %7320 = vmatprep.subr.mxu0 0.0
        %7321 = vmatpush1.msra.mxu0 0.0
        %7322 = vmatprep.subr.mxu0 0.0
        %7323 = vmatpush1.msra.mxu0 0.0
        %7324 = vmatprep.subr.mxu0 0.0
        %7325 = vmatpush1.msra.mxu0 0.0
        %7326 = vmatprep.subr.mxu0 0.0
        %7327 = vmatpush1.msra.mxu0 0.0
        %7328 = vmatprep.subr.mxu0 0.0
        %7329 = vmatpush1.msra.mxu0 0.0
        %7330 = vmatprep.subr.mxu0 0.0
        %7331 = vmatpush1.msra.mxu0 0.0
        %7332 = vmatprep.subr.mxu0 0.0
        %7333 = vmatpush1.msra.mxu0 0.0
        %7334 = vmatprep.subr.mxu0 0.0
        %7335 = vmatpush1.msra.mxu0 0.0
        %7336 = vmatprep.subr.mxu0 0.0
        %7337 = vmatpush1.msra.mxu0 0.0
        %7338 = vmatprep.subr.mxu0 0.0
        %7339 = vmatpush1.msra.mxu0 0.0
        %7340 = vmatprep.subr.mxu0 0.0
        %7341 = vmatpush1.msra.mxu0 0.0
        %7342 = vmatprep.subr.mxu0 0.0
        %7343 = vmatpush1.msra.mxu0 0.0
        %7344 = vmatprep.subr.mxu0 0.0
        %7345 = vmatpush1.msra.mxu0 0.0
        %7346 = vmatprep.subr.mxu0 0.0
        %7347 = vmatpush1.msra.mxu0 0.0
        %7348 = vmatprep.subr.mxu0 0.0
        %7349 = vmatpush1.msra.mxu0 0.0
        %7350 = vmatprep.subr.mxu0 0.0
        %7351 = vmatpush1.msra.mxu0 0.0
        %7352 = vmatprep.subr.mxu0 0.0
        %7353 = vmatpush1.msra.mxu0 0.0
        %7354 = vmatprep.subr.mxu0 0.0
        %7355 = vmatpush1.msra.mxu0 0.0
        %7356 = vmatprep.mubr.f32.mxu0 0.0
        %7357 = vmatmul.mubr.f32.gmra.mrb[0].mxu0 %v7219
        %v7358 = vpop.f32.mrb[0].mxu0
        %v7359 = vadd.f32 0.0, %v7358
        %v7360 = vpop.f32.mrb[0].mxu0
        %v7361 = vadd.f32 0.0, %v7360
        %7362 = vdwg.mxu0
        %7363 = vmatprep.subr.mxu0 %v7205
        %7364 = vmatpush1.msra.mxu0 %v7204
        %7365 = vmatprep.subr.mxu0 0.0
        %7366 = vmatpush1.msra.mxu0 0.0
        %7367 = vmatprep.subr.mxu0 0.0
        %7368 = vmatpush1.msra.mxu0 0.0
        %7369 = vmatprep.subr.mxu0 0.0
        %7370 = vmatpush1.msra.mxu0 0.0
        %7371 = vmatprep.subr.mxu0 0.0
        %7372 = vmatpush1.msra.mxu0 0.0
        %7373 = vmatprep.subr.mxu0 0.0
        %7374 = vmatpush1.msra.mxu0 0.0
        %7375 = vmatprep.subr.mxu0 0.0
        %7376 = vmatpush1.msra.mxu0 0.0
        %7377 = vmatprep.subr.mxu0 0.0
        %7378 = vmatpush1.msra.mxu0 0.0
        %7379 = vmatprep.subr.mxu0 0.0
        %7380 = vmatpush1.msra.mxu0 0.0
        %7381 = vmatprep.subr.mxu0 0.0
        %7382 = vmatpush1.msra.mxu0 0.0
        %7383 = vmatprep.subr.mxu0 0.0
        %7384 = vmatpush1.msra.mxu0 0.0
        %7385 = vmatprep.subr.mxu0 0.0
        %7386 = vmatpush1.msra.mxu0 0.0
        %7387 = vmatprep.subr.mxu0 0.0
        %7388 = vmatpush1.msra.mxu0 0.0
        %7389 = vmatprep.subr.mxu0 0.0
        %7390 = vmatpush1.msra.mxu0 0.0
        %7391 = vmatprep.subr.mxu0 0.0
        %7392 = vmatpush1.msra.mxu0 0.0
        %7393 = vmatprep.subr.mxu0 0.0
        %7394 = vmatpush1.msra.mxu0 0.0
        %7395 = vmatprep.subr.mxu0 0.0
        %7396 = vmatpush1.msra.mxu0 0.0
        %7397 = vmatprep.subr.mxu0 0.0
        %7398 = vmatpush1.msra.mxu0 0.0
        %7399 = vmatprep.subr.mxu0 0.0
        %7400 = vmatpush1.msra.mxu0 0.0
        %7401 = vmatprep.subr.mxu0 0.0
        %7402 = vmatpush1.msra.mxu0 0.0
        %7403 = vmatprep.subr.mxu0 0.0
        %7404 = vmatpush1.msra.mxu0 0.0
        %7405 = vmatprep.subr.mxu0 0.0
        %7406 = vmatpush1.msra.mxu0 0.0
        %7407 = vmatprep.subr.mxu0 0.0
        %7408 = vmatpush1.msra.mxu0 0.0
        %7409 = vmatprep.subr.mxu0 0.0
        %7410 = vmatpush1.msra.mxu0 0.0
        %7411 = vmatprep.subr.mxu0 0.0
        %7412 = vmatpush1.msra.mxu0 0.0
        %7413 = vmatprep.subr.mxu0 0.0
        %7414 = vmatpush1.msra.mxu0 0.0
        %7415 = vmatprep.subr.mxu0 0.0
        %7416 = vmatpush1.msra.mxu0 0.0
        %7417 = vmatprep.subr.mxu0 0.0
        %7418 = vmatpush1.msra.mxu0 0.0
        %7419 = vmatprep.subr.mxu0 0.0
        %7420 = vmatpush1.msra.mxu0 0.0
        %7421 = vmatprep.subr.mxu0 0.0
        %7422 = vmatpush1.msra.mxu0 0.0
        %7423 = vmatprep.subr.mxu0 0.0
        %7424 = vmatpush1.msra.mxu0 0.0
        %7425 = vmatprep.subr.mxu0 0.0
        %7426 = vmatpush1.msra.mxu0 0.0
        %7427 = vmatprep.mubr.f32.mxu0 0.0
        %7428 = vmatmul.mubr.f32.gmra.mrb[0].mxu0 %v7219
        %v7429 = vpop.f32.mrb[0].mxu0
        %v7430 = vadd.f32 0.0, %v7429
        %v7431 = vpop.f32.mrb[0].mxu0
        %v7432 = vadd.f32 0.0, %v7431
        %7433 = vdwg.mxu0
        %7434 = vmatprep.subr.mxu0 %v7207
        %7435 = vmatpush1.msra.mxu0 %v7206
        %7436 = vmatprep.subr.mxu0 0.0
        %7437 = vmatpush1.msra.mxu0 0.0
        %7438 = vmatprep.subr.mxu0 0.0
        %7439 = vmatpush1.msra.mxu0 0.0
        %7440 = vmatprep.subr.mxu0 0.0
        %7441 = vmatpush1.msra.mxu0 0.0
        %7442 = vmatprep.subr.mxu0 0.0
        %7443 = vmatpush1.msra.mxu0 0.0
        %7444 = vmatprep.subr.mxu0 0.0
        %7445 = vmatpush1.msra.mxu0 0.0
        %7446 = vmatprep.subr.mxu0 0.0
        %7447 = vmatpush1.msra.mxu0 0.0
        %7448 = vmatprep.subr.mxu0 0.0
        %7449 = vmatpush1.msra.mxu0 0.0
        %7450 = vmatprep.subr.mxu0 0.0
        %7451 = vmatpush1.msra.mxu0 0.0
        %7452 = vmatprep.subr.mxu0 0.0
        %7453 = vmatpush1.msra.mxu0 0.0
        %7454 = vmatprep.subr.mxu0 0.0
        %7455 = vmatpush1.msra.mxu0 0.0
        %7456 = vmatprep.subr.mxu0 0.0
        %7457 = vmatpush1.msra.mxu0 0.0
        %7458 = vmatprep.subr.mxu0 0.0
        %7459 = vmatpush1.msra.mxu0 0.0
        %7460 = vmatprep.subr.mxu0 0.0
        %7461 = vmatpush1.msra.mxu0 0.0
        %7462 = vmatprep.subr.mxu0 0.0
        %7463 = vmatpush1.msra.mxu0 0.0
        %7464 = vmatprep.subr.mxu0 0.0
        %7465 = vmatpush1.msra.mxu0 0.0
        %7466 = vmatprep.subr.mxu0 0.0
        %7467 = vmatpush1.msra.mxu0 0.0
        %7468 = vmatprep.subr.mxu0 0.0
        %7469 = vmatpush1.msra.mxu0 0.0
        %7470 = vmatprep.subr.mxu0 0.0
        %7471 = vmatpush1.msra.mxu0 0.0
        %7472 = vmatprep.subr.mxu0 0.0
        %7473 = vmatpush1.msra.mxu0 0.0
        %7474 = vmatprep.subr.mxu0 0.0
        %7475 = vmatpush1.msra.mxu0 0.0
        %7476 = vmatprep.subr.mxu0 0.0
        %7477 = vmatpush1.msra.mxu0 0.0
        %7478 = vmatprep.subr.mxu0 0.0
        %7479 = vmatpush1.msra.mxu0 0.0
        %7480 = vmatprep.subr.mxu0 0.0
        %7481 = vmatpush1.msra.mxu0 0.0
        %7482 = vmatprep.subr.mxu0 0.0
        %7483 = vmatpush1.msra.mxu0 0.0
        %7484 = vmatprep.subr.mxu0 0.0
        %7485 = vmatpush1.msra.mxu0 0.0
        %7486 = vmatprep.subr.mxu0 0.0
        %7487 = vmatpush1.msra.mxu0 0.0
        %7488 = vmatprep.subr.mxu0 0.0
        %7489 = vmatpush1.msra.mxu0 0.0
        %7490 = vmatprep.subr.mxu0 0.0
        %7491 = vmatpush1.msra.mxu0 0.0
        %7492 = vmatprep.subr.mxu0 0.0
        %7493 = vmatpush1.msra.mxu0 0.0
        %7494 = vmatprep.subr.mxu0 0.0
        %7495 = vmatpush1.msra.mxu0 0.0
        %7496 = vmatprep.subr.mxu0 0.0
        %7497 = vmatpush1.msra.mxu0 0.0
        %7498 = vmatprep.mubr.f32.mxu0 0.0
        %7499 = vmatmul.mubr.f32.gmra.mrb[0].mxu0 %v7219
        %v7500 = vpop.f32.mrb[0].mxu0
        %v7501 = vadd.f32 0.0, %v7500
        %v7502 = vpop.f32.mrb[0].mxu0
        %v7503 = vadd.f32 0.0, %v7502
        %7504 = vdwg.mxu0
        %7505 = vmatprep.subr.mxu0 0.0
        %7506 = vmatpush1.msra.mxu0 %v7208
        %7507 = vmatprep.subr.mxu0 0.0
        %7508 = vmatpush1.msra.mxu0 0.0
        %7509 = vmatprep.subr.mxu0 0.0
        %7510 = vmatpush1.msra.mxu0 0.0
        %7511 = vmatprep.subr.mxu0 0.0
        %7512 = vmatpush1.msra.mxu0 0.0
        %7513 = vmatprep.subr.mxu0 0.0
        %7514 = vmatpush1.msra.mxu0 0.0
        %7515 = vmatprep.subr.mxu0 0.0
        %7516 = vmatpush1.msra.mxu0 0.0
        %7517 = vmatprep.subr.mxu0 0.0
        %7518 = vmatpush1.msra.mxu0 0.0
        %7519 = vmatprep.subr.mxu0 0.0
        %7520 = vmatpush1.msra.mxu0 0.0
        %7521 = vmatprep.subr.mxu0 0.0
        %7522 = vmatpush1.msra.mxu0 0.0
        %7523 = vmatprep.subr.mxu0 0.0
        %7524 = vmatpush1.msra.mxu0 0.0
        %7525 = vmatprep.subr.mxu0 0.0
        %7526 = vmatpush1.msra.mxu0 0.0
        %7527 = vmatprep.subr.mxu0 0.0
        %7528 = vmatpush1.msra.mxu0 0.0
        %7529 = vmatprep.subr.mxu0 0.0
        %7530 = vmatpush1.msra.mxu0 0.0
        %7531 = vmatprep.subr.mxu0 0.0
        %7532 = vmatpush1.msra.mxu0 0.0
        %7533 = vmatprep.subr.mxu0 0.0
        %7534 = vmatpush1.msra.mxu0 0.0
        %7535 = vmatprep.subr.mxu0 0.0
        %7536 = vmatpush1.msra.mxu0 0.0
        %7537 = vmatprep.subr.mxu0 0.0
        %7538 = vmatpush1.msra.mxu0 0.0
        %7539 = vmatprep.subr.mxu0 0.0
        %7540 = vmatpush1.msra.mxu0 0.0
        %7541 = vmatprep.subr.mxu0 0.0
        %7542 = vmatpush1.msra.mxu0 0.0
        %7543 = vmatprep.subr.mxu0 0.0
        %7544 = vmatpush1.msra.mxu0 0.0
        %7545 = vmatprep.subr.mxu0 0.0
        %7546 = vmatpush1.msra.mxu0 0.0
        %7547 = vmatprep.subr.mxu0 0.0
        %7548 = vmatpush1.msra.mxu0 0.0
        %7549 = vmatprep.subr.mxu0 0.0
        %7550 = vmatpush1.msra.mxu0 0.0
        %7551 = vmatprep.subr.mxu0 0.0
        %7552 = vmatpush1.msra.mxu0 0.0
        %7553 = vmatprep.subr.mxu0 0.0
        %7554 = vmatpush1.msra.mxu0 0.0
        %7555 = vmatprep.subr.mxu0 0.0
        %7556 = vmatpush1.msra.mxu0 0.0
        %7557 = vmatprep.subr.mxu0 0.0
        %7558 = vmatpush1.msra.mxu0 0.0
        %7559 = vmatprep.subr.mxu0 0.0
        %7560 = vmatpush1.msra.mxu0 0.0
        %7561 = vmatprep.subr.mxu0 0.0
        %7562 = vmatpush1.msra.mxu0 0.0
        %7563 = vmatprep.subr.mxu0 0.0
        %7564 = vmatpush1.msra.mxu0 0.0
        %7565 = vmatprep.subr.mxu0 0.0
        %7566 = vmatpush1.msra.mxu0 0.0
        %7567 = vmatprep.subr.mxu0 0.0
        %7568 = vmatpush1.msra.mxu0 0.0
        %7569 = vmatprep.mubr.f32.mxu0 0.0
        %7570 = vmatmul.mubr.f32.gmra.mrb[0].mxu0 %v7219
        %v7571 = vpop.f32.mrb[0].mxu0
        %v7572 = vadd.f32 0.0, %v7571
        %v7573 = vpop.f32.mrb[0].mxu0
        %7574 = vdwg.mxu0
        %v7575 = vadd.f32 %v7168, %v7288
        %v7576 = vadd.f32 %v7169, %v7290
        %v7577 = vadd.f32 %v7170, %v7359
        %v7578 = vadd.f32 %v7171, %v7361
        %v7579 = vadd.f32 %v7172, %v7430
        %v7580 = vadd.f32 %v7173, %v7432
        %v7581 = vadd.f32 %v7174, %v7501
        %v7582 = vadd.f32 %v7175, %v7503
        %v7583 = vadd.f32 %v7176, %v7572
        %s7584 = scalar_lea.vmem [#allocation6], 56
        %v7585 = vld [vmem:[%s7584] sm:$0xff]
        %7586 = vrot.lane.b32.xlu0 %v6753, 92
        %v7587 = vpop.permute.xlu0 %7586
        %7588 = vrot.lane.b32.xlu0 %v6754, 92
        %v7589 = vpop.permute.xlu0 %7588
        %7590 = vrot.lane.b32.xlu0 %v6755, 92
        %v7591 = vpop.permute.xlu0 %7590
        %7592 = vrot.lane.b32.xlu0 %v6756, 92
        %v7593 = vpop.permute.xlu0 %7592
        %7594 = vrot.lane.b32.xlu0 %v6757, 92
        %v7595 = vpop.permute.xlu0 %7594
        %7596 = vrot.lane.b32.xlu0 %v6758, 92
        %v7597 = vpop.permute.xlu0 %7596
        %7598 = vrot.lane.b32.xlu0 %v6759, 92
        %v7599 = vpop.permute.xlu0 %7598
        %7600 = vrot.lane.b32.xlu0 %v6760, 92
        %v7601 = vpop.permute.xlu0 %7600
        %7602 = vrot.lane.b32.xlu0 %v6761, 92
        %v7603 = vpop.permute.xlu0 %7602
        %7604 = vrot.lane.b32.xlu0 %v6762, 92
        %v7605 = vpop.permute.xlu0 %7604
        %v7606 = vsel %vm2223, %v7587, %v7589
        %v7607 = vsel %vm2223, %v7589, %v7591
        %v7608 = vsel %vm2223, %v7591, %v7593
        %v7609 = vsel %vm2223, %v7593, %v7595
        %v7610 = vsel %vm2223, %v7595, %v7597
        %v7611 = vsel %vm2223, %v7597, %v7599
        %v7612 = vsel %vm2223, %v7599, %v7601
        %v7613 = vsel %vm2223, %v7601, %v7603
        %v7614 = vsel %vm2223, %v7603, %v7605
        %v7625 = vsel %vm1079, %v7585, 0
        %7627 = vmatprep.subr.mxu0 %v7607
        %7628 = vmatpush1.msra.mxu0 %v7606
        %7629 = vmatprep.subr.mxu0 0.0
        %7630 = vmatpush1.msra.mxu0 0.0
        %7631 = vmatprep.subr.mxu0 0.0
        %7632 = vmatpush1.msra.mxu0 0.0
        %7633 = vmatprep.subr.mxu0 0.0
        %7634 = vmatpush1.msra.mxu0 0.0
        %7635 = vmatprep.subr.mxu0 0.0
        %7636 = vmatpush1.msra.mxu0 0.0
        %7637 = vmatprep.subr.mxu0 0.0
        %7638 = vmatpush1.msra.mxu0 0.0
        %7639 = vmatprep.subr.mxu0 0.0
        %7640 = vmatpush1.msra.mxu0 0.0
        %7641 = vmatprep.subr.mxu0 0.0
        %7642 = vmatpush1.msra.mxu0 0.0
        %7643 = vmatprep.subr.mxu0 0.0
        %7644 = vmatpush1.msra.mxu0 0.0
        %7645 = vmatprep.subr.mxu0 0.0
        %7646 = vmatpush1.msra.mxu0 0.0
        %7647 = vmatprep.subr.mxu0 0.0
        %7648 = vmatpush1.msra.mxu0 0.0
        %7649 = vmatprep.subr.mxu0 0.0
        %7650 = vmatpush1.msra.mxu0 0.0
        %7651 = vmatprep.subr.mxu0 0.0
        %7652 = vmatpush1.msra.mxu0 0.0
        %7653 = vmatprep.subr.mxu0 0.0
        %7654 = vmatpush1.msra.mxu0 0.0
        %7655 = vmatprep.subr.mxu0 0.0
        %7656 = vmatpush1.msra.mxu0 0.0
        %7657 = vmatprep.subr.mxu0 0.0
        %7658 = vmatpush1.msra.mxu0 0.0
        %7659 = vmatprep.subr.mxu0 0.0
        %7660 = vmatpush1.msra.mxu0 0.0
        %7661 = vmatprep.subr.mxu0 0.0
        %7662 = vmatpush1.msra.mxu0 0.0
        %7663 = vmatprep.subr.mxu0 0.0
        %7664 = vmatpush1.msra.mxu0 0.0
        %7665 = vmatprep.subr.mxu0 0.0
        %7666 = vmatpush1.msra.mxu0 0.0
        %7667 = vmatprep.subr.mxu0 0.0
        %7668 = vmatpush1.msra.mxu0 0.0
        %7669 = vmatprep.subr.mxu0 0.0
        %7670 = vmatpush1.msra.mxu0 0.0
        %7671 = vmatprep.subr.mxu0 0.0
        %7672 = vmatpush1.msra.mxu0 0.0
        %7673 = vmatprep.subr.mxu0 0.0
        %7674 = vmatpush1.msra.mxu0 0.0
        %7675 = vmatprep.subr.mxu0 0.0
        %7676 = vmatpush1.msra.mxu0 0.0
        %7677 = vmatprep.subr.mxu0 0.0
        %7678 = vmatpush1.msra.mxu0 0.0
        %7679 = vmatprep.subr.mxu0 0.0
        %7680 = vmatpush1.msra.mxu0 0.0
        %7681 = vmatprep.subr.mxu0 0.0
        %7682 = vmatpush1.msra.mxu0 0.0
        %7683 = vmatprep.subr.mxu0 0.0
        %7684 = vmatpush1.msra.mxu0 0.0
        %7685 = vmatprep.subr.mxu0 0.0
        %7686 = vmatpush1.msra.mxu0 0.0
        %7687 = vmatprep.subr.mxu0 0.0
        %7688 = vmatpush1.msra.mxu0 0.0
        %7689 = vmatprep.subr.mxu0 0.0
        %7690 = vmatpush1.msra.mxu0 0.0
        %7691 = vmatprep.mubr.f32.mxu0 0.0
        %7692 = vmatmul.mubr.f32.gmra.mrb[0].mxu0 %v7625
        %v7693 = vpop.f32.mrb[0].mxu0
        %v7694 = vadd.f32 0.0, %v7693
        %v7695 = vpop.f32.mrb[0].mxu0
        %v7696 = vadd.f32 0.0, %v7695
        %7697 = vdwg.mxu0
        %7698 = vmatprep.subr.mxu0 %v7609
        %7699 = vmatpush1.msra.mxu0 %v7608
        %7700 = vmatprep.subr.mxu0 0.0
        %7701 = vmatpush1.msra.mxu0 0.0
        %7702 = vmatprep.subr.mxu0 0.0
        %7703 = vmatpush1.msra.mxu0 0.0
        %7704 = vmatprep.subr.mxu0 0.0
        %7705 = vmatpush1.msra.mxu0 0.0
        %7706 = vmatprep.subr.mxu0 0.0
        %7707 = vmatpush1.msra.mxu0 0.0
        %7708 = vmatprep.subr.mxu0 0.0
        %7709 = vmatpush1.msra.mxu0 0.0
        %7710 = vmatprep.subr.mxu0 0.0
        %7711 = vmatpush1.msra.mxu0 0.0
        %7712 = vmatprep.subr.mxu0 0.0
        %7713 = vmatpush1.msra.mxu0 0.0
        %7714 = vmatprep.subr.mxu0 0.0
        %7715 = vmatpush1.msra.mxu0 0.0
        %7716 = vmatprep.subr.mxu0 0.0
        %7717 = vmatpush1.msra.mxu0 0.0
        %7718 = vmatprep.subr.mxu0 0.0
        %7719 = vmatpush1.msra.mxu0 0.0
        %7720 = vmatprep.subr.mxu0 0.0
        %7721 = vmatpush1.msra.mxu0 0.0
        %7722 = vmatprep.subr.mxu0 0.0
        %7723 = vmatpush1.msra.mxu0 0.0
        %7724 = vmatprep.subr.mxu0 0.0
        %7725 = vmatpush1.msra.mxu0 0.0
        %7726 = vmatprep.subr.mxu0 0.0
        %7727 = vmatpush1.msra.mxu0 0.0
        %7728 = vmatprep.subr.mxu0 0.0
        %7729 = vmatpush1.msra.mxu0 0.0
        %7730 = vmatprep.subr.mxu0 0.0
        %7731 = vmatpush1.msra.mxu0 0.0
        %7732 = vmatprep.subr.mxu0 0.0
        %7733 = vmatpush1.msra.mxu0 0.0
        %7734 = vmatprep.subr.mxu0 0.0
        %7735 = vmatpush1.msra.mxu0 0.0
        %7736 = vmatprep.subr.mxu0 0.0
        %7737 = vmatpush1.msra.mxu0 0.0
        %7738 = vmatprep.subr.mxu0 0.0
        %7739 = vmatpush1.msra.mxu0 0.0
        %7740 = vmatprep.subr.mxu0 0.0
        %7741 = vmatpush1.msra.mxu0 0.0
        %7742 = vmatprep.subr.mxu0 0.0
        %7743 = vmatpush1.msra.mxu0 0.0
        %7744 = vmatprep.subr.mxu0 0.0
        %7745 = vmatpush1.msra.mxu0 0.0
        %7746 = vmatprep.subr.mxu0 0.0
        %7747 = vmatpush1.msra.mxu0 0.0
        %7748 = vmatprep.subr.mxu0 0.0
        %7749 = vmatpush1.msra.mxu0 0.0
        %7750 = vmatprep.subr.mxu0 0.0
        %7751 = vmatpush1.msra.mxu0 0.0
        %7752 = vmatprep.subr.mxu0 0.0
        %7753 = vmatpush1.msra.mxu0 0.0
        %7754 = vmatprep.subr.mxu0 0.0
        %7755 = vmatpush1.msra.mxu0 0.0
        %7756 = vmatprep.subr.mxu0 0.0
        %7757 = vmatpush1.msra.mxu0 0.0
        %7758 = vmatprep.subr.mxu0 0.0
        %7759 = vmatpush1.msra.mxu0 0.0
        %7760 = vmatprep.subr.mxu0 0.0
        %7761 = vmatpush1.msra.mxu0 0.0
        %7762 = vmatprep.mubr.f32.mxu0 0.0
        %7763 = vmatmul.mubr.f32.gmra.mrb[0].mxu0 %v7625
        %v7764 = vpop.f32.mrb[0].mxu0
        %v7765 = vadd.f32 0.0, %v7764
        %v7766 = vpop.f32.mrb[0].mxu0
        %v7767 = vadd.f32 0.0, %v7766
        %7768 = vdwg.mxu0
        %7769 = vmatprep.subr.mxu0 %v7611
        %7770 = vmatpush1.msra.mxu0 %v7610
        %7771 = vmatprep.subr.mxu0 0.0
        %7772 = vmatpush1.msra.mxu0 0.0
        %7773 = vmatprep.subr.mxu0 0.0
        %7774 = vmatpush1.msra.mxu0 0.0
        %7775 = vmatprep.subr.mxu0 0.0
        %7776 = vmatpush1.msra.mxu0 0.0
        %7777 = vmatprep.subr.mxu0 0.0
        %7778 = vmatpush1.msra.mxu0 0.0
        %7779 = vmatprep.subr.mxu0 0.0
        %7780 = vmatpush1.msra.mxu0 0.0
        %7781 = vmatprep.subr.mxu0 0.0
        %7782 = vmatpush1.msra.mxu0 0.0
        %7783 = vmatprep.subr.mxu0 0.0
        %7784 = vmatpush1.msra.mxu0 0.0
        %7785 = vmatprep.subr.mxu0 0.0
        %7786 = vmatpush1.msra.mxu0 0.0
        %7787 = vmatprep.subr.mxu0 0.0
        %7788 = vmatpush1.msra.mxu0 0.0
        %7789 = vmatprep.subr.mxu0 0.0
        %7790 = vmatpush1.msra.mxu0 0.0
        %7791 = vmatprep.subr.mxu0 0.0
        %7792 = vmatpush1.msra.mxu0 0.0
        %7793 = vmatprep.subr.mxu0 0.0
        %7794 = vmatpush1.msra.mxu0 0.0
        %7795 = vmatprep.subr.mxu0 0.0
        %7796 = vmatpush1.msra.mxu0 0.0
        %7797 = vmatprep.subr.mxu0 0.0
        %7798 = vmatpush1.msra.mxu0 0.0
        %7799 = vmatprep.subr.mxu0 0.0
        %7800 = vmatpush1.msra.mxu0 0.0
        %7801 = vmatprep.subr.mxu0 0.0
        %7802 = vmatpush1.msra.mxu0 0.0
        %7803 = vmatprep.subr.mxu0 0.0
        %7804 = vmatpush1.msra.mxu0 0.0
        %7805 = vmatprep.subr.mxu0 0.0
        %7806 = vmatpush1.msra.mxu0 0.0
        %7807 = vmatprep.subr.mxu0 0.0
        %7808 = vmatpush1.msra.mxu0 0.0
        %7809 = vmatprep.subr.mxu0 0.0
        %7810 = vmatpush1.msra.mxu0 0.0
        %7811 = vmatprep.subr.mxu0 0.0
        %7812 = vmatpush1.msra.mxu0 0.0
        %7813 = vmatprep.subr.mxu0 0.0
        %7814 = vmatpush1.msra.mxu0 0.0
        %7815 = vmatprep.subr.mxu0 0.0
        %7816 = vmatpush1.msra.mxu0 0.0
        %7817 = vmatprep.subr.mxu0 0.0
        %7818 = vmatpush1.msra.mxu0 0.0
        %7819 = vmatprep.subr.mxu0 0.0
        %7820 = vmatpush1.msra.mxu0 0.0
        %7821 = vmatprep.subr.mxu0 0.0
        %7822 = vmatpush1.msra.mxu0 0.0
        %7823 = vmatprep.subr.mxu0 0.0
        %7824 = vmatpush1.msra.mxu0 0.0
        %7825 = vmatprep.subr.mxu0 0.0
        %7826 = vmatpush1.msra.mxu0 0.0
        %7827 = vmatprep.subr.mxu0 0.0
        %7828 = vmatpush1.msra.mxu0 0.0
        %7829 = vmatprep.subr.mxu0 0.0
        %7830 = vmatpush1.msra.mxu0 0.0
        %7831 = vmatprep.subr.mxu0 0.0
        %7832 = vmatpush1.msra.mxu0 0.0
        %7833 = vmatprep.mubr.f32.mxu0 0.0
        %7834 = vmatmul.mubr.f32.gmra.mrb[0].mxu0 %v7625
        %v7835 = vpop.f32.mrb[0].mxu0
        %v7836 = vadd.f32 0.0, %v7835
        %v7837 = vpop.f32.mrb[0].mxu0
        %v7838 = vadd.f32 0.0, %v7837
        %7839 = vdwg.mxu0
        %7840 = vmatprep.subr.mxu0 %v7613
        %7841 = vmatpush1.msra.mxu0 %v7612
        %7842 = vmatprep.subr.mxu0 0.0
        %7843 = vmatpush1.msra.mxu0 0.0
        %7844 = vmatprep.subr.mxu0 0.0
        %7845 = vmatpush1.msra.mxu0 0.0
        %7846 = vmatprep.subr.mxu0 0.0
        %7847 = vmatpush1.msra.mxu0 0.0
        %7848 = vmatprep.subr.mxu0 0.0
        %7849 = vmatpush1.msra.mxu0 0.0
        %7850 = vmatprep.subr.mxu0 0.0
        %7851 = vmatpush1.msra.mxu0 0.0
        %7852 = vmatprep.subr.mxu0 0.0
        %7853 = vmatpush1.msra.mxu0 0.0
        %7854 = vmatprep.subr.mxu0 0.0
        %7855 = vmatpush1.msra.mxu0 0.0
        %7856 = vmatprep.subr.mxu0 0.0
        %7857 = vmatpush1.msra.mxu0 0.0
        %7858 = vmatprep.subr.mxu0 0.0
        %7859 = vmatpush1.msra.mxu0 0.0
        %7860 = vmatprep.subr.mxu0 0.0
        %7861 = vmatpush1.msra.mxu0 0.0
        %7862 = vmatprep.subr.mxu0 0.0
        %7863 = vmatpush1.msra.mxu0 0.0
        %7864 = vmatprep.subr.mxu0 0.0
        %7865 = vmatpush1.msra.mxu0 0.0
        %7866 = vmatprep.subr.mxu0 0.0
        %7867 = vmatpush1.msra.mxu0 0.0
        %7868 = vmatprep.subr.mxu0 0.0
        %7869 = vmatpush1.msra.mxu0 0.0
        %7870 = vmatprep.subr.mxu0 0.0
        %7871 = vmatpush1.msra.mxu0 0.0
        %7872 = vmatprep.subr.mxu0 0.0
        %7873 = vmatpush1.msra.mxu0 0.0
        %7874 = vmatprep.subr.mxu0 0.0
        %7875 = vmatpush1.msra.mxu0 0.0
        %7876 = vmatprep.subr.mxu0 0.0
        %7877 = vmatpush1.msra.mxu0 0.0
        %7878 = vmatprep.subr.mxu0 0.0
        %7879 = vmatpush1.msra.mxu0 0.0
        %7880 = vmatprep.subr.mxu0 0.0
        %7881 = vmatpush1.msra.mxu0 0.0
        %7882 = vmatprep.subr.mxu0 0.0
        %7883 = vmatpush1.msra.mxu0 0.0
        %7884 = vmatprep.subr.mxu0 0.0
        %7885 = vmatpush1.msra.mxu0 0.0
        %7886 = vmatprep.subr.mxu0 0.0
        %7887 = vmatpush1.msra.mxu0 0.0
        %7888 = vmatprep.subr.mxu0 0.0
        %7889 = vmatpush1.msra.mxu0 0.0
        %7890 = vmatprep.subr.mxu0 0.0
        %7891 = vmatpush1.msra.mxu0 0.0
        %7892 = vmatprep.subr.mxu0 0.0
        %7893 = vmatpush1.msra.mxu0 0.0
        %7894 = vmatprep.subr.mxu0 0.0
        %7895 = vmatpush1.msra.mxu0 0.0
        %7896 = vmatprep.subr.mxu0 0.0
        %7897 = vmatpush1.msra.mxu0 0.0
        %7898 = vmatprep.subr.mxu0 0.0
        %7899 = vmatpush1.msra.mxu0 0.0
        %7900 = vmatprep.subr.mxu0 0.0
        %7901 = vmatpush1.msra.mxu0 0.0
        %7902 = vmatprep.subr.mxu0 0.0
        %7903 = vmatpush1.msra.mxu0 0.0
        %7904 = vmatprep.mubr.f32.mxu0 0.0
        %7905 = vmatmul.mubr.f32.gmra.mrb[0].mxu0 %v7625
        %v7906 = vpop.f32.mrb[0].mxu0
        %v7907 = vadd.f32 0.0, %v7906
        %v7908 = vpop.f32.mrb[0].mxu0
        %v7909 = vadd.f32 0.0, %v7908
        %7910 = vdwg.mxu0
        %7911 = vmatprep.subr.mxu0 0.0
        %7912 = vmatpush1.msra.mxu0 %v7614
        %7913 = vmatprep.subr.mxu0 0.0
        %7914 = vmatpush1.msra.mxu0 0.0
        %7915 = vmatprep.subr.mxu0 0.0
        %7916 = vmatpush1.msra.mxu0 0.0
        %7917 = vmatprep.subr.mxu0 0.0
        %7918 = vmatpush1.msra.mxu0 0.0
        %7919 = vmatprep.subr.mxu0 0.0
        %7920 = vmatpush1.msra.mxu0 0.0
        %7921 = vmatprep.subr.mxu0 0.0
        %7922 = vmatpush1.msra.mxu0 0.0
        %7923 = vmatprep.subr.mxu0 0.0
        %7924 = vmatpush1.msra.mxu0 0.0
        %7925 = vmatprep.subr.mxu0 0.0
        %7926 = vmatpush1.msra.mxu0 0.0
        %7927 = vmatprep.subr.mxu0 0.0
        %7928 = vmatpush1.msra.mxu0 0.0
        %7929 = vmatprep.subr.mxu0 0.0
        %7930 = vmatpush1.msra.mxu0 0.0
        %7931 = vmatprep.subr.mxu0 0.0
        %7932 = vmatpush1.msra.mxu0 0.0
        %7933 = vmatprep.subr.mxu0 0.0
        %7934 = vmatpush1.msra.mxu0 0.0
        %7935 = vmatprep.subr.mxu0 0.0
        %7936 = vmatpush1.msra.mxu0 0.0
        %7937 = vmatprep.subr.mxu0 0.0
        %7938 = vmatpush1.msra.mxu0 0.0
        %7939 = vmatprep.subr.mxu0 0.0
        %7940 = vmatpush1.msra.mxu0 0.0
        %7941 = vmatprep.subr.mxu0 0.0
        %7942 = vmatpush1.msra.mxu0 0.0
        %7943 = vmatprep.subr.mxu0 0.0
        %7944 = vmatpush1.msra.mxu0 0.0
        %7945 = vmatprep.subr.mxu0 0.0
        %7946 = vmatpush1.msra.mxu0 0.0
        %7947 = vmatprep.subr.mxu0 0.0
        %7948 = vmatpush1.msra.mxu0 0.0
        %7949 = vmatprep.subr.mxu0 0.0
        %7950 = vmatpush1.msra.mxu0 0.0
        %7951 = vmatprep.subr.mxu0 0.0
        %7952 = vmatpush1.msra.mxu0 0.0
        %7953 = vmatprep.subr.mxu0 0.0
        %7954 = vmatpush1.msra.mxu0 0.0
        %7955 = vmatprep.subr.mxu0 0.0
        %7956 = vmatpush1.msra.mxu0 0.0
        %7957 = vmatprep.subr.mxu0 0.0
        %7958 = vmatpush1.msra.mxu0 0.0
        %7959 = vmatprep.subr.mxu0 0.0
        %7960 = vmatpush1.msra.mxu0 0.0
        %7961 = vmatprep.subr.mxu0 0.0
        %7962 = vmatpush1.msra.mxu0 0.0
        %7963 = vmatprep.subr.mxu0 0.0
        %7964 = vmatpush1.msra.mxu0 0.0
        %7965 = vmatprep.subr.mxu0 0.0
        %7966 = vmatpush1.msra.mxu0 0.0
        %7967 = vmatprep.subr.mxu0 0.0
        %7968 = vmatpush1.msra.mxu0 0.0
        %7969 = vmatprep.subr.mxu0 0.0
        %7970 = vmatpush1.msra.mxu0 0.0
        %7971 = vmatprep.subr.mxu0 0.0
        %7972 = vmatpush1.msra.mxu0 0.0
        %7973 = vmatprep.subr.mxu0 0.0
        %7974 = vmatpush1.msra.mxu0 0.0
        %7975 = vmatprep.mubr.f32.mxu0 0.0
        %7976 = vmatmul.mubr.f32.gmra.mrb[0].mxu0 %v7625
        %v7977 = vpop.f32.mrb[0].mxu0
        %v7978 = vadd.f32 0.0, %v7977
        %v7979 = vpop.f32.mrb[0].mxu0
        %7980 = vdwg.mxu0
        %v7981 = vadd.f32 %v7575, %v7694
        %v7982 = vadd.f32 %v7576, %v7696
        %v7983 = vadd.f32 %v7577, %v7765
        %v7984 = vadd.f32 %v7578, %v7767
        %v7985 = vadd.f32 %v7579, %v7836
        %v7986 = vadd.f32 %v7580, %v7838
        %v7987 = vadd.f32 %v7581, %v7907
        %v7988 = vadd.f32 %v7582, %v7909
        %v7989 = vadd.f32 %v7583, %v7978
        %s7990 = scalar_lea.vmem [#allocation6], 64
        %v7991 = vld [vmem:[%s7990] sm:$0xff]
        %7992 = vrot.lane.b32.xlu0 %v6753, 91
        %v7993 = vpop.permute.xlu0 %7992
        %7994 = vrot.lane.b32.xlu0 %v6754, 91
        %v7995 = vpop.permute.xlu0 %7994
        %7996 = vrot.lane.b32.xlu0 %v6755, 91
        %v7997 = vpop.permute.xlu0 %7996
        %7998 = vrot.lane.b32.xlu0 %v6756, 91
        %v7999 = vpop.permute.xlu0 %7998
        %8000 = vrot.lane.b32.xlu0 %v6757, 91
        %v8001 = vpop.permute.xlu0 %8000
        %8002 = vrot.lane.b32.xlu0 %v6758, 91
        %v8003 = vpop.permute.xlu0 %8002
        %8004 = vrot.lane.b32.xlu0 %v6759, 91
        %v8005 = vpop.permute.xlu0 %8004
        %8006 = vrot.lane.b32.xlu0 %v6760, 91
        %v8007 = vpop.permute.xlu0 %8006
        %8008 = vrot.lane.b32.xlu0 %v6761, 91
        %v8009 = vpop.permute.xlu0 %8008
        %8010 = vrot.lane.b32.xlu0 %v6762, 91
        %v8011 = vpop.permute.xlu0 %8010
        %v8012 = vsel %vm2630, %v7993, %v7995
        %v8013 = vsel %vm2630, %v7995, %v7997
        %v8014 = vsel %vm2630, %v7997, %v7999
        %v8015 = vsel %vm2630, %v7999, %v8001
        %v8016 = vsel %vm2630, %v8001, %v8003
        %v8017 = vsel %vm2630, %v8003, %v8005
        %v8018 = vsel %vm2630, %v8005, %v8007
        %v8019 = vsel %vm2630, %v8007, %v8009
        %v8020 = vsel %vm2630, %v8009, %v8011
        %v8031 = vsel %vm1079, %v7991, 0
        %8033 = vmatprep.subr.mxu0 %v8013
        %8034 = vmatpush1.msra.mxu0 %v8012
        %8035 = vmatprep.subr.mxu0 0.0
        %8036 = vmatpush1.msra.mxu0 0.0
        %8037 = vmatprep.subr.mxu0 0.0
        %8038 = vmatpush1.msra.mxu0 0.0
        %8039 = vmatprep.subr.mxu0 0.0
        %8040 = vmatpush1.msra.mxu0 0.0
        %8041 = vmatprep.subr.mxu0 0.0
        %8042 = vmatpush1.msra.mxu0 0.0
        %8043 = vmatprep.subr.mxu0 0.0
        %8044 = vmatpush1.msra.mxu0 0.0
        %8045 = vmatprep.subr.mxu0 0.0
        %8046 = vmatpush1.msra.mxu0 0.0
        %8047 = vmatprep.subr.mxu0 0.0
        %8048 = vmatpush1.msra.mxu0 0.0
        %8049 = vmatprep.subr.mxu0 0.0
        %8050 = vmatpush1.msra.mxu0 0.0
        %8051 = vmatprep.subr.mxu0 0.0
        %8052 = vmatpush1.msra.mxu0 0.0
        %8053 = vmatprep.subr.mxu0 0.0
        %8054 = vmatpush1.msra.mxu0 0.0
        %8055 = vmatprep.subr.mxu0 0.0
        %8056 = vmatpush1.msra.mxu0 0.0
        %8057 = vmatprep.subr.mxu0 0.0
        %8058 = vmatpush1.msra.mxu0 0.0
        %8059 = vmatprep.subr.mxu0 0.0
        %8060 = vmatpush1.msra.mxu0 0.0
        %8061 = vmatprep.subr.mxu0 0.0
        %8062 = vmatpush1.msra.mxu0 0.0
        %8063 = vmatprep.subr.mxu0 0.0
        %8064 = vmatpush1.msra.mxu0 0.0
        %8065 = vmatprep.subr.mxu0 0.0
        %8066 = vmatpush1.msra.mxu0 0.0
        %8067 = vmatprep.subr.mxu0 0.0
        %8068 = vmatpush1.msra.mxu0 0.0
        %8069 = vmatprep.subr.mxu0 0.0
        %8070 = vmatpush1.msra.mxu0 0.0
        %8071 = vmatprep.subr.mxu0 0.0
        %8072 = vmatpush1.msra.mxu0 0.0
        %8073 = vmatprep.subr.mxu0 0.0
        %8074 = vmatpush1.msra.mxu0 0.0
        %8075 = vmatprep.subr.mxu0 0.0
        %8076 = vmatpush1.msra.mxu0 0.0
        %8077 = vmatprep.subr.mxu0 0.0
        %8078 = vmatpush1.msra.mxu0 0.0
        %8079 = vmatprep.subr.mxu0 0.0
        %8080 = vmatpush1.msra.mxu0 0.0
        %8081 = vmatprep.subr.mxu0 0.0
        %8082 = vmatpush1.msra.mxu0 0.0
        %8083 = vmatprep.subr.mxu0 0.0
        %8084 = vmatpush1.msra.mxu0 0.0
        %8085 = vmatprep.subr.mxu0 0.0
        %8086 = vmatpush1.msra.mxu0 0.0
        %8087 = vmatprep.subr.mxu0 0.0
        %8088 = vmatpush1.msra.mxu0 0.0
        %8089 = vmatprep.subr.mxu0 0.0
        %8090 = vmatpush1.msra.mxu0 0.0
        %8091 = vmatprep.subr.mxu0 0.0
        %8092 = vmatpush1.msra.mxu0 0.0
        %8093 = vmatprep.subr.mxu0 0.0
        %8094 = vmatpush1.msra.mxu0 0.0
        %8095 = vmatprep.subr.mxu0 0.0
        %8096 = vmatpush1.msra.mxu0 0.0
        %8097 = vmatprep.mubr.f32.mxu0 0.0
        %8098 = vmatmul.mubr.f32.gmra.mrb[0].mxu0 %v8031
        %v8099 = vpop.f32.mrb[0].mxu0
        %v8100 = vadd.f32 0.0, %v8099
        %v8101 = vpop.f32.mrb[0].mxu0
        %v8102 = vadd.f32 0.0, %v8101
        %8103 = vdwg.mxu0
        %8104 = vmatprep.subr.mxu0 %v8015
        %8105 = vmatpush1.msra.mxu0 %v8014
        %8106 = vmatprep.subr.mxu0 0.0
        %8107 = vmatpush1.msra.mxu0 0.0
        %8108 = vmatprep.subr.mxu0 0.0
        %8109 = vmatpush1.msra.mxu0 0.0
        %8110 = vmatprep.subr.mxu0 0.0
        %8111 = vmatpush1.msra.mxu0 0.0
        %8112 = vmatprep.subr.mxu0 0.0
        %8113 = vmatpush1.msra.mxu0 0.0
        %8114 = vmatprep.subr.mxu0 0.0
        %8115 = vmatpush1.msra.mxu0 0.0
        %8116 = vmatprep.subr.mxu0 0.0
        %8117 = vmatpush1.msra.mxu0 0.0
        %8118 = vmatprep.subr.mxu0 0.0
        %8119 = vmatpush1.msra.mxu0 0.0
        %8120 = vmatprep.subr.mxu0 0.0
        %8121 = vmatpush1.msra.mxu0 0.0
        %8122 = vmatprep.subr.mxu0 0.0
        %8123 = vmatpush1.msra.mxu0 0.0
        %8124 = vmatprep.subr.mxu0 0.0
        %8125 = vmatpush1.msra.mxu0 0.0
        %8126 = vmatprep.subr.mxu0 0.0
        %8127 = vmatpush1.msra.mxu0 0.0
        %8128 = vmatprep.subr.mxu0 0.0
        %8129 = vmatpush1.msra.mxu0 0.0
        %8130 = vmatprep.subr.mxu0 0.0
        %8131 = vmatpush1.msra.mxu0 0.0
        %8132 = vmatprep.subr.mxu0 0.0
        %8133 = vmatpush1.msra.mxu0 0.0
        %8134 = vmatprep.subr.mxu0 0.0
        %8135 = vmatpush1.msra.mxu0 0.0
        %8136 = vmatprep.subr.mxu0 0.0
        %8137 = vmatpush1.msra.mxu0 0.0
        %8138 = vmatprep.subr.mxu0 0.0
        %8139 = vmatpush1.msra.mxu0 0.0
        %8140 = vmatprep.subr.mxu0 0.0
        %8141 = vmatpush1.msra.mxu0 0.0
        %8142 = vmatprep.subr.mxu0 0.0
        %8143 = vmatpush1.msra.mxu0 0.0
        %8144 = vmatprep.subr.mxu0 0.0
        %8145 = vmatpush1.msra.mxu0 0.0
        %8146 = vmatprep.subr.mxu0 0.0
        %8147 = vmatpush1.msra.mxu0 0.0
        %8148 = vmatprep.subr.mxu0 0.0
        %8149 = vmatpush1.msra.mxu0 0.0
        %8150 = vmatprep.subr.mxu0 0.0
        %8151 = vmatpush1.msra.mxu0 0.0
        %8152 = vmatprep.subr.mxu0 0.0
        %8153 = vmatpush1.msra.mxu0 0.0
        %8154 = vmatprep.subr.mxu0 0.0
        %8155 = vmatpush1.msra.mxu0 0.0
        %8156 = vmatprep.subr.mxu0 0.0
        %8157 = vmatpush1.msra.mxu0 0.0
        %8158 = vmatprep.subr.mxu0 0.0
        %8159 = vmatpush1.msra.mxu0 0.0
        %8160 = vmatprep.subr.mxu0 0.0
        %8161 = vmatpush1.msra.mxu0 0.0
        %8162 = vmatprep.subr.mxu0 0.0
        %8163 = vmatpush1.msra.mxu0 0.0
        %8164 = vmatprep.subr.mxu0 0.0
        %8165 = vmatpush1.msra.mxu0 0.0
        %8166 = vmatprep.subr.mxu0 0.0
        %8167 = vmatpush1.msra.mxu0 0.0
        %8168 = vmatprep.mubr.f32.mxu0 0.0
        %8169 = vmatmul.mubr.f32.gmra.mrb[0].mxu0 %v8031
        %v8170 = vpop.f32.mrb[0].mxu0
        %v8171 = vadd.f32 0.0, %v8170
        %v8172 = vpop.f32.mrb[0].mxu0
        %v8173 = vadd.f32 0.0, %v8172
        %8174 = vdwg.mxu0
        %8175 = vmatprep.subr.mxu0 %v8017
        %8176 = vmatpush1.msra.mxu0 %v8016
        %8177 = vmatprep.subr.mxu0 0.0
        %8178 = vmatpush1.msra.mxu0 0.0
        %8179 = vmatprep.subr.mxu0 0.0
        %8180 = vmatpush1.msra.mxu0 0.0
        %8181 = vmatprep.subr.mxu0 0.0
        %8182 = vmatpush1.msra.mxu0 0.0
        %8183 = vmatprep.subr.mxu0 0.0
        %8184 = vmatpush1.msra.mxu0 0.0
        %8185 = vmatprep.subr.mxu0 0.0
        %8186 = vmatpush1.msra.mxu0 0.0
        %8187 = vmatprep.subr.mxu0 0.0
        %8188 = vmatpush1.msra.mxu0 0.0
        %8189 = vmatprep.subr.mxu0 0.0
        %8190 = vmatpush1.msra.mxu0 0.0
        %8191 = vmatprep.subr.mxu0 0.0
        %8192 = vmatpush1.msra.mxu0 0.0
        %8193 = vmatprep.subr.mxu0 0.0
        %8194 = vmatpush1.msra.mxu0 0.0
        %8195 = vmatprep.subr.mxu0 0.0
        %8196 = vmatpush1.msra.mxu0 0.0
        %8197 = vmatprep.subr.mxu0 0.0
        %8198 = vmatpush1.msra.mxu0 0.0
        %8199 = vmatprep.subr.mxu0 0.0
        %8200 = vmatpush1.msra.mxu0 0.0
        %8201 = vmatprep.subr.mxu0 0.0
        %8202 = vmatpush1.msra.mxu0 0.0
        %8203 = vmatprep.subr.mxu0 0.0
        %8204 = vmatpush1.msra.mxu0 0.0
        %8205 = vmatprep.subr.mxu0 0.0
        %8206 = vmatpush1.msra.mxu0 0.0
        %8207 = vmatprep.subr.mxu0 0.0
        %8208 = vmatpush1.msra.mxu0 0.0
        %8209 = vmatprep.subr.mxu0 0.0
        %8210 = vmatpush1.msra.mxu0 0.0
        %8211 = vmatprep.subr.mxu0 0.0
        %8212 = vmatpush1.msra.mxu0 0.0
        %8213 = vmatprep.subr.mxu0 0.0
        %8214 = vmatpush1.msra.mxu0 0.0
        %8215 = vmatprep.subr.mxu0 0.0
        %8216 = vmatpush1.msra.mxu0 0.0
        %8217 = vmatprep.subr.mxu0 0.0
        %8218 = vmatpush1.msra.mxu0 0.0
        %8219 = vmatprep.subr.mxu0 0.0
        %8220 = vmatpush1.msra.mxu0 0.0
        %8221 = vmatprep.subr.mxu0 0.0
        %8222 = vmatpush1.msra.mxu0 0.0
        %8223 = vmatprep.subr.mxu0 0.0
        %8224 = vmatpush1.msra.mxu0 0.0
        %8225 = vmatprep.subr.mxu0 0.0
        %8226 = vmatpush1.msra.mxu0 0.0
        %8227 = vmatprep.subr.mxu0 0.0
        %8228 = vmatpush1.msra.mxu0 0.0
        %8229 = vmatprep.subr.mxu0 0.0
        %8230 = vmatpush1.msra.mxu0 0.0
        %8231 = vmatprep.subr.mxu0 0.0
        %8232 = vmatpush1.msra.mxu0 0.0
        %8233 = vmatprep.subr.mxu0 0.0
        %8234 = vmatpush1.msra.mxu0 0.0
        %8235 = vmatprep.subr.mxu0 0.0
        %8236 = vmatpush1.msra.mxu0 0.0
        %8237 = vmatprep.subr.mxu0 0.0
        %8238 = vmatpush1.msra.mxu0 0.0
        %8239 = vmatprep.mubr.f32.mxu0 0.0
        %8240 = vmatmul.mubr.f32.gmra.mrb[0].mxu0 %v8031
        %v8241 = vpop.f32.mrb[0].mxu0
        %v8242 = vadd.f32 0.0, %v8241
        %v8243 = vpop.f32.mrb[0].mxu0
        %v8244 = vadd.f32 0.0, %v8243
        %8245 = vdwg.mxu0
        %8246 = vmatprep.subr.mxu0 %v8019
        %8247 = vmatpush1.msra.mxu0 %v8018
        %8248 = vmatprep.subr.mxu0 0.0
        %8249 = vmatpush1.msra.mxu0 0.0
        %8250 = vmatprep.subr.mxu0 0.0
        %8251 = vmatpush1.msra.mxu0 0.0
        %8252 = vmatprep.subr.mxu0 0.0
        %8253 = vmatpush1.msra.mxu0 0.0
        %8254 = vmatprep.subr.mxu0 0.0
        %8255 = vmatpush1.msra.mxu0 0.0
        %8256 = vmatprep.subr.mxu0 0.0
        %8257 = vmatpush1.msra.mxu0 0.0
        %8258 = vmatprep.subr.mxu0 0.0
        %8259 = vmatpush1.msra.mxu0 0.0
        %8260 = vmatprep.subr.mxu0 0.0
        %8261 = vmatpush1.msra.mxu0 0.0
        %8262 = vmatprep.subr.mxu0 0.0
        %8263 = vmatpush1.msra.mxu0 0.0
        %8264 = vmatprep.subr.mxu0 0.0
        %8265 = vmatpush1.msra.mxu0 0.0
        %8266 = vmatprep.subr.mxu0 0.0
        %8267 = vmatpush1.msra.mxu0 0.0
        %8268 = vmatprep.subr.mxu0 0.0
        %8269 = vmatpush1.msra.mxu0 0.0
        %8270 = vmatprep.subr.mxu0 0.0
        %8271 = vmatpush1.msra.mxu0 0.0
        %8272 = vmatprep.subr.mxu0 0.0
        %8273 = vmatpush1.msra.mxu0 0.0
        %8274 = vmatprep.subr.mxu0 0.0
        %8275 = vmatpush1.msra.mxu0 0.0
        %8276 = vmatprep.subr.mxu0 0.0
        %8277 = vmatpush1.msra.mxu0 0.0
        %8278 = vmatprep.subr.mxu0 0.0
        %8279 = vmatpush1.msra.mxu0 0.0
        %8280 = vmatprep.subr.mxu0 0.0
        %8281 = vmatpush1.msra.mxu0 0.0
        %8282 = vmatprep.subr.mxu0 0.0
        %8283 = vmatpush1.msra.mxu0 0.0
        %8284 = vmatprep.subr.mxu0 0.0
        %8285 = vmatpush1.msra.mxu0 0.0
        %8286 = vmatprep.subr.mxu0 0.0
        %8287 = vmatpush1.msra.mxu0 0.0
        %8288 = vmatprep.subr.mxu0 0.0
        %8289 = vmatpush1.msra.mxu0 0.0
        %8290 = vmatprep.subr.mxu0 0.0
        %8291 = vmatpush1.msra.mxu0 0.0
        %8292 = vmatprep.subr.mxu0 0.0
        %8293 = vmatpush1.msra.mxu0 0.0
        %8294 = vmatprep.subr.mxu0 0.0
        %8295 = vmatpush1.msra.mxu0 0.0
        %8296 = vmatprep.subr.mxu0 0.0
        %8297 = vmatpush1.msra.mxu0 0.0
        %8298 = vmatprep.subr.mxu0 0.0
        %8299 = vmatpush1.msra.mxu0 0.0
        %8300 = vmatprep.subr.mxu0 0.0
        %8301 = vmatpush1.msra.mxu0 0.0
        %8302 = vmatprep.subr.mxu0 0.0
        %8303 = vmatpush1.msra.mxu0 0.0
        %8304 = vmatprep.subr.mxu0 0.0
        %8305 = vmatpush1.msra.mxu0 0.0
        %8306 = vmatprep.subr.mxu0 0.0
        %8307 = vmatpush1.msra.mxu0 0.0
        %8308 = vmatprep.subr.mxu0 0.0
        %8309 = vmatpush1.msra.mxu0 0.0
        %8310 = vmatprep.mubr.f32.mxu0 0.0
        %8311 = vmatmul.mubr.f32.gmra.mrb[0].mxu0 %v8031
        %v8312 = vpop.f32.mrb[0].mxu0
        %v8313 = vadd.f32 0.0, %v8312
        %v8314 = vpop.f32.mrb[0].mxu0
        %v8315 = vadd.f32 0.0, %v8314
        %8316 = vdwg.mxu0
        %8317 = vmatprep.subr.mxu0 0.0
        %8318 = vmatpush1.msra.mxu0 %v8020
        %8319 = vmatprep.subr.mxu0 0.0
        %8320 = vmatpush1.msra.mxu0 0.0
        %8321 = vmatprep.subr.mxu0 0.0
        %8322 = vmatpush1.msra.mxu0 0.0
        %8323 = vmatprep.subr.mxu0 0.0
        %8324 = vmatpush1.msra.mxu0 0.0
        %8325 = vmatprep.subr.mxu0 0.0
        %8326 = vmatpush1.msra.mxu0 0.0
        %8327 = vmatprep.subr.mxu0 0.0
        %8328 = vmatpush1.msra.mxu0 0.0
        %8329 = vmatprep.subr.mxu0 0.0
        %8330 = vmatpush1.msra.mxu0 0.0
        %8331 = vmatprep.subr.mxu0 0.0
        %8332 = vmatpush1.msra.mxu0 0.0
        %8333 = vmatprep.subr.mxu0 0.0
        %8334 = vmatpush1.msra.mxu0 0.0
        %8335 = vmatprep.subr.mxu0 0.0
        %8336 = vmatpush1.msra.mxu0 0.0
        %8337 = vmatprep.subr.mxu0 0.0
        %8338 = vmatpush1.msra.mxu0 0.0
        %8339 = vmatprep.subr.mxu0 0.0
        %8340 = vmatpush1.msra.mxu0 0.0
        %8341 = vmatprep.subr.mxu0 0.0
        %8342 = vmatpush1.msra.mxu0 0.0
        %8343 = vmatprep.subr.mxu0 0.0
        %8344 = vmatpush1.msra.mxu0 0.0
        %8345 = vmatprep.subr.mxu0 0.0
        %8346 = vmatpush1.msra.mxu0 0.0
        %8347 = vmatprep.subr.mxu0 0.0
        %8348 = vmatpush1.msra.mxu0 0.0
        %8349 = vmatprep.subr.mxu0 0.0
        %8350 = vmatpush1.msra.mxu0 0.0
        %8351 = vmatprep.subr.mxu0 0.0
        %8352 = vmatpush1.msra.mxu0 0.0
        %8353 = vmatprep.subr.mxu0 0.0
        %8354 = vmatpush1.msra.mxu0 0.0
        %8355 = vmatprep.subr.mxu0 0.0
        %8356 = vmatpush1.msra.mxu0 0.0
        %8357 = vmatprep.subr.mxu0 0.0
        %8358 = vmatpush1.msra.mxu0 0.0
        %8359 = vmatprep.subr.mxu0 0.0
        %8360 = vmatpush1.msra.mxu0 0.0
        %8361 = vmatprep.subr.mxu0 0.0
        %8362 = vmatpush1.msra.mxu0 0.0
        %8363 = vmatprep.subr.mxu0 0.0
        %8364 = vmatpush1.msra.mxu0 0.0
        %8365 = vmatprep.subr.mxu0 0.0
        %8366 = vmatpush1.msra.mxu0 0.0
        %8367 = vmatprep.subr.mxu0 0.0
        %8368 = vmatpush1.msra.mxu0 0.0
        %8369 = vmatprep.subr.mxu0 0.0
        %8370 = vmatpush1.msra.mxu0 0.0
        %8371 = vmatprep.subr.mxu0 0.0
        %8372 = vmatpush1.msra.mxu0 0.0
        %8373 = vmatprep.subr.mxu0 0.0
        %8374 = vmatpush1.msra.mxu0 0.0
        %8375 = vmatprep.subr.mxu0 0.0
        %8376 = vmatpush1.msra.mxu0 0.0
        %8377 = vmatprep.subr.mxu0 0.0
        %8378 = vmatpush1.msra.mxu0 0.0
        %8379 = vmatprep.subr.mxu0 0.0
        %8380 = vmatpush1.msra.mxu0 0.0
        %8381 = vmatprep.mubr.f32.mxu0 0.0
        %8382 = vmatmul.mubr.f32.gmra.mrb[0].mxu0 %v8031
        %v8383 = vpop.f32.mrb[0].mxu0
        %v8384 = vadd.f32 0.0, %v8383
        %v8385 = vpop.f32.mrb[0].mxu0
        %8386 = vdwg.mxu0
        %v8387 = vadd.f32 %v7981, %v8100
        %v8388 = vadd.f32 %v7982, %v8102
        %v8389 = vadd.f32 %v7983, %v8171
        %v8390 = vadd.f32 %v7984, %v8173
        %v8391 = vadd.f32 %v7985, %v8242
        %v8392 = vadd.f32 %v7986, %v8244
        %v8393 = vadd.f32 %v7987, %v8313
        %v8394 = vadd.f32 %v7988, %v8315
        %v8395 = vadd.f32 %v7989, %v8384
        %v8396 = vadd.f32 %v4745, %v8387
        %v8397 = vadd.f32 %v4746, %v8388
        %v8398 = vadd.f32 %v4747, %v8389
        %v8399 = vadd.f32 %v4748, %v8390
        %v8400 = vadd.f32 %v4749, %v8391
        %v8401 = vadd.f32 %v4750, %v8392
        %v8402 = vadd.f32 %v4751, %v8393
        %v8403 = vadd.f32 %v4752, %v8394
        %v8404 = vadd.f32 %v4753, %v8395
        %v8405 = vld [vmem:[%s5] sm:$0xff]
        %8407 = vset.pattern.permute.xlu0 0
        %8408 = vperm.xlu0 %8407, %v8405
        %v8409 = vpop.permute.xlu0 %8408
        %v8411 = vadd.f32 %v8396, %v8409
        %v8412 = vadd.f32 %v8397, %v8409
        %v8413 = vadd.f32 %v8398, %v8409
        %v8414 = vadd.f32 %v8399, %v8409
        %v8415 = vadd.f32 %v8400, %v8409
        %v8416 = vadd.f32 %v8401, %v8409
        %v8417 = vadd.f32 %v8402, %v8409
        %v8418 = vadd.f32 %v8403, %v8409
        %v8419 = vadd.f32 %v8404, %v8409
        %8420 = vst [vmem:[%s320] sm:$0xff] %v8411
        %8421 = vst [vmem:[%s320 + $0x8] sm:$0xff] %v8412
        %8422 = vst [vmem:[%s320 + $0x10] sm:$0xff] %v8413
        %8423 = vst [vmem:[%s320 + $0x18] sm:$0xff] %v8414
        %8424 = vst [vmem:[%s320 + $0x20] sm:$0xff] %v8415
        %8425 = vst [vmem:[%s320 + $0x28] sm:$0xff] %v8416
        %8426 = vst [vmem:[%s320 + $0x30] sm:$0xff] %v8417
        %8427 = vst [vmem:[%s320 + $0x38] sm:$0xff] %v8418
        %8428 = vst [vmem:[%s320 + $0x40] sm:$0xff] %v8419
        %p8429 = scmp.lt.s32.totalorder %s20, 1
        %s8430 = scalar_select %p8429, %s20, 1
        %s8431 = smul.addr %s8430, 9
        %s8432 = smul.addr %s8431, 8
        %s8433 = scalar_lea.vmem %s7, %s8432
        // Predicated region
        $region61: #{upsample_blk_forward.1} parent=47 // pred_check
          %p8434 = pneg %p190
        $region62: #{upsample_blk_forward.1} parent=47 // pred_check_branch
          %8436 = sbr.rel (%p8434) target = $region64
        $region63: #{upsample_blk_forward.1} parent=47 // pred_region
          _
        $region64: #{upsample_blk_forward.1} parent=47 // pred_fallthru
          _
      $region48: #{upsample_blk_forward.1} parent=5 // pred_fallthru
        _
      %p8437 = scmp.le.s32.totalorder 2, %s15
      // Predicated region
      $region65: #{upsample_blk_forward.1} parent=5 // pred_check
        %p8438 = pneg %p8437
      $region66: #{upsample_blk_forward.1} parent=5 // pred_check_branch
        %8440 = sbr.rel (%p8438) target = $region68
      $region67: #{upsample_blk_forward.1} parent=5 // pred_region
        %s8441 = ssub.s32 %s15, 2
        // Predicated region
        $region69: #{upsample_blk_forward.1} parent=67 // pred_check
          %p8442 = pneg %p196
        $region70: #{upsample_blk_forward.1} parent=67 // pred_check_branch
          %8444 = sbr.rel (%p8442) target = $region72
        $region71: #{upsample_blk_forward.1} parent=67 // pred_region
          %p8445 = scmp.lt.s32.totalorder %s21, 1
          %s8446 = scalar_select %p8445, %s21, 1
          %s8447 = smul.addr %s8446, 9
          %s8448 = smul.addr %s8447, 8
          %s8449 = scalar_lea.vmem %s7, %s8448
        $region72: #{upsample_blk_forward.1} parent=67 // pred_fallthru
          _
      $region68: #{upsample_blk_forward.1} parent=5 // pred_fallthru
        _
    $region6: #{upsample_blk_forward.1} parent=1 // loop_footer
      %s19 = sadd.s32 1, %s15
    $region7: #{upsample_blk_forward.1} parent=1 // loop_footer_branch
      %14 = sbr.rel target = $region3
    $region8: #{upsample_blk_forward.1} parent=1 // loop_exit
      _
    %8450 = vsyncpa [#allocation5], 1
    %s8451 = scalar_lea.sflag [#allocation5], 1
    %8452 = vsyncpa %s8451, 1
    %8453 = vsyncpa [#allocation7], 1

</llo_original>
